<compile_context>
chip_gen: v5e
topology: v5e:2x2
jax: 0.10.0
libtpu: 0.0.40
codegen_flags: <defaults>
</compile_context>

<pallas_src>
import functools

import jax
import jax.numpy as jnp
from jax import lax
from jax.experimental import pallas as pl
from jax.experimental.pallas import tpu as pltpu  # noqa: F401  (hardware namespace)


# For ConvTranspose2d(k=4, s=2, p=1): output pixel (2m+py, 2n+px) receives
# contributions from input pixel (m+dy, n+dx) through deconv tap ky (resp. kx):
#   parity 0: (dy, ky) in {(0, 1), (-1, 3)};  parity 1: (dy, ky) in {(1, 0), (0, 2)}
# (same table for the x axis).  This turns the stride-2 deconv into 16 dense
# channel matmuls over shifted inputs - no zero dilation, no structural zeros.
_PAIRS = (((0, 1), (-1, 3)), ((1, 0), (0, 2)))


def _shift_lanes(x, d):
    """y[:, l] = x[:, l + d], zero-filled outside [0, S). Static d, f32 data."""
    if d == 0:
        return x
    c, s = x.shape
    z = jnp.zeros((c, abs(d)), x.dtype)
    if d > 0:
        return jnp.concatenate([x[:, d:], z], axis=1)
    return jnp.concatenate([z, x[:, : s + d]], axis=1)


def _proj_kernel(x_ref, w_ref, b_ref, g_ref, bt_ref, o_ref, *, eps):
    """Layer 0: ConvTranspose2d(k=4, s=1, p=0) on a 1x1 input + BatchNorm + ReLU.

    x_ref: (Cin, B) latent, channel-major.  w_ref: (16, Cout, Cin) with the
    leading index = ky*4 + kx.  o_ref: (16, Cout, B).
    """
    n_sp = o_ref.shape[0]                      # 16 spatial positions (4x4)
    nb = x_ref.shape[1]
    x = x_ref[...].astype(jnp.float32)
    bias = b_ref[...]                          # (Cout, 1)

    vals = []
    for p in range(n_sp):
        vals.append(jnp.dot(w_ref[p], x, preferred_element_type=jnp.float32) + bias)

    # BatchNorm2d (training-mode batch statistics, biased variance).
    total = vals[0]
    sq = vals[0] * vals[0]
    for v in vals[1:]:
        total = total + v
        sq = sq + v * v
    cnt = float(n_sp * nb)
    mean = jnp.sum(total, axis=1, keepdims=True) / cnt
    var = jnp.maximum(jnp.sum(sq, axis=1, keepdims=True) / cnt - mean * mean, 0.0)
    scale = g_ref[...] * lax.rsqrt(var + eps)
    shift = bt_ref[...] - mean * scale

    for p in range(n_sp):
        o_ref[p] = jnp.maximum(vals[p] * scale + shift, 0.0).astype(o_ref.dtype)


def _deconv_kernel(x_ref, w_ref, b_ref, g_ref, bt_ref, o_ref, *, h, w, eps, final):
    """ConvTranspose2d(k=4, s=2, p=1) + (BatchNorm+ReLU | tanh), fully fused.

    x_ref: (Cin, S) post-activation input, channel-major, S = B*h*w, flat (b,y,x).
    w_ref: (16, Cout, Cin) plane/tap matrices, index = ((py*2+px)*2 + a)*2 + b.
    o_ref: (4, Cout, S) output parity planes, plane index = py*2 + px.
    """
    cin, s = x_ref.shape
    cout = o_ref.shape[1]
    x = x_ref[...].astype(jnp.float32)

    # lane index -> (row, col) inside one image (h, w are powers of two)
    lane = lax.broadcasted_iota(jnp.int32, (1, s), 1)
    col = jnp.bitwise_and(lane, w - 1)
    row = jnp.bitwise_and(jnp.right_shift(lane, w.bit_length() - 1), h - 1)

    def tap(dy, dx):
        xs = _shift_lanes(x, dy * w + dx)
        conds = []
        if dy == 1:
            conds.append(row < (h - 1))
        elif dy == -1:
            conds.append(row >= 1)
        if dx == 1:
            conds.append(col < (w - 1))
        elif dx == -1:
            conds.append(col >= 1)
        if conds:
            m = conds[0]
            for c in conds[1:]:
                m = jnp.logical_and(m, c)
            xs = xs * m.astype(xs.dtype)          # zero out across-edge reads
        return xs

    taps = {(dy, dx): tap(dy, dx) for dy in (-1, 0, 1) for dx in (-1, 0, 1)}

    bias = b_ref[...]                             # (Cout, 1)
    planes = []
    for py in (0, 1):
        for px in (0, 1):
            acc = jnp.zeros((cout, s), jnp.float32)
            for a, (dy, _) in enumerate(_PAIRS[py]):
                for bi, (dx, _) in enumerate(_PAIRS[px]):
                    idx = ((py * 2 + px) * 2 + a) * 2 + bi
                    acc = acc + jnp.dot(w_ref[idx], taps[(dy, dx)],
                                        preferred_element_type=jnp.float32)
            planes.append(acc + bias)

    if final:
        outs = [jnp.tanh(p) for p in planes]      # EUP transcendental
    else:
        # BatchNorm2d over all 4*S output pixels per channel + ReLU, in-kernel.
        cnt = 4.0 * s
        total = planes[0] + planes[1] + planes[2] + planes[3]
        sq = (planes[0] * planes[0] + planes[1] * planes[1]
              + planes[2] * planes[2] + planes[3] * planes[3])
        mean = jnp.sum(total, axis=1, keepdims=True) / cnt
        var = jnp.maximum(jnp.sum(sq, axis=1, keepdims=True) / cnt - mean * mean, 0.0)
        scale = g_ref[...] * lax.rsqrt(var + eps)
        shift = bt_ref[...] - mean * scale
        outs = [jnp.maximum(p * scale + shift, 0.0) for p in planes]

    for k in range(4):
        o_ref[k] = outs[k].astype(o_ref.dtype)


def _full_spec(shape):
    zeros = (0,) * len(shape)
    return pl.BlockSpec(tuple(shape), lambda i: zeros)


def proj_block(x_cm, w16, bias, gamma, beta, *, eps=1e-5, out_dtype=jnp.bfloat16):
    n_sp, cout, _ = w16.shape
    nb = x_cm.shape[1]
    return pl.pallas_call(
        functools.partial(_proj_kernel, eps=eps),
        out_shape=jax.ShapeDtypeStruct((n_sp, cout, nb), out_dtype),
        grid=(1,),
        in_specs=[_full_spec(x_cm.shape), _full_spec(w16.shape),
                  _full_spec(bias.shape), _full_spec(gamma.shape),
                  _full_spec(beta.shape)],
        out_specs=_full_spec((n_sp, cout, nb)),
    )(x_cm, w16, bias, gamma, beta)


def deconv_block(x_cm, w16, bias, gamma, beta, h, w, *, final,
                 eps=1e-5, out_dtype=jnp.bfloat16):
    assert (h & (h - 1)) == 0 and (w & (w - 1)) == 0, "spatial dims must be pow2"
    _, s = x_cm.shape
    cout = w16.shape[1]
    return pl.pallas_call(
        functools.partial(_deconv_kernel, h=h, w=w, eps=eps, final=final),
        out_shape=jax.ShapeDtypeStruct((4, cout, s), out_dtype),
        grid=(1,),
        in_specs=[_full_spec(x_cm.shape), _full_spec(w16.shape),
                  _full_spec(bias.shape), _full_spec(gamma.shape),
                  _full_spec(beta.shape)],
        out_specs=_full_spec((4, cout, s)),
    )(x_cm, w16, bias, gamma, beta)


def init_params(key, input_dim=32, num_filters=(64, 32, 16), output_dim=3):
    """Deterministic synthetic parameters matching the module's shapes/init."""
    keys = jax.random.split(key, len(num_filters) + 1)
    hidden = []
    cin = input_dim
    for i, nf in enumerate(num_filters):
        wgt = 0.02 * jax.random.normal(keys[i], (cin, nf, 4, 4), jnp.float32)
        b = jnp.zeros((nf,), jnp.float32)
        gamma = jnp.ones((nf,), jnp.float32)
        beta = jnp.zeros((nf,), jnp.float32)
        hidden.append((wgt, b, gamma, beta))
        cin = nf
    w_out = 0.02 * jax.random.normal(keys[-1], (cin, output_dim, 4, 4), jnp.float32)
    b_out = jnp.zeros((output_dim,), jnp.float32)
    return {"hidden": hidden, "out": (w_out, b_out)}


def prepare_params(params):
    """One-time (outside jit) re-layout of PyTorch-style params to kernel form."""
    hidden = params["hidden"]

    # Layer 0: (Cin, Cout, 4, 4) -> (16, Cout, Cin), spatial-major (ky*4 + kx).
    w0, b0, g0, t0 = hidden[0]
    cin0, c1 = w0.shape[0], w0.shape[1]
    w0p = jnp.transpose(w0, (2, 3, 1, 0)).reshape(16, c1, cin0)
    proj = (w0p, b0.reshape(c1, 1), g0.reshape(c1, 1), t0.reshape(c1, 1))

    def plane_weights(wgt):
        blocks = []
        for py in (0, 1):
            for px in (0, 1):
                for (_, ky) in _PAIRS[py]:
                    for (_, kx) in _PAIRS[px]:
                        blocks.append(jnp.transpose(wgt[:, :, ky, kx], (1, 0)))
        return jnp.stack(blocks, axis=0)           # (16, Cout, Cin)

    mids = []
    for (wi, bi, gi, ti) in hidden[1:]:
        co = wi.shape[1]
        mids.append((plane_weights(wi), bi.reshape(co, 1),
                     gi.reshape(co, 1), ti.reshape(co, 1)))

    wo, bo = params["out"]
    co = wo.shape[1]
    out = (plane_weights(wo), bo.reshape(co, 1),
           jnp.ones((co, 1), jnp.float32), jnp.zeros((co, 1), jnp.float32))
    return {"proj": proj, "hidden": tuple(mids), "out": out}


def generator_forward(x, prep):
    """x: (B, input_dim) latent; returns (B, output_dim, 32, 32) in [-1, 1]."""
    nb = x.shape[0]

    # Layer 0: 1x1 -> 4x4, fused deconv + BN + ReLU.
    w0p, b0, g0, t0 = prep["proj"]
    c1 = w0p.shape[1]
    h0 = proj_block(jnp.transpose(x, (1, 0)), w0p, b0, g0, t0)   # (16, C1, B)
    # -> channel-major flat (C1, B*4*4), flat order (b, y, x)
    h = jnp.transpose(h0, (1, 2, 0)).reshape(c1, nb * 16)
    hh = ww = 4

    # Hidden stride-2 deconvs, fused deconv + BN + ReLU.
    for (wp, bi, gi, ti) in prep["hidden"]:
        co = wp.shape[1]
        planes = deconv_block(h, wp, bi, gi, ti, hh, ww, final=False)
        t = planes.reshape(2, 2, co, nb, hh, ww)
        # depth-to-space: (py, px, c, b, m, n) -> (c, b, 2m+py, 2n+px)
        # TODO(synk): this lane-strided interleave is the only piece keeping the
        # layers in separate pallas_calls; it stays as one tiny XLA transpose.
        h = jnp.transpose(t, (2, 3, 4, 0, 5, 1)).reshape(co, nb * (2 * hh) * (2 * ww))
        hh, ww = 2 * hh, 2 * ww

    # Output layer: stride-2 deconv + tanh.
    wp, bi, gi, ti = prep["out"]
    co = wp.shape[1]
    planes = deconv_block(h, wp, bi, gi, ti, hh, ww, final=True,
                          out_dtype=jnp.float32)
    t = planes.reshape(2, 2, co, nb, hh, ww)
    # Final depth-to-space doubles as the NCHW arrangement (no extra transpose).
    return jnp.transpose(t, (3, 2, 4, 0, 5, 1)).reshape(nb, co, 2 * hh, 2 * ww)


if __name__ == "__main__":
    key = jax.random.PRNGKey(0)
    kx, kp = jax.random.split(key)
    # Small constructor args consistent with the module: 1x1 -> 4 -> 8 -> 16 -> 32
    input_dim, num_filters, output_dim = 32, (64, 32, 16), 3
    x = jax.random.normal(kx, (2, input_dim), jnp.float32)
    params = init_params(kp, input_dim, num_filters, output_dim)
    prep = prepare_params(params)          # weight re-layout once, outside the jit

    fwd = jax.jit(generator_forward)
    out = jax.block_until_ready(fwd(x, prep))

    assert out.shape == (2, 3, 32, 32), out.shape
    assert bool(jnp.all(jnp.isfinite(out)))
    assert bool(jnp.all((out >= -1.0) & (out <= 1.0)))   # tanh output range
    print("KERNEL_OK")
</pallas_src>

<mosaic_0001>
module attributes {stable_mosaic.version = 11 : i64} {
  func.func @_proj_kernel(%arg0: i32, %arg1: memref<32x2xf32, #tpu.memory_space<vmem>>, %arg2: memref<16x64x32xf32, #tpu.memory_space<vmem>>, %arg3: memref<64x1xf32, #tpu.memory_space<vmem>>, %arg4: memref<64x1xf32, #tpu.memory_space<vmem>>, %arg5: memref<64x1xf32, #tpu.memory_space<vmem>>, %arg6: memref<16x64x2xbf16, #tpu.memory_space<vmem>>) attributes {dimension_semantics = [#tpu.dimension_semantics<arbitrary>], iteration_bounds = array<i64: 1>, scalar_prefetch = 0 : i64, scratch_operands = 0 : i64, tpu.core_type = #tpu.core_type<tc>, window_params = [{pipeline_mode = #tpu.pipeline_mode<synchronous>, transform_indices = @transform_0, window_bounds = array<i64: 32, 2>}, {pipeline_mode = #tpu.pipeline_mode<synchronous>, transform_indices = @transform_1, window_bounds = array<i64: 16, 64, 32>}, {pipeline_mode = #tpu.pipeline_mode<synchronous>, transform_indices = @transform_2, window_bounds = array<i64: 64, 1>}, {pipeline_mode = #tpu.pipeline_mode<synchronous>, transform_indices = @transform_3, window_bounds = array<i64: 64, 1>}, {pipeline_mode = #tpu.pipeline_mode<synchronous>, transform_indices = @transform_4, window_bounds = array<i64: 64, 1>}, {pipeline_mode = #tpu.pipeline_mode<synchronous>, transform_indices = @transform_5, window_bounds = array<i64: 16, 64, 2>}]} {
    %c0 = arith.constant 0 : index
    %c0_0 = arith.constant 0 : index
    %0 = vector.load %arg1[%c0, %c0_0] : memref<32x2xf32, #tpu.memory_space<vmem>>, vector<32x2xf32>
    %c0_1 = arith.constant 0 : index
    %c0_2 = arith.constant 0 : index
    %1 = vector.load %arg3[%c0_1, %c0_2] : memref<64x1xf32, #tpu.memory_space<vmem>>, vector<64x1xf32>
    %c0_3 = arith.constant 0 : index
    %c0_4 = arith.constant 0 : index
    %c0_5 = arith.constant 0 : index
    %2 = vector.load %arg2[%c0_3, %c0_4, %c0_5] : memref<16x64x32xf32, #tpu.memory_space<vmem>>, vector<1x64x32xf32>
    %3 = vector.shape_cast %2 : vector<1x64x32xf32> to vector<64x32xf32>
    %cst = arith.constant dense<0.000000e+00> : vector<64x2xf32>
    %4 = tpu.matmul %3, %0, %cst {dimension_numbers = #tpu.dot_dimension_numbers<[1], [0], [0], [1], [0, 0, 1, 1], [], []>} : vector<64x32xf32>, vector<32x2xf32>, vector<64x2xf32> -> vector<64x2xf32>
    %5 = vector.broadcast %1 : vector<64x1xf32> to vector<64x2xf32>
    %6 = arith.addf %4, %5 : vector<64x2xf32>
    %c1 = arith.constant 1 : index
    %c0_6 = arith.constant 0 : index
    %c0_7 = arith.constant 0 : index
    %7 = vector.load %arg2[%c1, %c0_6, %c0_7] : memref<16x64x32xf32, #tpu.memory_space<vmem>>, vector<1x64x32xf32>
    %8 = vector.shape_cast %7 : vector<1x64x32xf32> to vector<64x32xf32>
    %cst_8 = arith.constant dense<0.000000e+00> : vector<64x2xf32>
    %9 = tpu.matmul %8, %0, %cst_8 {dimension_numbers = #tpu.dot_dimension_numbers<[1], [0], [0], [1], [0, 0, 1, 1], [], []>} : vector<64x32xf32>, vector<32x2xf32>, vector<64x2xf32> -> vector<64x2xf32>
    %10 = vector.broadcast %1 : vector<64x1xf32> to vector<64x2xf32>
    %11 = arith.addf %9, %10 : vector<64x2xf32>
    %c2 = arith.constant 2 : index
    %c0_9 = arith.constant 0 : index
    %c0_10 = arith.constant 0 : index
    %12 = vector.load %arg2[%c2, %c0_9, %c0_10] : memref<16x64x32xf32, #tpu.memory_space<vmem>>, vector<1x64x32xf32>
    %13 = vector.shape_cast %12 : vector<1x64x32xf32> to vector<64x32xf32>
    %cst_11 = arith.constant dense<0.000000e+00> : vector<64x2xf32>
    %14 = tpu.matmul %13, %0, %cst_11 {dimension_numbers = #tpu.dot_dimension_numbers<[1], [0], [0], [1], [0, 0, 1, 1], [], []>} : vector<64x32xf32>, vector<32x2xf32>, vector<64x2xf32> -> vector<64x2xf32>
    %15 = vector.broadcast %1 : vector<64x1xf32> to vector<64x2xf32>
    %16 = arith.addf %14, %15 : vector<64x2xf32>
    %c3 = arith.constant 3 : index
    %c0_12 = arith.constant 0 : index
    %c0_13 = arith.constant 0 : index
    %17 = vector.load %arg2[%c3, %c0_12, %c0_13] : memref<16x64x32xf32, #tpu.memory_space<vmem>>, vector<1x64x32xf32>
    %18 = vector.shape_cast %17 : vector<1x64x32xf32> to vector<64x32xf32>
    %cst_14 = arith.constant dense<0.000000e+00> : vector<64x2xf32>
    %19 = tpu.matmul %18, %0, %cst_14 {dimension_numbers = #tpu.dot_dimension_numbers<[1], [0], [0], [1], [0, 0, 1, 1], [], []>} : vector<64x32xf32>, vector<32x2xf32>, vector<64x2xf32> -> vector<64x2xf32>
    %20 = vector.broadcast %1 : vector<64x1xf32> to vector<64x2xf32>
    %21 = arith.addf %19, %20 : vector<64x2xf32>
    %c4 = arith.constant 4 : index
    %c0_15 = arith.constant 0 : index
    %c0_16 = arith.constant 0 : index
    %22 = vector.load %arg2[%c4, %c0_15, %c0_16] : memref<16x64x32xf32, #tpu.memory_space<vmem>>, vector<1x64x32xf32>
    %23 = vector.shape_cast %22 : vector<1x64x32xf32> to vector<64x32xf32>
    %cst_17 = arith.constant dense<0.000000e+00> : vector<64x2xf32>
    %24 = tpu.matmul %23, %0, %cst_17 {dimension_numbers = #tpu.dot_dimension_numbers<[1], [0], [0], [1], [0, 0, 1, 1], [], []>} : vector<64x32xf32>, vector<32x2xf32>, vector<64x2xf32> -> vector<64x2xf32>
    %25 = vector.broadcast %1 : vector<64x1xf32> to vector<64x2xf32>
    %26 = arith.addf %24, %25 : vector<64x2xf32>
    %c5 = arith.constant 5 : index
    %c0_18 = arith.constant 0 : index
    %c0_19 = arith.constant 0 : index
    %27 = vector.load %arg2[%c5, %c0_18, %c0_19] : memref<16x64x32xf32, #tpu.memory_space<vmem>>, vector<1x64x32xf32>
    %28 = vector.shape_cast %27 : vector<1x64x32xf32> to vector<64x32xf32>
    %cst_20 = arith.constant dense<0.000000e+00> : vector<64x2xf32>
    %29 = tpu.matmul %28, %0, %cst_20 {dimension_numbers = #tpu.dot_dimension_numbers<[1], [0], [0], [1], [0, 0, 1, 1], [], []>} : vector<64x32xf32>, vector<32x2xf32>, vector<64x2xf32> -> vector<64x2xf32>
    %30 = vector.broadcast %1 : vector<64x1xf32> to vector<64x2xf32>
    %31 = arith.addf %29, %30 : vector<64x2xf32>
    %c6 = arith.constant 6 : index
    %c0_21 = arith.constant 0 : index
    %c0_22 = arith.constant 0 : index
    %32 = vector.load %arg2[%c6, %c0_21, %c0_22] : memref<16x64x32xf32, #tpu.memory_space<vmem>>, vector<1x64x32xf32>
    %33 = vector.shape_cast %32 : vector<1x64x32xf32> to vector<64x32xf32>
    %cst_23 = arith.constant dense<0.000000e+00> : vector<64x2xf32>
    %34 = tpu.matmul %33, %0, %cst_23 {dimension_numbers = #tpu.dot_dimension_numbers<[1], [0], [0], [1], [0, 0, 1, 1], [], []>} : vector<64x32xf32>, vector<32x2xf32>, vector<64x2xf32> -> vector<64x2xf32>
    %35 = vector.broadcast %1 : vector<64x1xf32> to vector<64x2xf32>
    %36 = arith.addf %34, %35 : vector<64x2xf32>
    %c7 = arith.constant 7 : index
    %c0_24 = arith.constant 0 : index
    %c0_25 = arith.constant 0 : index
    %37 = vector.load %arg2[%c7, %c0_24, %c0_25] : memref<16x64x32xf32, #tpu.memory_space<vmem>>, vector<1x64x32xf32>
    %38 = vector.shape_cast %37 : vector<1x64x32xf32> to vector<64x32xf32>
    %cst_26 = arith.constant dense<0.000000e+00> : vector<64x2xf32>
    %39 = tpu.matmul %38, %0, %cst_26 {dimension_numbers = #tpu.dot_dimension_numbers<[1], [0], [0], [1], [0, 0, 1, 1], [], []>} : vector<64x32xf32>, vector<32x2xf32>, vector<64x2xf32> -> vector<64x2xf32>
    %40 = vector.broadcast %1 : vector<64x1xf32> to vector<64x2xf32>
    %41 = arith.addf %39, %40 : vector<64x2xf32>
    %c8 = arith.constant 8 : index
    %c0_27 = arith.constant 0 : index
    %c0_28 = arith.constant 0 : index
    %42 = vector.load %arg2[%c8, %c0_27, %c0_28] : memref<16x64x32xf32, #tpu.memory_space<vmem>>, vector<1x64x32xf32>
    %43 = vector.shape_cast %42 : vector<1x64x32xf32> to vector<64x32xf32>
    %cst_29 = arith.constant dense<0.000000e+00> : vector<64x2xf32>
    %44 = tpu.matmul %43, %0, %cst_29 {dimension_numbers = #tpu.dot_dimension_numbers<[1], [0], [0], [1], [0, 0, 1, 1], [], []>} : vector<64x32xf32>, vector<32x2xf32>, vector<64x2xf32> -> vector<64x2xf32>
    %45 = vector.broadcast %1 : vector<64x1xf32> to vector<64x2xf32>
    %46 = arith.addf %44, %45 : vector<64x2xf32>
    %c9 = arith.constant 9 : index
    %c0_30 = arith.constant 0 : index
    %c0_31 = arith.constant 0 : index
    %47 = vector.load %arg2[%c9, %c0_30, %c0_31] : memref<16x64x32xf32, #tpu.memory_space<vmem>>, vector<1x64x32xf32>
    %48 = vector.shape_cast %47 : vector<1x64x32xf32> to vector<64x32xf32>
    %cst_32 = arith.constant dense<0.000000e+00> : vector<64x2xf32>
    %49 = tpu.matmul %48, %0, %cst_32 {dimension_numbers = #tpu.dot_dimension_numbers<[1], [0], [0], [1], [0, 0, 1, 1], [], []>} : vector<64x32xf32>, vector<32x2xf32>, vector<64x2xf32> -> vector<64x2xf32>
    %50 = vector.broadcast %1 : vector<64x1xf32> to vector<64x2xf32>
    %51 = arith.addf %49, %50 : vector<64x2xf32>
    %c10 = arith.constant 10 : index
    %c0_33 = arith.constant 0 : index
    %c0_34 = arith.constant 0 : index
    %52 = vector.load %arg2[%c10, %c0_33, %c0_34] : memref<16x64x32xf32, #tpu.memory_space<vmem>>, vector<1x64x32xf32>
    %53 = vector.shape_cast %52 : vector<1x64x32xf32> to vector<64x32xf32>
    %cst_35 = arith.constant dense<0.000000e+00> : vector<64x2xf32>
    %54 = tpu.matmul %53, %0, %cst_35 {dimension_numbers = #tpu.dot_dimension_numbers<[1], [0], [0], [1], [0, 0, 1, 1], [], []>} : vector<64x32xf32>, vector<32x2xf32>, vector<64x2xf32> -> vector<64x2xf32>
    %55 = vector.broadcast %1 : vector<64x1xf32> to vector<64x2xf32>
    %56 = arith.addf %54, %55 : vector<64x2xf32>
    %c11 = arith.constant 11 : index
    %c0_36 = arith.constant 0 : index
    %c0_37 = arith.constant 0 : index
    %57 = vector.load %arg2[%c11, %c0_36, %c0_37] : memref<16x64x32xf32, #tpu.memory_space<vmem>>, vector<1x64x32xf32>
    %58 = vector.shape_cast %57 : vector<1x64x32xf32> to vector<64x32xf32>
    %cst_38 = arith.constant dense<0.000000e+00> : vector<64x2xf32>
    %59 = tpu.matmul %58, %0, %cst_38 {dimension_numbers = #tpu.dot_dimension_numbers<[1], [0], [0], [1], [0, 0, 1, 1], [], []>} : vector<64x32xf32>, vector<32x2xf32>, vector<64x2xf32> -> vector<64x2xf32>
    %60 = vector.broadcast %1 : vector<64x1xf32> to vector<64x2xf32>
    %61 = arith.addf %59, %60 : vector<64x2xf32>
    %c12 = arith.constant 12 : index
    %c0_39 = arith.constant 0 : index
    %c0_40 = arith.constant 0 : index
    %62 = vector.load %arg2[%c12, %c0_39, %c0_40] : memref<16x64x32xf32, #tpu.memory_space<vmem>>, vector<1x64x32xf32>
    %63 = vector.shape_cast %62 : vector<1x64x32xf32> to vector<64x32xf32>
    %cst_41 = arith.constant dense<0.000000e+00> : vector<64x2xf32>
    %64 = tpu.matmul %63, %0, %cst_41 {dimension_numbers = #tpu.dot_dimension_numbers<[1], [0], [0], [1], [0, 0, 1, 1], [], []>} : vector<64x32xf32>, vector<32x2xf32>, vector<64x2xf32> -> vector<64x2xf32>
    %65 = vector.broadcast %1 : vector<64x1xf32> to vector<64x2xf32>
    %66 = arith.addf %64, %65 : vector<64x2xf32>
    %c13 = arith.constant 13 : index
    %c0_42 = arith.constant 0 : index
    %c0_43 = arith.constant 0 : index
    %67 = vector.load %arg2[%c13, %c0_42, %c0_43] : memref<16x64x32xf32, #tpu.memory_space<vmem>>, vector<1x64x32xf32>
    %68 = vector.shape_cast %67 : vector<1x64x32xf32> to vector<64x32xf32>
    %cst_44 = arith.constant dense<0.000000e+00> : vector<64x2xf32>
    %69 = tpu.matmul %68, %0, %cst_44 {dimension_numbers = #tpu.dot_dimension_numbers<[1], [0], [0], [1], [0, 0, 1, 1], [], []>} : vector<64x32xf32>, vector<32x2xf32>, vector<64x2xf32> -> vector<64x2xf32>
    %70 = vector.broadcast %1 : vector<64x1xf32> to vector<64x2xf32>
    %71 = arith.addf %69, %70 : vector<64x2xf32>
    %c14 = arith.constant 14 : index
    %c0_45 = arith.constant 0 : index
    %c0_46 = arith.constant 0 : index
    %72 = vector.load %arg2[%c14, %c0_45, %c0_46] : memref<16x64x32xf32, #tpu.memory_space<vmem>>, vector<1x64x32xf32>
    %73 = vector.shape_cast %72 : vector<1x64x32xf32> to vector<64x32xf32>
    %cst_47 = arith.constant dense<0.000000e+00> : vector<64x2xf32>
    %74 = tpu.matmul %73, %0, %cst_47 {dimension_numbers = #tpu.dot_dimension_numbers<[1], [0], [0], [1], [0, 0, 1, 1], [], []>} : vector<64x32xf32>, vector<32x2xf32>, vector<64x2xf32> -> vector<64x2xf32>
    %75 = vector.broadcast %1 : vector<64x1xf32> to vector<64x2xf32>
    %76 = arith.addf %74, %75 : vector<64x2xf32>
    %c15 = arith.constant 15 : index
    %c0_48 = arith.constant 0 : index
    %c0_49 = arith.constant 0 : index
    %77 = vector.load %arg2[%c15, %c0_48, %c0_49] : memref<16x64x32xf32, #tpu.memory_space<vmem>>, vector<1x64x32xf32>
    %78 = vector.shape_cast %77 : vector<1x64x32xf32> to vector<64x32xf32>
    %cst_50 = arith.constant dense<0.000000e+00> : vector<64x2xf32>
    %79 = tpu.matmul %78, %0, %cst_50 {dimension_numbers = #tpu.dot_dimension_numbers<[1], [0], [0], [1], [0, 0, 1, 1], [], []>} : vector<64x32xf32>, vector<32x2xf32>, vector<64x2xf32> -> vector<64x2xf32>
    %80 = vector.broadcast %1 : vector<64x1xf32> to vector<64x2xf32>
    %81 = arith.addf %79, %80 : vector<64x2xf32>
    %82 = arith.mulf %6, %6 : vector<64x2xf32>
    %83 = arith.addf %6, %11 : vector<64x2xf32>
    %84 = arith.mulf %11, %11 : vector<64x2xf32>
    %85 = arith.addf %82, %84 : vector<64x2xf32>
    %86 = arith.addf %83, %16 : vector<64x2xf32>
    %87 = arith.mulf %16, %16 : vector<64x2xf32>
    %88 = arith.addf %85, %87 : vector<64x2xf32>
    %89 = arith.addf %86, %21 : vector<64x2xf32>
    %90 = arith.mulf %21, %21 : vector<64x2xf32>
    %91 = arith.addf %88, %90 : vector<64x2xf32>
    %92 = arith.addf %89, %26 : vector<64x2xf32>
    %93 = arith.mulf %26, %26 : vector<64x2xf32>
    %94 = arith.addf %91, %93 : vector<64x2xf32>
    %95 = arith.addf %92, %31 : vector<64x2xf32>
    %96 = arith.mulf %31, %31 : vector<64x2xf32>
    %97 = arith.addf %94, %96 : vector<64x2xf32>
    %98 = arith.addf %95, %36 : vector<64x2xf32>
    %99 = arith.mulf %36, %36 : vector<64x2xf32>
    %100 = arith.addf %97, %99 : vector<64x2xf32>
    %101 = arith.addf %98, %41 : vector<64x2xf32>
    %102 = arith.mulf %41, %41 : vector<64x2xf32>
    %103 = arith.addf %100, %102 : vector<64x2xf32>
    %104 = arith.addf %101, %46 : vector<64x2xf32>
    %105 = arith.mulf %46, %46 : vector<64x2xf32>
    %106 = arith.addf %103, %105 : vector<64x2xf32>
    %107 = arith.addf %104, %51 : vector<64x2xf32>
    %108 = arith.mulf %51, %51 : vector<64x2xf32>
    %109 = arith.addf %106, %108 : vector<64x2xf32>
    %110 = arith.addf %107, %56 : vector<64x2xf32>
    %111 = arith.mulf %56, %56 : vector<64x2xf32>
    %112 = arith.addf %109, %111 : vector<64x2xf32>
    %113 = arith.addf %110, %61 : vector<64x2xf32>
    %114 = arith.mulf %61, %61 : vector<64x2xf32>
    %115 = arith.addf %112, %114 : vector<64x2xf32>
    %116 = arith.addf %113, %66 : vector<64x2xf32>
    %117 = arith.mulf %66, %66 : vector<64x2xf32>
    %118 = arith.addf %115, %117 : vector<64x2xf32>
    %119 = arith.addf %116, %71 : vector<64x2xf32>
    %120 = arith.mulf %71, %71 : vector<64x2xf32>
    %121 = arith.addf %118, %120 : vector<64x2xf32>
    %122 = arith.addf %119, %76 : vector<64x2xf32>
    %123 = arith.mulf %76, %76 : vector<64x2xf32>
    %124 = arith.addf %121, %123 : vector<64x2xf32>
    %125 = arith.addf %122, %81 : vector<64x2xf32>
    %126 = arith.mulf %81, %81 : vector<64x2xf32>
    %127 = arith.addf %124, %126 : vector<64x2xf32>
    %cst_51 = arith.constant dense<0.000000e+00> : vector<64xf32>
    %128 = vector.multi_reduction <add>, %125, %cst_51 [1] : vector<64x2xf32> to vector<64xf32>
    %129 = vector.shape_cast %128 : vector<64xf32> to vector<64x1xf32>
    %cst_52 = arith.constant 3.200000e+01 : f32
    %130 = vector.broadcast %cst_52 : f32 to vector<64x1xf32>
    %131 = arith.divf %129, %130 : vector<64x1xf32>
    %cst_53 = arith.constant dense<0.000000e+00> : vector<64xf32>
    %132 = vector.multi_reduction <add>, %127, %cst_53 [1] : vector<64x2xf32> to vector<64xf32>
    %133 = vector.shape_cast %132 : vector<64xf32> to vector<64x1xf32>
    %cst_54 = arith.constant 3.200000e+01 : f32
    %134 = vector.broadcast %cst_54 : f32 to vector<64x1xf32>
    %135 = arith.divf %133, %134 : vector<64x1xf32>
    %136 = arith.mulf %131, %131 : vector<64x1xf32>
    %137 = arith.subf %135, %136 : vector<64x1xf32>
    %cst_55 = arith.constant 0.000000e+00 : f32
    %138 = vector.broadcast %cst_55 : f32 to vector<64x1xf32>
    %139 = arith.maximumf %137, %138 : vector<64x1xf32>
    %c0_56 = arith.constant 0 : index
    %c0_57 = arith.constant 0 : index
    %140 = vector.load %arg4[%c0_56, %c0_57] : memref<64x1xf32, #tpu.memory_space<vmem>>, vector<64x1xf32>
    %cst_58 = arith.constant 9.99999974E-6 : f32
    %141 = vector.broadcast %cst_58 : f32 to vector<64x1xf32>
    %142 = arith.addf %139, %141 : vector<64x1xf32>
    %143 = math.rsqrt %142 : vector<64x1xf32>
    %144 = arith.mulf %140, %143 : vector<64x1xf32>
    %c0_59 = arith.constant 0 : index
    %c0_60 = arith.constant 0 : index
    %145 = vector.load %arg5[%c0_59, %c0_60] : memref<64x1xf32, #tpu.memory_space<vmem>>, vector<64x1xf32>
    %146 = arith.mulf %131, %144 : vector<64x1xf32>
    %147 = arith.subf %145, %146 : vector<64x1xf32>
    %148 = vector.broadcast %144 : vector<64x1xf32> to vector<64x2xf32>
    %149 = arith.mulf %6, %148 : vector<64x2xf32>
    %150 = vector.broadcast %147 : vector<64x1xf32> to vector<64x2xf32>
    %151 = arith.addf %149, %150 : vector<64x2xf32>
    %cst_61 = arith.constant 0.000000e+00 : f32
    %152 = vector.broadcast %cst_61 : f32 to vector<64x2xf32>
    %153 = arith.maximumf %151, %152 : vector<64x2xf32>
    %154 = arith.truncf %153 : vector<64x2xf32> to vector<64x2xbf16>
    %c0_62 = arith.constant 0 : index
    %c0_63 = arith.constant 0 : index
    %c0_64 = arith.constant 0 : index
    %155 = vector.load %arg6[%c0_62, %c0_63, %c0_64] : memref<16x64x2xbf16, #tpu.memory_space<vmem>>, vector<1x64x2xbf16>
    %156 = vector.shape_cast %155 : vector<1x64x2xbf16> to vector<64x2xbf16>
    %157 = vector.shape_cast %154 : vector<64x2xbf16> to vector<1x64x2xbf16>
    tpu.vector_store %arg6[%c0_62, %c0_63, %c0_64], %157 {strides = array<i32>} : memref<16x64x2xbf16, #tpu.memory_space<vmem>>, vector<1x64x2xbf16>,
    %158 = vector.broadcast %144 : vector<64x1xf32> to vector<64x2xf32>
    %159 = arith.mulf %11, %158 : vector<64x2xf32>
    %160 = vector.broadcast %147 : vector<64x1xf32> to vector<64x2xf32>
    %161 = arith.addf %159, %160 : vector<64x2xf32>
    %cst_65 = arith.constant 0.000000e+00 : f32
    %162 = vector.broadcast %cst_65 : f32 to vector<64x2xf32>
    %163 = arith.maximumf %161, %162 : vector<64x2xf32>
    %164 = arith.truncf %163 : vector<64x2xf32> to vector<64x2xbf16>
    %c1_66 = arith.constant 1 : index
    %c0_67 = arith.constant 0 : index
    %c0_68 = arith.constant 0 : index
    %165 = vector.load %arg6[%c1_66, %c0_67, %c0_68] : memref<16x64x2xbf16, #tpu.memory_space<vmem>>, vector<1x64x2xbf16>
    %166 = vector.shape_cast %165 : vector<1x64x2xbf16> to vector<64x2xbf16>
    %167 = vector.shape_cast %164 : vector<64x2xbf16> to vector<1x64x2xbf16>
    tpu.vector_store %arg6[%c1_66, %c0_67, %c0_68], %167 {strides = array<i32>} : memref<16x64x2xbf16, #tpu.memory_space<vmem>>, vector<1x64x2xbf16>,
    %168 = vector.broadcast %144 : vector<64x1xf32> to vector<64x2xf32>
    %169 = arith.mulf %16, %168 : vector<64x2xf32>
    %170 = vector.broadcast %147 : vector<64x1xf32> to vector<64x2xf32>
    %171 = arith.addf %169, %170 : vector<64x2xf32>
    %cst_69 = arith.constant 0.000000e+00 : f32
    %172 = vector.broadcast %cst_69 : f32 to vector<64x2xf32>
    %173 = arith.maximumf %171, %172 : vector<64x2xf32>
    %174 = arith.truncf %173 : vector<64x2xf32> to vector<64x2xbf16>
    %c2_70 = arith.constant 2 : index
    %c0_71 = arith.constant 0 : index
    %c0_72 = arith.constant 0 : index
    %175 = vector.load %arg6[%c2_70, %c0_71, %c0_72] : memref<16x64x2xbf16, #tpu.memory_space<vmem>>, vector<1x64x2xbf16>
    %176 = vector.shape_cast %175 : vector<1x64x2xbf16> to vector<64x2xbf16>
    %177 = vector.shape_cast %174 : vector<64x2xbf16> to vector<1x64x2xbf16>
    tpu.vector_store %arg6[%c2_70, %c0_71, %c0_72], %177 {strides = array<i32>} : memref<16x64x2xbf16, #tpu.memory_space<vmem>>, vector<1x64x2xbf16>,
    %178 = vector.broadcast %144 : vector<64x1xf32> to vector<64x2xf32>
    %179 = arith.mulf %21, %178 : vector<64x2xf32>
    %180 = vector.broadcast %147 : vector<64x1xf32> to vector<64x2xf32>
    %181 = arith.addf %179, %180 : vector<64x2xf32>
    %cst_73 = arith.constant 0.000000e+00 : f32
    %182 = vector.broadcast %cst_73 : f32 to vector<64x2xf32>
    %183 = arith.maximumf %181, %182 : vector<64x2xf32>
    %184 = arith.truncf %183 : vector<64x2xf32> to vector<64x2xbf16>
    %c3_74 = arith.constant 3 : index
    %c0_75 = arith.constant 0 : index
    %c0_76 = arith.constant 0 : index
    %185 = vector.load %arg6[%c3_74, %c0_75, %c0_76] : memref<16x64x2xbf16, #tpu.memory_space<vmem>>, vector<1x64x2xbf16>
    %186 = vector.shape_cast %185 : vector<1x64x2xbf16> to vector<64x2xbf16>
    %187 = vector.shape_cast %184 : vector<64x2xbf16> to vector<1x64x2xbf16>
    tpu.vector_store %arg6[%c3_74, %c0_75, %c0_76], %187 {strides = array<i32>} : memref<16x64x2xbf16, #tpu.memory_space<vmem>>, vector<1x64x2xbf16>,
    %188 = vector.broadcast %144 : vector<64x1xf32> to vector<64x2xf32>
    %189 = arith.mulf %26, %188 : vector<64x2xf32>
    %190 = vector.broadcast %147 : vector<64x1xf32> to vector<64x2xf32>
    %191 = arith.addf %189, %190 : vector<64x2xf32>
    %cst_77 = arith.constant 0.000000e+00 : f32
    %192 = vector.broadcast %cst_77 : f32 to vector<64x2xf32>
    %193 = arith.maximumf %191, %192 : vector<64x2xf32>
    %194 = arith.truncf %193 : vector<64x2xf32> to vector<64x2xbf16>
    %c4_78 = arith.constant 4 : index
    %c0_79 = arith.constant 0 : index
    %c0_80 = arith.constant 0 : index
    %195 = vector.load %arg6[%c4_78, %c0_79, %c0_80] : memref<16x64x2xbf16, #tpu.memory_space<vmem>>, vector<1x64x2xbf16>
    %196 = vector.shape_cast %195 : vector<1x64x2xbf16> to vector<64x2xbf16>
    %197 = vector.shape_cast %194 : vector<64x2xbf16> to vector<1x64x2xbf16>
    tpu.vector_store %arg6[%c4_78, %c0_79, %c0_80], %197 {strides = array<i32>} : memref<16x64x2xbf16, #tpu.memory_space<vmem>>, vector<1x64x2xbf16>,
    %198 = vector.broadcast %144 : vector<64x1xf32> to vector<64x2xf32>
    %199 = arith.mulf %31, %198 : vector<64x2xf32>
    %200 = vector.broadcast %147 : vector<64x1xf32> to vector<64x2xf32>
    %201 = arith.addf %199, %200 : vector<64x2xf32>
    %cst_81 = arith.constant 0.000000e+00 : f32
    %202 = vector.broadcast %cst_81 : f32 to vector<64x2xf32>
    %203 = arith.maximumf %201, %202 : vector<64x2xf32>
    %204 = arith.truncf %203 : vector<64x2xf32> to vector<64x2xbf16>
    %c5_82 = arith.constant 5 : index
    %c0_83 = arith.constant 0 : index
    %c0_84 = arith.constant 0 : index
    %205 = vector.load %arg6[%c5_82, %c0_83, %c0_84] : memref<16x64x2xbf16, #tpu.memory_space<vmem>>, vector<1x64x2xbf16>
    %206 = vector.shape_cast %205 : vector<1x64x2xbf16> to vector<64x2xbf16>
    %207 = vector.shape_cast %204 : vector<64x2xbf16> to vector<1x64x2xbf16>
    tpu.vector_store %arg6[%c5_82, %c0_83, %c0_84], %207 {strides = array<i32>} : memref<16x64x2xbf16, #tpu.memory_space<vmem>>, vector<1x64x2xbf16>,
    %208 = vector.broadcast %144 : vector<64x1xf32> to vector<64x2xf32>
    %209 = arith.mulf %36, %208 : vector<64x2xf32>
    %210 = vector.broadcast %147 : vector<64x1xf32> to vector<64x2xf32>
    %211 = arith.addf %209, %210 : vector<64x2xf32>
    %cst_85 = arith.constant 0.000000e+00 : f32
    %212 = vector.broadcast %cst_85 : f32 to vector<64x2xf32>
    %213 = arith.maximumf %211, %212 : vector<64x2xf32>
    %214 = arith.truncf %213 : vector<64x2xf32> to vector<64x2xbf16>
    %c6_86 = arith.constant 6 : index
    %c0_87 = arith.constant 0 : index
    %c0_88 = arith.constant 0 : index
    %215 = vector.load %arg6[%c6_86, %c0_87, %c0_88] : memref<16x64x2xbf16, #tpu.memory_space<vmem>>, vector<1x64x2xbf16>
    %216 = vector.shape_cast %215 : vector<1x64x2xbf16> to vector<64x2xbf16>
    %217 = vector.shape_cast %214 : vector<64x2xbf16> to vector<1x64x2xbf16>
    tpu.vector_store %arg6[%c6_86, %c0_87, %c0_88], %217 {strides = array<i32>} : memref<16x64x2xbf16, #tpu.memory_space<vmem>>, vector<1x64x2xbf16>,
    %218 = vector.broadcast %144 : vector<64x1xf32> to vector<64x2xf32>
    %219 = arith.mulf %41, %218 : vector<64x2xf32>
    %220 = vector.broadcast %147 : vector<64x1xf32> to vector<64x2xf32>
    %221 = arith.addf %219, %220 : vector<64x2xf32>
    %cst_89 = arith.constant 0.000000e+00 : f32
    %222 = vector.broadcast %cst_89 : f32 to vector<64x2xf32>
    %223 = arith.maximumf %221, %222 : vector<64x2xf32>
    %224 = arith.truncf %223 : vector<64x2xf32> to vector<64x2xbf16>
    %c7_90 = arith.constant 7 : index
    %c0_91 = arith.constant 0 : index
    %c0_92 = arith.constant 0 : index
    %225 = vector.load %arg6[%c7_90, %c0_91, %c0_92] : memref<16x64x2xbf16, #tpu.memory_space<vmem>>, vector<1x64x2xbf16>
    %226 = vector.shape_cast %225 : vector<1x64x2xbf16> to vector<64x2xbf16>
    %227 = vector.shape_cast %224 : vector<64x2xbf16> to vector<1x64x2xbf16>
    tpu.vector_store %arg6[%c7_90, %c0_91, %c0_92], %227 {strides = array<i32>} : memref<16x64x2xbf16, #tpu.memory_space<vmem>>, vector<1x64x2xbf16>,
    %228 = vector.broadcast %144 : vector<64x1xf32> to vector<64x2xf32>
    %229 = arith.mulf %46, %228 : vector<64x2xf32>
    %230 = vector.broadcast %147 : vector<64x1xf32> to vector<64x2xf32>
    %231 = arith.addf %229, %230 : vector<64x2xf32>
    %cst_93 = arith.constant 0.000000e+00 : f32
    %232 = vector.broadcast %cst_93 : f32 to vector<64x2xf32>
    %233 = arith.maximumf %231, %232 : vector<64x2xf32>
    %234 = arith.truncf %233 : vector<64x2xf32> to vector<64x2xbf16>
    %c8_94 = arith.constant 8 : index
    %c0_95 = arith.constant 0 : index
    %c0_96 = arith.constant 0 : index
    %235 = vector.load %arg6[%c8_94, %c0_95, %c0_96] : memref<16x64x2xbf16, #tpu.memory_space<vmem>>, vector<1x64x2xbf16>
    %236 = vector.shape_cast %235 : vector<1x64x2xbf16> to vector<64x2xbf16>
    %237 = vector.shape_cast %234 : vector<64x2xbf16> to vector<1x64x2xbf16>
    tpu.vector_store %arg6[%c8_94, %c0_95, %c0_96], %237 {strides = array<i32>} : memref<16x64x2xbf16, #tpu.memory_space<vmem>>, vector<1x64x2xbf16>,
    %238 = vector.broadcast %144 : vector<64x1xf32> to vector<64x2xf32>
    %239 = arith.mulf %51, %238 : vector<64x2xf32>
    %240 = vector.broadcast %147 : vector<64x1xf32> to vector<64x2xf32>
    %241 = arith.addf %239, %240 : vector<64x2xf32>
    %cst_97 = arith.constant 0.000000e+00 : f32
    %242 = vector.broadcast %cst_97 : f32 to vector<64x2xf32>
    %243 = arith.maximumf %241, %242 : vector<64x2xf32>
    %244 = arith.truncf %243 : vector<64x2xf32> to vector<64x2xbf16>
    %c9_98 = arith.constant 9 : index
    %c0_99 = arith.constant 0 : index
    %c0_100 = arith.constant 0 : index
    %245 = vector.load %arg6[%c9_98, %c0_99, %c0_100] : memref<16x64x2xbf16, #tpu.memory_space<vmem>>, vector<1x64x2xbf16>
    %246 = vector.shape_cast %245 : vector<1x64x2xbf16> to vector<64x2xbf16>
    %247 = vector.shape_cast %244 : vector<64x2xbf16> to vector<1x64x2xbf16>
    tpu.vector_store %arg6[%c9_98, %c0_99, %c0_100], %247 {strides = array<i32>} : memref<16x64x2xbf16, #tpu.memory_space<vmem>>, vector<1x64x2xbf16>,
    %248 = vector.broadcast %144 : vector<64x1xf32> to vector<64x2xf32>
    %249 = arith.mulf %56, %248 : vector<64x2xf32>
    %250 = vector.broadcast %147 : vector<64x1xf32> to vector<64x2xf32>
    %251 = arith.addf %249, %250 : vector<64x2xf32>
    %cst_101 = arith.constant 0.000000e+00 : f32
    %252 = vector.broadcast %cst_101 : f32 to vector<64x2xf32>
    %253 = arith.maximumf %251, %252 : vector<64x2xf32>
    %254 = arith.truncf %253 : vector<64x2xf32> to vector<64x2xbf16>
    %c10_102 = arith.constant 10 : index
    %c0_103 = arith.constant 0 : index
    %c0_104 = arith.constant 0 : index
    %255 = vector.load %arg6[%c10_102, %c0_103, %c0_104] : memref<16x64x2xbf16, #tpu.memory_space<vmem>>, vector<1x64x2xbf16>
    %256 = vector.shape_cast %255 : vector<1x64x2xbf16> to vector<64x2xbf16>
    %257 = vector.shape_cast %254 : vector<64x2xbf16> to vector<1x64x2xbf16>
    tpu.vector_store %arg6[%c10_102, %c0_103, %c0_104], %257 {strides = array<i32>} : memref<16x64x2xbf16, #tpu.memory_space<vmem>>, vector<1x64x2xbf16>,
    %258 = vector.broadcast %144 : vector<64x1xf32> to vector<64x2xf32>
    %259 = arith.mulf %61, %258 : vector<64x2xf32>
    %260 = vector.broadcast %147 : vector<64x1xf32> to vector<64x2xf32>
    %261 = arith.addf %259, %260 : vector<64x2xf32>
    %cst_105 = arith.constant 0.000000e+00 : f32
    %262 = vector.broadcast %cst_105 : f32 to vector<64x2xf32>
    %263 = arith.maximumf %261, %262 : vector<64x2xf32>
    %264 = arith.truncf %263 : vector<64x2xf32> to vector<64x2xbf16>
    %c11_106 = arith.constant 11 : index
    %c0_107 = arith.constant 0 : index
    %c0_108 = arith.constant 0 : index
    %265 = vector.load %arg6[%c11_106, %c0_107, %c0_108] : memref<16x64x2xbf16, #tpu.memory_space<vmem>>, vector<1x64x2xbf16>
    %266 = vector.shape_cast %265 : vector<1x64x2xbf16> to vector<64x2xbf16>
    %267 = vector.shape_cast %264 : vector<64x2xbf16> to vector<1x64x2xbf16>
    tpu.vector_store %arg6[%c11_106, %c0_107, %c0_108], %267 {strides = array<i32>} : memref<16x64x2xbf16, #tpu.memory_space<vmem>>, vector<1x64x2xbf16>,
    %268 = vector.broadcast %144 : vector<64x1xf32> to vector<64x2xf32>
    %269 = arith.mulf %66, %268 : vector<64x2xf32>
    %270 = vector.broadcast %147 : vector<64x1xf32> to vector<64x2xf32>
    %271 = arith.addf %269, %270 : vector<64x2xf32>
    %cst_109 = arith.constant 0.000000e+00 : f32
    %272 = vector.broadcast %cst_109 : f32 to vector<64x2xf32>
    %273 = arith.maximumf %271, %272 : vector<64x2xf32>
    %274 = arith.truncf %273 : vector<64x2xf32> to vector<64x2xbf16>
    %c12_110 = arith.constant 12 : index
    %c0_111 = arith.constant 0 : index
    %c0_112 = arith.constant 0 : index
    %275 = vector.load %arg6[%c12_110, %c0_111, %c0_112] : memref<16x64x2xbf16, #tpu.memory_space<vmem>>, vector<1x64x2xbf16>
    %276 = vector.shape_cast %275 : vector<1x64x2xbf16> to vector<64x2xbf16>
    %277 = vector.shape_cast %274 : vector<64x2xbf16> to vector<1x64x2xbf16>
    tpu.vector_store %arg6[%c12_110, %c0_111, %c0_112], %277 {strides = array<i32>} : memref<16x64x2xbf16, #tpu.memory_space<vmem>>, vector<1x64x2xbf16>,
    %278 = vector.broadcast %144 : vector<64x1xf32> to vector<64x2xf32>
    %279 = arith.mulf %71, %278 : vector<64x2xf32>
    %280 = vector.broadcast %147 : vector<64x1xf32> to vector<64x2xf32>
    %281 = arith.addf %279, %280 : vector<64x2xf32>
    %cst_113 = arith.constant 0.000000e+00 : f32
    %282 = vector.broadcast %cst_113 : f32 to vector<64x2xf32>
    %283 = arith.maximumf %281, %282 : vector<64x2xf32>
    %284 = arith.truncf %283 : vector<64x2xf32> to vector<64x2xbf16>
    %c13_114 = arith.constant 13 : index
    %c0_115 = arith.constant 0 : index
    %c0_116 = arith.constant 0 : index
    %285 = vector.load %arg6[%c13_114, %c0_115, %c0_116] : memref<16x64x2xbf16, #tpu.memory_space<vmem>>, vector<1x64x2xbf16>
    %286 = vector.shape_cast %285 : vector<1x64x2xbf16> to vector<64x2xbf16>
    %287 = vector.shape_cast %284 : vector<64x2xbf16> to vector<1x64x2xbf16>
    tpu.vector_store %arg6[%c13_114, %c0_115, %c0_116], %287 {strides = array<i32>} : memref<16x64x2xbf16, #tpu.memory_space<vmem>>, vector<1x64x2xbf16>,
    %288 = vector.broadcast %144 : vector<64x1xf32> to vector<64x2xf32>
    %289 = arith.mulf %76, %288 : vector<64x2xf32>
    %290 = vector.broadcast %147 : vector<64x1xf32> to vector<64x2xf32>
    %291 = arith.addf %289, %290 : vector<64x2xf32>
    %cst_117 = arith.constant 0.000000e+00 : f32
    %292 = vector.broadcast %cst_117 : f32 to vector<64x2xf32>
    %293 = arith.maximumf %291, %292 : vector<64x2xf32>
    %294 = arith.truncf %293 : vector<64x2xf32> to vector<64x2xbf16>
    %c14_118 = arith.constant 14 : index
    %c0_119 = arith.constant 0 : index
    %c0_120 = arith.constant 0 : index
    %295 = vector.load %arg6[%c14_118, %c0_119, %c0_120] : memref<16x64x2xbf16, #tpu.memory_space<vmem>>, vector<1x64x2xbf16>
    %296 = vector.shape_cast %295 : vector<1x64x2xbf16> to vector<64x2xbf16>
    %297 = vector.shape_cast %294 : vector<64x2xbf16> to vector<1x64x2xbf16>
    tpu.vector_store %arg6[%c14_118, %c0_119, %c0_120], %297 {strides = array<i32>} : memref<16x64x2xbf16, #tpu.memory_space<vmem>>, vector<1x64x2xbf16>,
    %298 = vector.broadcast %144 : vector<64x1xf32> to vector<64x2xf32>
    %299 = arith.mulf %81, %298 : vector<64x2xf32>
    %300 = vector.broadcast %147 : vector<64x1xf32> to vector<64x2xf32>
    %301 = arith.addf %299, %300 : vector<64x2xf32>
    %cst_121 = arith.constant 0.000000e+00 : f32
    %302 = vector.broadcast %cst_121 : f32 to vector<64x2xf32>
    %303 = arith.maximumf %301, %302 : vector<64x2xf32>
    %304 = arith.truncf %303 : vector<64x2xf32> to vector<64x2xbf16>
    %c15_122 = arith.constant 15 : index
    %c0_123 = arith.constant 0 : index
    %c0_124 = arith.constant 0 : index
    %305 = vector.load %arg6[%c15_122, %c0_123, %c0_124] : memref<16x64x2xbf16, #tpu.memory_space<vmem>>, vector<1x64x2xbf16>
    %306 = vector.shape_cast %305 : vector<1x64x2xbf16> to vector<64x2xbf16>
    %307 = vector.shape_cast %304 : vector<64x2xbf16> to vector<1x64x2xbf16>
    tpu.vector_store %arg6[%c15_122, %c0_123, %c0_124], %307 {strides = array<i32>} : memref<16x64x2xbf16, #tpu.memory_space<vmem>>, vector<1x64x2xbf16>,
    return
  }
  func.func @transform_0(%arg0: i32) -> (i32, i32) {
    %c0_i32 = arith.constant 0 : i32
    %c0_i32_0 = arith.constant 0 : i32
    %c0_i32_1 = arith.constant 0 : i32
    return %c0_i32, %c0_i32_0 : i32, i32
  }
  func.func @transform_1(%arg0: i32) -> (i32, i32, i32) {
    %c0_i32 = arith.constant 0 : i32
    %c0_i32_0 = arith.constant 0 : i32
    %c0_i32_1 = arith.constant 0 : i32
    %c0_i32_2 = arith.constant 0 : i32
    return %c0_i32, %c0_i32_0, %c0_i32_1 : i32, i32, i32
  }
  func.func @transform_2(%arg0: i32) -> (i32, i32) {
    %c0_i32 = arith.constant 0 : i32
    %c0_i32_0 = arith.constant 0 : i32
    %c0_i32_1 = arith.constant 0 : i32
    return %c0_i32, %c0_i32_0 : i32, i32
  }
  func.func @transform_3(%arg0: i32) -> (i32, i32) {
    %c0_i32 = arith.constant 0 : i32
    %c0_i32_0 = arith.constant 0 : i32
    %c0_i32_1 = arith.constant 0 : i32
    return %c0_i32, %c0_i32_0 : i32, i32
  }
  func.func @transform_4(%arg0: i32) -> (i32, i32) {
    %c0_i32 = arith.constant 0 : i32
    %c0_i32_0 = arith.constant 0 : i32
    %c0_i32_1 = arith.constant 0 : i32
    return %c0_i32, %c0_i32_0 : i32, i32
  }
  func.func @transform_5(%arg0: i32) -> (i32, i32, i32) {
    %c0_i32 = arith.constant 0 : i32
    %c0_i32_0 = arith.constant 0 : i32
    %c0_i32_1 = arith.constant 0 : i32
    %c0_i32_2 = arith.constant 0 : i32
    return %c0_i32, %c0_i32_0, %c0_i32_1 : i32, i32, i32
  }
}

module attributes {stable_mosaic.version = 11 : i64} {
  func.func @_deconv_kernel(%arg0: i32, %arg1: memref<64x32xbf16, #tpu.memory_space<vmem>>, %arg2: memref<16x32x64xf32, #tpu.memory_space<vmem>>, %arg3: memref<32x1xf32, #tpu.memory_space<vmem>>, %arg4: memref<32x1xf32, #tpu.memory_space<vmem>>, %arg5: memref<32x1xf32, #tpu.memory_space<vmem>>, %arg6: memref<4x32x32xbf16, #tpu.memory_space<vmem>>) attributes {dimension_semantics = [#tpu.dimension_semantics<arbitrary>], iteration_bounds = array<i64: 1>, scalar_prefetch = 0 : i64, scratch_operands = 0 : i64, tpu.core_type = #tpu.core_type<tc>, window_params = [{pipeline_mode = #tpu.pipeline_mode<synchronous>, transform_indices = @transform_0, window_bounds = array<i64: 64, 32>}, {pipeline_mode = #tpu.pipeline_mode<synchronous>, transform_indices = @transform_1, window_bounds = array<i64: 16, 32, 64>}, {pipeline_mode = #tpu.pipeline_mode<synchronous>, transform_indices = @transform_2, window_bounds = array<i64: 32, 1>}, {pipeline_mode = #tpu.pipeline_mode<synchronous>, transform_indices = @transform_3, window_bounds = array<i64: 32, 1>}, {pipeline_mode = #tpu.pipeline_mode<synchronous>, transform_indices = @transform_4, window_bounds = array<i64: 32, 1>}, {pipeline_mode = #tpu.pipeline_mode<synchronous>, transform_indices = @transform_5, window_bounds = array<i64: 4, 32, 32>}]} {
    %c0 = arith.constant 0 : index
    %c0_0 = arith.constant 0 : index
    %0 = vector.load %arg1[%c0, %c0_0] : memref<64x32xbf16, #tpu.memory_space<vmem>>, vector<64x32xbf16>
    %1 = arith.extf %0 : vector<64x32xbf16> to vector<64x32xf32>
    %2 = tpu.iota {dimensions = array<i32: 1>} : vector<1x32xi32>
    %c3_i32 = arith.constant 3 : i32
    %3 = vector.broadcast %c3_i32 : i32 to vector<1x32xi32>
    %4 = arith.andi %2, %3 : vector<1x32xi32>
    %c2_i32 = arith.constant 2 : i32
    %5 = vector.broadcast %c2_i32 : i32 to vector<1x32xi32>
    %6 = arith.shrsi %2, %5 : vector<1x32xi32>
    %c3_i32_1 = arith.constant 3 : i32
    %7 = vector.broadcast %c3_i32_1 : i32 to vector<1x32xi32>
    %8 = arith.andi %6, %7 : vector<1x32xi32>
    %cst = arith.constant 0.000000e+00 : f32
    %9 = vector.broadcast %cst : f32 to vector<64x5xf32>
    %10 = vector.extract_strided_slice %1 {offsets = [0, 0], sizes = [64, 27], strides = [1, 1]} : vector<64x32xf32> to vector<64x27xf32>
    %11 = tpu.concatenate %9, %10 in 1 : vector<64x5xf32>, vector<64x27xf32> -> vector<64x32xf32>
    %c1_i32 = arith.constant 1 : i32
    %12 = vector.broadcast %c1_i32 : i32 to vector<1x32xi32>
    %13 = arith.cmpi sge, %8, %12 : vector<1x32xi32>
    %c1_i32_2 = arith.constant 1 : i32
    %14 = vector.broadcast %c1_i32_2 : i32 to vector<1x32xi32>
    %15 = arith.cmpi sge, %4, %14 : vector<1x32xi32>
    %16 = arith.andi %13, %15 : vector<1x32xi1>
    %17 = arith.extui %16 : vector<1x32xi1> to vector<1x32xi32>
    %18 = arith.sitofp %17 : vector<1x32xi32> to vector<1x32xf32>
    %19 = vector.broadcast %18 : vector<1x32xf32> to vector<64x32xf32>
    %20 = arith.mulf %11, %19 : vector<64x32xf32>
    %cst_3 = arith.constant 0.000000e+00 : f32
    %21 = vector.broadcast %cst_3 : f32 to vector<64x4xf32>
    %22 = vector.extract_strided_slice %1 {offsets = [0, 0], sizes = [64, 28], strides = [1, 1]} : vector<64x32xf32> to vector<64x28xf32>
    %23 = tpu.concatenate %21, %22 in 1 : vector<64x4xf32>, vector<64x28xf32> -> vector<64x32xf32>
    %c1_i32_4 = arith.constant 1 : i32
    %24 = vector.broadcast %c1_i32_4 : i32 to vector<1x32xi32>
    %25 = arith.cmpi sge, %8, %24 : vector<1x32xi32>
    %26 = arith.extui %25 : vector<1x32xi1> to vector<1x32xi32>
    %27 = arith.sitofp %26 : vector<1x32xi32> to vector<1x32xf32>
    %28 = vector.broadcast %27 : vector<1x32xf32> to vector<64x32xf32>
    %29 = arith.mulf %23, %28 : vector<64x32xf32>
    %cst_5 = arith.constant 0.000000e+00 : f32
    %30 = vector.broadcast %cst_5 : f32 to vector<64x3xf32>
    %31 = vector.extract_strided_slice %1 {offsets = [0, 0], sizes = [64, 29], strides = [1, 1]} : vector<64x32xf32> to vector<64x29xf32>
    %32 = tpu.concatenate %30, %31 in 1 : vector<64x3xf32>, vector<64x29xf32> -> vector<64x32xf32>
    %c1_i32_6 = arith.constant 1 : i32
    %33 = vector.broadcast %c1_i32_6 : i32 to vector<1x32xi32>
    %34 = arith.cmpi sge, %8, %33 : vector<1x32xi32>
    %c3_i32_7 = arith.constant 3 : i32
    %35 = vector.broadcast %c3_i32_7 : i32 to vector<1x32xi32>
    %36 = arith.cmpi slt, %4, %35 : vector<1x32xi32>
    %37 = arith.andi %34, %36 : vector<1x32xi1>
    %38 = arith.extui %37 : vector<1x32xi1> to vector<1x32xi32>
    %39 = arith.sitofp %38 : vector<1x32xi32> to vector<1x32xf32>
    %40 = vector.broadcast %39 : vector<1x32xf32> to vector<64x32xf32>
    %41 = arith.mulf %32, %40 : vector<64x32xf32>
    %cst_8 = arith.constant 0.000000e+00 : f32
    %42 = vector.broadcast %cst_8 : f32 to vector<64x1xf32>
    %43 = vector.extract_strided_slice %1 {offsets = [0, 0], sizes = [64, 31], strides = [1, 1]} : vector<64x32xf32> to vector<64x31xf32>
    %44 = tpu.concatenate %42, %43 in 1 : vector<64x1xf32>, vector<64x31xf32> -> vector<64x32xf32>
    %c1_i32_9 = arith.constant 1 : i32
    %45 = vector.broadcast %c1_i32_9 : i32 to vector<1x32xi32>
    %46 = arith.cmpi sge, %4, %45 : vector<1x32xi32>
    %47 = arith.extui %46 : vector<1x32xi1> to vector<1x32xi32>
    %48 = arith.sitofp %47 : vector<1x32xi32> to vector<1x32xf32>
    %49 = vector.broadcast %48 : vector<1x32xf32> to vector<64x32xf32>
    %50 = arith.mulf %44, %49 : vector<64x32xf32>
    %cst_10 = arith.constant 0.000000e+00 : f32
    %51 = vector.broadcast %cst_10 : f32 to vector<64x1xf32>
    %52 = vector.extract_strided_slice %1 {offsets = [0, 1], sizes = [64, 31], strides = [1, 1]} : vector<64x32xf32> to vector<64x31xf32>
    %53 = tpu.concatenate %52, %51 in 1 : vector<64x31xf32>, vector<64x1xf32> -> vector<64x32xf32>
    %c3_i32_11 = arith.constant 3 : i32
    %54 = vector.broadcast %c3_i32_11 : i32 to vector<1x32xi32>
    %55 = arith.cmpi slt, %4, %54 : vector<1x32xi32>
    %56 = arith.extui %55 : vector<1x32xi1> to vector<1x32xi32>
    %57 = arith.sitofp %56 : vector<1x32xi32> to vector<1x32xf32>
    %58 = vector.broadcast %57 : vector<1x32xf32> to vector<64x32xf32>
    %59 = arith.mulf %53, %58 : vector<64x32xf32>
    %cst_12 = arith.constant 0.000000e+00 : f32
    %60 = vector.broadcast %cst_12 : f32 to vector<64x3xf32>
    %61 = vector.extract_strided_slice %1 {offsets = [0, 3], sizes = [64, 29], strides = [1, 1]} : vector<64x32xf32> to vector<64x29xf32>
    %62 = tpu.concatenate %61, %60 in 1 : vector<64x29xf32>, vector<64x3xf32> -> vector<64x32xf32>
    %c3_i32_13 = arith.constant 3 : i32
    %63 = vector.broadcast %c3_i32_13 : i32 to vector<1x32xi32>
    %64 = arith.cmpi slt, %8, %63 : vector<1x32xi32>
    %c1_i32_14 = arith.constant 1 : i32
    %65 = vector.broadcast %c1_i32_14 : i32 to vector<1x32xi32>
    %66 = arith.cmpi sge, %4, %65 : vector<1x32xi32>
    %67 = arith.andi %64, %66 : vector<1x32xi1>
    %68 = arith.extui %67 : vector<1x32xi1> to vector<1x32xi32>
    %69 = arith.sitofp %68 : vector<1x32xi32> to vector<1x32xf32>
    %70 = vector.broadcast %69 : vector<1x32xf32> to vector<64x32xf32>
    %71 = arith.mulf %62, %70 : vector<64x32xf32>
    %cst_15 = arith.constant 0.000000e+00 : f32
    %72 = vector.broadcast %cst_15 : f32 to vector<64x4xf32>
    %73 = vector.extract_strided_slice %1 {offsets = [0, 4], sizes = [64, 28], strides = [1, 1]} : vector<64x32xf32> to vector<64x28xf32>
    %74 = tpu.concatenate %73, %72 in 1 : vector<64x28xf32>, vector<64x4xf32> -> vector<64x32xf32>
    %c3_i32_16 = arith.constant 3 : i32
    %75 = vector.broadcast %c3_i32_16 : i32 to vector<1x32xi32>
    %76 = arith.cmpi slt, %8, %75 : vector<1x32xi32>
    %77 = arith.extui %76 : vector<1x32xi1> to vector<1x32xi32>
    %78 = arith.sitofp %77 : vector<1x32xi32> to vector<1x32xf32>
    %79 = vector.broadcast %78 : vector<1x32xf32> to vector<64x32xf32>
    %80 = arith.mulf %74, %79 : vector<64x32xf32>
    %cst_17 = arith.constant 0.000000e+00 : f32
    %81 = vector.broadcast %cst_17 : f32 to vector<64x5xf32>
    %82 = vector.extract_strided_slice %1 {offsets = [0, 5], sizes = [64, 27], strides = [1, 1]} : vector<64x32xf32> to vector<64x27xf32>
    %83 = tpu.concatenate %82, %81 in 1 : vector<64x27xf32>, vector<64x5xf32> -> vector<64x32xf32>
    %c3_i32_18 = arith.constant 3 : i32
    %84 = vector.broadcast %c3_i32_18 : i32 to vector<1x32xi32>
    %85 = arith.cmpi slt, %8, %84 : vector<1x32xi32>
    %c3_i32_19 = arith.constant 3 : i32
    %86 = vector.broadcast %c3_i32_19 : i32 to vector<1x32xi32>
    %87 = arith.cmpi slt, %4, %86 : vector<1x32xi32>
    %88 = arith.andi %85, %87 : vector<1x32xi1>
    %89 = arith.extui %88 : vector<1x32xi1> to vector<1x32xi32>
    %90 = arith.sitofp %89 : vector<1x32xi32> to vector<1x32xf32>
    %91 = vector.broadcast %90 : vector<1x32xf32> to vector<64x32xf32>
    %92 = arith.mulf %83, %91 : vector<64x32xf32>
    %c0_20 = arith.constant 0 : index
    %c0_21 = arith.constant 0 : index
    %93 = vector.load %arg3[%c0_20, %c0_21] : memref<32x1xf32, #tpu.memory_space<vmem>>, vector<32x1xf32>
    %cst_22 = arith.constant 0.000000e+00 : f32
    %94 = vector.broadcast %cst_22 : f32 to vector<32x32xf32>
    %c0_23 = arith.constant 0 : index
    %c0_24 = arith.constant 0 : index
    %c0_25 = arith.constant 0 : index
    %95 = vector.load %arg2[%c0_23, %c0_24, %c0_25] : memref<16x32x64xf32, #tpu.memory_space<vmem>>, vector<1x32x64xf32>
    %96 = vector.shape_cast %95 : vector<1x32x64xf32> to vector<32x64xf32>
    %cst_26 = arith.constant dense<0.000000e+00> : vector<32x32xf32>
    %97 = tpu.matmul %96, %1, %cst_26 {dimension_numbers = #tpu.dot_dimension_numbers<[1], [0], [0], [1], [0, 0, 1, 1], [], []>} : vector<32x64xf32>, vector<64x32xf32>, vector<32x32xf32> -> vector<32x32xf32>
    %98 = arith.addf %94, %97 : vector<32x32xf32>
    %c1 = arith.constant 1 : index
    %c0_27 = arith.constant 0 : index
    %c0_28 = arith.constant 0 : index
    %99 = vector.load %arg2[%c1, %c0_27, %c0_28] : memref<16x32x64xf32, #tpu.memory_space<vmem>>, vector<1x32x64xf32>
    %100 = vector.shape_cast %99 : vector<1x32x64xf32> to vector<32x64xf32>
    %cst_29 = arith.constant dense<0.000000e+00> : vector<32x32xf32>
    %101 = tpu.matmul %100, %50, %cst_29 {dimension_numbers = #tpu.dot_dimension_numbers<[1], [0], [0], [1], [0, 0, 1, 1], [], []>} : vector<32x64xf32>, vector<64x32xf32>, vector<32x32xf32> -> vector<32x32xf32>
    %102 = arith.addf %98, %101 : vector<32x32xf32>
    %c2 = arith.constant 2 : index
    %c0_30 = arith.constant 0 : index
    %c0_31 = arith.constant 0 : index
    %103 = vector.load %arg2[%c2, %c0_30, %c0_31] : memref<16x32x64xf32, #tpu.memory_space<vmem>>, vector<1x32x64xf32>
    %104 = vector.shape_cast %103 : vector<1x32x64xf32> to vector<32x64xf32>
    %cst_32 = arith.constant dense<0.000000e+00> : vector<32x32xf32>
    %105 = tpu.matmul %104, %29, %cst_32 {dimension_numbers = #tpu.dot_dimension_numbers<[1], [0], [0], [1], [0, 0, 1, 1], [], []>} : vector<32x64xf32>, vector<64x32xf32>, vector<32x32xf32> -> vector<32x32xf32>
    %106 = arith.addf %102, %105 : vector<32x32xf32>
    %c3 = arith.constant 3 : index
    %c0_33 = arith.constant 0 : index
    %c0_34 = arith.constant 0 : index
    %107 = vector.load %arg2[%c3, %c0_33, %c0_34] : memref<16x32x64xf32, #tpu.memory_space<vmem>>, vector<1x32x64xf32>
    %108 = vector.shape_cast %107 : vector<1x32x64xf32> to vector<32x64xf32>
    %cst_35 = arith.constant dense<0.000000e+00> : vector<32x32xf32>
    %109 = tpu.matmul %108, %20, %cst_35 {dimension_numbers = #tpu.dot_dimension_numbers<[1], [0], [0], [1], [0, 0, 1, 1], [], []>} : vector<32x64xf32>, vector<64x32xf32>, vector<32x32xf32> -> vector<32x32xf32>
    %110 = arith.addf %106, %109 : vector<32x32xf32>
    %111 = vector.broadcast %93 : vector<32x1xf32> to vector<32x32xf32>
    %112 = arith.addf %110, %111 : vector<32x32xf32>
    %cst_36 = arith.constant 0.000000e+00 : f32
    %113 = vector.broadcast %cst_36 : f32 to vector<32x32xf32>
    %c4 = arith.constant 4 : index
    %c0_37 = arith.constant 0 : index
    %c0_38 = arith.constant 0 : index
    %114 = vector.load %arg2[%c4, %c0_37, %c0_38] : memref<16x32x64xf32, #tpu.memory_space<vmem>>, vector<1x32x64xf32>
    %115 = vector.shape_cast %114 : vector<1x32x64xf32> to vector<32x64xf32>
    %cst_39 = arith.constant dense<0.000000e+00> : vector<32x32xf32>
    %116 = tpu.matmul %115, %59, %cst_39 {dimension_numbers = #tpu.dot_dimension_numbers<[1], [0], [0], [1], [0, 0, 1, 1], [], []>} : vector<32x64xf32>, vector<64x32xf32>, vector<32x32xf32> -> vector<32x32xf32>
    %117 = arith.addf %113, %116 : vector<32x32xf32>
    %c5 = arith.constant 5 : index
    %c0_40 = arith.constant 0 : index
    %c0_41 = arith.constant 0 : index
    %118 = vector.load %arg2[%c5, %c0_40, %c0_41] : memref<16x32x64xf32, #tpu.memory_space<vmem>>, vector<1x32x64xf32>
    %119 = vector.shape_cast %118 : vector<1x32x64xf32> to vector<32x64xf32>
    %cst_42 = arith.constant dense<0.000000e+00> : vector<32x32xf32>
    %120 = tpu.matmul %119, %1, %cst_42 {dimension_numbers = #tpu.dot_dimension_numbers<[1], [0], [0], [1], [0, 0, 1, 1], [], []>} : vector<32x64xf32>, vector<64x32xf32>, vector<32x32xf32> -> vector<32x32xf32>
    %121 = arith.addf %117, %120 : vector<32x32xf32>
    %c6 = arith.constant 6 : index
    %c0_43 = arith.constant 0 : index
    %c0_44 = arith.constant 0 : index
    %122 = vector.load %arg2[%c6, %c0_43, %c0_44] : memref<16x32x64xf32, #tpu.memory_space<vmem>>, vector<1x32x64xf32>
    %123 = vector.shape_cast %122 : vector<1x32x64xf32> to vector<32x64xf32>
    %cst_45 = arith.constant dense<0.000000e+00> : vector<32x32xf32>
    %124 = tpu.matmul %123, %41, %cst_45 {dimension_numbers = #tpu.dot_dimension_numbers<[1], [0], [0], [1], [0, 0, 1, 1], [], []>} : vector<32x64xf32>, vector<64x32xf32>, vector<32x32xf32> -> vector<32x32xf32>
    %125 = arith.addf %121, %124 : vector<32x32xf32>
    %c7 = arith.constant 7 : index
    %c0_46 = arith.constant 0 : index
    %c0_47 = arith.constant 0 : index
    %126 = vector.load %arg2[%c7, %c0_46, %c0_47] : memref<16x32x64xf32, #tpu.memory_space<vmem>>, vector<1x32x64xf32>
    %127 = vector.shape_cast %126 : vector<1x32x64xf32> to vector<32x64xf32>
    %cst_48 = arith.constant dense<0.000000e+00> : vector<32x32xf32>
    %128 = tpu.matmul %127, %29, %cst_48 {dimension_numbers = #tpu.dot_dimension_numbers<[1], [0], [0], [1], [0, 0, 1, 1], [], []>} : vector<32x64xf32>, vector<64x32xf32>, vector<32x32xf32> -> vector<32x32xf32>
    %129 = arith.addf %125, %128 : vector<32x32xf32>
    %130 = vector.broadcast %93 : vector<32x1xf32> to vector<32x32xf32>
    %131 = arith.addf %129, %130 : vector<32x32xf32>
    %cst_49 = arith.constant 0.000000e+00 : f32
    %132 = vector.broadcast %cst_49 : f32 to vector<32x32xf32>
    %c8 = arith.constant 8 : index
    %c0_50 = arith.constant 0 : index
    %c0_51 = arith.constant 0 : index
    %133 = vector.load %arg2[%c8, %c0_50, %c0_51] : memref<16x32x64xf32, #tpu.memory_space<vmem>>, vector<1x32x64xf32>
    %134 = vector.shape_cast %133 : vector<1x32x64xf32> to vector<32x64xf32>
    %cst_52 = arith.constant dense<0.000000e+00> : vector<32x32xf32>
    %135 = tpu.matmul %134, %80, %cst_52 {dimension_numbers = #tpu.dot_dimension_numbers<[1], [0], [0], [1], [0, 0, 1, 1], [], []>} : vector<32x64xf32>, vector<64x32xf32>, vector<32x32xf32> -> vector<32x32xf32>
    %136 = arith.addf %132, %135 : vector<32x32xf32>
    %c9 = arith.constant 9 : index
    %c0_53 = arith.constant 0 : index
    %c0_54 = arith.constant 0 : index
    %137 = vector.load %arg2[%c9, %c0_53, %c0_54] : memref<16x32x64xf32, #tpu.memory_space<vmem>>, vector<1x32x64xf32>
    %138 = vector.shape_cast %137 : vector<1x32x64xf32> to vector<32x64xf32>
    %cst_55 = arith.constant dense<0.000000e+00> : vector<32x32xf32>
    %139 = tpu.matmul %138, %71, %cst_55 {dimension_numbers = #tpu.dot_dimension_numbers<[1], [0], [0], [1], [0, 0, 1, 1], [], []>} : vector<32x64xf32>, vector<64x32xf32>, vector<32x32xf32> -> vector<32x32xf32>
    %140 = arith.addf %136, %139 : vector<32x32xf32>
    %c10 = arith.constant 10 : index
    %c0_56 = arith.constant 0 : index
    %c0_57 = arith.constant 0 : index
    %141 = vector.load %arg2[%c10, %c0_56, %c0_57] : memref<16x32x64xf32, #tpu.memory_space<vmem>>, vector<1x32x64xf32>
    %142 = vector.shape_cast %141 : vector<1x32x64xf32> to vector<32x64xf32>
    %cst_58 = arith.constant dense<0.000000e+00> : vector<32x32xf32>
    %143 = tpu.matmul %142, %1, %cst_58 {dimension_numbers = #tpu.dot_dimension_numbers<[1], [0], [0], [1], [0, 0, 1, 1], [], []>} : vector<32x64xf32>, vector<64x32xf32>, vector<32x32xf32> -> vector<32x32xf32>
    %144 = arith.addf %140, %143 : vector<32x32xf32>
    %c11 = arith.constant 11 : index
    %c0_59 = arith.constant 0 : index
    %c0_60 = arith.constant 0 : index
    %145 = vector.load %arg2[%c11, %c0_59, %c0_60] : memref<16x32x64xf32, #tpu.memory_space<vmem>>, vector<1x32x64xf32>
    %146 = vector.shape_cast %145 : vector<1x32x64xf32> to vector<32x64xf32>
    %cst_61 = arith.constant dense<0.000000e+00> : vector<32x32xf32>
    %147 = tpu.matmul %146, %50, %cst_61 {dimension_numbers = #tpu.dot_dimension_numbers<[1], [0], [0], [1], [0, 0, 1, 1], [], []>} : vector<32x64xf32>, vector<64x32xf32>, vector<32x32xf32> -> vector<32x32xf32>
    %148 = arith.addf %144, %147 : vector<32x32xf32>
    %149 = vector.broadcast %93 : vector<32x1xf32> to vector<32x32xf32>
    %150 = arith.addf %148, %149 : vector<32x32xf32>
    %cst_62 = arith.constant 0.000000e+00 : f32
    %151 = vector.broadcast %cst_62 : f32 to vector<32x32xf32>
    %c12 = arith.constant 12 : index
    %c0_63 = arith.constant 0 : index
    %c0_64 = arith.constant 0 : index
    %152 = vector.load %arg2[%c12, %c0_63, %c0_64] : memref<16x32x64xf32, #tpu.memory_space<vmem>>, vector<1x32x64xf32>
    %153 = vector.shape_cast %152 : vector<1x32x64xf32> to vector<32x64xf32>
    %cst_65 = arith.constant dense<0.000000e+00> : vector<32x32xf32>
    %154 = tpu.matmul %153, %92, %cst_65 {dimension_numbers = #tpu.dot_dimension_numbers<[1], [0], [0], [1], [0, 0, 1, 1], [], []>} : vector<32x64xf32>, vector<64x32xf32>, vector<32x32xf32> -> vector<32x32xf32>
    %155 = arith.addf %151, %154 : vector<32x32xf32>
    %c13 = arith.constant 13 : index
    %c0_66 = arith.constant 0 : index
    %c0_67 = arith.constant 0 : index
    %156 = vector.load %arg2[%c13, %c0_66, %c0_67] : memref<16x32x64xf32, #tpu.memory_space<vmem>>, vector<1x32x64xf32>
    %157 = vector.shape_cast %156 : vector<1x32x64xf32> to vector<32x64xf32>
    %cst_68 = arith.constant dense<0.000000e+00> : vector<32x32xf32>
    %158 = tpu.matmul %157, %80, %cst_68 {dimension_numbers = #tpu.dot_dimension_numbers<[1], [0], [0], [1], [0, 0, 1, 1], [], []>} : vector<32x64xf32>, vector<64x32xf32>, vector<32x32xf32> -> vector<32x32xf32>
    %159 = arith.addf %155, %158 : vector<32x32xf32>
    %c14 = arith.constant 14 : index
    %c0_69 = arith.constant 0 : index
    %c0_70 = arith.constant 0 : index
    %160 = vector.load %arg2[%c14, %c0_69, %c0_70] : memref<16x32x64xf32, #tpu.memory_space<vmem>>, vector<1x32x64xf32>
    %161 = vector.shape_cast %160 : vector<1x32x64xf32> to vector<32x64xf32>
    %cst_71 = arith.constant dense<0.000000e+00> : vector<32x32xf32>
    %162 = tpu.matmul %161, %59, %cst_71 {dimension_numbers = #tpu.dot_dimension_numbers<[1], [0], [0], [1], [0, 0, 1, 1], [], []>} : vector<32x64xf32>, vector<64x32xf32>, vector<32x32xf32> -> vector<32x32xf32>
    %163 = arith.addf %159, %162 : vector<32x32xf32>
    %c15 = arith.constant 15 : index
    %c0_72 = arith.constant 0 : index
    %c0_73 = arith.constant 0 : index
    %164 = vector.load %arg2[%c15, %c0_72, %c0_73] : memref<16x32x64xf32, #tpu.memory_space<vmem>>, vector<1x32x64xf32>
    %165 = vector.shape_cast %164 : vector<1x32x64xf32> to vector<32x64xf32>
    %cst_74 = arith.constant dense<0.000000e+00> : vector<32x32xf32>
    %166 = tpu.matmul %165, %1, %cst_74 {dimension_numbers = #tpu.dot_dimension_numbers<[1], [0], [0], [1], [0, 0, 1, 1], [], []>} : vector<32x64xf32>, vector<64x32xf32>, vector<32x32xf32> -> vector<32x32xf32>
    %167 = arith.addf %163, %166 : vector<32x32xf32>
    %168 = vector.broadcast %93 : vector<32x1xf32> to vector<32x32xf32>
    %169 = arith.addf %167, %168 : vector<32x32xf32>
    %170 = arith.addf %112, %131 : vector<32x32xf32>
    %171 = arith.addf %170, %150 : vector<32x32xf32>
    %172 = arith.addf %171, %169 : vector<32x32xf32>
    %173 = arith.mulf %112, %112 : vector<32x32xf32>
    %174 = arith.mulf %131, %131 : vector<32x32xf32>
    %175 = arith.addf %173, %174 : vector<32x32xf32>
    %176 = arith.mulf %150, %150 : vector<32x32xf32>
    %177 = arith.addf %175, %176 : vector<32x32xf32>
    %178 = arith.mulf %169, %169 : vector<32x32xf32>
    %179 = arith.addf %177, %178 : vector<32x32xf32>
    %cst_75 = arith.constant dense<0.000000e+00> : vector<32xf32>
    %180 = vector.multi_reduction <add>, %172, %cst_75 [1] : vector<32x32xf32> to vector<32xf32>
    %181 = vector.shape_cast %180 : vector<32xf32> to vector<32x1xf32>
    %cst_76 = arith.constant 1.280000e+02 : f32
    %182 = vector.broadcast %cst_76 : f32 to vector<32x1xf32>
    %183 = arith.divf %181, %182 : vector<32x1xf32>
    %cst_77 = arith.constant dense<0.000000e+00> : vector<32xf32>
    %184 = vector.multi_reduction <add>, %179, %cst_77 [1] : vector<32x32xf32> to vector<32xf32>
    %185 = vector.shape_cast %184 : vector<32xf32> to vector<32x1xf32>
    %cst_78 = arith.constant 1.280000e+02 : f32
    %186 = vector.broadcast %cst_78 : f32 to vector<32x1xf32>
    %187 = arith.divf %185, %186 : vector<32x1xf32>
    %188 = arith.mulf %183, %183 : vector<32x1xf32>
    %189 = arith.subf %187, %188 : vector<32x1xf32>
    %cst_79 = arith.constant 0.000000e+00 : f32
    %190 = vector.broadcast %cst_79 : f32 to vector<32x1xf32>
    %191 = arith.maximumf %189, %190 : vector<32x1xf32>
    %c0_80 = arith.constant 0 : index
    %c0_81 = arith.constant 0 : index
    %192 = vector.load %arg4[%c0_80, %c0_81] : memref<32x1xf32, #tpu.memory_space<vmem>>, vector<32x1xf32>
    %cst_82 = arith.constant 9.99999974E-6 : f32
    %193 = vector.broadcast %cst_82 : f32 to vector<32x1xf32>
    %194 = arith.addf %191, %193 : vector<32x1xf32>
    %195 = math.rsqrt %194 : vector<32x1xf32>
    %196 = arith.mulf %192, %195 : vector<32x1xf32>
    %c0_83 = arith.constant 0 : index
    %c0_84 = arith.constant 0 : index
    %197 = vector.load %arg5[%c0_83, %c0_84] : memref<32x1xf32, #tpu.memory_space<vmem>>, vector<32x1xf32>
    %198 = arith.mulf %183, %196 : vector<32x1xf32>
    %199 = arith.subf %197, %198 : vector<32x1xf32>
    %200 = vector.broadcast %196 : vector<32x1xf32> to vector<32x32xf32>
    %201 = arith.mulf %112, %200 : vector<32x32xf32>
    %202 = vector.broadcast %199 : vector<32x1xf32> to vector<32x32xf32>
    %203 = arith.addf %201, %202 : vector<32x32xf32>
    %cst_85 = arith.constant 0.000000e+00 : f32
    %204 = vector.broadcast %cst_85 : f32 to vector<32x32xf32>
    %205 = arith.maximumf %203, %204 : vector<32x32xf32>
    %206 = vector.broadcast %196 : vector<32x1xf32> to vector<32x32xf32>
    %207 = arith.mulf %131, %206 : vector<32x32xf32>
    %208 = vector.broadcast %199 : vector<32x1xf32> to vector<32x32xf32>
    %209 = arith.addf %207, %208 : vector<32x32xf32>
    %cst_86 = arith.constant 0.000000e+00 : f32
    %210 = vector.broadcast %cst_86 : f32 to vector<32x32xf32>
    %211 = arith.maximumf %209, %210 : vector<32x32xf32>
    %212 = vector.broadcast %196 : vector<32x1xf32> to vector<32x32xf32>
    %213 = arith.mulf %150, %212 : vector<32x32xf32>
    %214 = vector.broadcast %199 : vector<32x1xf32> to vector<32x32xf32>
    %215 = arith.addf %213, %214 : vector<32x32xf32>
    %cst_87 = arith.constant 0.000000e+00 : f32
    %216 = vector.broadcast %cst_87 : f32 to vector<32x32xf32>
    %217 = arith.maximumf %215, %216 : vector<32x32xf32>
    %218 = vector.broadcast %196 : vector<32x1xf32> to vector<32x32xf32>
    %219 = arith.mulf %169, %218 : vector<32x32xf32>
    %220 = vector.broadcast %199 : vector<32x1xf32> to vector<32x32xf32>
    %221 = arith.addf %219, %220 : vector<32x32xf32>
    %cst_88 = arith.constant 0.000000e+00 : f32
    %222 = vector.broadcast %cst_88 : f32 to vector<32x32xf32>
    %223 = arith.maximumf %221, %222 : vector<32x32xf32>
    %224 = arith.truncf %205 : vector<32x32xf32> to vector<32x32xbf16>
    %c0_89 = arith.constant 0 : index
    %c0_90 = arith.constant 0 : index
    %c0_91 = arith.constant 0 : index
    %225 = vector.load %arg6[%c0_89, %c0_90, %c0_91] : memref<4x32x32xbf16, #tpu.memory_space<vmem>>, vector<1x32x32xbf16>
    %226 = vector.shape_cast %225 : vector<1x32x32xbf16> to vector<32x32xbf16>
    %227 = vector.shape_cast %224 : vector<32x32xbf16> to vector<1x32x32xbf16>
    tpu.vector_store %arg6[%c0_89, %c0_90, %c0_91], %227 {strides = array<i32>} : memref<4x32x32xbf16, #tpu.memory_space<vmem>>, vector<1x32x32xbf16>,
    %228 = arith.truncf %211 : vector<32x32xf32> to vector<32x32xbf16>
    %c1_92 = arith.constant 1 : index
    %c0_93 = arith.constant 0 : index
    %c0_94 = arith.constant 0 : index
    %229 = vector.load %arg6[%c1_92, %c0_93, %c0_94] : memref<4x32x32xbf16, #tpu.memory_space<vmem>>, vector<1x32x32xbf16>
    %230 = vector.shape_cast %229 : vector<1x32x32xbf16> to vector<32x32xbf16>
    %231 = vector.shape_cast %228 : vector<32x32xbf16> to vector<1x32x32xbf16>
    tpu.vector_store %arg6[%c1_92, %c0_93, %c0_94], %231 {strides = array<i32>} : memref<4x32x32xbf16, #tpu.memory_space<vmem>>, vector<1x32x32xbf16>,
    %232 = arith.truncf %217 : vector<32x32xf32> to vector<32x32xbf16>
    %c2_95 = arith.constant 2 : index
    %c0_96 = arith.constant 0 : index
    %c0_97 = arith.constant 0 : index
    %233 = vector.load %arg6[%c2_95, %c0_96, %c0_97] : memref<4x32x32xbf16, #tpu.memory_space<vmem>>, vector<1x32x32xbf16>
    %234 = vector.shape_cast %233 : vector<1x32x32xbf16> to vector<32x32xbf16>
    %235 = vector.shape_cast %232 : vector<32x32xbf16> to vector<1x32x32xbf16>
    tpu.vector_store %arg6[%c2_95, %c0_96, %c0_97], %235 {strides = array<i32>} : memref<4x32x32xbf16, #tpu.memory_space<vmem>>, vector<1x32x32xbf16>,
    %236 = arith.truncf %223 : vector<32x32xf32> to vector<32x32xbf16>
    %c3_98 = arith.constant 3 : index
    %c0_99 = arith.constant 0 : index
    %c0_100 = arith.constant 0 : index
    %237 = vector.load %arg6[%c3_98, %c0_99, %c0_100] : memref<4x32x32xbf16, #tpu.memory_space<vmem>>, vector<1x32x32xbf16>
    %238 = vector.shape_cast %237 : vector<1x32x32xbf16> to vector<32x32xbf16>
    %239 = vector.shape_cast %236 : vector<32x32xbf16> to vector<1x32x32xbf16>
    tpu.vector_store %arg6[%c3_98, %c0_99, %c0_100], %239 {strides = array<i32>} : memref<4x32x32xbf16, #tpu.memory_space<vmem>>, vector<1x32x32xbf16>,
    return
  }
  func.func @transform_0(%arg0: i32) -> (i32, i32) {
    %c0_i32 = arith.constant 0 : i32
    %c0_i32_0 = arith.constant 0 : i32
    %c0_i32_1 = arith.constant 0 : i32
    return %c0_i32, %c0_i32_0 : i32, i32
  }
  func.func @transform_1(%arg0: i32) -> (i32, i32, i32) {
    %c0_i32 = arith.constant 0 : i32
    %c0_i32_0 = arith.constant 0 : i32
    %c0_i32_1 = arith.constant 0 : i32
    %c0_i32_2 = arith.constant 0 : i32
    return %c0_i32, %c0_i32_0, %c0_i32_1 : i32, i32, i32
  }
  func.func @transform_2(%arg0: i32) -> (i32, i32) {
    %c0_i32 = arith.constant 0 : i32
    %c0_i32_0 = arith.constant 0 : i32
    %c0_i32_1 = arith.constant 0 : i32
    return %c0_i32, %c0_i32_0 : i32, i32
  }
  func.func @transform_3(%arg0: i32) -> (i32, i32) {
    %c0_i32 = arith.constant 0 : i32
    %c0_i32_0 = arith.constant 0 : i32
    %c0_i32_1 = arith.constant 0 : i32
    return %c0_i32, %c0_i32_0 : i32, i32
  }
  func.func @transform_4(%arg0: i32) -> (i32, i32) {
    %c0_i32 = arith.constant 0 : i32
    %c0_i32_0 = arith.constant 0 : i32
    %c0_i32_1 = arith.constant 0 : i32
    return %c0_i32, %c0_i32_0 : i32, i32
  }
  func.func @transform_5(%arg0: i32) -> (i32, i32, i32) {
    %c0_i32 = arith.constant 0 : i32
    %c0_i32_0 = arith.constant 0 : i32
    %c0_i32_1 = arith.constant 0 : i32
    %c0_i32_2 = arith.constant 0 : i32
    return %c0_i32, %c0_i32_0, %c0_i32_1 : i32, i32, i32
  }
}

module attributes {stable_mosaic.version = 11 : i64} {
  func.func @_deconv_kernel(%arg0: i32, %arg1: memref<32x128xbf16, #tpu.memory_space<vmem>>, %arg2: memref<16x16x32xf32, #tpu.memory_space<vmem>>, %arg3: memref<16x1xf32, #tpu.memory_space<vmem>>, %arg4: memref<16x1xf32, #tpu.memory_space<vmem>>, %arg5: memref<16x1xf32, #tpu.memory_space<vmem>>, %arg6: memref<4x16x128xbf16, #tpu.memory_space<vmem>>) attributes {dimension_semantics = [#tpu.dimension_semantics<arbitrary>], iteration_bounds = array<i64: 1>, scalar_prefetch = 0 : i64, scratch_operands = 0 : i64, tpu.core_type = #tpu.core_type<tc>, window_params = [{pipeline_mode = #tpu.pipeline_mode<synchronous>, transform_indices = @transform_0, window_bounds = array<i64: 32, 128>}, {pipeline_mode = #tpu.pipeline_mode<synchronous>, transform_indices = @transform_1, window_bounds = array<i64: 16, 16, 32>}, {pipeline_mode = #tpu.pipeline_mode<synchronous>, transform_indices = @transform_2, window_bounds = array<i64: 16, 1>}, {pipeline_mode = #tpu.pipeline_mode<synchronous>, transform_indices = @transform_3, window_bounds = array<i64: 16, 1>}, {pipeline_mode = #tpu.pipeline_mode<synchronous>, transform_indices = @transform_4, window_bounds = array<i64: 16, 1>}, {pipeline_mode = #tpu.pipeline_mode<synchronous>, transform_indices = @transform_5, window_bounds = array<i64: 4, 16, 128>}]} {
    %c0 = arith.constant 0 : index
    %c0_0 = arith.constant 0 : index
    %0 = vector.load %arg1[%c0, %c0_0] : memref<32x128xbf16, #tpu.memory_space<vmem>>, vector<32x128xbf16>
    %1 = arith.extf %0 : vector<32x128xbf16> to vector<32x128xf32>
    %2 = tpu.iota {dimensions = array<i32: 1>} : vector<1x128xi32>
    %c7_i32 = arith.constant 7 : i32
    %3 = vector.broadcast %c7_i32 : i32 to vector<1x128xi32>
    %4 = arith.andi %2, %3 : vector<1x128xi32>
    %c3_i32 = arith.constant 3 : i32
    %5 = vector.broadcast %c3_i32 : i32 to vector<1x128xi32>
    %6 = arith.shrsi %2, %5 : vector<1x128xi32>
    %c7_i32_1 = arith.constant 7 : i32
    %7 = vector.broadcast %c7_i32_1 : i32 to vector<1x128xi32>
    %8 = arith.andi %6, %7 : vector<1x128xi32>
    %cst = arith.constant 0.000000e+00 : f32
    %9 = vector.broadcast %cst : f32 to vector<32x9xf32>
    %10 = vector.extract_strided_slice %1 {offsets = [0, 0], sizes = [32, 119], strides = [1, 1]} : vector<32x128xf32> to vector<32x119xf32>
    %11 = tpu.concatenate %9, %10 in 1 : vector<32x9xf32>, vector<32x119xf32> -> vector<32x128xf32>
    %c1_i32 = arith.constant 1 : i32
    %12 = vector.broadcast %c1_i32 : i32 to vector<1x128xi32>
    %13 = arith.cmpi sge, %8, %12 : vector<1x128xi32>
    %c1_i32_2 = arith.constant 1 : i32
    %14 = vector.broadcast %c1_i32_2 : i32 to vector<1x128xi32>
    %15 = arith.cmpi sge, %4, %14 : vector<1x128xi32>
    %16 = arith.andi %13, %15 : vector<1x128xi1>
    %17 = arith.extui %16 : vector<1x128xi1> to vector<1x128xi32>
    %18 = arith.sitofp %17 : vector<1x128xi32> to vector<1x128xf32>
    %19 = vector.broadcast %18 : vector<1x128xf32> to vector<32x128xf32>
    %20 = arith.mulf %11, %19 : vector<32x128xf32>
    %cst_3 = arith.constant 0.000000e+00 : f32
    %21 = vector.broadcast %cst_3 : f32 to vector<32x8xf32>
    %22 = vector.extract_strided_slice %1 {offsets = [0, 0], sizes = [32, 120], strides = [1, 1]} : vector<32x128xf32> to vector<32x120xf32>
    %23 = tpu.concatenate %21, %22 in 1 : vector<32x8xf32>, vector<32x120xf32> -> vector<32x128xf32>
    %c1_i32_4 = arith.constant 1 : i32
    %24 = vector.broadcast %c1_i32_4 : i32 to vector<1x128xi32>
    %25 = arith.cmpi sge, %8, %24 : vector<1x128xi32>
    %26 = arith.extui %25 : vector<1x128xi1> to vector<1x128xi32>
    %27 = arith.sitofp %26 : vector<1x128xi32> to vector<1x128xf32>
    %28 = vector.broadcast %27 : vector<1x128xf32> to vector<32x128xf32>
    %29 = arith.mulf %23, %28 : vector<32x128xf32>
    %cst_5 = arith.constant 0.000000e+00 : f32
    %30 = vector.broadcast %cst_5 : f32 to vector<32x7xf32>
    %31 = vector.extract_strided_slice %1 {offsets = [0, 0], sizes = [32, 121], strides = [1, 1]} : vector<32x128xf32> to vector<32x121xf32>
    %32 = tpu.concatenate %30, %31 in 1 : vector<32x7xf32>, vector<32x121xf32> -> vector<32x128xf32>
    %c1_i32_6 = arith.constant 1 : i32
    %33 = vector.broadcast %c1_i32_6 : i32 to vector<1x128xi32>
    %34 = arith.cmpi sge, %8, %33 : vector<1x128xi32>
    %c7_i32_7 = arith.constant 7 : i32
    %35 = vector.broadcast %c7_i32_7 : i32 to vector<1x128xi32>
    %36 = arith.cmpi slt, %4, %35 : vector<1x128xi32>
    %37 = arith.andi %34, %36 : vector<1x128xi1>
    %38 = arith.extui %37 : vector<1x128xi1> to vector<1x128xi32>
    %39 = arith.sitofp %38 : vector<1x128xi32> to vector<1x128xf32>
    %40 = vector.broadcast %39 : vector<1x128xf32> to vector<32x128xf32>
    %41 = arith.mulf %32, %40 : vector<32x128xf32>
    %cst_8 = arith.constant 0.000000e+00 : f32
    %42 = vector.broadcast %cst_8 : f32 to vector<32x1xf32>
    %43 = vector.extract_strided_slice %1 {offsets = [0, 0], sizes = [32, 127], strides = [1, 1]} : vector<32x128xf32> to vector<32x127xf32>
    %44 = tpu.concatenate %42, %43 in 1 : vector<32x1xf32>, vector<32x127xf32> -> vector<32x128xf32>
    %c1_i32_9 = arith.constant 1 : i32
    %45 = vector.broadcast %c1_i32_9 : i32 to vector<1x128xi32>
    %46 = arith.cmpi sge, %4, %45 : vector<1x128xi32>
    %47 = arith.extui %46 : vector<1x128xi1> to vector<1x128xi32>
    %48 = arith.sitofp %47 : vector<1x128xi32> to vector<1x128xf32>
    %49 = vector.broadcast %48 : vector<1x128xf32> to vector<32x128xf32>
    %50 = arith.mulf %44, %49 : vector<32x128xf32>
    %cst_10 = arith.constant 0.000000e+00 : f32
    %51 = vector.broadcast %cst_10 : f32 to vector<32x1xf32>
    %52 = vector.extract_strided_slice %1 {offsets = [0, 1], sizes = [32, 127], strides = [1, 1]} : vector<32x128xf32> to vector<32x127xf32>
    %53 = tpu.concatenate %52, %51 in 1 : vector<32x127xf32>, vector<32x1xf32> -> vector<32x128xf32>
    %c7_i32_11 = arith.constant 7 : i32
    %54 = vector.broadcast %c7_i32_11 : i32 to vector<1x128xi32>
    %55 = arith.cmpi slt, %4, %54 : vector<1x128xi32>
    %56 = arith.extui %55 : vector<1x128xi1> to vector<1x128xi32>
    %57 = arith.sitofp %56 : vector<1x128xi32> to vector<1x128xf32>
    %58 = vector.broadcast %57 : vector<1x128xf32> to vector<32x128xf32>
    %59 = arith.mulf %53, %58 : vector<32x128xf32>
    %cst_12 = arith.constant 0.000000e+00 : f32
    %60 = vector.broadcast %cst_12 : f32 to vector<32x7xf32>
    %61 = vector.extract_strided_slice %1 {offsets = [0, 7], sizes = [32, 121], strides = [1, 1]} : vector<32x128xf32> to vector<32x121xf32>
    %62 = tpu.concatenate %61, %60 in 1 : vector<32x121xf32>, vector<32x7xf32> -> vector<32x128xf32>
    %c7_i32_13 = arith.constant 7 : i32
    %63 = vector.broadcast %c7_i32_13 : i32 to vector<1x128xi32>
    %64 = arith.cmpi slt, %8, %63 : vector<1x128xi32>
    %c1_i32_14 = arith.constant 1 : i32
    %65 = vector.broadcast %c1_i32_14 : i32 to vector<1x128xi32>
    %66 = arith.cmpi sge, %4, %65 : vector<1x128xi32>
    %67 = arith.andi %64, %66 : vector<1x128xi1>
    %68 = arith.extui %67 : vector<1x128xi1> to vector<1x128xi32>
    %69 = arith.sitofp %68 : vector<1x128xi32> to vector<1x128xf32>
    %70 = vector.broadcast %69 : vector<1x128xf32> to vector<32x128xf32>
    %71 = arith.mulf %62, %70 : vector<32x128xf32>
    %cst_15 = arith.constant 0.000000e+00 : f32
    %72 = vector.broadcast %cst_15 : f32 to vector<32x8xf32>
    %73 = vector.extract_strided_slice %1 {offsets = [0, 8], sizes = [32, 120], strides = [1, 1]} : vector<32x128xf32> to vector<32x120xf32>
    %74 = tpu.concatenate %73, %72 in 1 : vector<32x120xf32>, vector<32x8xf32> -> vector<32x128xf32>
    %c7_i32_16 = arith.constant 7 : i32
    %75 = vector.broadcast %c7_i32_16 : i32 to vector<1x128xi32>
    %76 = arith.cmpi slt, %8, %75 : vector<1x128xi32>
    %77 = arith.extui %76 : vector<1x128xi1> to vector<1x128xi32>
    %78 = arith.sitofp %77 : vector<1x128xi32> to vector<1x128xf32>
    %79 = vector.broadcast %78 : vector<1x128xf32> to vector<32x128xf32>
    %80 = arith.mulf %74, %79 : vector<32x128xf32>
    %cst_17 = arith.constant 0.000000e+00 : f32
    %81 = vector.broadcast %cst_17 : f32 to vector<32x9xf32>
    %82 = vector.extract_strided_slice %1 {offsets = [0, 9], sizes = [32, 119], strides = [1, 1]} : vector<32x128xf32> to vector<32x119xf32>
    %83 = tpu.concatenate %82, %81 in 1 : vector<32x119xf32>, vector<32x9xf32> -> vector<32x128xf32>
    %c7_i32_18 = arith.constant 7 : i32
    %84 = vector.broadcast %c7_i32_18 : i32 to vector<1x128xi32>
    %85 = arith.cmpi slt, %8, %84 : vector<1x128xi32>
    %c7_i32_19 = arith.constant 7 : i32
    %86 = vector.broadcast %c7_i32_19 : i32 to vector<1x128xi32>
    %87 = arith.cmpi slt, %4, %86 : vector<1x128xi32>
    %88 = arith.andi %85, %87 : vector<1x128xi1>
    %89 = arith.extui %88 : vector<1x128xi1> to vector<1x128xi32>
    %90 = arith.sitofp %89 : vector<1x128xi32> to vector<1x128xf32>
    %91 = vector.broadcast %90 : vector<1x128xf32> to vector<32x128xf32>
    %92 = arith.mulf %83, %91 : vector<32x128xf32>
    %c0_20 = arith.constant 0 : index
    %c0_21 = arith.constant 0 : index
    %93 = vector.load %arg3[%c0_20, %c0_21] : memref<16x1xf32, #tpu.memory_space<vmem>>, vector<16x1xf32>
    %cst_22 = arith.constant 0.000000e+00 : f32
    %94 = vector.broadcast %cst_22 : f32 to vector<16x128xf32>
    %c0_23 = arith.constant 0 : index
    %c0_24 = arith.constant 0 : index
    %c0_25 = arith.constant 0 : index
    %95 = vector.load %arg2[%c0_23, %c0_24, %c0_25] : memref<16x16x32xf32, #tpu.memory_space<vmem>>, vector<1x16x32xf32>
    %96 = vector.shape_cast %95 : vector<1x16x32xf32> to vector<16x32xf32>
    %cst_26 = arith.constant dense<0.000000e+00> : vector<16x128xf32>
    %97 = tpu.matmul %96, %1, %cst_26 {dimension_numbers = #tpu.dot_dimension_numbers<[1], [0], [0], [1], [0, 0, 1, 1], [], []>} : vector<16x32xf32>, vector<32x128xf32>, vector<16x128xf32> -> vector<16x128xf32>
    %98 = arith.addf %94, %97 : vector<16x128xf32>
    %c1 = arith.constant 1 : index
    %c0_27 = arith.constant 0 : index
    %c0_28 = arith.constant 0 : index
    %99 = vector.load %arg2[%c1, %c0_27, %c0_28] : memref<16x16x32xf32, #tpu.memory_space<vmem>>, vector<1x16x32xf32>
    %100 = vector.shape_cast %99 : vector<1x16x32xf32> to vector<16x32xf32>
    %cst_29 = arith.constant dense<0.000000e+00> : vector<16x128xf32>
    %101 = tpu.matmul %100, %50, %cst_29 {dimension_numbers = #tpu.dot_dimension_numbers<[1], [0], [0], [1], [0, 0, 1, 1], [], []>} : vector<16x32xf32>, vector<32x128xf32>, vector<16x128xf32> -> vector<16x128xf32>
    %102 = arith.addf %98, %101 : vector<16x128xf32>
    %c2 = arith.constant 2 : index
    %c0_30 = arith.constant 0 : index
    %c0_31 = arith.constant 0 : index
    %103 = vector.load %arg2[%c2, %c0_30, %c0_31] : memref<16x16x32xf32, #tpu.memory_space<vmem>>, vector<1x16x32xf32>
    %104 = vector.shape_cast %103 : vector<1x16x32xf32> to vector<16x32xf32>
    %cst_32 = arith.constant dense<0.000000e+00> : vector<16x128xf32>
    %105 = tpu.matmul %104, %29, %cst_32 {dimension_numbers = #tpu.dot_dimension_numbers<[1], [0], [0], [1], [0, 0, 1, 1], [], []>} : vector<16x32xf32>, vector<32x128xf32>, vector<16x128xf32> -> vector<16x128xf32>
    %106 = arith.addf %102, %105 : vector<16x128xf32>
    %c3 = arith.constant 3 : index
    %c0_33 = arith.constant 0 : index
    %c0_34 = arith.constant 0 : index
    %107 = vector.load %arg2[%c3, %c0_33, %c0_34] : memref<16x16x32xf32, #tpu.memory_space<vmem>>, vector<1x16x32xf32>
    %108 = vector.shape_cast %107 : vector<1x16x32xf32> to vector<16x32xf32>
    %cst_35 = arith.constant dense<0.000000e+00> : vector<16x128xf32>
    %109 = tpu.matmul %108, %20, %cst_35 {dimension_numbers = #tpu.dot_dimension_numbers<[1], [0], [0], [1], [0, 0, 1, 1], [], []>} : vector<16x32xf32>, vector<32x128xf32>, vector<16x128xf32> -> vector<16x128xf32>
    %110 = arith.addf %106, %109 : vector<16x128xf32>
    %111 = vector.broadcast %93 : vector<16x1xf32> to vector<16x128xf32>
    %112 = arith.addf %110, %111 : vector<16x128xf32>
    %cst_36 = arith.constant 0.000000e+00 : f32
    %113 = vector.broadcast %cst_36 : f32 to vector<16x128xf32>
    %c4 = arith.constant 4 : index
    %c0_37 = arith.constant 0 : index
    %c0_38 = arith.constant 0 : index
    %114 = vector.load %arg2[%c4, %c0_37, %c0_38] : memref<16x16x32xf32, #tpu.memory_space<vmem>>, vector<1x16x32xf32>
    %115 = vector.shape_cast %114 : vector<1x16x32xf32> to vector<16x32xf32>
    %cst_39 = arith.constant dense<0.000000e+00> : vector<16x128xf32>
    %116 = tpu.matmul %115, %59, %cst_39 {dimension_numbers = #tpu.dot_dimension_numbers<[1], [0], [0], [1], [0, 0, 1, 1], [], []>} : vector<16x32xf32>, vector<32x128xf32>, vector<16x128xf32> -> vector<16x128xf32>
    %117 = arith.addf %113, %116 : vector<16x128xf32>
    %c5 = arith.constant 5 : index
    %c0_40 = arith.constant 0 : index
    %c0_41 = arith.constant 0 : index
    %118 = vector.load %arg2[%c5, %c0_40, %c0_41] : memref<16x16x32xf32, #tpu.memory_space<vmem>>, vector<1x16x32xf32>
    %119 = vector.shape_cast %118 : vector<1x16x32xf32> to vector<16x32xf32>
    %cst_42 = arith.constant dense<0.000000e+00> : vector<16x128xf32>
    %120 = tpu.matmul %119, %1, %cst_42 {dimension_numbers = #tpu.dot_dimension_numbers<[1], [0], [0], [1], [0, 0, 1, 1], [], []>} : vector<16x32xf32>, vector<32x128xf32>, vector<16x128xf32> -> vector<16x128xf32>
    %121 = arith.addf %117, %120 : vector<16x128xf32>
    %c6 = arith.constant 6 : index
    %c0_43 = arith.constant 0 : index
    %c0_44 = arith.constant 0 : index
    %122 = vector.load %arg2[%c6, %c0_43, %c0_44] : memref<16x16x32xf32, #tpu.memory_space<vmem>>, vector<1x16x32xf32>
    %123 = vector.shape_cast %122 : vector<1x16x32xf32> to vector<16x32xf32>
    %cst_45 = arith.constant dense<0.000000e+00> : vector<16x128xf32>
    %124 = tpu.matmul %123, %41, %cst_45 {dimension_numbers = #tpu.dot_dimension_numbers<[1], [0], [0], [1], [0, 0, 1, 1], [], []>} : vector<16x32xf32>, vector<32x128xf32>, vector<16x128xf32> -> vector<16x128xf32>
    %125 = arith.addf %121, %124 : vector<16x128xf32>
    %c7 = arith.constant 7 : index
    %c0_46 = arith.constant 0 : index
    %c0_47 = arith.constant 0 : index
    %126 = vector.load %arg2[%c7, %c0_46, %c0_47] : memref<16x16x32xf32, #tpu.memory_space<vmem>>, vector<1x16x32xf32>
    %127 = vector.shape_cast %126 : vector<1x16x32xf32> to vector<16x32xf32>
    %cst_48 = arith.constant dense<0.000000e+00> : vector<16x128xf32>
    %128 = tpu.matmul %127, %29, %cst_48 {dimension_numbers = #tpu.dot_dimension_numbers<[1], [0], [0], [1], [0, 0, 1, 1], [], []>} : vector<16x32xf32>, vector<32x128xf32>, vector<16x128xf32> -> vector<16x128xf32>
    %129 = arith.addf %125, %128 : vector<16x128xf32>
    %130 = vector.broadcast %93 : vector<16x1xf32> to vector<16x128xf32>
    %131 = arith.addf %129, %130 : vector<16x128xf32>
    %cst_49 = arith.constant 0.000000e+00 : f32
    %132 = vector.broadcast %cst_49 : f32 to vector<16x128xf32>
    %c8 = arith.constant 8 : index
    %c0_50 = arith.constant 0 : index
    %c0_51 = arith.constant 0 : index
    %133 = vector.load %arg2[%c8, %c0_50, %c0_51] : memref<16x16x32xf32, #tpu.memory_space<vmem>>, vector<1x16x32xf32>
    %134 = vector.shape_cast %133 : vector<1x16x32xf32> to vector<16x32xf32>
    %cst_52 = arith.constant dense<0.000000e+00> : vector<16x128xf32>
    %135 = tpu.matmul %134, %80, %cst_52 {dimension_numbers = #tpu.dot_dimension_numbers<[1], [0], [0], [1], [0, 0, 1, 1], [], []>} : vector<16x32xf32>, vector<32x128xf32>, vector<16x128xf32> -> vector<16x128xf32>
    %136 = arith.addf %132, %135 : vector<16x128xf32>
    %c9 = arith.constant 9 : index
    %c0_53 = arith.constant 0 : index
    %c0_54 = arith.constant 0 : index
    %137 = vector.load %arg2[%c9, %c0_53, %c0_54] : memref<16x16x32xf32, #tpu.memory_space<vmem>>, vector<1x16x32xf32>
    %138 = vector.shape_cast %137 : vector<1x16x32xf32> to vector<16x32xf32>
    %cst_55 = arith.constant dense<0.000000e+00> : vector<16x128xf32>
    %139 = tpu.matmul %138, %71, %cst_55 {dimension_numbers = #tpu.dot_dimension_numbers<[1], [0], [0], [1], [0, 0, 1, 1], [], []>} : vector<16x32xf32>, vector<32x128xf32>, vector<16x128xf32> -> vector<16x128xf32>
    %140 = arith.addf %136, %139 : vector<16x128xf32>
    %c10 = arith.constant 10 : index
    %c0_56 = arith.constant 0 : index
    %c0_57 = arith.constant 0 : index
    %141 = vector.load %arg2[%c10, %c0_56, %c0_57] : memref<16x16x32xf32, #tpu.memory_space<vmem>>, vector<1x16x32xf32>
    %142 = vector.shape_cast %141 : vector<1x16x32xf32> to vector<16x32xf32>
    %cst_58 = arith.constant dense<0.000000e+00> : vector<16x128xf32>
    %143 = tpu.matmul %142, %1, %cst_58 {dimension_numbers = #tpu.dot_dimension_numbers<[1], [0], [0], [1], [0, 0, 1, 1], [], []>} : vector<16x32xf32>, vector<32x128xf32>, vector<16x128xf32> -> vector<16x128xf32>
    %144 = arith.addf %140, %143 : vector<16x128xf32>
    %c11 = arith.constant 11 : index
    %c0_59 = arith.constant 0 : index
    %c0_60 = arith.constant 0 : index
    %145 = vector.load %arg2[%c11, %c0_59, %c0_60] : memref<16x16x32xf32, #tpu.memory_space<vmem>>, vector<1x16x32xf32>
    %146 = vector.shape_cast %145 : vector<1x16x32xf32> to vector<16x32xf32>
    %cst_61 = arith.constant dense<0.000000e+00> : vector<16x128xf32>
    %147 = tpu.matmul %146, %50, %cst_61 {dimension_numbers = #tpu.dot_dimension_numbers<[1], [0], [0], [1], [0, 0, 1, 1], [], []>} : vector<16x32xf32>, vector<32x128xf32>, vector<16x128xf32> -> vector<16x128xf32>
    %148 = arith.addf %144, %147 : vector<16x128xf32>
    %149 = vector.broadcast %93 : vector<16x1xf32> to vector<16x128xf32>
    %150 = arith.addf %148, %149 : vector<16x128xf32>
    %cst_62 = arith.constant 0.000000e+00 : f32
    %151 = vector.broadcast %cst_62 : f32 to vector<16x128xf32>
    %c12 = arith.constant 12 : index
    %c0_63 = arith.constant 0 : index
    %c0_64 = arith.constant 0 : index
    %152 = vector.load %arg2[%c12, %c0_63, %c0_64] : memref<16x16x32xf32, #tpu.memory_space<vmem>>, vector<1x16x32xf32>
    %153 = vector.shape_cast %152 : vector<1x16x32xf32> to vector<16x32xf32>
    %cst_65 = arith.constant dense<0.000000e+00> : vector<16x128xf32>
    %154 = tpu.matmul %153, %92, %cst_65 {dimension_numbers = #tpu.dot_dimension_numbers<[1], [0], [0], [1], [0, 0, 1, 1], [], []>} : vector<16x32xf32>, vector<32x128xf32>, vector<16x128xf32> -> vector<16x128xf32>
    %155 = arith.addf %151, %154 : vector<16x128xf32>
    %c13 = arith.constant 13 : index
    %c0_66 = arith.constant 0 : index
    %c0_67 = arith.constant 0 : index
    %156 = vector.load %arg2[%c13, %c0_66, %c0_67] : memref<16x16x32xf32, #tpu.memory_space<vmem>>, vector<1x16x32xf32>
    %157 = vector.shape_cast %156 : vector<1x16x32xf32> to vector<16x32xf32>
    %cst_68 = arith.constant dense<0.000000e+00> : vector<16x128xf32>
    %158 = tpu.matmul %157, %80, %cst_68 {dimension_numbers = #tpu.dot_dimension_numbers<[1], [0], [0], [1], [0, 0, 1, 1], [], []>} : vector<16x32xf32>, vector<32x128xf32>, vector<16x128xf32> -> vector<16x128xf32>
    %159 = arith.addf %155, %158 : vector<16x128xf32>
    %c14 = arith.constant 14 : index
    %c0_69 = arith.constant 0 : index
    %c0_70 = arith.constant 0 : index
    %160 = vector.load %arg2[%c14, %c0_69, %c0_70] : memref<16x16x32xf32, #tpu.memory_space<vmem>>, vector<1x16x32xf32>
    %161 = vector.shape_cast %160 : vector<1x16x32xf32> to vector<16x32xf32>
    %cst_71 = arith.constant dense<0.000000e+00> : vector<16x128xf32>
    %162 = tpu.matmul %161, %59, %cst_71 {dimension_numbers = #tpu.dot_dimension_numbers<[1], [0], [0], [1], [0, 0, 1, 1], [], []>} : vector<16x32xf32>, vector<32x128xf32>, vector<16x128xf32> -> vector<16x128xf32>
    %163 = arith.addf %159, %162 : vector<16x128xf32>
    %c15 = arith.constant 15 : index
    %c0_72 = arith.constant 0 : index
    %c0_73 = arith.constant 0 : index
    %164 = vector.load %arg2[%c15, %c0_72, %c0_73] : memref<16x16x32xf32, #tpu.memory_space<vmem>>, vector<1x16x32xf32>
    %165 = vector.shape_cast %164 : vector<1x16x32xf32> to vector<16x32xf32>
    %cst_74 = arith.constant dense<0.000000e+00> : vector<16x128xf32>
    %166 = tpu.matmul %165, %1, %cst_74 {dimension_numbers = #tpu.dot_dimension_numbers<[1], [0], [0], [1], [0, 0, 1, 1], [], []>} : vector<16x32xf32>, vector<32x128xf32>, vector<16x128xf32> -> vector<16x128xf32>
    %167 = arith.addf %163, %166 : vector<16x128xf32>
    %168 = vector.broadcast %93 : vector<16x1xf32> to vector<16x128xf32>
    %169 = arith.addf %167, %168 : vector<16x128xf32>
    %170 = arith.addf %112, %131 : vector<16x128xf32>
    %171 = arith.addf %170, %150 : vector<16x128xf32>
    %172 = arith.addf %171, %169 : vector<16x128xf32>
    %173 = arith.mulf %112, %112 : vector<16x128xf32>
    %174 = arith.mulf %131, %131 : vector<16x128xf32>
    %175 = arith.addf %173, %174 : vector<16x128xf32>
    %176 = arith.mulf %150, %150 : vector<16x128xf32>
    %177 = arith.addf %175, %176 : vector<16x128xf32>
    %178 = arith.mulf %169, %169 : vector<16x128xf32>
    %179 = arith.addf %177, %178 : vector<16x128xf32>
    %cst_75 = arith.constant dense<0.000000e+00> : vector<16xf32>
    %180 = vector.multi_reduction <add>, %172, %cst_75 [1] : vector<16x128xf32> to vector<16xf32>
    %181 = vector.shape_cast %180 : vector<16xf32> to vector<16x1xf32>
    %cst_76 = arith.constant 5.120000e+02 : f32
    %182 = vector.broadcast %cst_76 : f32 to vector<16x1xf32>
    %183 = arith.divf %181, %182 : vector<16x1xf32>
    %cst_77 = arith.constant dense<0.000000e+00> : vector<16xf32>
    %184 = vector.multi_reduction <add>, %179, %cst_77 [1] : vector<16x128xf32> to vector<16xf32>
    %185 = vector.shape_cast %184 : vector<16xf32> to vector<16x1xf32>
    %cst_78 = arith.constant 5.120000e+02 : f32
    %186 = vector.broadcast %cst_78 : f32 to vector<16x1xf32>
    %187 = arith.divf %185, %186 : vector<16x1xf32>
    %188 = arith.mulf %183, %183 : vector<16x1xf32>
    %189 = arith.subf %187, %188 : vector<16x1xf32>
    %cst_79 = arith.constant 0.000000e+00 : f32
    %190 = vector.broadcast %cst_79 : f32 to vector<16x1xf32>
    %191 = arith.maximumf %189, %190 : vector<16x1xf32>
    %c0_80 = arith.constant 0 : index
    %c0_81 = arith.constant 0 : index
    %192 = vector.load %arg4[%c0_80, %c0_81] : memref<16x1xf32, #tpu.memory_space<vmem>>, vector<16x1xf32>
    %cst_82 = arith.constant 9.99999974E-6 : f32
    %193 = vector.broadcast %cst_82 : f32 to vector<16x1xf32>
    %194 = arith.addf %191, %193 : vector<16x1xf32>
    %195 = math.rsqrt %194 : vector<16x1xf32>
    %196 = arith.mulf %192, %195 : vector<16x1xf32>
    %c0_83 = arith.constant 0 : index
    %c0_84 = arith.constant 0 : index
    %197 = vector.load %arg5[%c0_83, %c0_84] : memref<16x1xf32, #tpu.memory_space<vmem>>, vector<16x1xf32>
    %198 = arith.mulf %183, %196 : vector<16x1xf32>
    %199 = arith.subf %197, %198 : vector<16x1xf32>
    %200 = vector.broadcast %196 : vector<16x1xf32> to vector<16x128xf32>
    %201 = arith.mulf %112, %200 : vector<16x128xf32>
    %202 = vector.broadcast %199 : vector<16x1xf32> to vector<16x128xf32>
    %203 = arith.addf %201, %202 : vector<16x128xf32>
    %cst_85 = arith.constant 0.000000e+00 : f32
    %204 = vector.broadcast %cst_85 : f32 to vector<16x128xf32>
    %205 = arith.maximumf %203, %204 : vector<16x128xf32>
    %206 = vector.broadcast %196 : vector<16x1xf32> to vector<16x128xf32>
    %207 = arith.mulf %131, %206 : vector<16x128xf32>
    %208 = vector.broadcast %199 : vector<16x1xf32> to vector<16x128xf32>
    %209 = arith.addf %207, %208 : vector<16x128xf32>
    %cst_86 = arith.constant 0.000000e+00 : f32
    %210 = vector.broadcast %cst_86 : f32 to vector<16x128xf32>
    %211 = arith.maximumf %209, %210 : vector<16x128xf32>
    %212 = vector.broadcast %196 : vector<16x1xf32> to vector<16x128xf32>
    %213 = arith.mulf %150, %212 : vector<16x128xf32>
    %214 = vector.broadcast %199 : vector<16x1xf32> to vector<16x128xf32>
    %215 = arith.addf %213, %214 : vector<16x128xf32>
    %cst_87 = arith.constant 0.000000e+00 : f32
    %216 = vector.broadcast %cst_87 : f32 to vector<16x128xf32>
    %217 = arith.maximumf %215, %216 : vector<16x128xf32>
    %218 = vector.broadcast %196 : vector<16x1xf32> to vector<16x128xf32>
    %219 = arith.mulf %169, %218 : vector<16x128xf32>
    %220 = vector.broadcast %199 : vector<16x1xf32> to vector<16x128xf32>
    %221 = arith.addf %219, %220 : vector<16x128xf32>
    %cst_88 = arith.constant 0.000000e+00 : f32
    %222 = vector.broadcast %cst_88 : f32 to vector<16x128xf32>
    %223 = arith.maximumf %221, %222 : vector<16x128xf32>
    %224 = arith.truncf %205 : vector<16x128xf32> to vector<16x128xbf16>
    %c0_89 = arith.constant 0 : index
    %c0_90 = arith.constant 0 : index
    %c0_91 = arith.constant 0 : index
    %225 = vector.load %arg6[%c0_89, %c0_90, %c0_91] : memref<4x16x128xbf16, #tpu.memory_space<vmem>>, vector<1x16x128xbf16>
    %226 = vector.shape_cast %225 : vector<1x16x128xbf16> to vector<16x128xbf16>
    %227 = vector.shape_cast %224 : vector<16x128xbf16> to vector<1x16x128xbf16>
    tpu.vector_store %arg6[%c0_89, %c0_90, %c0_91], %227 {strides = array<i32>} : memref<4x16x128xbf16, #tpu.memory_space<vmem>>, vector<1x16x128xbf16>,
    %228 = arith.truncf %211 : vector<16x128xf32> to vector<16x128xbf16>
    %c1_92 = arith.constant 1 : index
    %c0_93 = arith.constant 0 : index
    %c0_94 = arith.constant 0 : index
    %229 = vector.load %arg6[%c1_92, %c0_93, %c0_94] : memref<4x16x128xbf16, #tpu.memory_space<vmem>>, vector<1x16x128xbf16>
    %230 = vector.shape_cast %229 : vector<1x16x128xbf16> to vector<16x128xbf16>
    %231 = vector.shape_cast %228 : vector<16x128xbf16> to vector<1x16x128xbf16>
    tpu.vector_store %arg6[%c1_92, %c0_93, %c0_94], %231 {strides = array<i32>} : memref<4x16x128xbf16, #tpu.memory_space<vmem>>, vector<1x16x128xbf16>,
    %232 = arith.truncf %217 : vector<16x128xf32> to vector<16x128xbf16>
    %c2_95 = arith.constant 2 : index
    %c0_96 = arith.constant 0 : index
    %c0_97 = arith.constant 0 : index
    %233 = vector.load %arg6[%c2_95, %c0_96, %c0_97] : memref<4x16x128xbf16, #tpu.memory_space<vmem>>, vector<1x16x128xbf16>
    %234 = vector.shape_cast %233 : vector<1x16x128xbf16> to vector<16x128xbf16>
    %235 = vector.shape_cast %232 : vector<16x128xbf16> to vector<1x16x128xbf16>
    tpu.vector_store %arg6[%c2_95, %c0_96, %c0_97], %235 {strides = array<i32>} : memref<4x16x128xbf16, #tpu.memory_space<vmem>>, vector<1x16x128xbf16>,
    %236 = arith.truncf %223 : vector<16x128xf32> to vector<16x128xbf16>
    %c3_98 = arith.constant 3 : index
    %c0_99 = arith.constant 0 : index
    %c0_100 = arith.constant 0 : index
    %237 = vector.load %arg6[%c3_98, %c0_99, %c0_100] : memref<4x16x128xbf16, #tpu.memory_space<vmem>>, vector<1x16x128xbf16>
    %238 = vector.shape_cast %237 : vector<1x16x128xbf16> to vector<16x128xbf16>
    %239 = vector.shape_cast %236 : vector<16x128xbf16> to vector<1x16x128xbf16>
    tpu.vector_store %arg6[%c3_98, %c0_99, %c0_100], %239 {strides = array<i32>} : memref<4x16x128xbf16, #tpu.memory_space<vmem>>, vector<1x16x128xbf16>,
    return
  }
  func.func @transform_0(%arg0: i32) -> (i32, i32) {
    %c0_i32 = arith.constant 0 : i32
    %c0_i32_0 = arith.constant 0 : i32
    %c0_i32_1 = arith.constant 0 : i32
    return %c0_i32, %c0_i32_0 : i32, i32
  }
  func.func @transform_1(%arg0: i32) -> (i32, i32, i32) {
    %c0_i32 = arith.constant 0 : i32
    %c0_i32_0 = arith.constant 0 : i32
    %c0_i32_1 = arith.constant 0 : i32
    %c0_i32_2 = arith.constant 0 : i32
    return %c0_i32, %c0_i32_0, %c0_i32_1 : i32, i32, i32
  }
  func.func @transform_2(%arg0: i32) -> (i32, i32) {
    %c0_i32 = arith.constant 0 : i32
    %c0_i32_0 = arith.constant 0 : i32
    %c0_i32_1 = arith.constant 0 : i32
    return %c0_i32, %c0_i32_0 : i32, i32
  }
  func.func @transform_3(%arg0: i32) -> (i32, i32) {
    %c0_i32 = arith.constant 0 : i32
    %c0_i32_0 = arith.constant 0 : i32
    %c0_i32_1 = arith.constant 0 : i32
    return %c0_i32, %c0_i32_0 : i32, i32
  }
  func.func @transform_4(%arg0: i32) -> (i32, i32) {
    %c0_i32 = arith.constant 0 : i32
    %c0_i32_0 = arith.constant 0 : i32
    %c0_i32_1 = arith.constant 0 : i32
    return %c0_i32, %c0_i32_0 : i32, i32
  }
  func.func @transform_5(%arg0: i32) -> (i32, i32, i32) {
    %c0_i32 = arith.constant 0 : i32
    %c0_i32_0 = arith.constant 0 : i32
    %c0_i32_1 = arith.constant 0 : i32
    %c0_i32_2 = arith.constant 0 : i32
    return %c0_i32, %c0_i32_0, %c0_i32_1 : i32, i32, i32
  }
}

module attributes {stable_mosaic.version = 11 : i64} {
  func.func @_deconv_kernel(%arg0: i32, %arg1: memref<16x512xbf16, #tpu.memory_space<vmem>>, %arg2: memref<16x3x16xf32, #tpu.memory_space<vmem>>, %arg3: memref<3x1xf32, #tpu.memory_space<vmem>>, %arg4: memref<3x1xf32, #tpu.memory_space<vmem>>, %arg5: memref<3x1xf32, #tpu.memory_space<vmem>>, %arg6: memref<4x3x512xf32, #tpu.memory_space<vmem>>) attributes {dimension_semantics = [#tpu.dimension_semantics<arbitrary>], iteration_bounds = array<i64: 1>, scalar_prefetch = 0 : i64, scratch_operands = 0 : i64, tpu.core_type = #tpu.core_type<tc>, window_params = [{pipeline_mode = #tpu.pipeline_mode<synchronous>, transform_indices = @transform_0, window_bounds = array<i64: 16, 512>}, {pipeline_mode = #tpu.pipeline_mode<synchronous>, transform_indices = @transform_1, window_bounds = array<i64: 16, 3, 16>}, {pipeline_mode = #tpu.pipeline_mode<synchronous>, transform_indices = @transform_2, window_bounds = array<i64: 3, 1>}, {pipeline_mode = #tpu.pipeline_mode<synchronous>, transform_indices = @transform_3, window_bounds = array<i64: 3, 1>}, {pipeline_mode = #tpu.pipeline_mode<synchronous>, transform_indices = @transform_4, window_bounds = array<i64: 3, 1>}, {pipeline_mode = #tpu.pipeline_mode<synchronous>, transform_indices = @transform_5, window_bounds = array<i64: 4, 3, 512>}]} {
    %c0 = arith.constant 0 : index
    %c0_0 = arith.constant 0 : index
    %0 = vector.load %arg1[%c0, %c0_0] : memref<16x512xbf16, #tpu.memory_space<vmem>>, vector<16x512xbf16>
    %1 = arith.extf %0 : vector<16x512xbf16> to vector<16x512xf32>
    %2 = tpu.iota {dimensions = array<i32: 1>} : vector<1x512xi32>
    %c15_i32 = arith.constant 15 : i32
    %3 = vector.broadcast %c15_i32 : i32 to vector<1x512xi32>
    %4 = arith.andi %2, %3 : vector<1x512xi32>
    %c4_i32 = arith.constant 4 : i32
    %5 = vector.broadcast %c4_i32 : i32 to vector<1x512xi32>
    %6 = arith.shrsi %2, %5 : vector<1x512xi32>
    %c15_i32_1 = arith.constant 15 : i32
    %7 = vector.broadcast %c15_i32_1 : i32 to vector<1x512xi32>
    %8 = arith.andi %6, %7 : vector<1x512xi32>
    %cst = arith.constant 0.000000e+00 : f32
    %9 = vector.broadcast %cst : f32 to vector<16x17xf32>
    %10 = vector.extract_strided_slice %1 {offsets = [0, 0], sizes = [16, 495], strides = [1, 1]} : vector<16x512xf32> to vector<16x495xf32>
    %11 = tpu.concatenate %9, %10 in 1 : vector<16x17xf32>, vector<16x495xf32> -> vector<16x512xf32>
    %c1_i32 = arith.constant 1 : i32
    %12 = vector.broadcast %c1_i32 : i32 to vector<1x512xi32>
    %13 = arith.cmpi sge, %8, %12 : vector<1x512xi32>
    %c1_i32_2 = arith.constant 1 : i32
    %14 = vector.broadcast %c1_i32_2 : i32 to vector<1x512xi32>
    %15 = arith.cmpi sge, %4, %14 : vector<1x512xi32>
    %16 = arith.andi %13, %15 : vector<1x512xi1>
    %17 = arith.extui %16 : vector<1x512xi1> to vector<1x512xi32>
    %18 = arith.sitofp %17 : vector<1x512xi32> to vector<1x512xf32>
    %19 = vector.broadcast %18 : vector<1x512xf32> to vector<16x512xf32>
    %20 = arith.mulf %11, %19 : vector<16x512xf32>
    %cst_3 = arith.constant 0.000000e+00 : f32
    %21 = vector.broadcast %cst_3 : f32 to vector<16x16xf32>
    %22 = vector.extract_strided_slice %1 {offsets = [0, 0], sizes = [16, 496], strides = [1, 1]} : vector<16x512xf32> to vector<16x496xf32>
    %23 = tpu.concatenate %21, %22 in 1 : vector<16x16xf32>, vector<16x496xf32> -> vector<16x512xf32>
    %c1_i32_4 = arith.constant 1 : i32
    %24 = vector.broadcast %c1_i32_4 : i32 to vector<1x512xi32>
    %25 = arith.cmpi sge, %8, %24 : vector<1x512xi32>
    %26 = arith.extui %25 : vector<1x512xi1> to vector<1x512xi32>
    %27 = arith.sitofp %26 : vector<1x512xi32> to vector<1x512xf32>
    %28 = vector.broadcast %27 : vector<1x512xf32> to vector<16x512xf32>
    %29 = arith.mulf %23, %28 : vector<16x512xf32>
    %cst_5 = arith.constant 0.000000e+00 : f32
    %30 = vector.broadcast %cst_5 : f32 to vector<16x15xf32>
    %31 = vector.extract_strided_slice %1 {offsets = [0, 0], sizes = [16, 497], strides = [1, 1]} : vector<16x512xf32> to vector<16x497xf32>
    %32 = tpu.concatenate %30, %31 in 1 : vector<16x15xf32>, vector<16x497xf32> -> vector<16x512xf32>
    %c1_i32_6 = arith.constant 1 : i32
    %33 = vector.broadcast %c1_i32_6 : i32 to vector<1x512xi32>
    %34 = arith.cmpi sge, %8, %33 : vector<1x512xi32>
    %c15_i32_7 = arith.constant 15 : i32
    %35 = vector.broadcast %c15_i32_7 : i32 to vector<1x512xi32>
    %36 = arith.cmpi slt, %4, %35 : vector<1x512xi32>
    %37 = arith.andi %34, %36 : vector<1x512xi1>
    %38 = arith.extui %37 : vector<1x512xi1> to vector<1x512xi32>
    %39 = arith.sitofp %38 : vector<1x512xi32> to vector<1x512xf32>
    %40 = vector.broadcast %39 : vector<1x512xf32> to vector<16x512xf32>
    %41 = arith.mulf %32, %40 : vector<16x512xf32>
    %cst_8 = arith.constant 0.000000e+00 : f32
    %42 = vector.broadcast %cst_8 : f32 to vector<16x1xf32>
    %43 = vector.extract_strided_slice %1 {offsets = [0, 0], sizes = [16, 511], strides = [1, 1]} : vector<16x512xf32> to vector<16x511xf32>
    %44 = tpu.concatenate %42, %43 in 1 : vector<16x1xf32>, vector<16x511xf32> -> vector<16x512xf32>
    %c1_i32_9 = arith.constant 1 : i32
    %45 = vector.broadcast %c1_i32_9 : i32 to vector<1x512xi32>
    %46 = arith.cmpi sge, %4, %45 : vector<1x512xi32>
    %47 = arith.extui %46 : vector<1x512xi1> to vector<1x512xi32>
    %48 = arith.sitofp %47 : vector<1x512xi32> to vector<1x512xf32>
    %49 = vector.broadcast %48 : vector<1x512xf32> to vector<16x512xf32>
    %50 = arith.mulf %44, %49 : vector<16x512xf32>
    %cst_10 = arith.constant 0.000000e+00 : f32
    %51 = vector.broadcast %cst_10 : f32 to vector<16x1xf32>
    %52 = vector.extract_strided_slice %1 {offsets = [0, 1], sizes = [16, 511], strides = [1, 1]} : vector<16x512xf32> to vector<16x511xf32>
    %53 = tpu.concatenate %52, %51 in 1 : vector<16x511xf32>, vector<16x1xf32> -> vector<16x512xf32>
    %c15_i32_11 = arith.constant 15 : i32
    %54 = vector.broadcast %c15_i32_11 : i32 to vector<1x512xi32>
    %55 = arith.cmpi slt, %4, %54 : vector<1x512xi32>
    %56 = arith.extui %55 : vector<1x512xi1> to vector<1x512xi32>
    %57 = arith.sitofp %56 : vector<1x512xi32> to vector<1x512xf32>
    %58 = vector.broadcast %57 : vector<1x512xf32> to vector<16x512xf32>
    %59 = arith.mulf %53, %58 : vector<16x512xf32>
    %cst_12 = arith.constant 0.000000e+00 : f32
    %60 = vector.broadcast %cst_12 : f32 to vector<16x15xf32>
    %61 = vector.extract_strided_slice %1 {offsets = [0, 15], sizes = [16, 497], strides = [1, 1]} : vector<16x512xf32> to vector<16x497xf32>
    %62 = tpu.concatenate %61, %60 in 1 : vector<16x497xf32>, vector<16x15xf32> -> vector<16x512xf32>
    %c15_i32_13 = arith.constant 15 : i32
    %63 = vector.broadcast %c15_i32_13 : i32 to vector<1x512xi32>
    %64 = arith.cmpi slt, %8, %63 : vector<1x512xi32>
    %c1_i32_14 = arith.constant 1 : i32
    %65 = vector.broadcast %c1_i32_14 : i32 to vector<1x512xi32>
    %66 = arith.cmpi sge, %4, %65 : vector<1x512xi32>
    %67 = arith.andi %64, %66 : vector<1x512xi1>
    %68 = arith.extui %67 : vector<1x512xi1> to vector<1x512xi32>
    %69 = arith.sitofp %68 : vector<1x512xi32> to vector<1x512xf32>
    %70 = vector.broadcast %69 : vector<1x512xf32> to vector<16x512xf32>
    %71 = arith.mulf %62, %70 : vector<16x512xf32>
    %cst_15 = arith.constant 0.000000e+00 : f32
    %72 = vector.broadcast %cst_15 : f32 to vector<16x16xf32>
    %73 = vector.extract_strided_slice %1 {offsets = [0, 16], sizes = [16, 496], strides = [1, 1]} : vector<16x512xf32> to vector<16x496xf32>
    %74 = tpu.concatenate %73, %72 in 1 : vector<16x496xf32>, vector<16x16xf32> -> vector<16x512xf32>
    %c15_i32_16 = arith.constant 15 : i32
    %75 = vector.broadcast %c15_i32_16 : i32 to vector<1x512xi32>
    %76 = arith.cmpi slt, %8, %75 : vector<1x512xi32>
    %77 = arith.extui %76 : vector<1x512xi1> to vector<1x512xi32>
    %78 = arith.sitofp %77 : vector<1x512xi32> to vector<1x512xf32>
    %79 = vector.broadcast %78 : vector<1x512xf32> to vector<16x512xf32>
    %80 = arith.mulf %74, %79 : vector<16x512xf32>
    %cst_17 = arith.constant 0.000000e+00 : f32
    %81 = vector.broadcast %cst_17 : f32 to vector<16x17xf32>
    %82 = vector.extract_strided_slice %1 {offsets = [0, 17], sizes = [16, 495], strides = [1, 1]} : vector<16x512xf32> to vector<16x495xf32>
    %83 = tpu.concatenate %82, %81 in 1 : vector<16x495xf32>, vector<16x17xf32> -> vector<16x512xf32>
    %c15_i32_18 = arith.constant 15 : i32
    %84 = vector.broadcast %c15_i32_18 : i32 to vector<1x512xi32>
    %85 = arith.cmpi slt, %8, %84 : vector<1x512xi32>
    %c15_i32_19 = arith.constant 15 : i32
    %86 = vector.broadcast %c15_i32_19 : i32 to vector<1x512xi32>
    %87 = arith.cmpi slt, %4, %86 : vector<1x512xi32>
    %88 = arith.andi %85, %87 : vector<1x512xi1>
    %89 = arith.extui %88 : vector<1x512xi1> to vector<1x512xi32>
    %90 = arith.sitofp %89 : vector<1x512xi32> to vector<1x512xf32>
    %91 = vector.broadcast %90 : vector<1x512xf32> to vector<16x512xf32>
    %92 = arith.mulf %83, %91 : vector<16x512xf32>
    %c0_20 = arith.constant 0 : index
    %c0_21 = arith.constant 0 : index
    %93 = vector.load %arg3[%c0_20, %c0_21] : memref<3x1xf32, #tpu.memory_space<vmem>>, vector<3x1xf32>
    %cst_22 = arith.constant 0.000000e+00 : f32
    %94 = vector.broadcast %cst_22 : f32 to vector<3x512xf32>
    %c0_23 = arith.constant 0 : index
    %c0_24 = arith.constant 0 : index
    %c0_25 = arith.constant 0 : index
    %95 = vector.load %arg2[%c0_23, %c0_24, %c0_25] : memref<16x3x16xf32, #tpu.memory_space<vmem>>, vector<1x3x16xf32>
    %96 = vector.shape_cast %95 : vector<1x3x16xf32> to vector<3x16xf32>
    %cst_26 = arith.constant dense<0.000000e+00> : vector<3x512xf32>
    %97 = tpu.matmul %96, %1, %cst_26 {dimension_numbers = #tpu.dot_dimension_numbers<[1], [0], [0], [1], [0, 0, 1, 1], [], []>} : vector<3x16xf32>, vector<16x512xf32>, vector<3x512xf32> -> vector<3x512xf32>
    %98 = arith.addf %94, %97 : vector<3x512xf32>
    %c1 = arith.constant 1 : index
    %c0_27 = arith.constant 0 : index
    %c0_28 = arith.constant 0 : index
    %99 = vector.load %arg2[%c1, %c0_27, %c0_28] : memref<16x3x16xf32, #tpu.memory_space<vmem>>, vector<1x3x16xf32>
    %100 = vector.shape_cast %99 : vector<1x3x16xf32> to vector<3x16xf32>
    %cst_29 = arith.constant dense<0.000000e+00> : vector<3x512xf32>
    %101 = tpu.matmul %100, %50, %cst_29 {dimension_numbers = #tpu.dot_dimension_numbers<[1], [0], [0], [1], [0, 0, 1, 1], [], []>} : vector<3x16xf32>, vector<16x512xf32>, vector<3x512xf32> -> vector<3x512xf32>
    %102 = arith.addf %98, %101 : vector<3x512xf32>
    %c2 = arith.constant 2 : index
    %c0_30 = arith.constant 0 : index
    %c0_31 = arith.constant 0 : index
    %103 = vector.load %arg2[%c2, %c0_30, %c0_31] : memref<16x3x16xf32, #tpu.memory_space<vmem>>, vector<1x3x16xf32>
    %104 = vector.shape_cast %103 : vector<1x3x16xf32> to vector<3x16xf32>
    %cst_32 = arith.constant dense<0.000000e+00> : vector<3x512xf32>
    %105 = tpu.matmul %104, %29, %cst_32 {dimension_numbers = #tpu.dot_dimension_numbers<[1], [0], [0], [1], [0, 0, 1, 1], [], []>} : vector<3x16xf32>, vector<16x512xf32>, vector<3x512xf32> -> vector<3x512xf32>
    %106 = arith.addf %102, %105 : vector<3x512xf32>
    %c3 = arith.constant 3 : index
    %c0_33 = arith.constant 0 : index
    %c0_34 = arith.constant 0 : index
    %107 = vector.load %arg2[%c3, %c0_33, %c0_34] : memref<16x3x16xf32, #tpu.memory_space<vmem>>, vector<1x3x16xf32>
    %108 = vector.shape_cast %107 : vector<1x3x16xf32> to vector<3x16xf32>
    %cst_35 = arith.constant dense<0.000000e+00> : vector<3x512xf32>
    %109 = tpu.matmul %108, %20, %cst_35 {dimension_numbers = #tpu.dot_dimension_numbers<[1], [0], [0], [1], [0, 0, 1, 1], [], []>} : vector<3x16xf32>, vector<16x512xf32>, vector<3x512xf32> -> vector<3x512xf32>
    %110 = arith.addf %106, %109 : vector<3x512xf32>
    %111 = vector.broadcast %93 : vector<3x1xf32> to vector<3x512xf32>
    %112 = arith.addf %110, %111 : vector<3x512xf32>
    %cst_36 = arith.constant 0.000000e+00 : f32
    %113 = vector.broadcast %cst_36 : f32 to vector<3x512xf32>
    %c4 = arith.constant 4 : index
    %c0_37 = arith.constant 0 : index
    %c0_38 = arith.constant 0 : index
    %114 = vector.load %arg2[%c4, %c0_37, %c0_38] : memref<16x3x16xf32, #tpu.memory_space<vmem>>, vector<1x3x16xf32>
    %115 = vector.shape_cast %114 : vector<1x3x16xf32> to vector<3x16xf32>
    %cst_39 = arith.constant dense<0.000000e+00> : vector<3x512xf32>
    %116 = tpu.matmul %115, %59, %cst_39 {dimension_numbers = #tpu.dot_dimension_numbers<[1], [0], [0], [1], [0, 0, 1, 1], [], []>} : vector<3x16xf32>, vector<16x512xf32>, vector<3x512xf32> -> vector<3x512xf32>
    %117 = arith.addf %113, %116 : vector<3x512xf32>
    %c5 = arith.constant 5 : index
    %c0_40 = arith.constant 0 : index
    %c0_41 = arith.constant 0 : index
    %118 = vector.load %arg2[%c5, %c0_40, %c0_41] : memref<16x3x16xf32, #tpu.memory_space<vmem>>, vector<1x3x16xf32>
    %119 = vector.shape_cast %118 : vector<1x3x16xf32> to vector<3x16xf32>
    %cst_42 = arith.constant dense<0.000000e+00> : vector<3x512xf32>
    %120 = tpu.matmul %119, %1, %cst_42 {dimension_numbers = #tpu.dot_dimension_numbers<[1], [0], [0], [1], [0, 0, 1, 1], [], []>} : vector<3x16xf32>, vector<16x512xf32>, vector<3x512xf32> -> vector<3x512xf32>
    %121 = arith.addf %117, %120 : vector<3x512xf32>
    %c6 = arith.constant 6 : index
    %c0_43 = arith.constant 0 : index
    %c0_44 = arith.constant 0 : index
    %122 = vector.load %arg2[%c6, %c0_43, %c0_44] : memref<16x3x16xf32, #tpu.memory_space<vmem>>, vector<1x3x16xf32>
    %123 = vector.shape_cast %122 : vector<1x3x16xf32> to vector<3x16xf32>
    %cst_45 = arith.constant dense<0.000000e+00> : vector<3x512xf32>
    %124 = tpu.matmul %123, %41, %cst_45 {dimension_numbers = #tpu.dot_dimension_numbers<[1], [0], [0], [1], [0, 0, 1, 1], [], []>} : vector<3x16xf32>, vector<16x512xf32>, vector<3x512xf32> -> vector<3x512xf32>
    %125 = arith.addf %121, %124 : vector<3x512xf32>
    %c7 = arith.constant 7 : index
    %c0_46 = arith.constant 0 : index
    %c0_47 = arith.constant 0 : index
    %126 = vector.load %arg2[%c7, %c0_46, %c0_47] : memref<16x3x16xf32, #tpu.memory_space<vmem>>, vector<1x3x16xf32>
    %127 = vector.shape_cast %126 : vector<1x3x16xf32> to vector<3x16xf32>
    %cst_48 = arith.constant dense<0.000000e+00> : vector<3x512xf32>
    %128 = tpu.matmul %127, %29, %cst_48 {dimension_numbers = #tpu.dot_dimension_numbers<[1], [0], [0], [1], [0, 0, 1, 1], [], []>} : vector<3x16xf32>, vector<16x512xf32>, vector<3x512xf32> -> vector<3x512xf32>
    %129 = arith.addf %125, %128 : vector<3x512xf32>
    %130 = vector.broadcast %93 : vector<3x1xf32> to vector<3x512xf32>
    %131 = arith.addf %129, %130 : vector<3x512xf32>
    %cst_49 = arith.constant 0.000000e+00 : f32
    %132 = vector.broadcast %cst_49 : f32 to vector<3x512xf32>
    %c8 = arith.constant 8 : index
    %c0_50 = arith.constant 0 : index
    %c0_51 = arith.constant 0 : index
    %133 = vector.load %arg2[%c8, %c0_50, %c0_51] : memref<16x3x16xf32, #tpu.memory_space<vmem>>, vector<1x3x16xf32>
    %134 = vector.shape_cast %133 : vector<1x3x16xf32> to vector<3x16xf32>
    %cst_52 = arith.constant dense<0.000000e+00> : vector<3x512xf32>
    %135 = tpu.matmul %134, %80, %cst_52 {dimension_numbers = #tpu.dot_dimension_numbers<[1], [0], [0], [1], [0, 0, 1, 1], [], []>} : vector<3x16xf32>, vector<16x512xf32>, vector<3x512xf32> -> vector<3x512xf32>
    %136 = arith.addf %132, %135 : vector<3x512xf32>
    %c9 = arith.constant 9 : index
    %c0_53 = arith.constant 0 : index
    %c0_54 = arith.constant 0 : index
    %137 = vector.load %arg2[%c9, %c0_53, %c0_54] : memref<16x3x16xf32, #tpu.memory_space<vmem>>, vector<1x3x16xf32>
    %138 = vector.shape_cast %137 : vector<1x3x16xf32> to vector<3x16xf32>
    %cst_55 = arith.constant dense<0.000000e+00> : vector<3x512xf32>
    %139 = tpu.matmul %138, %71, %cst_55 {dimension_numbers = #tpu.dot_dimension_numbers<[1], [0], [0], [1], [0, 0, 1, 1], [], []>} : vector<3x16xf32>, vector<16x512xf32>, vector<3x512xf32> -> vector<3x512xf32>
    %140 = arith.addf %136, %139 : vector<3x512xf32>
    %c10 = arith.constant 10 : index
    %c0_56 = arith.constant 0 : index
    %c0_57 = arith.constant 0 : index
    %141 = vector.load %arg2[%c10, %c0_56, %c0_57] : memref<16x3x16xf32, #tpu.memory_space<vmem>>, vector<1x3x16xf32>
    %142 = vector.shape_cast %141 : vector<1x3x16xf32> to vector<3x16xf32>
    %cst_58 = arith.constant dense<0.000000e+00> : vector<3x512xf32>
    %143 = tpu.matmul %142, %1, %cst_58 {dimension_numbers = #tpu.dot_dimension_numbers<[1], [0], [0], [1], [0, 0, 1, 1], [], []>} : vector<3x16xf32>, vector<16x512xf32>, vector<3x512xf32> -> vector<3x512xf32>
    %144 = arith.addf %140, %143 : vector<3x512xf32>
    %c11 = arith.constant 11 : index
    %c0_59 = arith.constant 0 : index
    %c0_60 = arith.constant 0 : index
    %145 = vector.load %arg2[%c11, %c0_59, %c0_60] : memref<16x3x16xf32, #tpu.memory_space<vmem>>, vector<1x3x16xf32>
    %146 = vector.shape_cast %145 : vector<1x3x16xf32> to vector<3x16xf32>
    %cst_61 = arith.constant dense<0.000000e+00> : vector<3x512xf32>
    %147 = tpu.matmul %146, %50, %cst_61 {dimension_numbers = #tpu.dot_dimension_numbers<[1], [0], [0], [1], [0, 0, 1, 1], [], []>} : vector<3x16xf32>, vector<16x512xf32>, vector<3x512xf32> -> vector<3x512xf32>
    %148 = arith.addf %144, %147 : vector<3x512xf32>
    %149 = vector.broadcast %93 : vector<3x1xf32> to vector<3x512xf32>
    %150 = arith.addf %148, %149 : vector<3x512xf32>
    %cst_62 = arith.constant 0.000000e+00 : f32
    %151 = vector.broadcast %cst_62 : f32 to vector<3x512xf32>
    %c12 = arith.constant 12 : index
    %c0_63 = arith.constant 0 : index
    %c0_64 = arith.constant 0 : index
    %152 = vector.load %arg2[%c12, %c0_63, %c0_64] : memref<16x3x16xf32, #tpu.memory_space<vmem>>, vector<1x3x16xf32>
    %153 = vector.shape_cast %152 : vector<1x3x16xf32> to vector<3x16xf32>
    %cst_65 = arith.constant dense<0.000000e+00> : vector<3x512xf32>
    %154 = tpu.matmul %153, %92, %cst_65 {dimension_numbers = #tpu.dot_dimension_numbers<[1], [0], [0], [1], [0, 0, 1, 1], [], []>} : vector<3x16xf32>, vector<16x512xf32>, vector<3x512xf32> -> vector<3x512xf32>
    %155 = arith.addf %151, %154 : vector<3x512xf32>
    %c13 = arith.constant 13 : index
    %c0_66 = arith.constant 0 : index
    %c0_67 = arith.constant 0 : index
    %156 = vector.load %arg2[%c13, %c0_66, %c0_67] : memref<16x3x16xf32, #tpu.memory_space<vmem>>, vector<1x3x16xf32>
    %157 = vector.shape_cast %156 : vector<1x3x16xf32> to vector<3x16xf32>
    %cst_68 = arith.constant dense<0.000000e+00> : vector<3x512xf32>
    %158 = tpu.matmul %157, %80, %cst_68 {dimension_numbers = #tpu.dot_dimension_numbers<[1], [0], [0], [1], [0, 0, 1, 1], [], []>} : vector<3x16xf32>, vector<16x512xf32>, vector<3x512xf32> -> vector<3x512xf32>
    %159 = arith.addf %155, %158 : vector<3x512xf32>
    %c14 = arith.constant 14 : index
    %c0_69 = arith.constant 0 : index
    %c0_70 = arith.constant 0 : index
    %160 = vector.load %arg2[%c14, %c0_69, %c0_70] : memref<16x3x16xf32, #tpu.memory_space<vmem>>, vector<1x3x16xf32>
    %161 = vector.shape_cast %160 : vector<1x3x16xf32> to vector<3x16xf32>
    %cst_71 = arith.constant dense<0.000000e+00> : vector<3x512xf32>
    %162 = tpu.matmul %161, %59, %cst_71 {dimension_numbers = #tpu.dot_dimension_numbers<[1], [0], [0], [1], [0, 0, 1, 1], [], []>} : vector<3x16xf32>, vector<16x512xf32>, vector<3x512xf32> -> vector<3x512xf32>
    %163 = arith.addf %159, %162 : vector<3x512xf32>
    %c15 = arith.constant 15 : index
    %c0_72 = arith.constant 0 : index
    %c0_73 = arith.constant 0 : index
    %164 = vector.load %arg2[%c15, %c0_72, %c0_73] : memref<16x3x16xf32, #tpu.memory_space<vmem>>, vector<1x3x16xf32>
    %165 = vector.shape_cast %164 : vector<1x3x16xf32> to vector<3x16xf32>
    %cst_74 = arith.constant dense<0.000000e+00> : vector<3x512xf32>
    %166 = tpu.matmul %165, %1, %cst_74 {dimension_numbers = #tpu.dot_dimension_numbers<[1], [0], [0], [1], [0, 0, 1, 1], [], []>} : vector<3x16xf32>, vector<16x512xf32>, vector<3x512xf32> -> vector<3x512xf32>
    %167 = arith.addf %163, %166 : vector<3x512xf32>
    %168 = vector.broadcast %93 : vector<3x1xf32> to vector<3x512xf32>
    %169 = arith.addf %167, %168 : vector<3x512xf32>
    %170 = math.tanh %112 : vector<3x512xf32>
    %171 = math.tanh %131 : vector<3x512xf32>
    %172 = math.tanh %150 : vector<3x512xf32>
    %173 = math.tanh %169 : vector<3x512xf32>
    %c0_75 = arith.constant 0 : index
    %c0_76 = arith.constant 0 : index
    %c0_77 = arith.constant 0 : index
    %174 = vector.load %arg6[%c0_75, %c0_76, %c0_77] : memref<4x3x512xf32, #tpu.memory_space<vmem>>, vector<1x3x512xf32>
    %175 = vector.shape_cast %174 : vector<1x3x512xf32> to vector<3x512xf32>
    %176 = vector.shape_cast %170 : vector<3x512xf32> to vector<1x3x512xf32>
    tpu.vector_store %arg6[%c0_75, %c0_76, %c0_77], %176 {strides = array<i32>} : memref<4x3x512xf32, #tpu.memory_space<vmem>>, vector<1x3x512xf32>,
    %c1_78 = arith.constant 1 : index
    %c0_79 = arith.constant 0 : index
    %c0_80 = arith.constant 0 : index
    %177 = vector.load %arg6[%c1_78, %c0_79, %c0_80] : memref<4x3x512xf32, #tpu.memory_space<vmem>>, vector<1x3x512xf32>
    %178 = vector.shape_cast %177 : vector<1x3x512xf32> to vector<3x512xf32>
    %179 = vector.shape_cast %171 : vector<3x512xf32> to vector<1x3x512xf32>
    tpu.vector_store %arg6[%c1_78, %c0_79, %c0_80], %179 {strides = array<i32>} : memref<4x3x512xf32, #tpu.memory_space<vmem>>, vector<1x3x512xf32>,
    %c2_81 = arith.constant 2 : index
    %c0_82 = arith.constant 0 : index
    %c0_83 = arith.constant 0 : index
    %180 = vector.load %arg6[%c2_81, %c0_82, %c0_83] : memref<4x3x512xf32, #tpu.memory_space<vmem>>, vector<1x3x512xf32>
    %181 = vector.shape_cast %180 : vector<1x3x512xf32> to vector<3x512xf32>
    %182 = vector.shape_cast %172 : vector<3x512xf32> to vector<1x3x512xf32>
    tpu.vector_store %arg6[%c2_81, %c0_82, %c0_83], %182 {strides = array<i32>} : memref<4x3x512xf32, #tpu.memory_space<vmem>>, vector<1x3x512xf32>,
    %c3_84 = arith.constant 3 : index
    %c0_85 = arith.constant 0 : index
    %c0_86 = arith.constant 0 : index
    %183 = vector.load %arg6[%c3_84, %c0_85, %c0_86] : memref<4x3x512xf32, #tpu.memory_space<vmem>>, vector<1x3x512xf32>
    %184 = vector.shape_cast %183 : vector<1x3x512xf32> to vector<3x512xf32>
    %185 = vector.shape_cast %173 : vector<3x512xf32> to vector<1x3x512xf32>
    tpu.vector_store %arg6[%c3_84, %c0_85, %c0_86], %185 {strides = array<i32>} : memref<4x3x512xf32, #tpu.memory_space<vmem>>, vector<1x3x512xf32>,
    return
  }
  func.func @transform_0(%arg0: i32) -> (i32, i32) {
    %c0_i32 = arith.constant 0 : i32
    %c0_i32_0 = arith.constant 0 : i32
    %c0_i32_1 = arith.constant 0 : i32
    return %c0_i32, %c0_i32_0 : i32, i32
  }
  func.func @transform_1(%arg0: i32) -> (i32, i32, i32) {
    %c0_i32 = arith.constant 0 : i32
    %c0_i32_0 = arith.constant 0 : i32
    %c0_i32_1 = arith.constant 0 : i32
    %c0_i32_2 = arith.constant 0 : i32
    return %c0_i32, %c0_i32_0, %c0_i32_1 : i32, i32, i32
  }
  func.func @transform_2(%arg0: i32) -> (i32, i32) {
    %c0_i32 = arith.constant 0 : i32
    %c0_i32_0 = arith.constant 0 : i32
    %c0_i32_1 = arith.constant 0 : i32
    return %c0_i32, %c0_i32_0 : i32, i32
  }
  func.func @transform_3(%arg0: i32) -> (i32, i32) {
    %c0_i32 = arith.constant 0 : i32
    %c0_i32_0 = arith.constant 0 : i32
    %c0_i32_1 = arith.constant 0 : i32
    return %c0_i32, %c0_i32_0 : i32, i32
  }
  func.func @transform_4(%arg0: i32) -> (i32, i32) {
    %c0_i32 = arith.constant 0 : i32
    %c0_i32_0 = arith.constant 0 : i32
    %c0_i32_1 = arith.constant 0 : i32
    return %c0_i32, %c0_i32_0 : i32, i32
  }
  func.func @transform_5(%arg0: i32) -> (i32, i32, i32) {
    %c0_i32 = arith.constant 0 : i32
    %c0_i32_0 = arith.constant 0 : i32
    %c0_i32_1 = arith.constant 0 : i32
    %c0_i32_2 = arith.constant 0 : i32
    return %c0_i32, %c0_i32_0, %c0_i32_1 : i32, i32, i32
  }
}

</mosaic_0001>

<llo_original>
// kernel: generator_forward.5
$region0: #{generator_forward.5}
  #allocation0 [shape = 'u32[]', space=smem, size = 0x4, offset = 0x4, fixed_abs, tag = 'smem constant byte address 0x4 - core index']
  #allocation1 [shape = 'u32[72,128]{1,0:T(1,128)}', space=vmem, size = 0x9000, scoped, tag = 'internal scratch']
  %s0 = inlined_call_operand.vmem [shape: bf16[64,32], index: 0, kind: input, shape index: {}]
  %s1 = inlined_call_operand.hbm [shape: f32[16,32,64], index: 1, kind: input, shape index: {}]
  %s2 = inlined_call_operand.vmem [shape: f32[32,1], index: 2, kind: input, shape index: {}]
  %s3 = inlined_call_operand.vmem [shape: f32[32,1], index: 3, kind: input, shape index: {}]
  %s4 = inlined_call_operand.vmem [shape: f32[32,1], index: 4, kind: input, shape index: {}]
  %s5 = inlined_call_operand.vmem [shape: bf16[4,32,32], index: 5, kind: output, shape index: {}]
  %s6 = sld [smem:[#allocation0]]
  $region34: #{generator_forward.5} parent=0
    _
  %s8 = ssub.s32 1, %s6
  %s9 = scalar_select 0, %s8, %s6
  $region1: #{generator_forward.5} parent=0
    #allocation2 [shape = 'u8[262144]{0}', space=vmem, size = 0x40000, scoped, tag = 'input window, operand 1, single buffered']
    #allocation3 [shape = 's32[1]{0}', space=sflag, size = 0x4, scoped, tag = 'scoped memory for generator_forward.5']
    %10 = vsyncpa [#allocation3], 0
    // Predicated region
    $region2: #{generator_forward.5} parent=1 // pred_check
      _
    $region3: #{generator_forward.5} parent=1 // pred_check_branch
      %12 = sbr.rel (0) target = $region5
    $region4: #{generator_forward.5} parent=1 // pred_region
      _
    $region5: #{generator_forward.5} parent=1 // pred_fallthru
      _
    // Predicated region
    $region6: #{generator_forward.5} parent=1 // pred_check
      _
    $region7: #{generator_forward.5} parent=1 // pred_check_branch
      %14 = sbr.rel (0) target = $region9
    $region8: #{generator_forward.5} parent=1 // pred_region
      %16 = vsyncadd [#allocation3], 0
      %s17 = sshll.u32 %s1, 4
      %s18 = int_to_ptr.hbm [resolvable:$true] %s17
      %s19 = sshll.u32 [#allocation2], 4
      %s20 = int_to_ptr.vmem [resolvable:$true] %s19
      %25 = dma.hbm_to_vmem [thread:$0]  %s18, 8192, %s20, [#allocation3], 128, 128, 8
    $region9: #{generator_forward.5} parent=1 // pred_fallthru
      _
    // Predicated region
    $region10: #{generator_forward.5} parent=1 // pred_check
      _
    $region11: #{generator_forward.5} parent=1 // pred_check_branch
      %27 = sbr.rel (0) target = $region13
    $region12: #{generator_forward.5} parent=1 // pred_region
      _
    $region13: #{generator_forward.5} parent=1 // pred_fallthru
      _
    // Predicated region
    $region14: #{generator_forward.5} parent=1 // pred_check
      _
    $region15: #{generator_forward.5} parent=1 // pred_check_branch
      %29 = sbr.rel (0) target = $region17
    $region16: #{generator_forward.5} parent=1 // pred_region
      _
    $region17: #{generator_forward.5} parent=1 // pred_fallthru
      _
    // Predicated region
    $region18: #{generator_forward.5} parent=1 // pred_check
      _
    $region19: #{generator_forward.5} parent=1 // pred_check_branch
      %31 = sbr.rel (0) target = $region21
    $region20: #{generator_forward.5} parent=1 // pred_region
      _
    $region21: #{generator_forward.5} parent=1 // pred_fallthru
      _
    // Predicated region
    $region22: #{generator_forward.5} parent=1 // pred_check
      _
    $region23: #{generator_forward.5} parent=1 // pred_check_branch
      %33 = sbr.rel (0) target = $region25
    $region24: #{generator_forward.5} parent=1 // pred_region
      %35 = dma.done [#allocation3], 8192
    $region25: #{generator_forward.5} parent=1 // pred_fallthru
      _
    %v36 = vld [vmem:[%s0] sm:$0xf]
    %v37 = vld [vmem:[%s0 + $0x4] sm:$0xf]
    %v38 = vld [vmem:[%s0 + $0x8] sm:$0xf]
    %v39 = vld [vmem:[%s0 + $0xc] sm:$0xf]
    %v40 = vld [vmem:[%s0 + $0x10] sm:$0xf]
    %v41 = vld [vmem:[%s0 + $0x14] sm:$0xf]
    %v42 = vld [vmem:[%s0 + $0x18] sm:$0xf]
    %v43 = vld [vmem:[%s0 + $0x1c] sm:$0xf]
    %v44 = vunpack.c.l.bf16 %v36
    %v45 = vunpack.c.l.bf16 %v37
    %v46 = vunpack.c.l.bf16 %v38
    %v47 = vunpack.c.l.bf16 %v39
    %v48 = vunpack.c.l.bf16 %v40
    %v49 = vunpack.c.l.bf16 %v41
    %v50 = vunpack.c.l.bf16 %v42
    %v51 = vunpack.c.l.bf16 %v43
    %v52 = vlaneseq
    %v53 = vand.u32 %v52, 127
    %v54 = vand.u32 %v53, 3
    %v55 = vshra.s32 %v53, 2
    %v56 = vand.u32 %v55, 3
    %65 = vrot.lane.b32.xlu0 %v44, 5
    %v66 = vpop.permute.xlu0 %65
    %67 = vrot.lane.b32.xlu0 %v45, 5
    %v68 = vpop.permute.xlu0 %67
    %69 = vrot.lane.b32.xlu0 %v46, 5
    %v70 = vpop.permute.xlu0 %69
    %71 = vrot.lane.b32.xlu0 %v47, 5
    %v72 = vpop.permute.xlu0 %71
    %73 = vrot.lane.b32.xlu0 %v48, 5
    %v74 = vpop.permute.xlu0 %73
    %75 = vrot.lane.b32.xlu0 %v49, 5
    %v76 = vpop.permute.xlu0 %75
    %77 = vrot.lane.b32.xlu0 %v50, 5
    %v78 = vpop.permute.xlu0 %77
    %79 = vrot.lane.b32.xlu0 %v51, 5
    %v80 = vpop.permute.xlu0 %79
    %vm89 = vcmask 39936
    %v90 = vsel %vm89, 0.0, %v66
    %v91 = vsel %vm89, 0.0, %v68
    %v92 = vsel %vm89, 0.0, %v70
    %v93 = vsel %vm89, 0.0, %v72
    %v94 = vsel %vm89, 0.0, %v74
    %v95 = vsel %vm89, 0.0, %v76
    %v96 = vsel %vm89, 0.0, %v78
    %v97 = vsel %vm89, 0.0, %v80
    %vm98 = vcmp.ge.s32.totalorder %v56, 1
    %vm99 = vcmp.ge.s32.totalorder %v54, 1
    %vm100 = vmand %vm98, %vm99
    %v101 = vsel %vm100, 1, 0
    %v102 = vcvt.s32.f32 %v101
    %v103 = vmul.f32 %v90, %v102
    %v104 = vmul.f32 %v91, %v102
    %v105 = vmul.f32 %v92, %v102
    %v106 = vmul.f32 %v93, %v102
    %v107 = vmul.f32 %v94, %v102
    %v108 = vmul.f32 %v95, %v102
    %v109 = vmul.f32 %v96, %v102
    %v110 = vmul.f32 %v97, %v102
    %111 = vrot.lane.b32.xlu0 %v44, 4
    %v112 = vpop.permute.xlu0 %111
    %113 = vrot.lane.b32.xlu0 %v45, 4
    %v114 = vpop.permute.xlu0 %113
    %115 = vrot.lane.b32.xlu0 %v46, 4
    %v116 = vpop.permute.xlu0 %115
    %117 = vrot.lane.b32.xlu0 %v47, 4
    %v118 = vpop.permute.xlu0 %117
    %119 = vrot.lane.b32.xlu0 %v48, 4
    %v120 = vpop.permute.xlu0 %119
    %121 = vrot.lane.b32.xlu0 %v49, 4
    %v122 = vpop.permute.xlu0 %121
    %123 = vrot.lane.b32.xlu0 %v50, 4
    %v124 = vpop.permute.xlu0 %123
    %125 = vrot.lane.b32.xlu0 %v51, 4
    %v126 = vpop.permute.xlu0 %125
    %vm135 = vcmask 31744
    %v136 = vsel %vm135, 0.0, %v112
    %v137 = vsel %vm135, 0.0, %v114
    %v138 = vsel %vm135, 0.0, %v116
    %v139 = vsel %vm135, 0.0, %v118
    %v140 = vsel %vm135, 0.0, %v120
    %v141 = vsel %vm135, 0.0, %v122
    %v142 = vsel %vm135, 0.0, %v124
    %v143 = vsel %vm135, 0.0, %v126
    %v144 = vsel %vm98, 1, 0
    %v145 = vcvt.s32.f32 %v144
    %v146 = vmul.f32 %v136, %v145
    %v147 = vmul.f32 %v137, %v145
    %v148 = vmul.f32 %v138, %v145
    %v149 = vmul.f32 %v139, %v145
    %v150 = vmul.f32 %v140, %v145
    %v151 = vmul.f32 %v141, %v145
    %v152 = vmul.f32 %v142, %v145
    %v153 = vmul.f32 %v143, %v145
    %154 = vrot.lane.b32.xlu0 %v44, 3
    %v155 = vpop.permute.xlu0 %154
    %156 = vrot.lane.b32.xlu0 %v45, 3
    %v157 = vpop.permute.xlu0 %156
    %158 = vrot.lane.b32.xlu0 %v46, 3
    %v159 = vpop.permute.xlu0 %158
    %160 = vrot.lane.b32.xlu0 %v47, 3
    %v161 = vpop.permute.xlu0 %160
    %162 = vrot.lane.b32.xlu0 %v48, 3
    %v163 = vpop.permute.xlu0 %162
    %164 = vrot.lane.b32.xlu0 %v49, 3
    %v165 = vpop.permute.xlu0 %164
    %166 = vrot.lane.b32.xlu0 %v50, 3
    %v167 = vpop.permute.xlu0 %166
    %168 = vrot.lane.b32.xlu0 %v51, 3
    %v169 = vpop.permute.xlu0 %168
    %vm178 = vcmask 23552
    %v179 = vsel %vm178, 0.0, %v155
    %v180 = vsel %vm178, 0.0, %v157
    %v181 = vsel %vm178, 0.0, %v159
    %v182 = vsel %vm178, 0.0, %v161
    %v183 = vsel %vm178, 0.0, %v163
    %v184 = vsel %vm178, 0.0, %v165
    %v185 = vsel %vm178, 0.0, %v167
    %v186 = vsel %vm178, 0.0, %v169
    %vm187 = vcmp.lt.s32.totalorder %v54, 3
    %vm188 = vmand %vm98, %vm187
    %v189 = vsel %vm188, 1, 0
    %v190 = vcvt.s32.f32 %v189
    %v191 = vmul.f32 %v179, %v190
    %v192 = vmul.f32 %v180, %v190
    %v193 = vmul.f32 %v181, %v190
    %v194 = vmul.f32 %v182, %v190
    %v195 = vmul.f32 %v183, %v190
    %v196 = vmul.f32 %v184, %v190
    %v197 = vmul.f32 %v185, %v190
    %v198 = vmul.f32 %v186, %v190
    %199 = vrot.lane.b32.xlu0 %v44, 1
    %v200 = vpop.permute.xlu0 %199
    %201 = vrot.lane.b32.xlu0 %v45, 1
    %v202 = vpop.permute.xlu0 %201
    %203 = vrot.lane.b32.xlu0 %v46, 1
    %v204 = vpop.permute.xlu0 %203
    %205 = vrot.lane.b32.xlu0 %v47, 1
    %v206 = vpop.permute.xlu0 %205
    %207 = vrot.lane.b32.xlu0 %v48, 1
    %v208 = vpop.permute.xlu0 %207
    %209 = vrot.lane.b32.xlu0 %v49, 1
    %v210 = vpop.permute.xlu0 %209
    %211 = vrot.lane.b32.xlu0 %v50, 1
    %v212 = vpop.permute.xlu0 %211
    %213 = vrot.lane.b32.xlu0 %v51, 1
    %v214 = vpop.permute.xlu0 %213
    %vm223 = vcmask 7168
    %v224 = vsel %vm223, 0.0, %v200
    %v225 = vsel %vm223, 0.0, %v202
    %v226 = vsel %vm223, 0.0, %v204
    %v227 = vsel %vm223, 0.0, %v206
    %v228 = vsel %vm223, 0.0, %v208
    %v229 = vsel %vm223, 0.0, %v210
    %v230 = vsel %vm223, 0.0, %v212
    %v231 = vsel %vm223, 0.0, %v214
    %v232 = vsel %vm99, 1, 0
    %v233 = vcvt.s32.f32 %v232
    %v234 = vmul.f32 %v224, %v233
    %v235 = vmul.f32 %v225, %v233
    %v236 = vmul.f32 %v226, %v233
    %v237 = vmul.f32 %v227, %v233
    %v238 = vmul.f32 %v228, %v233
    %v239 = vmul.f32 %v229, %v233
    %v240 = vmul.f32 %v230, %v233
    %v241 = vmul.f32 %v231, %v233
    %242 = vrot.lane.b32.xlu0 %v44, 127
    %v243 = vpop.permute.xlu0 %242
    %244 = vrot.lane.b32.xlu0 %v45, 127
    %v245 = vpop.permute.xlu0 %244
    %246 = vrot.lane.b32.xlu0 %v46, 127
    %v247 = vpop.permute.xlu0 %246
    %248 = vrot.lane.b32.xlu0 %v47, 127
    %v249 = vpop.permute.xlu0 %248
    %250 = vrot.lane.b32.xlu0 %v48, 127
    %v251 = vpop.permute.xlu0 %250
    %252 = vrot.lane.b32.xlu0 %v49, 127
    %v253 = vpop.permute.xlu0 %252
    %254 = vrot.lane.b32.xlu0 %v50, 127
    %v255 = vpop.permute.xlu0 %254
    %256 = vrot.lane.b32.xlu0 %v51, 127
    %v257 = vpop.permute.xlu0 %256
    %vm266 = vcmask 252928
    %v267 = vsel %vm266, %v243, 0.0
    %v268 = vsel %vm266, %v245, 0.0
    %v269 = vsel %vm266, %v247, 0.0
    %v270 = vsel %vm266, %v249, 0.0
    %v271 = vsel %vm266, %v251, 0.0
    %v272 = vsel %vm266, %v253, 0.0
    %v273 = vsel %vm266, %v255, 0.0
    %v274 = vsel %vm266, %v257, 0.0
    %v275 = vsel %vm187, 1, 0
    %v276 = vcvt.s32.f32 %v275
    %v277 = vmul.f32 %v267, %v276
    %v278 = vmul.f32 %v268, %v276
    %v279 = vmul.f32 %v269, %v276
    %v280 = vmul.f32 %v270, %v276
    %v281 = vmul.f32 %v271, %v276
    %v282 = vmul.f32 %v272, %v276
    %v283 = vmul.f32 %v273, %v276
    %v284 = vmul.f32 %v274, %v276
    %285 = vrot.lane.b32.xlu0 %v44, 125
    %v286 = vpop.permute.xlu0 %285
    %287 = vrot.lane.b32.xlu0 %v45, 125
    %v288 = vpop.permute.xlu0 %287
    %289 = vrot.lane.b32.xlu0 %v46, 125
    %v290 = vpop.permute.xlu0 %289
    %291 = vrot.lane.b32.xlu0 %v47, 125
    %v292 = vpop.permute.xlu0 %291
    %293 = vrot.lane.b32.xlu0 %v48, 125
    %v294 = vpop.permute.xlu0 %293
    %295 = vrot.lane.b32.xlu0 %v49, 125
    %v296 = vpop.permute.xlu0 %295
    %297 = vrot.lane.b32.xlu0 %v50, 125
    %v298 = vpop.permute.xlu0 %297
    %299 = vrot.lane.b32.xlu0 %v51, 125
    %v300 = vpop.permute.xlu0 %299
    %vm309 = vcmask 236544
    %v310 = vsel %vm309, %v286, 0.0
    %v311 = vsel %vm309, %v288, 0.0
    %v312 = vsel %vm309, %v290, 0.0
    %v313 = vsel %vm309, %v292, 0.0
    %v314 = vsel %vm309, %v294, 0.0
    %v315 = vsel %vm309, %v296, 0.0
    %v316 = vsel %vm309, %v298, 0.0
    %v317 = vsel %vm309, %v300, 0.0
    %vm318 = vcmp.lt.s32.totalorder %v56, 3
    %vm319 = vmand %vm318, %vm99
    %v320 = vsel %vm319, 1, 0
    %v321 = vcvt.s32.f32 %v320
    %v322 = vmul.f32 %v310, %v321
    %v323 = vmul.f32 %v311, %v321
    %v324 = vmul.f32 %v312, %v321
    %v325 = vmul.f32 %v313, %v321
    %v326 = vmul.f32 %v314, %v321
    %v327 = vmul.f32 %v315, %v321
    %v328 = vmul.f32 %v316, %v321
    %v329 = vmul.f32 %v317, %v321
    %330 = vrot.lane.b32.xlu0 %v44, 124
    %v331 = vpop.permute.xlu0 %330
    %332 = vrot.lane.b32.xlu0 %v45, 124
    %v333 = vpop.permute.xlu0 %332
    %334 = vrot.lane.b32.xlu0 %v46, 124
    %v335 = vpop.permute.xlu0 %334
    %336 = vrot.lane.b32.xlu0 %v47, 124
    %v337 = vpop.permute.xlu0 %336
    %338 = vrot.lane.b32.xlu0 %v48, 124
    %v339 = vpop.permute.xlu0 %338
    %340 = vrot.lane.b32.xlu0 %v49, 124
    %v341 = vpop.permute.xlu0 %340
    %342 = vrot.lane.b32.xlu0 %v50, 124
    %v343 = vpop.permute.xlu0 %342
    %344 = vrot.lane.b32.xlu0 %v51, 124
    %v345 = vpop.permute.xlu0 %344
    %vm354 = vcmask 228352
    %v355 = vsel %vm354, %v331, 0.0
    %v356 = vsel %vm354, %v333, 0.0
    %v357 = vsel %vm354, %v335, 0.0
    %v358 = vsel %vm354, %v337, 0.0
    %v359 = vsel %vm354, %v339, 0.0
    %v360 = vsel %vm354, %v341, 0.0
    %v361 = vsel %vm354, %v343, 0.0
    %v362 = vsel %vm354, %v345, 0.0
    %v363 = vsel %vm318, 1, 0
    %v364 = vcvt.s32.f32 %v363
    %v365 = vmul.f32 %v355, %v364
    %v366 = vmul.f32 %v356, %v364
    %v367 = vmul.f32 %v357, %v364
    %v368 = vmul.f32 %v358, %v364
    %v369 = vmul.f32 %v359, %v364
    %v370 = vmul.f32 %v360, %v364
    %v371 = vmul.f32 %v361, %v364
    %v372 = vmul.f32 %v362, %v364
    %373 = vrot.lane.b32.xlu0 %v44, 123
    %v374 = vpop.permute.xlu0 %373
    %375 = vrot.lane.b32.xlu0 %v45, 123
    %v376 = vpop.permute.xlu0 %375
    %377 = vrot.lane.b32.xlu0 %v46, 123
    %v378 = vpop.permute.xlu0 %377
    %379 = vrot.lane.b32.xlu0 %v47, 123
    %v380 = vpop.permute.xlu0 %379
    %381 = vrot.lane.b32.xlu0 %v48, 123
    %v382 = vpop.permute.xlu0 %381
    %383 = vrot.lane.b32.xlu0 %v49, 123
    %v384 = vpop.permute.xlu0 %383
    %385 = vrot.lane.b32.xlu0 %v50, 123
    %v386 = vpop.permute.xlu0 %385
    %387 = vrot.lane.b32.xlu0 %v51, 123
    %v388 = vpop.permute.xlu0 %387
    %vm397 = vcmask 220160
    %v398 = vsel %vm397, %v374, 0.0
    %v399 = vsel %vm397, %v376, 0.0
    %v400 = vsel %vm397, %v378, 0.0
    %v401 = vsel %vm397, %v380, 0.0
    %v402 = vsel %vm397, %v382, 0.0
    %v403 = vsel %vm397, %v384, 0.0
    %v404 = vsel %vm397, %v386, 0.0
    %v405 = vsel %vm397, %v388, 0.0
    %vm406 = vmand %vm318, %vm187
    %v407 = vsel %vm406, 1, 0
    %v408 = vcvt.s32.f32 %v407
    %v409 = vmul.f32 %v398, %v408
    %v410 = vmul.f32 %v399, %v408
    %v411 = vmul.f32 %v400, %v408
    %v412 = vmul.f32 %v401, %v408
    %v413 = vmul.f32 %v402, %v408
    %v414 = vmul.f32 %v403, %v408
    %v415 = vmul.f32 %v404, %v408
    %v416 = vmul.f32 %v405, %v408
    %v417 = vld [vmem:[%s2] sm:$0xff]
    %v418 = vld [vmem:[%s2 + $0x8] sm:$0xff]
    %v419 = vld [vmem:[%s2 + $0x10] sm:$0xff]
    %v420 = vld [vmem:[%s2 + $0x18] sm:$0xff]
    %v421 = vld [vmem:[#allocation2] sm:$0xff]
    %v422 = vld [vmem:[#allocation2 + $0x8] sm:$0xff]
    %v423 = vld [vmem:[#allocation2 + $0x10] sm:$0xff]
    %v424 = vld [vmem:[#allocation2 + $0x18] sm:$0xff]
    %s425 = scalar_lea.vmem [#allocation2], 32
    %v426 = vld [vmem:[%s425] sm:$0xff]
    %v427 = vld [vmem:[%s425 + $0x8] sm:$0xff]
    %v428 = vld [vmem:[%s425 + $0x10] sm:$0xff]
    %v429 = vld [vmem:[%s425 + $0x18] sm:$0xff]
    %vm430 = vcmask 523264
    %v432 = vsel %vm430, %v426, 0
    %v435 = vsel %vm430, %v427, 0
    %v438 = vsel %vm430, %v428, 0
    %v441 = vsel %vm430, %v429, 0
    %443 = vmatpush.msra.mxu0 0.0
    %444 = vmatpush.msra.mxu0 0.0
    %445 = vmatpush.msra.mxu0 0.0
    %446 = vmatpush.msra.mxu0 0.0
    %447 = vmatpush.msra.mxu0 0.0
    %448 = vmatpush.msra.mxu0 0.0
    %449 = vmatpush.msra.mxu0 0.0
    %450 = vmatpush.msra.mxu0 0.0
    %451 = vmatpush.msra.mxu0 %v241
    %452 = vmatpush.msra.mxu0 %v240
    %453 = vmatpush.msra.mxu0 %v239
    %454 = vmatpush.msra.mxu0 %v238
    %455 = vmatpush.msra.mxu0 %v237
    %456 = vmatpush.msra.mxu0 %v236
    %457 = vmatpush.msra.mxu0 %v235
    %458 = vmatpush.msra.mxu0 %v234
    %459 = vmatmul.f32.gmra.mxu0 %v432
    %v460 = vpop.f32.mrf.mxu0
    %v461 = vadd.f32 0.0, %v460
    %462 = vmatmul.f32.gmra.mxu0 %v435
    %v463 = vpop.f32.mrf.mxu0
    %v464 = vadd.f32 0.0, %v463
    %465 = vmatmul.f32.gmra.mxu0 %v438
    %v466 = vpop.f32.mrf.mxu0
    %v467 = vadd.f32 0.0, %v466
    %468 = vmatmul.f32.gmra.mxu0 %v441
    %v469 = vpop.f32.mrf.mxu0
    %v470 = vadd.f32 0.0, %v469
    %471 = vdwg.mxu0
    %v473 = vsel %vm430, %v421, 0
    %v476 = vsel %vm430, %v422, 0
    %v479 = vsel %vm430, %v423, 0
    %v482 = vsel %vm430, %v424, 0
    %484 = vmatpush.msra.mxu0 0.0
    %485 = vmatpush.msra.mxu0 0.0
    %486 = vmatpush.msra.mxu0 0.0
    %487 = vmatpush.msra.mxu0 0.0
    %488 = vmatpush.msra.mxu0 0.0
    %489 = vmatpush.msra.mxu0 0.0
    %490 = vmatpush.msra.mxu0 0.0
    %491 = vmatpush.msra.mxu0 0.0
    %492 = vmatpush.msra.mxu0 %v51
    %493 = vmatpush.msra.mxu0 %v50
    %494 = vmatpush.msra.mxu0 %v49
    %495 = vmatpush.msra.mxu0 %v48
    %496 = vmatpush.msra.mxu0 %v47
    %497 = vmatpush.msra.mxu0 %v46
    %498 = vmatpush.msra.mxu0 %v45
    %499 = vmatpush.msra.mxu0 %v44
    %500 = vmatmul.f32.gmra.mxu0 %v473
    %v501 = vpop.f32.mrf.mxu0
    %v502 = vadd.f32 %v461, %v501
    %503 = vmatmul.f32.gmra.mxu0 %v476
    %v504 = vpop.f32.mrf.mxu0
    %v505 = vadd.f32 %v464, %v504
    %506 = vmatmul.f32.gmra.mxu0 %v479
    %v507 = vpop.f32.mrf.mxu0
    %v508 = vadd.f32 %v467, %v507
    %509 = vmatmul.f32.gmra.mxu0 %v482
    %v510 = vpop.f32.mrf.mxu0
    %v511 = vadd.f32 %v470, %v510
    %512 = vdwg.mxu0
    %s513 = scalar_lea.vmem [#allocation2], 64
    %v514 = vld [vmem:[%s513] sm:$0xff]
    %v515 = vld [vmem:[%s513 + $0x8] sm:$0xff]
    %v516 = vld [vmem:[%s513 + $0x10] sm:$0xff]
    %v517 = vld [vmem:[%s513 + $0x18] sm:$0xff]
    %v519 = vsel %vm430, %v514, 0
    %v522 = vsel %vm430, %v515, 0
    %v525 = vsel %vm430, %v516, 0
    %v528 = vsel %vm430, %v517, 0
    %530 = vmatpush.msra.mxu0 0.0
    %531 = vmatpush.msra.mxu0 0.0
    %532 = vmatpush.msra.mxu0 0.0
    %533 = vmatpush.msra.mxu0 0.0
    %534 = vmatpush.msra.mxu0 0.0
    %535 = vmatpush.msra.mxu0 0.0
    %536 = vmatpush.msra.mxu0 0.0
    %537 = vmatpush.msra.mxu0 0.0
    %538 = vmatpush.msra.mxu0 %v153
    %539 = vmatpush.msra.mxu0 %v152
    %540 = vmatpush.msra.mxu0 %v151
    %541 = vmatpush.msra.mxu0 %v150
    %542 = vmatpush.msra.mxu0 %v149
    %543 = vmatpush.msra.mxu0 %v148
    %544 = vmatpush.msra.mxu0 %v147
    %545 = vmatpush.msra.mxu0 %v146
    %546 = vmatmul.f32.gmra.mxu0 %v519
    %v547 = vpop.f32.mrf.mxu0
    %v548 = vadd.f32 0.0, %v547
    %549 = vmatmul.f32.gmra.mxu0 %v522
    %v550 = vpop.f32.mrf.mxu0
    %v551 = vadd.f32 0.0, %v550
    %552 = vmatmul.f32.gmra.mxu0 %v525
    %v553 = vpop.f32.mrf.mxu0
    %v554 = vadd.f32 0.0, %v553
    %555 = vmatmul.f32.gmra.mxu0 %v528
    %v556 = vpop.f32.mrf.mxu0
    %v557 = vadd.f32 0.0, %v556
    %558 = vdwg.mxu0
    %v559 = vadd.f32 %v502, %v548
    %v560 = vadd.f32 %v505, %v551
    %v561 = vadd.f32 %v508, %v554
    %v562 = vadd.f32 %v511, %v557
    %s563 = scalar_lea.vmem [#allocation2], 96
    %v564 = vld [vmem:[%s563] sm:$0xff]
    %v565 = vld [vmem:[%s563 + $0x8] sm:$0xff]
    %v566 = vld [vmem:[%s563 + $0x10] sm:$0xff]
    %v567 = vld [vmem:[%s563 + $0x18] sm:$0xff]
    %v569 = vsel %vm430, %v564, 0
    %v572 = vsel %vm430, %v565, 0
    %v575 = vsel %vm430, %v566, 0
    %v578 = vsel %vm430, %v567, 0
    %580 = vmatpush.msra.mxu0 0.0
    %581 = vmatpush.msra.mxu0 0.0
    %582 = vmatpush.msra.mxu0 0.0
    %583 = vmatpush.msra.mxu0 0.0
    %584 = vmatpush.msra.mxu0 0.0
    %585 = vmatpush.msra.mxu0 0.0
    %586 = vmatpush.msra.mxu0 0.0
    %587 = vmatpush.msra.mxu0 0.0
    %588 = vmatpush.msra.mxu0 %v110
    %589 = vmatpush.msra.mxu0 %v109
    %590 = vmatpush.msra.mxu0 %v108
    %591 = vmatpush.msra.mxu0 %v107
    %592 = vmatpush.msra.mxu0 %v106
    %593 = vmatpush.msra.mxu0 %v105
    %594 = vmatpush.msra.mxu0 %v104
    %595 = vmatpush.msra.mxu0 %v103
    %596 = vmatmul.f32.gmra.mxu0 %v569
    %v597 = vpop.f32.mrf.mxu0
    %v598 = vadd.f32 0.0, %v597
    %599 = vmatmul.f32.gmra.mxu0 %v572
    %v600 = vpop.f32.mrf.mxu0
    %v601 = vadd.f32 0.0, %v600
    %602 = vmatmul.f32.gmra.mxu0 %v575
    %v603 = vpop.f32.mrf.mxu0
    %v604 = vadd.f32 0.0, %v603
    %605 = vmatmul.f32.gmra.mxu0 %v578
    %v606 = vpop.f32.mrf.mxu0
    %v607 = vadd.f32 0.0, %v606
    %608 = vdwg.mxu0
    %v609 = vadd.f32 %v559, %v598
    %v610 = vadd.f32 %v560, %v601
    %v611 = vadd.f32 %v561, %v604
    %v612 = vadd.f32 %v562, %v607
    %614 = vset.pattern.permute.xlu0 0
    %615 = vperm.xlu0 %614, %v417
    %v616 = vpop.permute.xlu0 %615
    %619 = vset.pattern.permute.xlu0 0
    %620 = vperm.xlu0 %619, %v418
    %v621 = vpop.permute.xlu0 %620
    %624 = vset.pattern.permute.xlu0 0
    %625 = vperm.xlu0 %624, %v419
    %v626 = vpop.permute.xlu0 %625
    %629 = vset.pattern.permute.xlu0 0
    %630 = vperm.xlu0 %629, %v420
    %v631 = vpop.permute.xlu0 %630
    %v633 = vadd.f32 %v609, %v616
    %v634 = vadd.f32 %v610, %v621
    %v635 = vadd.f32 %v611, %v626
    %v636 = vadd.f32 %v612, %v631
    %s637 = scalar_lea.vmem [#allocation2], 128
    %v638 = vld [vmem:[%s637] sm:$0xff]
    %v639 = vld [vmem:[%s637 + $0x8] sm:$0xff]
    %v640 = vld [vmem:[%s637 + $0x10] sm:$0xff]
    %v641 = vld [vmem:[%s637 + $0x18] sm:$0xff]
    %s642 = scalar_lea.vmem [#allocation2], 160
    %v643 = vld [vmem:[%s642] sm:$0xff]
    %v644 = vld [vmem:[%s642 + $0x8] sm:$0xff]
    %v645 = vld [vmem:[%s642 + $0x10] sm:$0xff]
    %v646 = vld [vmem:[%s642 + $0x18] sm:$0xff]
    %v648 = vsel %vm430, %v643, 0
    %v651 = vsel %vm430, %v644, 0
    %v654 = vsel %vm430, %v645, 0
    %v657 = vsel %vm430, %v646, 0
    %659 = vmatpush.msra.mxu0 0.0
    %660 = vmatpush.msra.mxu0 0.0
    %661 = vmatpush.msra.mxu0 0.0
    %662 = vmatpush.msra.mxu0 0.0
    %663 = vmatpush.msra.mxu0 0.0
    %664 = vmatpush.msra.mxu0 0.0
    %665 = vmatpush.msra.mxu0 0.0
    %666 = vmatpush.msra.mxu0 0.0
    %667 = vmatpush.msra.mxu0 %v51
    %668 = vmatpush.msra.mxu0 %v50
    %669 = vmatpush.msra.mxu0 %v49
    %670 = vmatpush.msra.mxu0 %v48
    %671 = vmatpush.msra.mxu0 %v47
    %672 = vmatpush.msra.mxu0 %v46
    %673 = vmatpush.msra.mxu0 %v45
    %674 = vmatpush.msra.mxu0 %v44
    %675 = vmatmul.f32.gmra.mxu0 %v648
    %v676 = vpop.f32.mrf.mxu0
    %v677 = vadd.f32 0.0, %v676
    %678 = vmatmul.f32.gmra.mxu0 %v651
    %v679 = vpop.f32.mrf.mxu0
    %v680 = vadd.f32 0.0, %v679
    %681 = vmatmul.f32.gmra.mxu0 %v654
    %v682 = vpop.f32.mrf.mxu0
    %v683 = vadd.f32 0.0, %v682
    %684 = vmatmul.f32.gmra.mxu0 %v657
    %v685 = vpop.f32.mrf.mxu0
    %v686 = vadd.f32 0.0, %v685
    %687 = vdwg.mxu0
    %v689 = vsel %vm430, %v638, 0
    %v692 = vsel %vm430, %v639, 0
    %v695 = vsel %vm430, %v640, 0
    %v698 = vsel %vm430, %v641, 0
    %700 = vmatpush.msra.mxu0 0.0
    %701 = vmatpush.msra.mxu0 0.0
    %702 = vmatpush.msra.mxu0 0.0
    %703 = vmatpush.msra.mxu0 0.0
    %704 = vmatpush.msra.mxu0 0.0
    %705 = vmatpush.msra.mxu0 0.0
    %706 = vmatpush.msra.mxu0 0.0
    %707 = vmatpush.msra.mxu0 0.0
    %708 = vmatpush.msra.mxu0 %v284
    %709 = vmatpush.msra.mxu0 %v283
    %710 = vmatpush.msra.mxu0 %v282
    %711 = vmatpush.msra.mxu0 %v281
    %712 = vmatpush.msra.mxu0 %v280
    %713 = vmatpush.msra.mxu0 %v279
    %714 = vmatpush.msra.mxu0 %v278
    %715 = vmatpush.msra.mxu0 %v277
    %716 = vmatmul.f32.gmra.mxu0 %v689
    %v717 = vpop.f32.mrf.mxu0
    %v718 = vadd.f32 %v677, %v717
    %719 = vmatmul.f32.gmra.mxu0 %v692
    %v720 = vpop.f32.mrf.mxu0
    %v721 = vadd.f32 %v680, %v720
    %722 = vmatmul.f32.gmra.mxu0 %v695
    %v723 = vpop.f32.mrf.mxu0
    %v724 = vadd.f32 %v683, %v723
    %725 = vmatmul.f32.gmra.mxu0 %v698
    %v726 = vpop.f32.mrf.mxu0
    %v727 = vadd.f32 %v686, %v726
    %728 = vdwg.mxu0
    %s729 = scalar_lea.vmem [#allocation2], 192
    %v730 = vld [vmem:[%s729] sm:$0xff]
    %v731 = vld [vmem:[%s729 + $0x8] sm:$0xff]
    %v732 = vld [vmem:[%s729 + $0x10] sm:$0xff]
    %v733 = vld [vmem:[%s729 + $0x18] sm:$0xff]
    %v735 = vsel %vm430, %v730, 0
    %v738 = vsel %vm430, %v731, 0
    %v741 = vsel %vm430, %v732, 0
    %v744 = vsel %vm430, %v733, 0
    %746 = vmatpush.msra.mxu0 0.0
    %747 = vmatpush.msra.mxu0 0.0
    %748 = vmatpush.msra.mxu0 0.0
    %749 = vmatpush.msra.mxu0 0.0
    %750 = vmatpush.msra.mxu0 0.0
    %751 = vmatpush.msra.mxu0 0.0
    %752 = vmatpush.msra.mxu0 0.0
    %753 = vmatpush.msra.mxu0 0.0
    %754 = vmatpush.msra.mxu0 %v198
    %755 = vmatpush.msra.mxu0 %v197
    %756 = vmatpush.msra.mxu0 %v196
    %757 = vmatpush.msra.mxu0 %v195
    %758 = vmatpush.msra.mxu0 %v194
    %759 = vmatpush.msra.mxu0 %v193
    %760 = vmatpush.msra.mxu0 %v192
    %761 = vmatpush.msra.mxu0 %v191
    %762 = vmatmul.f32.gmra.mxu0 %v735
    %v763 = vpop.f32.mrf.mxu0
    %v764 = vadd.f32 0.0, %v763
    %765 = vmatmul.f32.gmra.mxu0 %v738
    %v766 = vpop.f32.mrf.mxu0
    %v767 = vadd.f32 0.0, %v766
    %768 = vmatmul.f32.gmra.mxu0 %v741
    %v769 = vpop.f32.mrf.mxu0
    %v770 = vadd.f32 0.0, %v769
    %771 = vmatmul.f32.gmra.mxu0 %v744
    %v772 = vpop.f32.mrf.mxu0
    %v773 = vadd.f32 0.0, %v772
    %774 = vdwg.mxu0
    %v775 = vadd.f32 %v718, %v764
    %v776 = vadd.f32 %v721, %v767
    %v777 = vadd.f32 %v724, %v770
    %v778 = vadd.f32 %v727, %v773
    %s779 = scalar_lea.vmem [#allocation2], 224
    %v780 = vld [vmem:[%s779] sm:$0xff]
    %v781 = vld [vmem:[%s779 + $0x8] sm:$0xff]
    %v782 = vld [vmem:[%s779 + $0x10] sm:$0xff]
    %v783 = vld [vmem:[%s779 + $0x18] sm:$0xff]
    %v785 = vsel %vm430, %v780, 0
    %v788 = vsel %vm430, %v781, 0
    %v791 = vsel %vm430, %v782, 0
    %v794 = vsel %vm430, %v783, 0
    %796 = vmatpush.msra.mxu0 0.0
    %797 = vmatpush.msra.mxu0 0.0
    %798 = vmatpush.msra.mxu0 0.0
    %799 = vmatpush.msra.mxu0 0.0
    %800 = vmatpush.msra.mxu0 0.0
    %801 = vmatpush.msra.mxu0 0.0
    %802 = vmatpush.msra.mxu0 0.0
    %803 = vmatpush.msra.mxu0 0.0
    %804 = vmatpush.msra.mxu0 %v153
    %805 = vmatpush.msra.mxu0 %v152
    %806 = vmatpush.msra.mxu0 %v151
    %807 = vmatpush.msra.mxu0 %v150
    %808 = vmatpush.msra.mxu0 %v149
    %809 = vmatpush.msra.mxu0 %v148
    %810 = vmatpush.msra.mxu0 %v147
    %811 = vmatpush.msra.mxu0 %v146
    %812 = vmatmul.f32.gmra.mxu0 %v785
    %v813 = vpop.f32.mrf.mxu0
    %v814 = vadd.f32 0.0, %v813
    %815 = vmatmul.f32.gmra.mxu0 %v788
    %v816 = vpop.f32.mrf.mxu0
    %v817 = vadd.f32 0.0, %v816
    %818 = vmatmul.f32.gmra.mxu0 %v791
    %v819 = vpop.f32.mrf.mxu0
    %v820 = vadd.f32 0.0, %v819
    %821 = vmatmul.f32.gmra.mxu0 %v794
    %v822 = vpop.f32.mrf.mxu0
    %v823 = vadd.f32 0.0, %v822
    %824 = vdwg.mxu0
    %v825 = vadd.f32 %v775, %v814
    %v826 = vadd.f32 %v776, %v817
    %v827 = vadd.f32 %v777, %v820
    %v828 = vadd.f32 %v778, %v823
    %v829 = vadd.f32 %v825, %v616
    %v830 = vadd.f32 %v826, %v621
    %v831 = vadd.f32 %v827, %v626
    %v832 = vadd.f32 %v828, %v631
    %s833 = scalar_lea.vmem [#allocation2], 256
    %v834 = vld [vmem:[%s833] sm:$0xff]
    %v835 = vld [vmem:[%s833 + $0x8] sm:$0xff]
    %v836 = vld [vmem:[%s833 + $0x10] sm:$0xff]
    %v837 = vld [vmem:[%s833 + $0x18] sm:$0xff]
    %s838 = scalar_lea.vmem [#allocation2], 288
    %v839 = vld [vmem:[%s838] sm:$0xff]
    %v840 = vld [vmem:[%s838 + $0x8] sm:$0xff]
    %v841 = vld [vmem:[%s838 + $0x10] sm:$0xff]
    %v842 = vld [vmem:[%s838 + $0x18] sm:$0xff]
    %v844 = vsel %vm430, %v839, 0
    %v847 = vsel %vm430, %v840, 0
    %v850 = vsel %vm430, %v841, 0
    %v853 = vsel %vm430, %v842, 0
    %855 = vmatpush.msra.mxu0 0.0
    %856 = vmatpush.msra.mxu0 0.0
    %857 = vmatpush.msra.mxu0 0.0
    %858 = vmatpush.msra.mxu0 0.0
    %859 = vmatpush.msra.mxu0 0.0
    %860 = vmatpush.msra.mxu0 0.0
    %861 = vmatpush.msra.mxu0 0.0
    %862 = vmatpush.msra.mxu0 0.0
    %863 = vmatpush.msra.mxu0 %v329
    %864 = vmatpush.msra.mxu0 %v328
    %865 = vmatpush.msra.mxu0 %v327
    %866 = vmatpush.msra.mxu0 %v326
    %867 = vmatpush.msra.mxu0 %v325
    %868 = vmatpush.msra.mxu0 %v324
    %869 = vmatpush.msra.mxu0 %v323
    %870 = vmatpush.msra.mxu0 %v322
    %871 = vmatmul.f32.gmra.mxu0 %v844
    %v872 = vpop.f32.mrf.mxu0
    %v873 = vadd.f32 0.0, %v872
    %874 = vmatmul.f32.gmra.mxu0 %v847
    %v875 = vpop.f32.mrf.mxu0
    %v876 = vadd.f32 0.0, %v875
    %877 = vmatmul.f32.gmra.mxu0 %v850
    %v878 = vpop.f32.mrf.mxu0
    %v879 = vadd.f32 0.0, %v878
    %880 = vmatmul.f32.gmra.mxu0 %v853
    %v881 = vpop.f32.mrf.mxu0
    %v882 = vadd.f32 0.0, %v881
    %883 = vdwg.mxu0
    %v885 = vsel %vm430, %v834, 0
    %v888 = vsel %vm430, %v835, 0
    %v891 = vsel %vm430, %v836, 0
    %v894 = vsel %vm430, %v837, 0
    %896 = vmatpush.msra.mxu0 0.0
    %897 = vmatpush.msra.mxu0 0.0
    %898 = vmatpush.msra.mxu0 0.0
    %899 = vmatpush.msra.mxu0 0.0
    %900 = vmatpush.msra.mxu0 0.0
    %901 = vmatpush.msra.mxu0 0.0
    %902 = vmatpush.msra.mxu0 0.0
    %903 = vmatpush.msra.mxu0 0.0
    %904 = vmatpush.msra.mxu0 %v372
    %905 = vmatpush.msra.mxu0 %v371
    %906 = vmatpush.msra.mxu0 %v370
    %907 = vmatpush.msra.mxu0 %v369
    %908 = vmatpush.msra.mxu0 %v368
    %909 = vmatpush.msra.mxu0 %v367
    %910 = vmatpush.msra.mxu0 %v366
    %911 = vmatpush.msra.mxu0 %v365
    %912 = vmatmul.f32.gmra.mxu0 %v885
    %v913 = vpop.f32.mrf.mxu0
    %v914 = vadd.f32 %v873, %v913
    %915 = vmatmul.f32.gmra.mxu0 %v888
    %v916 = vpop.f32.mrf.mxu0
    %v917 = vadd.f32 %v876, %v916
    %918 = vmatmul.f32.gmra.mxu0 %v891
    %v919 = vpop.f32.mrf.mxu0
    %v920 = vadd.f32 %v879, %v919
    %921 = vmatmul.f32.gmra.mxu0 %v894
    %v922 = vpop.f32.mrf.mxu0
    %v923 = vadd.f32 %v882, %v922
    %924 = vdwg.mxu0
    %s925 = scalar_lea.vmem [#allocation2], 320
    %v926 = vld [vmem:[%s925] sm:$0xff]
    %v927 = vld [vmem:[%s925 + $0x8] sm:$0xff]
    %v928 = vld [vmem:[%s925 + $0x10] sm:$0xff]
    %v929 = vld [vmem:[%s925 + $0x18] sm:$0xff]
    %v931 = vsel %vm430, %v926, 0
    %v934 = vsel %vm430, %v927, 0
    %v937 = vsel %vm430, %v928, 0
    %v940 = vsel %vm430, %v929, 0
    %942 = vmatpush.msra.mxu0 0.0
    %943 = vmatpush.msra.mxu0 0.0
    %944 = vmatpush.msra.mxu0 0.0
    %945 = vmatpush.msra.mxu0 0.0
    %946 = vmatpush.msra.mxu0 0.0
    %947 = vmatpush.msra.mxu0 0.0
    %948 = vmatpush.msra.mxu0 0.0
    %949 = vmatpush.msra.mxu0 0.0
    %950 = vmatpush.msra.mxu0 %v51
    %951 = vmatpush.msra.mxu0 %v50
    %952 = vmatpush.msra.mxu0 %v49
    %953 = vmatpush.msra.mxu0 %v48
    %954 = vmatpush.msra.mxu0 %v47
    %955 = vmatpush.msra.mxu0 %v46
    %956 = vmatpush.msra.mxu0 %v45
    %957 = vmatpush.msra.mxu0 %v44
    %958 = vmatmul.f32.gmra.mxu0 %v931
    %v959 = vpop.f32.mrf.mxu0
    %v960 = vadd.f32 0.0, %v959
    %961 = vmatmul.f32.gmra.mxu0 %v934
    %v962 = vpop.f32.mrf.mxu0
    %v963 = vadd.f32 0.0, %v962
    %964 = vmatmul.f32.gmra.mxu0 %v937
    %v965 = vpop.f32.mrf.mxu0
    %v966 = vadd.f32 0.0, %v965
    %967 = vmatmul.f32.gmra.mxu0 %v940
    %v968 = vpop.f32.mrf.mxu0
    %v969 = vadd.f32 0.0, %v968
    %970 = vdwg.mxu0
    %v971 = vadd.f32 %v914, %v960
    %v972 = vadd.f32 %v917, %v963
    %v973 = vadd.f32 %v920, %v966
    %v974 = vadd.f32 %v923, %v969
    %s975 = scalar_lea.vmem [#allocation2], 352
    %v976 = vld [vmem:[%s975] sm:$0xff]
    %v977 = vld [vmem:[%s975 + $0x8] sm:$0xff]
    %v978 = vld [vmem:[%s975 + $0x10] sm:$0xff]
    %v979 = vld [vmem:[%s975 + $0x18] sm:$0xff]
    %v981 = vsel %vm430, %v976, 0
    %v984 = vsel %vm430, %v977, 0
    %v987 = vsel %vm430, %v978, 0
    %v990 = vsel %vm430, %v979, 0
    %992 = vmatpush.msra.mxu0 0.0
    %993 = vmatpush.msra.mxu0 0.0
    %994 = vmatpush.msra.mxu0 0.0
    %995 = vmatpush.msra.mxu0 0.0
    %996 = vmatpush.msra.mxu0 0.0
    %997 = vmatpush.msra.mxu0 0.0
    %998 = vmatpush.msra.mxu0 0.0
    %999 = vmatpush.msra.mxu0 0.0
    %1000 = vmatpush.msra.mxu0 %v241
    %1001 = vmatpush.msra.mxu0 %v240
    %1002 = vmatpush.msra.mxu0 %v239
    %1003 = vmatpush.msra.mxu0 %v238
    %1004 = vmatpush.msra.mxu0 %v237
    %1005 = vmatpush.msra.mxu0 %v236
    %1006 = vmatpush.msra.mxu0 %v235
    %1007 = vmatpush.msra.mxu0 %v234
    %1008 = vmatmul.f32.gmra.mxu0 %v981
    %v1009 = vpop.f32.mrf.mxu0
    %v1010 = vadd.f32 0.0, %v1009
    %1011 = vmatmul.f32.gmra.mxu0 %v984
    %v1012 = vpop.f32.mrf.mxu0
    %v1013 = vadd.f32 0.0, %v1012
    %1014 = vmatmul.f32.gmra.mxu0 %v987
    %v1015 = vpop.f32.mrf.mxu0
    %v1016 = vadd.f32 0.0, %v1015
    %1017 = vmatmul.f32.gmra.mxu0 %v990
    %v1018 = vpop.f32.mrf.mxu0
    %v1019 = vadd.f32 0.0, %v1018
    %1020 = vdwg.mxu0
    %v1021 = vadd.f32 %v971, %v1010
    %v1022 = vadd.f32 %v972, %v1013
    %v1023 = vadd.f32 %v973, %v1016
    %v1024 = vadd.f32 %v974, %v1019
    %v1025 = vadd.f32 %v1021, %v616
    %v1026 = vadd.f32 %v1022, %v621
    %v1027 = vadd.f32 %v1023, %v626
    %v1028 = vadd.f32 %v1024, %v631
    %s1029 = scalar_lea.vmem [#allocation2], 384
    %v1030 = vld [vmem:[%s1029] sm:$0xff]
    %v1031 = vld [vmem:[%s1029 + $0x8] sm:$0xff]
    %v1032 = vld [vmem:[%s1029 + $0x10] sm:$0xff]
    %v1033 = vld [vmem:[%s1029 + $0x18] sm:$0xff]
    %s1034 = scalar_lea.vmem [#allocation2], 416
    %v1035 = vld [vmem:[%s1034] sm:$0xff]
    %v1036 = vld [vmem:[%s1034 + $0x8] sm:$0xff]
    %v1037 = vld [vmem:[%s1034 + $0x10] sm:$0xff]
    %v1038 = vld [vmem:[%s1034 + $0x18] sm:$0xff]
    %v1040 = vsel %vm430, %v1035, 0
    %v1043 = vsel %vm430, %v1036, 0
    %v1046 = vsel %vm430, %v1037, 0
    %v1049 = vsel %vm430, %v1038, 0
    %1051 = vmatpush.msra.mxu0 0.0
    %1052 = vmatpush.msra.mxu0 0.0
    %1053 = vmatpush.msra.mxu0 0.0
    %1054 = vmatpush.msra.mxu0 0.0
    %1055 = vmatpush.msra.mxu0 0.0
    %1056 = vmatpush.msra.mxu0 0.0
    %1057 = vmatpush.msra.mxu0 0.0
    %1058 = vmatpush.msra.mxu0 0.0
    %1059 = vmatpush.msra.mxu0 %v372
    %1060 = vmatpush.msra.mxu0 %v371
    %1061 = vmatpush.msra.mxu0 %v370
    %1062 = vmatpush.msra.mxu0 %v369
    %1063 = vmatpush.msra.mxu0 %v368
    %1064 = vmatpush.msra.mxu0 %v367
    %1065 = vmatpush.msra.mxu0 %v366
    %1066 = vmatpush.msra.mxu0 %v365
    %1067 = vmatmul.f32.gmra.mxu0 %v1040
    %v1068 = vpop.f32.mrf.mxu0
    %v1069 = vadd.f32 0.0, %v1068
    %1070 = vmatmul.f32.gmra.mxu0 %v1043
    %v1071 = vpop.f32.mrf.mxu0
    %v1072 = vadd.f32 0.0, %v1071
    %1073 = vmatmul.f32.gmra.mxu0 %v1046
    %v1074 = vpop.f32.mrf.mxu0
    %v1075 = vadd.f32 0.0, %v1074
    %1076 = vmatmul.f32.gmra.mxu0 %v1049
    %v1077 = vpop.f32.mrf.mxu0
    %v1078 = vadd.f32 0.0, %v1077
    %1079 = vdwg.mxu0
    %v1081 = vsel %vm430, %v1030, 0
    %v1084 = vsel %vm430, %v1031, 0
    %v1087 = vsel %vm430, %v1032, 0
    %v1090 = vsel %vm430, %v1033, 0
    %1092 = vmatpush.msra.mxu0 0.0
    %1093 = vmatpush.msra.mxu0 0.0
    %1094 = vmatpush.msra.mxu0 0.0
    %1095 = vmatpush.msra.mxu0 0.0
    %1096 = vmatpush.msra.mxu0 0.0
    %1097 = vmatpush.msra.mxu0 0.0
    %1098 = vmatpush.msra.mxu0 0.0
    %1099 = vmatpush.msra.mxu0 0.0
    %1100 = vmatpush.msra.mxu0 %v416
    %1101 = vmatpush.msra.mxu0 %v415
    %1102 = vmatpush.msra.mxu0 %v414
    %1103 = vmatpush.msra.mxu0 %v413
    %1104 = vmatpush.msra.mxu0 %v412
    %1105 = vmatpush.msra.mxu0 %v411
    %1106 = vmatpush.msra.mxu0 %v410
    %1107 = vmatpush.msra.mxu0 %v409
    %1108 = vmatmul.f32.gmra.mxu0 %v1081
    %v1109 = vpop.f32.mrf.mxu0
    %v1110 = vadd.f32 %v1069, %v1109
    %1111 = vmatmul.f32.gmra.mxu0 %v1084
    %v1112 = vpop.f32.mrf.mxu0
    %v1113 = vadd.f32 %v1072, %v1112
    %1114 = vmatmul.f32.gmra.mxu0 %v1087
    %v1115 = vpop.f32.mrf.mxu0
    %v1116 = vadd.f32 %v1075, %v1115
    %1117 = vmatmul.f32.gmra.mxu0 %v1090
    %v1118 = vpop.f32.mrf.mxu0
    %v1119 = vadd.f32 %v1078, %v1118
    %1120 = vdwg.mxu0
    %s1121 = scalar_lea.vmem [#allocation2], 448
    %v1122 = vld [vmem:[%s1121] sm:$0xff]
    %v1123 = vld [vmem:[%s1121 + $0x8] sm:$0xff]
    %v1124 = vld [vmem:[%s1121 + $0x10] sm:$0xff]
    %v1125 = vld [vmem:[%s1121 + $0x18] sm:$0xff]
    %v1127 = vsel %vm430, %v1122, 0
    %v1130 = vsel %vm430, %v1123, 0
    %v1133 = vsel %vm430, %v1124, 0
    %v1136 = vsel %vm430, %v1125, 0
    %1138 = vmatpush.msra.mxu0 0.0
    %1139 = vmatpush.msra.mxu0 0.0
    %1140 = vmatpush.msra.mxu0 0.0
    %1141 = vmatpush.msra.mxu0 0.0
    %1142 = vmatpush.msra.mxu0 0.0
    %1143 = vmatpush.msra.mxu0 0.0
    %1144 = vmatpush.msra.mxu0 0.0
    %1145 = vmatpush.msra.mxu0 0.0
    %1146 = vmatpush.msra.mxu0 %v284
    %1147 = vmatpush.msra.mxu0 %v283
    %1148 = vmatpush.msra.mxu0 %v282
    %1149 = vmatpush.msra.mxu0 %v281
    %1150 = vmatpush.msra.mxu0 %v280
    %1151 = vmatpush.msra.mxu0 %v279
    %1152 = vmatpush.msra.mxu0 %v278
    %1153 = vmatpush.msra.mxu0 %v277
    %1154 = vmatmul.f32.gmra.mxu0 %v1127
    %v1155 = vpop.f32.mrf.mxu0
    %v1156 = vadd.f32 0.0, %v1155
    %1157 = vmatmul.f32.gmra.mxu0 %v1130
    %v1158 = vpop.f32.mrf.mxu0
    %v1159 = vadd.f32 0.0, %v1158
    %1160 = vmatmul.f32.gmra.mxu0 %v1133
    %v1161 = vpop.f32.mrf.mxu0
    %v1162 = vadd.f32 0.0, %v1161
    %1163 = vmatmul.f32.gmra.mxu0 %v1136
    %v1164 = vpop.f32.mrf.mxu0
    %v1165 = vadd.f32 0.0, %v1164
    %1166 = vdwg.mxu0
    %v1167 = vadd.f32 %v1110, %v1156
    %v1168 = vadd.f32 %v1113, %v1159
    %v1169 = vadd.f32 %v1116, %v1162
    %v1170 = vadd.f32 %v1119, %v1165
    %s1171 = scalar_lea.vmem [#allocation2], 480
    %v1172 = vld [vmem:[%s1171] sm:$0xff]
    %v1173 = vld [vmem:[%s1171 + $0x8] sm:$0xff]
    %v1174 = vld [vmem:[%s1171 + $0x10] sm:$0xff]
    %v1175 = vld [vmem:[%s1171 + $0x18] sm:$0xff]
    %v1177 = vsel %vm430, %v1172, 0
    %v1180 = vsel %vm430, %v1173, 0
    %v1183 = vsel %vm430, %v1174, 0
    %v1186 = vsel %vm430, %v1175, 0
    %1188 = vmatpush.msra.mxu0 0.0
    %1189 = vmatpush.msra.mxu0 0.0
    %1190 = vmatpush.msra.mxu0 0.0
    %1191 = vmatpush.msra.mxu0 0.0
    %1192 = vmatpush.msra.mxu0 0.0
    %1193 = vmatpush.msra.mxu0 0.0
    %1194 = vmatpush.msra.mxu0 0.0
    %1195 = vmatpush.msra.mxu0 0.0
    %1196 = vmatpush.msra.mxu0 %v51
    %1197 = vmatpush.msra.mxu0 %v50
    %1198 = vmatpush.msra.mxu0 %v49
    %1199 = vmatpush.msra.mxu0 %v48
    %1200 = vmatpush.msra.mxu0 %v47
    %1201 = vmatpush.msra.mxu0 %v46
    %1202 = vmatpush.msra.mxu0 %v45
    %1203 = vmatpush.msra.mxu0 %v44
    %1204 = vmatmul.f32.gmra.mxu0 %v1177
    %v1205 = vpop.f32.mrf.mxu0
    %v1206 = vadd.f32 0.0, %v1205
    %1207 = vmatmul.f32.gmra.mxu0 %v1180
    %v1208 = vpop.f32.mrf.mxu0
    %v1209 = vadd.f32 0.0, %v1208
    %1210 = vmatmul.f32.gmra.mxu0 %v1183
    %v1211 = vpop.f32.mrf.mxu0
    %v1212 = vadd.f32 0.0, %v1211
    %1213 = vmatmul.f32.gmra.mxu0 %v1186
    %v1214 = vpop.f32.mrf.mxu0
    %v1215 = vadd.f32 0.0, %v1214
    %1216 = vdwg.mxu0
    %v1217 = vadd.f32 %v1167, %v1206
    %v1218 = vadd.f32 %v1168, %v1209
    %v1219 = vadd.f32 %v1169, %v1212
    %v1220 = vadd.f32 %v1170, %v1215
    %v1221 = vadd.f32 %v1217, %v616
    %v1222 = vadd.f32 %v1218, %v621
    %v1223 = vadd.f32 %v1219, %v626
    %v1224 = vadd.f32 %v1220, %v631
    %v1225 = vadd.f32 %v633, %v829
    %v1226 = vadd.f32 %v634, %v830
    %v1227 = vadd.f32 %v635, %v831
    %v1228 = vadd.f32 %v636, %v832
    %v1229 = vadd.f32 %v1225, %v1025
    %v1230 = vadd.f32 %v1226, %v1026
    %v1231 = vadd.f32 %v1227, %v1027
    %v1232 = vadd.f32 %v1228, %v1028
    %v1233 = vadd.f32 %v1229, %v1221
    %v1234 = vadd.f32 %v1230, %v1222
    %v1235 = vadd.f32 %v1231, %v1223
    %v1236 = vadd.f32 %v1232, %v1224
    %v1237 = vmul.f32 %v633, %v633
    %v1238 = vmul.f32 %v634, %v634
    %v1239 = vmul.f32 %v635, %v635
    %v1240 = vmul.f32 %v636, %v636
    %v1241 = vmul.f32 %v829, %v829
    %v1242 = vmul.f32 %v830, %v830
    %v1243 = vmul.f32 %v831, %v831
    %v1244 = vmul.f32 %v832, %v832
    %v1245 = vadd.f32 %v1237, %v1241
    %v1246 = vadd.f32 %v1238, %v1242
    %v1247 = vadd.f32 %v1239, %v1243
    %v1248 = vadd.f32 %v1240, %v1244
    %v1249 = vmul.f32 %v1025, %v1025
    %v1250 = vmul.f32 %v1026, %v1026
    %v1251 = vmul.f32 %v1027, %v1027
    %v1252 = vmul.f32 %v1028, %v1028
    %v1253 = vadd.f32 %v1245, %v1249
    %v1254 = vadd.f32 %v1246, %v1250
    %v1255 = vadd.f32 %v1247, %v1251
    %v1256 = vadd.f32 %v1248, %v1252
    %v1257 = vmul.f32 %v1221, %v1221
    %v1258 = vmul.f32 %v1222, %v1222
    %v1259 = vmul.f32 %v1223, %v1223
    %v1260 = vmul.f32 %v1224, %v1224
    %v1261 = vadd.f32 %v1253, %v1257
    %v1262 = vadd.f32 %v1254, %v1258
    %v1263 = vadd.f32 %v1255, %v1259
    %v1264 = vadd.f32 %v1256, %v1260
    %vm1265 = vcmask 261120
    %v1266 = vsel %vm1265, %v1233, 0.0
    %1267 = vadd.xlane.f32.xlu0 %v1266
    %v1268 = vpop.xlane.xlu0 %1267
    %v1269 = vsel %vm1265, %v1234, 0.0
    %1270 = vadd.xlane.f32.xlu0 %v1269
    %v1271 = vpop.xlane.xlu0 %1270
    %v1272 = vsel %vm1265, %v1235, 0.0
    %1273 = vadd.xlane.f32.xlu0 %v1272
    %v1274 = vpop.xlane.xlu0 %1273
    %v1275 = vsel %vm1265, %v1236, 0.0
    %1276 = vadd.xlane.f32.xlu0 %v1275
    %v1277 = vpop.xlane.xlu0 %1276
    %v1278 = vrcp.pop 128.0
    %v1279 = vmul.f32 128.0, %v1278
    %v1280 = vsub.f32 1.0, %v1279
    %v1281 = vmul.f32 %v1278, %v1280
    %v1282 = vadd.f32 %v1278, %v1281
    %vm1283 = vweird.f32 %v1278
    %v1284 = vsel %vm1283, %v1278, %v1282
    %v1285 = vmul.f32 %v1268, %v1284
    %v1286 = vmul.f32 %v1271, %v1284
    %v1287 = vmul.f32 %v1274, %v1284
    %v1288 = vmul.f32 %v1277, %v1284
    %v1289 = vsel %vm1265, %v1261, 0.0
    %1290 = vadd.xlane.f32.xlu0 %v1289
    %v1291 = vpop.xlane.xlu0 %1290
    %v1292 = vsel %vm1265, %v1262, 0.0
    %1293 = vadd.xlane.f32.xlu0 %v1292
    %v1294 = vpop.xlane.xlu0 %1293
    %v1295 = vsel %vm1265, %v1263, 0.0
    %1296 = vadd.xlane.f32.xlu0 %v1295
    %v1297 = vpop.xlane.xlu0 %1296
    %v1298 = vsel %vm1265, %v1264, 0.0
    %1299 = vadd.xlane.f32.xlu0 %v1298
    %v1300 = vpop.xlane.xlu0 %1299
    %v1301 = vmul.f32 %v1291, %v1284
    %v1302 = vmul.f32 %v1294, %v1284
    %v1303 = vmul.f32 %v1297, %v1284
    %v1304 = vmul.f32 %v1300, %v1284
    %v1305 = vmul.f32 %v1285, %v1285
    %v1306 = vmul.f32 %v1286, %v1286
    %v1307 = vmul.f32 %v1287, %v1287
    %v1308 = vmul.f32 %v1288, %v1288
    %v1309 = vsub.f32 %v1301, %v1305
    %v1310 = vsub.f32 %v1302, %v1306
    %v1311 = vsub.f32 %v1303, %v1307
    %v1312 = vsub.f32 %v1304, %v1308
    %v1313 = vmax.f32 %v1309, 0.0
    %v1314 = vmax.f32 %v1310, 0.0
    %v1315 = vmax.f32 %v1311, 0.0
    %v1316 = vmax.f32 %v1312, 0.0
    %v1317 = vld [vmem:[%s3] sm:$0xff]
    %v1318 = vld [vmem:[%s3 + $0x8] sm:$0xff]
    %v1319 = vld [vmem:[%s3 + $0x10] sm:$0xff]
    %v1320 = vld [vmem:[%s3 + $0x18] sm:$0xff]
    %v1321 = vadd.f32 %v1313, 1e-05
    %v1322 = vadd.f32 %v1314, 1e-05
    %v1323 = vadd.f32 %v1315, 1e-05
    %v1324 = vadd.f32 %v1316, 1e-05
    %v1325 = vrsqrt.pop %v1321
    %v1326 = vmul.f32 %v1325, %v1321
    %v1327 = vmul.f32 %v1326, %v1325
    %v1328 = vmul.f32 0.5, %v1327
    %v1329 = vsub.f32 1.5, %v1328
    %v1330 = vmul.f32 %v1325, %v1329
    %vm1331 = vweird.f32 %v1321
    %vm1332 = vweird.f32 %v1325
    %vm1333 = vmor %vm1331, %vm1332
    %v1334 = vsel %vm1333, %v1325, %v1330
    %v1335 = vrsqrt.pop %v1322
    %v1336 = vmul.f32 %v1335, %v1322
    %v1337 = vmul.f32 %v1336, %v1335
    %v1338 = vmul.f32 0.5, %v1337
    %v1339 = vsub.f32 1.5, %v1338
    %v1340 = vmul.f32 %v1335, %v1339
    %vm1341 = vweird.f32 %v1322
    %vm1342 = vweird.f32 %v1335
    %vm1343 = vmor %vm1341, %vm1342
    %v1344 = vsel %vm1343, %v1335, %v1340
    %v1345 = vrsqrt.pop %v1323
    %v1346 = vmul.f32 %v1345, %v1323
    %v1347 = vmul.f32 %v1346, %v1345
    %v1348 = vmul.f32 0.5, %v1347
    %v1349 = vsub.f32 1.5, %v1348
    %v1350 = vmul.f32 %v1345, %v1349
    %vm1351 = vweird.f32 %v1323
    %vm1352 = vweird.f32 %v1345
    %vm1353 = vmor %vm1351, %vm1352
    %v1354 = vsel %vm1353, %v1345, %v1350
    %v1355 = vrsqrt.pop %v1324
    %v1356 = vmul.f32 %v1355, %v1324
    %v1357 = vmul.f32 %v1356, %v1355
    %v1358 = vmul.f32 0.5, %v1357
    %v1359 = vsub.f32 1.5, %v1358
    %v1360 = vmul.f32 %v1355, %v1359
    %vm1361 = vweird.f32 %v1324
    %vm1362 = vweird.f32 %v1355
    %vm1363 = vmor %vm1361, %vm1362
    %v1364 = vsel %vm1363, %v1355, %v1360
    %v1365 = vmul.f32 %v1317, %v1334
    %v1366 = vmul.f32 %v1318, %v1344
    %v1367 = vmul.f32 %v1319, %v1354
    %v1368 = vmul.f32 %v1320, %v1364
    %v1369 = vld [vmem:[%s4] sm:$0xff]
    %v1370 = vld [vmem:[%s4 + $0x8] sm:$0xff]
    %v1371 = vld [vmem:[%s4 + $0x10] sm:$0xff]
    %v1372 = vld [vmem:[%s4 + $0x18] sm:$0xff]
    %v1373 = vmul.f32 %v1285, %v1365
    %v1374 = vmul.f32 %v1286, %v1366
    %v1375 = vmul.f32 %v1287, %v1367
    %v1376 = vmul.f32 %v1288, %v1368
    %v1377 = vsub.f32 %v1369, %v1373
    %v1378 = vsub.f32 %v1370, %v1374
    %v1379 = vsub.f32 %v1371, %v1375
    %v1380 = vsub.f32 %v1372, %v1376
    %1382 = vset.pattern.permute.xlu0 0
    %1383 = vperm.xlu0 %1382, %v1365
    %v1384 = vpop.permute.xlu0 %1383
    %1387 = vset.pattern.permute.xlu0 0
    %1388 = vperm.xlu0 %1387, %v1366
    %v1389 = vpop.permute.xlu0 %1388
    %1392 = vset.pattern.permute.xlu0 0
    %1393 = vperm.xlu0 %1392, %v1367
    %v1394 = vpop.permute.xlu0 %1393
    %1397 = vset.pattern.permute.xlu0 0
    %1398 = vperm.xlu0 %1397, %v1368
    %v1399 = vpop.permute.xlu0 %1398
    %v1401 = vmul.f32 %v633, %v1384
    %v1402 = vmul.f32 %v634, %v1389
    %v1403 = vmul.f32 %v635, %v1394
    %v1404 = vmul.f32 %v636, %v1399
    %1406 = vset.pattern.permute.xlu0 0
    %1407 = vperm.xlu0 %1406, %v1377
    %v1408 = vpop.permute.xlu0 %1407
    %1411 = vset.pattern.permute.xlu0 0
    %1412 = vperm.xlu0 %1411, %v1378
    %v1413 = vpop.permute.xlu0 %1412
    %1416 = vset.pattern.permute.xlu0 0
    %1417 = vperm.xlu0 %1416, %v1379
    %v1418 = vpop.permute.xlu0 %1417
    %1421 = vset.pattern.permute.xlu0 0
    %1422 = vperm.xlu0 %1421, %v1380
    %v1423 = vpop.permute.xlu0 %1422
    %v1425 = vadd.f32 %v1401, %v1408
    %v1426 = vadd.f32 %v1402, %v1413
    %v1427 = vadd.f32 %v1403, %v1418
    %v1428 = vadd.f32 %v1404, %v1423
    %v1429 = vmax.f32 %v1425, 0.0
    %v1430 = vmax.f32 %v1426, 0.0
    %v1431 = vmax.f32 %v1427, 0.0
    %v1432 = vmax.f32 %v1428, 0.0
    %v1433 = vmul.f32 %v829, %v1384
    %v1434 = vmul.f32 %v830, %v1389
    %v1435 = vmul.f32 %v831, %v1394
    %v1436 = vmul.f32 %v832, %v1399
    %v1437 = vadd.f32 %v1433, %v1408
    %v1438 = vadd.f32 %v1434, %v1413
    %v1439 = vadd.f32 %v1435, %v1418
    %v1440 = vadd.f32 %v1436, %v1423
    %v1441 = vmax.f32 %v1437, 0.0
    %v1442 = vmax.f32 %v1438, 0.0
    %v1443 = vmax.f32 %v1439, 0.0
    %v1444 = vmax.f32 %v1440, 0.0
    %v1445 = vmul.f32 %v1025, %v1384
    %v1446 = vmul.f32 %v1026, %v1389
    %v1447 = vmul.f32 %v1027, %v1394
    %v1448 = vmul.f32 %v1028, %v1399
    %v1449 = vadd.f32 %v1445, %v1408
    %v1450 = vadd.f32 %v1446, %v1413
    %v1451 = vadd.f32 %v1447, %v1418
    %v1452 = vadd.f32 %v1448, %v1423
    %v1453 = vmax.f32 %v1449, 0.0
    %v1454 = vmax.f32 %v1450, 0.0
    %v1455 = vmax.f32 %v1451, 0.0
    %v1456 = vmax.f32 %v1452, 0.0
    %v1457 = vmul.f32 %v1221, %v1384
    %v1458 = vmul.f32 %v1222, %v1389
    %v1459 = vmul.f32 %v1223, %v1394
    %v1460 = vmul.f32 %v1224, %v1399
    %v1461 = vadd.f32 %v1457, %v1408
    %v1462 = vadd.f32 %v1458, %v1413
    %v1463 = vadd.f32 %v1459, %v1418
    %v1464 = vadd.f32 %v1460, %v1423
    %v1465 = vmax.f32 %v1461, 0.0
    %v1466 = vmax.f32 %v1462, 0.0
    %v1467 = vmax.f32 %v1463, 0.0
    %v1468 = vmax.f32 %v1464, 0.0
    %v1469 = vpack.c.bf16 %v1429, %v1429
    %v1470 = vpack.c.bf16 %v1430, %v1430
    %v1471 = vpack.c.bf16 %v1431, %v1431
    %v1472 = vpack.c.bf16 %v1432, %v1432
    %vm1473 = vcmask 257024
    %1474 = vst.msk [vmem:[%s5] sm:$0xf] %vm1473, %v1469
    %1475 = vst.msk [vmem:[%s5 + $0x4] sm:$0xf] %vm1473, %v1470
    %1476 = vst.msk [vmem:[%s5 + $0x8] sm:$0xf] %vm1473, %v1471
    %1477 = vst.msk [vmem:[%s5 + $0xc] sm:$0xf] %vm1473, %v1472
    %v1478 = vpack.c.bf16 %v1441, %v1441
    %v1479 = vpack.c.bf16 %v1442, %v1442
    %v1480 = vpack.c.bf16 %v1443, %v1443
    %v1481 = vpack.c.bf16 %v1444, %v1444
    %s1482 = scalar_lea.vmem %s5, 16
    %1483 = vst.msk [vmem:[%s1482] sm:$0xf] %vm1473, %v1478
    %1484 = vst.msk [vmem:[%s1482 + $0x4] sm:$0xf] %vm1473, %v1479
    %1485 = vst.msk [vmem:[%s1482 + $0x8] sm:$0xf] %vm1473, %v1480
    %1486 = vst.msk [vmem:[%s1482 + $0xc] sm:$0xf] %vm1473, %v1481
    %v1487 = vpack.c.bf16 %v1453, %v1453
    %v1488 = vpack.c.bf16 %v1454, %v1454
    %v1489 = vpack.c.bf16 %v1455, %v1455
    %v1490 = vpack.c.bf16 %v1456, %v1456
    %s1491 = scalar_lea.vmem %s5, 32
    %1492 = vst.msk [vmem:[%s1491] sm:$0xf] %vm1473, %v1487
    %1493 = vst.msk [vmem:[%s1491 + $0x4] sm:$0xf] %vm1473, %v1488
    %1494 = vst.msk [vmem:[%s1491 + $0x8] sm:$0xf] %vm1473, %v1489
    %1495 = vst.msk [vmem:[%s1491 + $0xc] sm:$0xf] %vm1473, %v1490
    %v1496 = vpack.c.bf16 %v1465, %v1465
    %v1497 = vpack.c.bf16 %v1466, %v1466
    %v1498 = vpack.c.bf16 %v1467, %v1467
    %v1499 = vpack.c.bf16 %v1468, %v1468
    %s1500 = scalar_lea.vmem %s5, 48
    %1501 = vst.msk [vmem:[%s1500] sm:$0xf] %vm1473, %v1496
    %1502 = vst.msk [vmem:[%s1500 + $0x4] sm:$0xf] %vm1473, %v1497
    %1503 = vst.msk [vmem:[%s1500 + $0x8] sm:$0xf] %vm1473, %v1498
    %1504 = vst.msk [vmem:[%s1500 + $0xc] sm:$0xf] %vm1473, %v1499
    // Predicated region
    $region26: #{generator_forward.5} parent=1 // pred_check
      _
    $region27: #{generator_forward.5} parent=1 // pred_check_branch
      %1506 = sbr.rel (0) target = $region29
    $region28: #{generator_forward.5} parent=1 // pred_region
      _
    $region29: #{generator_forward.5} parent=1 // pred_fallthru
      _
    // Predicated region
    $region30: #{generator_forward.5} parent=1 // pred_check
      _
    $region31: #{generator_forward.5} parent=1 // pred_check_branch
      %1508 = sbr.rel (0) target = $region33
    $region32: #{generator_forward.5} parent=1 // pred_region
      _
    $region33: #{generator_forward.5} parent=1 // pred_fallthru
      _
    %1509 = vsyncpa [#allocation3], 1

// kernel: generator_forward.6
$region0: #{generator_forward.6}
  #allocation0 [shape = 'u32[]', space=smem, size = 0x4, offset = 0x4, fixed_abs, tag = 'smem constant byte address 0x4 - core index']
  #allocation1 [shape = 'u32[72,128]{1,0:T(1,128)}', space=vmem, size = 0x9000, scoped, tag = 'internal scratch']
  %s0 = inlined_call_operand.vmem [shape: bf16[32,128], index: 0, kind: input, shape index: {}]
  %s1 = inlined_call_operand.hbm [shape: f32[16,16,32], index: 1, kind: input, shape index: {}]
  %s2 = inlined_call_operand.vmem [shape: f32[16,1], index: 2, kind: input, shape index: {}]
  %s3 = inlined_call_operand.vmem [shape: f32[16,1], index: 3, kind: input, shape index: {}]
  %s4 = inlined_call_operand.vmem [shape: f32[16,1], index: 4, kind: input, shape index: {}]
  %s5 = inlined_call_operand.vmem [shape: bf16[4,16,128], index: 5, kind: output, shape index: {}]
  %s6 = sld [smem:[#allocation0]]
  $region34: #{generator_forward.6} parent=0
    _
  %s8 = ssub.s32 1, %s6
  %s9 = scalar_select 0, %s8, %s6
  $region1: #{generator_forward.6} parent=0
    #allocation2 [shape = 'u8[131072]{0}', space=vmem, size = 0x20000, scoped, tag = 'input window, operand 1, single buffered']
    #allocation3 [shape = 's32[1]{0}', space=sflag, size = 0x4, scoped, tag = 'scoped memory for generator_forward.6']
    %10 = vsyncpa [#allocation3], 0
    // Predicated region
    $region2: #{generator_forward.6} parent=1 // pred_check
      _
    $region3: #{generator_forward.6} parent=1 // pred_check_branch
      %12 = sbr.rel (0) target = $region5
    $region4: #{generator_forward.6} parent=1 // pred_region
      _
    $region5: #{generator_forward.6} parent=1 // pred_fallthru
      _
    // Predicated region
    $region6: #{generator_forward.6} parent=1 // pred_check
      _
    $region7: #{generator_forward.6} parent=1 // pred_check_branch
      %14 = sbr.rel (0) target = $region9
    $region8: #{generator_forward.6} parent=1 // pred_region
      %16 = vsyncadd [#allocation3], 0
      %s17 = sshll.u32 %s1, 4
      %s18 = int_to_ptr.hbm [resolvable:$true] %s17
      %s19 = sshll.u32 [#allocation2], 4
      %s20 = int_to_ptr.vmem [resolvable:$true] %s19
      %25 = dma.hbm_to_vmem [thread:$0]  %s18, 4096, %s20, [#allocation3], 128, 128, 8
    $region9: #{generator_forward.6} parent=1 // pred_fallthru
      _
    // Predicated region
    $region10: #{generator_forward.6} parent=1 // pred_check
      _
    $region11: #{generator_forward.6} parent=1 // pred_check_branch
      %27 = sbr.rel (0) target = $region13
    $region12: #{generator_forward.6} parent=1 // pred_region
      _
    $region13: #{generator_forward.6} parent=1 // pred_fallthru
      _
    // Predicated region
    $region14: #{generator_forward.6} parent=1 // pred_check
      _
    $region15: #{generator_forward.6} parent=1 // pred_check_branch
      %29 = sbr.rel (0) target = $region17
    $region16: #{generator_forward.6} parent=1 // pred_region
      _
    $region17: #{generator_forward.6} parent=1 // pred_fallthru
      _
    // Predicated region
    $region18: #{generator_forward.6} parent=1 // pred_check
      _
    $region19: #{generator_forward.6} parent=1 // pred_check_branch
      %31 = sbr.rel (0) target = $region21
    $region20: #{generator_forward.6} parent=1 // pred_region
      _
    $region21: #{generator_forward.6} parent=1 // pred_fallthru
      _
    // Predicated region
    $region22: #{generator_forward.6} parent=1 // pred_check
      _
    $region23: #{generator_forward.6} parent=1 // pred_check_branch
      %33 = sbr.rel (0) target = $region25
    $region24: #{generator_forward.6} parent=1 // pred_region
      %35 = dma.done [#allocation3], 4096
    $region25: #{generator_forward.6} parent=1 // pred_fallthru
      _
    %v36 = vld [vmem:[%s0] sm:$0xf]
    %v37 = vld [vmem:[%s0 + $0x4] sm:$0xf]
    %v38 = vld [vmem:[%s0 + $0x8] sm:$0xf]
    %v39 = vld [vmem:[%s0 + $0xc] sm:$0xf]
    %v40 = vunpack.c.l.bf16 %v36
    %v41 = vunpack.c.l.bf16 %v37
    %v42 = vunpack.c.l.bf16 %v38
    %v43 = vunpack.c.l.bf16 %v39
    %v44 = vlaneseq
    %v45 = vand.u32 %v44, 127
    %v46 = vand.u32 %v45, 7
    %v47 = vshra.s32 %v45, 3
    %v48 = vand.u32 %v47, 7
    %53 = vrot.lane.b32.xlu0 %v40, 9
    %v54 = vpop.permute.xlu0 %53
    %55 = vrot.lane.b32.xlu0 %v41, 9
    %v56 = vpop.permute.xlu0 %55
    %57 = vrot.lane.b32.xlu0 %v42, 9
    %v58 = vpop.permute.xlu0 %57
    %59 = vrot.lane.b32.xlu0 %v43, 9
    %v60 = vpop.permute.xlu0 %59
    %vm65 = vcmask 72704
    %v66 = vsel %vm65, 0.0, %v54
    %v67 = vsel %vm65, 0.0, %v56
    %v68 = vsel %vm65, 0.0, %v58
    %v69 = vsel %vm65, 0.0, %v60
    %vm70 = vcmp.ge.s32.totalorder %v48, 1
    %vm71 = vcmp.ge.s32.totalorder %v46, 1
    %vm72 = vmand %vm70, %vm71
    %v73 = vsel %vm72, 1, 0
    %v74 = vcvt.s32.f32 %v73
    %v75 = vmul.f32 %v66, %v74
    %v76 = vmul.f32 %v67, %v74
    %v77 = vmul.f32 %v68, %v74
    %v78 = vmul.f32 %v69, %v74
    %79 = vrot.lane.b32.xlu0 %v40, 8
    %v80 = vpop.permute.xlu0 %79
    %81 = vrot.lane.b32.xlu0 %v41, 8
    %v82 = vpop.permute.xlu0 %81
    %83 = vrot.lane.b32.xlu0 %v42, 8
    %v84 = vpop.permute.xlu0 %83
    %85 = vrot.lane.b32.xlu0 %v43, 8
    %v86 = vpop.permute.xlu0 %85
    %vm91 = vcmask 64512
    %v92 = vsel %vm91, 0.0, %v80
    %v93 = vsel %vm91, 0.0, %v82
    %v94 = vsel %vm91, 0.0, %v84
    %v95 = vsel %vm91, 0.0, %v86
    %v96 = vsel %vm70, 1, 0
    %v97 = vcvt.s32.f32 %v96
    %v98 = vmul.f32 %v92, %v97
    %v99 = vmul.f32 %v93, %v97
    %v100 = vmul.f32 %v94, %v97
    %v101 = vmul.f32 %v95, %v97
    %102 = vrot.lane.b32.xlu0 %v40, 7
    %v103 = vpop.permute.xlu0 %102
    %104 = vrot.lane.b32.xlu0 %v41, 7
    %v105 = vpop.permute.xlu0 %104
    %106 = vrot.lane.b32.xlu0 %v42, 7
    %v107 = vpop.permute.xlu0 %106
    %108 = vrot.lane.b32.xlu0 %v43, 7
    %v109 = vpop.permute.xlu0 %108
    %vm114 = vcmask 56320
    %v115 = vsel %vm114, 0.0, %v103
    %v116 = vsel %vm114, 0.0, %v105
    %v117 = vsel %vm114, 0.0, %v107
    %v118 = vsel %vm114, 0.0, %v109
    %vm119 = vcmp.lt.s32.totalorder %v46, 7
    %vm120 = vmand %vm70, %vm119
    %v121 = vsel %vm120, 1, 0
    %v122 = vcvt.s32.f32 %v121
    %v123 = vmul.f32 %v115, %v122
    %v124 = vmul.f32 %v116, %v122
    %v125 = vmul.f32 %v117, %v122
    %v126 = vmul.f32 %v118, %v122
    %127 = vrot.lane.b32.xlu0 %v40, 1
    %v128 = vpop.permute.xlu0 %127
    %129 = vrot.lane.b32.xlu0 %v41, 1
    %v130 = vpop.permute.xlu0 %129
    %131 = vrot.lane.b32.xlu0 %v42, 1
    %v132 = vpop.permute.xlu0 %131
    %133 = vrot.lane.b32.xlu0 %v43, 1
    %v134 = vpop.permute.xlu0 %133
    %vm139 = vcmask 7168
    %v140 = vsel %vm139, 0.0, %v128
    %v141 = vsel %vm139, 0.0, %v130
    %v142 = vsel %vm139, 0.0, %v132
    %v143 = vsel %vm139, 0.0, %v134
    %v144 = vsel %vm71, 1, 0
    %v145 = vcvt.s32.f32 %v144
    %v146 = vmul.f32 %v140, %v145
    %v147 = vmul.f32 %v141, %v145
    %v148 = vmul.f32 %v142, %v145
    %v149 = vmul.f32 %v143, %v145
    %150 = vrot.lane.b32.xlu0 %v40, 127
    %v151 = vpop.permute.xlu0 %150
    %152 = vrot.lane.b32.xlu0 %v41, 127
    %v153 = vpop.permute.xlu0 %152
    %154 = vrot.lane.b32.xlu0 %v42, 127
    %v155 = vpop.permute.xlu0 %154
    %156 = vrot.lane.b32.xlu0 %v43, 127
    %v157 = vpop.permute.xlu0 %156
    %vm162 = vcmask 1039360
    %v163 = vsel %vm162, %v151, 0.0
    %v164 = vsel %vm162, %v153, 0.0
    %v165 = vsel %vm162, %v155, 0.0
    %v166 = vsel %vm162, %v157, 0.0
    %v167 = vsel %vm119, 1, 0
    %v168 = vcvt.s32.f32 %v167
    %v169 = vmul.f32 %v163, %v168
    %v170 = vmul.f32 %v164, %v168
    %v171 = vmul.f32 %v165, %v168
    %v172 = vmul.f32 %v166, %v168
    %173 = vrot.lane.b32.xlu0 %v40, 121
    %v174 = vpop.permute.xlu0 %173
    %175 = vrot.lane.b32.xlu0 %v41, 121
    %v176 = vpop.permute.xlu0 %175
    %177 = vrot.lane.b32.xlu0 %v42, 121
    %v178 = vpop.permute.xlu0 %177
    %179 = vrot.lane.b32.xlu0 %v43, 121
    %v180 = vpop.permute.xlu0 %179
    %vm185 = vcmask 990208
    %v186 = vsel %vm185, %v174, 0.0
    %v187 = vsel %vm185, %v176, 0.0
    %v188 = vsel %vm185, %v178, 0.0
    %v189 = vsel %vm185, %v180, 0.0
    %vm190 = vcmp.lt.s32.totalorder %v48, 7
    %vm191 = vmand %vm190, %vm71
    %v192 = vsel %vm191, 1, 0
    %v193 = vcvt.s32.f32 %v192
    %v194 = vmul.f32 %v186, %v193
    %v195 = vmul.f32 %v187, %v193
    %v196 = vmul.f32 %v188, %v193
    %v197 = vmul.f32 %v189, %v193
    %198 = vrot.lane.b32.xlu0 %v40, 120
    %v199 = vpop.permute.xlu0 %198
    %200 = vrot.lane.b32.xlu0 %v41, 120
    %v201 = vpop.permute.xlu0 %200
    %202 = vrot.lane.b32.xlu0 %v42, 120
    %v203 = vpop.permute.xlu0 %202
    %204 = vrot.lane.b32.xlu0 %v43, 120
    %v205 = vpop.permute.xlu0 %204
    %vm210 = vcmask 982016
    %v211 = vsel %vm210, %v199, 0.0
    %v212 = vsel %vm210, %v201, 0.0
    %v213 = vsel %vm210, %v203, 0.0
    %v214 = vsel %vm210, %v205, 0.0
    %v215 = vsel %vm190, 1, 0
    %v216 = vcvt.s32.f32 %v215
    %v217 = vmul.f32 %v211, %v216
    %v218 = vmul.f32 %v212, %v216
    %v219 = vmul.f32 %v213, %v216
    %v220 = vmul.f32 %v214, %v216
    %221 = vrot.lane.b32.xlu0 %v40, 119
    %v222 = vpop.permute.xlu0 %221
    %223 = vrot.lane.b32.xlu0 %v41, 119
    %v224 = vpop.permute.xlu0 %223
    %225 = vrot.lane.b32.xlu0 %v42, 119
    %v226 = vpop.permute.xlu0 %225
    %227 = vrot.lane.b32.xlu0 %v43, 119
    %v228 = vpop.permute.xlu0 %227
    %vm233 = vcmask 973824
    %v234 = vsel %vm233, %v222, 0.0
    %v235 = vsel %vm233, %v224, 0.0
    %v236 = vsel %vm233, %v226, 0.0
    %v237 = vsel %vm233, %v228, 0.0
    %vm238 = vmand %vm190, %vm119
    %v239 = vsel %vm238, 1, 0
    %v240 = vcvt.s32.f32 %v239
    %v241 = vmul.f32 %v234, %v240
    %v242 = vmul.f32 %v235, %v240
    %v243 = vmul.f32 %v236, %v240
    %v244 = vmul.f32 %v237, %v240
    %v245 = vld [vmem:[%s2] sm:$0xff]
    %v246 = vld [vmem:[%s2 + $0x8] sm:$0xff]
    %v247 = vld [vmem:[#allocation2] sm:$0xff]
    %v248 = vld [vmem:[#allocation2 + $0x8] sm:$0xff]
    %s249 = scalar_lea.vmem [#allocation2], 16
    %v250 = vld [vmem:[%s249] sm:$0xff]
    %v251 = vld [vmem:[%s249 + $0x8] sm:$0xff]
    %vm252 = vcmask 261120
    %v254 = vsel %vm252, %v250, 0
    %v257 = vsel %vm252, %v251, 0
    %259 = vmatpush.msra.mxu0 0.0
    %260 = vmatpush.msra.mxu0 0.0
    %261 = vmatpush.msra.mxu0 0.0
    %262 = vmatpush.msra.mxu0 0.0
    %263 = vmatpush.msra.mxu0 0.0
    %264 = vmatpush.msra.mxu0 0.0
    %265 = vmatpush.msra.mxu0 0.0
    %266 = vmatpush.msra.mxu0 0.0
    %267 = vmatpush.msra.mxu0 0.0
    %268 = vmatpush.msra.mxu0 0.0
    %269 = vmatpush.msra.mxu0 0.0
    %270 = vmatpush.msra.mxu0 0.0
    %271 = vmatpush.msra.mxu0 %v149
    %272 = vmatpush.msra.mxu0 %v148
    %273 = vmatpush.msra.mxu0 %v147
    %274 = vmatpush.msra.mxu0 %v146
    %275 = vmatmul.f32.gmra.mxu0 %v254
    %v276 = vpop.f32.mrf.mxu0
    %v277 = vadd.f32 0.0, %v276
    %278 = vmatmul.f32.gmra.mxu0 %v257
    %v279 = vpop.f32.mrf.mxu0
    %v280 = vadd.f32 0.0, %v279
    %281 = vdwg.mxu0
    %v283 = vsel %vm252, %v247, 0
    %v286 = vsel %vm252, %v248, 0
    %288 = vmatpush.msra.mxu0 0.0
    %289 = vmatpush.msra.mxu0 0.0
    %290 = vmatpush.msra.mxu0 0.0
    %291 = vmatpush.msra.mxu0 0.0
    %292 = vmatpush.msra.mxu0 0.0
    %293 = vmatpush.msra.mxu0 0.0
    %294 = vmatpush.msra.mxu0 0.0
    %295 = vmatpush.msra.mxu0 0.0
    %296 = vmatpush.msra.mxu0 0.0
    %297 = vmatpush.msra.mxu0 0.0
    %298 = vmatpush.msra.mxu0 0.0
    %299 = vmatpush.msra.mxu0 0.0
    %300 = vmatpush.msra.mxu0 %v43
    %301 = vmatpush.msra.mxu0 %v42
    %302 = vmatpush.msra.mxu0 %v41
    %303 = vmatpush.msra.mxu0 %v40
    %304 = vmatmul.f32.gmra.mxu0 %v283
    %v305 = vpop.f32.mrf.mxu0
    %v306 = vadd.f32 %v277, %v305
    %307 = vmatmul.f32.gmra.mxu0 %v286
    %v308 = vpop.f32.mrf.mxu0
    %v309 = vadd.f32 %v280, %v308
    %310 = vdwg.mxu0
    %s311 = scalar_lea.vmem [#allocation2], 32
    %v312 = vld [vmem:[%s311] sm:$0xff]
    %v313 = vld [vmem:[%s311 + $0x8] sm:$0xff]
    %v315 = vsel %vm252, %v312, 0
    %v318 = vsel %vm252, %v313, 0
    %320 = vmatpush.msra.mxu0 0.0
    %321 = vmatpush.msra.mxu0 0.0
    %322 = vmatpush.msra.mxu0 0.0
    %323 = vmatpush.msra.mxu0 0.0
    %324 = vmatpush.msra.mxu0 0.0
    %325 = vmatpush.msra.mxu0 0.0
    %326 = vmatpush.msra.mxu0 0.0
    %327 = vmatpush.msra.mxu0 0.0
    %328 = vmatpush.msra.mxu0 0.0
    %329 = vmatpush.msra.mxu0 0.0
    %330 = vmatpush.msra.mxu0 0.0
    %331 = vmatpush.msra.mxu0 0.0
    %332 = vmatpush.msra.mxu0 %v101
    %333 = vmatpush.msra.mxu0 %v100
    %334 = vmatpush.msra.mxu0 %v99
    %335 = vmatpush.msra.mxu0 %v98
    %336 = vmatmul.f32.gmra.mxu0 %v315
    %v337 = vpop.f32.mrf.mxu0
    %v338 = vadd.f32 0.0, %v337
    %339 = vmatmul.f32.gmra.mxu0 %v318
    %v340 = vpop.f32.mrf.mxu0
    %v341 = vadd.f32 0.0, %v340
    %342 = vdwg.mxu0
    %v343 = vadd.f32 %v306, %v338
    %v344 = vadd.f32 %v309, %v341
    %s345 = scalar_lea.vmem [#allocation2], 48
    %v346 = vld [vmem:[%s345] sm:$0xff]
    %v347 = vld [vmem:[%s345 + $0x8] sm:$0xff]
    %v349 = vsel %vm252, %v346, 0
    %v352 = vsel %vm252, %v347, 0
    %354 = vmatpush.msra.mxu0 0.0
    %355 = vmatpush.msra.mxu0 0.0
    %356 = vmatpush.msra.mxu0 0.0
    %357 = vmatpush.msra.mxu0 0.0
    %358 = vmatpush.msra.mxu0 0.0
    %359 = vmatpush.msra.mxu0 0.0
    %360 = vmatpush.msra.mxu0 0.0
    %361 = vmatpush.msra.mxu0 0.0
    %362 = vmatpush.msra.mxu0 0.0
    %363 = vmatpush.msra.mxu0 0.0
    %364 = vmatpush.msra.mxu0 0.0
    %365 = vmatpush.msra.mxu0 0.0
    %366 = vmatpush.msra.mxu0 %v78
    %367 = vmatpush.msra.mxu0 %v77
    %368 = vmatpush.msra.mxu0 %v76
    %369 = vmatpush.msra.mxu0 %v75
    %370 = vmatmul.f32.gmra.mxu0 %v349
    %v371 = vpop.f32.mrf.mxu0
    %v372 = vadd.f32 0.0, %v371
    %373 = vmatmul.f32.gmra.mxu0 %v352
    %v374 = vpop.f32.mrf.mxu0
    %v375 = vadd.f32 0.0, %v374
    %376 = vdwg.mxu0
    %v377 = vadd.f32 %v343, %v372
    %v378 = vadd.f32 %v344, %v375
    %380 = vset.pattern.permute.xlu0 0
    %381 = vperm.xlu0 %380, %v245
    %v382 = vpop.permute.xlu0 %381
    %385 = vset.pattern.permute.xlu0 0
    %386 = vperm.xlu0 %385, %v246
    %v387 = vpop.permute.xlu0 %386
    %v389 = vadd.f32 %v377, %v382
    %v390 = vadd.f32 %v378, %v387
    %s391 = scalar_lea.vmem [#allocation2], 64
    %v392 = vld [vmem:[%s391] sm:$0xff]
    %v393 = vld [vmem:[%s391 + $0x8] sm:$0xff]
    %s394 = scalar_lea.vmem [#allocation2], 80
    %v395 = vld [vmem:[%s394] sm:$0xff]
    %v396 = vld [vmem:[%s394 + $0x8] sm:$0xff]
    %v398 = vsel %vm252, %v395, 0
    %v401 = vsel %vm252, %v396, 0
    %403 = vmatpush.msra.mxu0 0.0
    %404 = vmatpush.msra.mxu0 0.0
    %405 = vmatpush.msra.mxu0 0.0
    %406 = vmatpush.msra.mxu0 0.0
    %407 = vmatpush.msra.mxu0 0.0
    %408 = vmatpush.msra.mxu0 0.0
    %409 = vmatpush.msra.mxu0 0.0
    %410 = vmatpush.msra.mxu0 0.0
    %411 = vmatpush.msra.mxu0 0.0
    %412 = vmatpush.msra.mxu0 0.0
    %413 = vmatpush.msra.mxu0 0.0
    %414 = vmatpush.msra.mxu0 0.0
    %415 = vmatpush.msra.mxu0 %v43
    %416 = vmatpush.msra.mxu0 %v42
    %417 = vmatpush.msra.mxu0 %v41
    %418 = vmatpush.msra.mxu0 %v40
    %419 = vmatmul.f32.gmra.mxu0 %v398
    %v420 = vpop.f32.mrf.mxu0
    %v421 = vadd.f32 0.0, %v420
    %422 = vmatmul.f32.gmra.mxu0 %v401
    %v423 = vpop.f32.mrf.mxu0
    %v424 = vadd.f32 0.0, %v423
    %425 = vdwg.mxu0
    %v427 = vsel %vm252, %v392, 0
    %v430 = vsel %vm252, %v393, 0
    %432 = vmatpush.msra.mxu0 0.0
    %433 = vmatpush.msra.mxu0 0.0
    %434 = vmatpush.msra.mxu0 0.0
    %435 = vmatpush.msra.mxu0 0.0
    %436 = vmatpush.msra.mxu0 0.0
    %437 = vmatpush.msra.mxu0 0.0
    %438 = vmatpush.msra.mxu0 0.0
    %439 = vmatpush.msra.mxu0 0.0
    %440 = vmatpush.msra.mxu0 0.0
    %441 = vmatpush.msra.mxu0 0.0
    %442 = vmatpush.msra.mxu0 0.0
    %443 = vmatpush.msra.mxu0 0.0
    %444 = vmatpush.msra.mxu0 %v172
    %445 = vmatpush.msra.mxu0 %v171
    %446 = vmatpush.msra.mxu0 %v170
    %447 = vmatpush.msra.mxu0 %v169
    %448 = vmatmul.f32.gmra.mxu0 %v427
    %v449 = vpop.f32.mrf.mxu0
    %v450 = vadd.f32 %v421, %v449
    %451 = vmatmul.f32.gmra.mxu0 %v430
    %v452 = vpop.f32.mrf.mxu0
    %v453 = vadd.f32 %v424, %v452
    %454 = vdwg.mxu0
    %s455 = scalar_lea.vmem [#allocation2], 96
    %v456 = vld [vmem:[%s455] sm:$0xff]
    %v457 = vld [vmem:[%s455 + $0x8] sm:$0xff]
    %v459 = vsel %vm252, %v456, 0
    %v462 = vsel %vm252, %v457, 0
    %464 = vmatpush.msra.mxu0 0.0
    %465 = vmatpush.msra.mxu0 0.0
    %466 = vmatpush.msra.mxu0 0.0
    %467 = vmatpush.msra.mxu0 0.0
    %468 = vmatpush.msra.mxu0 0.0
    %469 = vmatpush.msra.mxu0 0.0
    %470 = vmatpush.msra.mxu0 0.0
    %471 = vmatpush.msra.mxu0 0.0
    %472 = vmatpush.msra.mxu0 0.0
    %473 = vmatpush.msra.mxu0 0.0
    %474 = vmatpush.msra.mxu0 0.0
    %475 = vmatpush.msra.mxu0 0.0
    %476 = vmatpush.msra.mxu0 %v126
    %477 = vmatpush.msra.mxu0 %v125
    %478 = vmatpush.msra.mxu0 %v124
    %479 = vmatpush.msra.mxu0 %v123
    %480 = vmatmul.f32.gmra.mxu0 %v459
    %v481 = vpop.f32.mrf.mxu0
    %v482 = vadd.f32 0.0, %v481
    %483 = vmatmul.f32.gmra.mxu0 %v462
    %v484 = vpop.f32.mrf.mxu0
    %v485 = vadd.f32 0.0, %v484
    %486 = vdwg.mxu0
    %v487 = vadd.f32 %v450, %v482
    %v488 = vadd.f32 %v453, %v485
    %s489 = scalar_lea.vmem [#allocation2], 112
    %v490 = vld [vmem:[%s489] sm:$0xff]
    %v491 = vld [vmem:[%s489 + $0x8] sm:$0xff]
    %v493 = vsel %vm252, %v490, 0
    %v496 = vsel %vm252, %v491, 0
    %498 = vmatpush.msra.mxu0 0.0
    %499 = vmatpush.msra.mxu0 0.0
    %500 = vmatpush.msra.mxu0 0.0
    %501 = vmatpush.msra.mxu0 0.0
    %502 = vmatpush.msra.mxu0 0.0
    %503 = vmatpush.msra.mxu0 0.0
    %504 = vmatpush.msra.mxu0 0.0
    %505 = vmatpush.msra.mxu0 0.0
    %506 = vmatpush.msra.mxu0 0.0
    %507 = vmatpush.msra.mxu0 0.0
    %508 = vmatpush.msra.mxu0 0.0
    %509 = vmatpush.msra.mxu0 0.0
    %510 = vmatpush.msra.mxu0 %v101
    %511 = vmatpush.msra.mxu0 %v100
    %512 = vmatpush.msra.mxu0 %v99
    %513 = vmatpush.msra.mxu0 %v98
    %514 = vmatmul.f32.gmra.mxu0 %v493
    %v515 = vpop.f32.mrf.mxu0
    %v516 = vadd.f32 0.0, %v515
    %517 = vmatmul.f32.gmra.mxu0 %v496
    %v518 = vpop.f32.mrf.mxu0
    %v519 = vadd.f32 0.0, %v518
    %520 = vdwg.mxu0
    %v521 = vadd.f32 %v487, %v516
    %v522 = vadd.f32 %v488, %v519
    %v523 = vadd.f32 %v521, %v382
    %v524 = vadd.f32 %v522, %v387
    %s525 = scalar_lea.vmem [#allocation2], 128
    %v526 = vld [vmem:[%s525] sm:$0xff]
    %v527 = vld [vmem:[%s525 + $0x8] sm:$0xff]
    %s528 = scalar_lea.vmem [#allocation2], 144
    %v529 = vld [vmem:[%s528] sm:$0xff]
    %v530 = vld [vmem:[%s528 + $0x8] sm:$0xff]
    %v532 = vsel %vm252, %v529, 0
    %v535 = vsel %vm252, %v530, 0
    %537 = vmatpush.msra.mxu0 0.0
    %538 = vmatpush.msra.mxu0 0.0
    %539 = vmatpush.msra.mxu0 0.0
    %540 = vmatpush.msra.mxu0 0.0
    %541 = vmatpush.msra.mxu0 0.0
    %542 = vmatpush.msra.mxu0 0.0
    %543 = vmatpush.msra.mxu0 0.0
    %544 = vmatpush.msra.mxu0 0.0
    %545 = vmatpush.msra.mxu0 0.0
    %546 = vmatpush.msra.mxu0 0.0
    %547 = vmatpush.msra.mxu0 0.0
    %548 = vmatpush.msra.mxu0 0.0
    %549 = vmatpush.msra.mxu0 %v197
    %550 = vmatpush.msra.mxu0 %v196
    %551 = vmatpush.msra.mxu0 %v195
    %552 = vmatpush.msra.mxu0 %v194
    %553 = vmatmul.f32.gmra.mxu0 %v532
    %v554 = vpop.f32.mrf.mxu0
    %v555 = vadd.f32 0.0, %v554
    %556 = vmatmul.f32.gmra.mxu0 %v535
    %v557 = vpop.f32.mrf.mxu0
    %v558 = vadd.f32 0.0, %v557
    %559 = vdwg.mxu0
    %v561 = vsel %vm252, %v526, 0
    %v564 = vsel %vm252, %v527, 0
    %566 = vmatpush.msra.mxu0 0.0
    %567 = vmatpush.msra.mxu0 0.0
    %568 = vmatpush.msra.mxu0 0.0
    %569 = vmatpush.msra.mxu0 0.0
    %570 = vmatpush.msra.mxu0 0.0
    %571 = vmatpush.msra.mxu0 0.0
    %572 = vmatpush.msra.mxu0 0.0
    %573 = vmatpush.msra.mxu0 0.0
    %574 = vmatpush.msra.mxu0 0.0
    %575 = vmatpush.msra.mxu0 0.0
    %576 = vmatpush.msra.mxu0 0.0
    %577 = vmatpush.msra.mxu0 0.0
    %578 = vmatpush.msra.mxu0 %v220
    %579 = vmatpush.msra.mxu0 %v219
    %580 = vmatpush.msra.mxu0 %v218
    %581 = vmatpush.msra.mxu0 %v217
    %582 = vmatmul.f32.gmra.mxu0 %v561
    %v583 = vpop.f32.mrf.mxu0
    %v584 = vadd.f32 %v555, %v583
    %585 = vmatmul.f32.gmra.mxu0 %v564
    %v586 = vpop.f32.mrf.mxu0
    %v587 = vadd.f32 %v558, %v586
    %588 = vdwg.mxu0
    %s589 = scalar_lea.vmem [#allocation2], 160
    %v590 = vld [vmem:[%s589] sm:$0xff]
    %v591 = vld [vmem:[%s589 + $0x8] sm:$0xff]
    %v593 = vsel %vm252, %v590, 0
    %v596 = vsel %vm252, %v591, 0
    %598 = vmatpush.msra.mxu0 0.0
    %599 = vmatpush.msra.mxu0 0.0
    %600 = vmatpush.msra.mxu0 0.0
    %601 = vmatpush.msra.mxu0 0.0
    %602 = vmatpush.msra.mxu0 0.0
    %603 = vmatpush.msra.mxu0 0.0
    %604 = vmatpush.msra.mxu0 0.0
    %605 = vmatpush.msra.mxu0 0.0
    %606 = vmatpush.msra.mxu0 0.0
    %607 = vmatpush.msra.mxu0 0.0
    %608 = vmatpush.msra.mxu0 0.0
    %609 = vmatpush.msra.mxu0 0.0
    %610 = vmatpush.msra.mxu0 %v43
    %611 = vmatpush.msra.mxu0 %v42
    %612 = vmatpush.msra.mxu0 %v41
    %613 = vmatpush.msra.mxu0 %v40
    %614 = vmatmul.f32.gmra.mxu0 %v593
    %v615 = vpop.f32.mrf.mxu0
    %v616 = vadd.f32 0.0, %v615
    %617 = vmatmul.f32.gmra.mxu0 %v596
    %v618 = vpop.f32.mrf.mxu0
    %v619 = vadd.f32 0.0, %v618
    %620 = vdwg.mxu0
    %v621 = vadd.f32 %v584, %v616
    %v622 = vadd.f32 %v587, %v619
    %s623 = scalar_lea.vmem [#allocation2], 176
    %v624 = vld [vmem:[%s623] sm:$0xff]
    %v625 = vld [vmem:[%s623 + $0x8] sm:$0xff]
    %v627 = vsel %vm252, %v624, 0
    %v630 = vsel %vm252, %v625, 0
    %632 = vmatpush.msra.mxu0 0.0
    %633 = vmatpush.msra.mxu0 0.0
    %634 = vmatpush.msra.mxu0 0.0
    %635 = vmatpush.msra.mxu0 0.0
    %636 = vmatpush.msra.mxu0 0.0
    %637 = vmatpush.msra.mxu0 0.0
    %638 = vmatpush.msra.mxu0 0.0
    %639 = vmatpush.msra.mxu0 0.0
    %640 = vmatpush.msra.mxu0 0.0
    %641 = vmatpush.msra.mxu0 0.0
    %642 = vmatpush.msra.mxu0 0.0
    %643 = vmatpush.msra.mxu0 0.0
    %644 = vmatpush.msra.mxu0 %v149
    %645 = vmatpush.msra.mxu0 %v148
    %646 = vmatpush.msra.mxu0 %v147
    %647 = vmatpush.msra.mxu0 %v146
    %648 = vmatmul.f32.gmra.mxu0 %v627
    %v649 = vpop.f32.mrf.mxu0
    %v650 = vadd.f32 0.0, %v649
    %651 = vmatmul.f32.gmra.mxu0 %v630
    %v652 = vpop.f32.mrf.mxu0
    %v653 = vadd.f32 0.0, %v652
    %654 = vdwg.mxu0
    %v655 = vadd.f32 %v621, %v650
    %v656 = vadd.f32 %v622, %v653
    %v657 = vadd.f32 %v655, %v382
    %v658 = vadd.f32 %v656, %v387
    %s659 = scalar_lea.vmem [#allocation2], 192
    %v660 = vld [vmem:[%s659] sm:$0xff]
    %v661 = vld [vmem:[%s659 + $0x8] sm:$0xff]
    %s662 = scalar_lea.vmem [#allocation2], 208
    %v663 = vld [vmem:[%s662] sm:$0xff]
    %v664 = vld [vmem:[%s662 + $0x8] sm:$0xff]
    %v666 = vsel %vm252, %v663, 0
    %v669 = vsel %vm252, %v664, 0
    %671 = vmatpush.msra.mxu0 0.0
    %672 = vmatpush.msra.mxu0 0.0
    %673 = vmatpush.msra.mxu0 0.0
    %674 = vmatpush.msra.mxu0 0.0
    %675 = vmatpush.msra.mxu0 0.0
    %676 = vmatpush.msra.mxu0 0.0
    %677 = vmatpush.msra.mxu0 0.0
    %678 = vmatpush.msra.mxu0 0.0
    %679 = vmatpush.msra.mxu0 0.0
    %680 = vmatpush.msra.mxu0 0.0
    %681 = vmatpush.msra.mxu0 0.0
    %682 = vmatpush.msra.mxu0 0.0
    %683 = vmatpush.msra.mxu0 %v220
    %684 = vmatpush.msra.mxu0 %v219
    %685 = vmatpush.msra.mxu0 %v218
    %686 = vmatpush.msra.mxu0 %v217
    %687 = vmatmul.f32.gmra.mxu0 %v666
    %v688 = vpop.f32.mrf.mxu0
    %v689 = vadd.f32 0.0, %v688
    %690 = vmatmul.f32.gmra.mxu0 %v669
    %v691 = vpop.f32.mrf.mxu0
    %v692 = vadd.f32 0.0, %v691
    %693 = vdwg.mxu0
    %v695 = vsel %vm252, %v660, 0
    %v698 = vsel %vm252, %v661, 0
    %700 = vmatpush.msra.mxu0 0.0
    %701 = vmatpush.msra.mxu0 0.0
    %702 = vmatpush.msra.mxu0 0.0
    %703 = vmatpush.msra.mxu0 0.0
    %704 = vmatpush.msra.mxu0 0.0
    %705 = vmatpush.msra.mxu0 0.0
    %706 = vmatpush.msra.mxu0 0.0
    %707 = vmatpush.msra.mxu0 0.0
    %708 = vmatpush.msra.mxu0 0.0
    %709 = vmatpush.msra.mxu0 0.0
    %710 = vmatpush.msra.mxu0 0.0
    %711 = vmatpush.msra.mxu0 0.0
    %712 = vmatpush.msra.mxu0 %v244
    %713 = vmatpush.msra.mxu0 %v243
    %714 = vmatpush.msra.mxu0 %v242
    %715 = vmatpush.msra.mxu0 %v241
    %716 = vmatmul.f32.gmra.mxu0 %v695
    %v717 = vpop.f32.mrf.mxu0
    %v718 = vadd.f32 %v689, %v717
    %719 = vmatmul.f32.gmra.mxu0 %v698
    %v720 = vpop.f32.mrf.mxu0
    %v721 = vadd.f32 %v692, %v720
    %722 = vdwg.mxu0
    %s723 = scalar_lea.vmem [#allocation2], 224
    %v724 = vld [vmem:[%s723] sm:$0xff]
    %v725 = vld [vmem:[%s723 + $0x8] sm:$0xff]
    %v727 = vsel %vm252, %v724, 0
    %v730 = vsel %vm252, %v725, 0
    %732 = vmatpush.msra.mxu0 0.0
    %733 = vmatpush.msra.mxu0 0.0
    %734 = vmatpush.msra.mxu0 0.0
    %735 = vmatpush.msra.mxu0 0.0
    %736 = vmatpush.msra.mxu0 0.0
    %737 = vmatpush.msra.mxu0 0.0
    %738 = vmatpush.msra.mxu0 0.0
    %739 = vmatpush.msra.mxu0 0.0
    %740 = vmatpush.msra.mxu0 0.0
    %741 = vmatpush.msra.mxu0 0.0
    %742 = vmatpush.msra.mxu0 0.0
    %743 = vmatpush.msra.mxu0 0.0
    %744 = vmatpush.msra.mxu0 %v172
    %745 = vmatpush.msra.mxu0 %v171
    %746 = vmatpush.msra.mxu0 %v170
    %747 = vmatpush.msra.mxu0 %v169
    %748 = vmatmul.f32.gmra.mxu0 %v727
    %v749 = vpop.f32.mrf.mxu0
    %v750 = vadd.f32 0.0, %v749
    %751 = vmatmul.f32.gmra.mxu0 %v730
    %v752 = vpop.f32.mrf.mxu0
    %v753 = vadd.f32 0.0, %v752
    %754 = vdwg.mxu0
    %v755 = vadd.f32 %v718, %v750
    %v756 = vadd.f32 %v721, %v753
    %s757 = scalar_lea.vmem [#allocation2], 240
    %v758 = vld [vmem:[%s757] sm:$0xff]
    %v759 = vld [vmem:[%s757 + $0x8] sm:$0xff]
    %v761 = vsel %vm252, %v758, 0
    %v764 = vsel %vm252, %v759, 0
    %766 = vmatpush.msra.mxu0 0.0
    %767 = vmatpush.msra.mxu0 0.0
    %768 = vmatpush.msra.mxu0 0.0
    %769 = vmatpush.msra.mxu0 0.0
    %770 = vmatpush.msra.mxu0 0.0
    %771 = vmatpush.msra.mxu0 0.0
    %772 = vmatpush.msra.mxu0 0.0
    %773 = vmatpush.msra.mxu0 0.0
    %774 = vmatpush.msra.mxu0 0.0
    %775 = vmatpush.msra.mxu0 0.0
    %776 = vmatpush.msra.mxu0 0.0
    %777 = vmatpush.msra.mxu0 0.0
    %778 = vmatpush.msra.mxu0 %v43
    %779 = vmatpush.msra.mxu0 %v42
    %780 = vmatpush.msra.mxu0 %v41
    %781 = vmatpush.msra.mxu0 %v40
    %782 = vmatmul.f32.gmra.mxu0 %v761
    %v783 = vpop.f32.mrf.mxu0
    %v784 = vadd.f32 0.0, %v783
    %785 = vmatmul.f32.gmra.mxu0 %v764
    %v786 = vpop.f32.mrf.mxu0
    %v787 = vadd.f32 0.0, %v786
    %788 = vdwg.mxu0
    %v789 = vadd.f32 %v755, %v784
    %v790 = vadd.f32 %v756, %v787
    %v791 = vadd.f32 %v789, %v382
    %v792 = vadd.f32 %v790, %v387
    %v793 = vadd.f32 %v389, %v523
    %v794 = vadd.f32 %v390, %v524
    %v795 = vadd.f32 %v793, %v657
    %v796 = vadd.f32 %v794, %v658
    %v797 = vadd.f32 %v795, %v791
    %v798 = vadd.f32 %v796, %v792
    %v799 = vmul.f32 %v389, %v389
    %v800 = vmul.f32 %v390, %v390
    %v801 = vmul.f32 %v523, %v523
    %v802 = vmul.f32 %v524, %v524
    %v803 = vadd.f32 %v799, %v801
    %v804 = vadd.f32 %v800, %v802
    %v805 = vmul.f32 %v657, %v657
    %v806 = vmul.f32 %v658, %v658
    %v807 = vadd.f32 %v803, %v805
    %v808 = vadd.f32 %v804, %v806
    %v809 = vmul.f32 %v791, %v791
    %v810 = vmul.f32 %v792, %v792
    %v811 = vadd.f32 %v807, %v809
    %v812 = vadd.f32 %v808, %v810
    %813 = vadd.xlane.f32.xlu0 %v797
    %v814 = vpop.xlane.xlu0 %813
    %815 = vadd.xlane.f32.xlu0 %v798
    %v816 = vpop.xlane.xlu0 %815
    %v817 = vrcp.pop 512.0
    %v818 = vmul.f32 512.0, %v817
    %v819 = vsub.f32 1.0, %v818
    %v820 = vmul.f32 %v817, %v819
    %v821 = vadd.f32 %v817, %v820
    %vm822 = vweird.f32 %v817
    %v823 = vsel %vm822, %v817, %v821
    %v824 = vmul.f32 %v814, %v823
    %v825 = vmul.f32 %v816, %v823
    %826 = vadd.xlane.f32.xlu0 %v811
    %v827 = vpop.xlane.xlu0 %826
    %828 = vadd.xlane.f32.xlu0 %v812
    %v829 = vpop.xlane.xlu0 %828
    %v830 = vmul.f32 %v827, %v823
    %v831 = vmul.f32 %v829, %v823
    %v832 = vmul.f32 %v824, %v824
    %v833 = vmul.f32 %v825, %v825
    %v834 = vsub.f32 %v830, %v832
    %v835 = vsub.f32 %v831, %v833
    %v836 = vmax.f32 %v834, 0.0
    %v837 = vmax.f32 %v835, 0.0
    %v838 = vld [vmem:[%s3] sm:$0xff]
    %v839 = vld [vmem:[%s3 + $0x8] sm:$0xff]
    %v840 = vadd.f32 %v836, 1e-05
    %v841 = vadd.f32 %v837, 1e-05
    %v842 = vrsqrt.pop %v840
    %v843 = vmul.f32 %v842, %v840
    %v844 = vmul.f32 %v843, %v842
    %v845 = vmul.f32 0.5, %v844
    %v846 = vsub.f32 1.5, %v845
    %v847 = vmul.f32 %v842, %v846
    %vm848 = vweird.f32 %v840
    %vm849 = vweird.f32 %v842
    %vm850 = vmor %vm848, %vm849
    %v851 = vsel %vm850, %v842, %v847
    %v852 = vrsqrt.pop %v841
    %v853 = vmul.f32 %v852, %v841
    %v854 = vmul.f32 %v853, %v852
    %v855 = vmul.f32 0.5, %v854
    %v856 = vsub.f32 1.5, %v855
    %v857 = vmul.f32 %v852, %v856
    %vm858 = vweird.f32 %v841
    %vm859 = vweird.f32 %v852
    %vm860 = vmor %vm858, %vm859
    %v861 = vsel %vm860, %v852, %v857
    %v862 = vmul.f32 %v838, %v851
    %v863 = vmul.f32 %v839, %v861
    %v864 = vld [vmem:[%s4] sm:$0xff]
    %v865 = vld [vmem:[%s4 + $0x8] sm:$0xff]
    %v866 = vmul.f32 %v824, %v862
    %v867 = vmul.f32 %v825, %v863
    %v868 = vsub.f32 %v864, %v866
    %v869 = vsub.f32 %v865, %v867
    %871 = vset.pattern.permute.xlu0 0
    %872 = vperm.xlu0 %871, %v862
    %v873 = vpop.permute.xlu0 %872
    %876 = vset.pattern.permute.xlu0 0
    %877 = vperm.xlu0 %876, %v863
    %v878 = vpop.permute.xlu0 %877
    %v880 = vmul.f32 %v389, %v873
    %v881 = vmul.f32 %v390, %v878
    %883 = vset.pattern.permute.xlu0 0
    %884 = vperm.xlu0 %883, %v868
    %v885 = vpop.permute.xlu0 %884
    %888 = vset.pattern.permute.xlu0 0
    %889 = vperm.xlu0 %888, %v869
    %v890 = vpop.permute.xlu0 %889
    %v892 = vadd.f32 %v880, %v885
    %v893 = vadd.f32 %v881, %v890
    %v894 = vmax.f32 %v892, 0.0
    %v895 = vmax.f32 %v893, 0.0
    %v896 = vmul.f32 %v523, %v873
    %v897 = vmul.f32 %v524, %v878
    %v898 = vadd.f32 %v896, %v885
    %v899 = vadd.f32 %v897, %v890
    %v900 = vmax.f32 %v898, 0.0
    %v901 = vmax.f32 %v899, 0.0
    %v902 = vmul.f32 %v657, %v873
    %v903 = vmul.f32 %v658, %v878
    %v904 = vadd.f32 %v902, %v885
    %v905 = vadd.f32 %v903, %v890
    %v906 = vmax.f32 %v904, 0.0
    %v907 = vmax.f32 %v905, 0.0
    %v908 = vmul.f32 %v791, %v873
    %v909 = vmul.f32 %v792, %v878
    %v910 = vadd.f32 %v908, %v885
    %v911 = vadd.f32 %v909, %v890
    %v912 = vmax.f32 %v910, 0.0
    %v913 = vmax.f32 %v911, 0.0
    %v914 = vpack.c.bf16 %v894, %v894
    %v915 = vpack.c.bf16 %v895, %v895
    %916 = vst [vmem:[%s5] sm:$0xf] %v914
    %917 = vst [vmem:[%s5 + $0x4] sm:$0xf] %v915
    %v918 = vpack.c.bf16 %v900, %v900
    %v919 = vpack.c.bf16 %v901, %v901
    %s920 = scalar_lea.vmem %s5, 8
    %921 = vst [vmem:[%s920] sm:$0xf] %v918
    %922 = vst [vmem:[%s920 + $0x4] sm:$0xf] %v919
    %v923 = vpack.c.bf16 %v906, %v906
    %v924 = vpack.c.bf16 %v907, %v907
    %s925 = scalar_lea.vmem %s5, 16
    %926 = vst [vmem:[%s925] sm:$0xf] %v923
    %927 = vst [vmem:[%s925 + $0x4] sm:$0xf] %v924
    %v928 = vpack.c.bf16 %v912, %v912
    %v929 = vpack.c.bf16 %v913, %v913
    %s930 = scalar_lea.vmem %s5, 24
    %931 = vst [vmem:[%s930] sm:$0xf] %v928
    %932 = vst [vmem:[%s930 + $0x4] sm:$0xf] %v929
    // Predicated region
    $region26: #{generator_forward.6} parent=1 // pred_check
      _
    $region27: #{generator_forward.6} parent=1 // pred_check_branch
      %934 = sbr.rel (0) target = $region29
    $region28: #{generator_forward.6} parent=1 // pred_region
      _
    $region29: #{generator_forward.6} parent=1 // pred_fallthru
      _
    // Predicated region
    $region30: #{generator_forward.6} parent=1 // pred_check
      _
    $region31: #{generator_forward.6} parent=1 // pred_check_branch
      %936 = sbr.rel (0) target = $region33
    $region32: #{generator_forward.6} parent=1 // pred_region
      _
    $region33: #{generator_forward.6} parent=1 // pred_fallthru
      _
    %937 = vsyncpa [#allocation3], 1

// kernel: generator_forward.4
$region0: #{generator_forward.4}
  #allocation0 [shape = 'u32[]', space=smem, size = 0x4, offset = 0x4, fixed_abs, tag = 'smem constant byte address 0x4 - core index']
  #allocation1 [shape = 'u32[72,128]{1,0:T(1,128)}', space=vmem, size = 0x9000, scoped, tag = 'internal scratch']
  %s0 = inlined_call_operand.vmem [shape: f32[32,2], index: 0, kind: input, shape index: {}]
  %s1 = inlined_call_operand.vmem [shape: f32[16,64,32], index: 1, kind: input, shape index: {}]
  %s2 = inlined_call_operand.vmem [shape: f32[64,1], index: 2, kind: input, shape index: {}]
  %s3 = inlined_call_operand.vmem [shape: f32[64,1], index: 3, kind: input, shape index: {}]
  %s4 = inlined_call_operand.vmem [shape: f32[64,1], index: 4, kind: input, shape index: {}]
  %s5 = inlined_call_operand.vmem [shape: bf16[16,64,2], index: 5, kind: output, shape index: {}]
  %s6 = sld [smem:[#allocation0]]
  $region30: #{generator_forward.4} parent=0
    _
  %s8 = ssub.s32 1, %s6
  %s9 = scalar_select 0, %s8, %s6
  // Predicated region
  $region2: #{generator_forward.4} parent=0 // pred_check
    _
  $region3: #{generator_forward.4} parent=0 // pred_check_branch
    %11 = sbr.rel (0) target = $region5
  $region4: #{generator_forward.4} parent=0 // pred_region
    _
  $region5: #{generator_forward.4} parent=0 // pred_fallthru
    _
  // Predicated region
  $region6: #{generator_forward.4} parent=0 // pred_check
    _
  $region7: #{generator_forward.4} parent=0 // pred_check_branch
    %13 = sbr.rel (0) target = $region9
  $region8: #{generator_forward.4} parent=0 // pred_region
    _
  $region9: #{generator_forward.4} parent=0 // pred_fallthru
    _
  // Predicated region
  $region10: #{generator_forward.4} parent=0 // pred_check
    _
  $region11: #{generator_forward.4} parent=0 // pred_check_branch
    %15 = sbr.rel (0) target = $region13
  $region12: #{generator_forward.4} parent=0 // pred_region
    _
  $region13: #{generator_forward.4} parent=0 // pred_fallthru
    _
  // Predicated region
  $region14: #{generator_forward.4} parent=0 // pred_check
    _
  $region15: #{generator_forward.4} parent=0 // pred_check_branch
    %17 = sbr.rel (0) target = $region17
  $region16: #{generator_forward.4} parent=0 // pred_region
    _
  $region17: #{generator_forward.4} parent=0 // pred_fallthru
    _
  // Predicated region
  $region18: #{generator_forward.4} parent=0 // pred_check
    _
  $region19: #{generator_forward.4} parent=0 // pred_check_branch
    %19 = sbr.rel (0) target = $region21
  $region20: #{generator_forward.4} parent=0 // pred_region
    _
  $region21: #{generator_forward.4} parent=0 // pred_fallthru
    _
  %v20 = vld [vmem:[%s0] sm:$0xff]
  %v21 = vld [vmem:[%s0 + $0x8] sm:$0xff]
  %v22 = vld [vmem:[%s0 + $0x10] sm:$0xff]
  %v23 = vld [vmem:[%s0 + $0x18] sm:$0xff]
  %v24 = vld [vmem:[%s2] sm:$0xff]
  %v25 = vld [vmem:[%s2 + $0x8] sm:$0xff]
  %v26 = vld [vmem:[%s2 + $0x10] sm:$0xff]
  %v27 = vld [vmem:[%s2 + $0x18] sm:$0xff]
  %v28 = vld [vmem:[%s2 + $0x20] sm:$0xff]
  %v29 = vld [vmem:[%s2 + $0x28] sm:$0xff]
  %v30 = vld [vmem:[%s2 + $0x30] sm:$0xff]
  %v31 = vld [vmem:[%s2 + $0x38] sm:$0xff]
  %v32 = vld [vmem:[%s1] sm:$0xff]
  %v33 = vld [vmem:[%s1 + $0x8] sm:$0xff]
  %v34 = vld [vmem:[%s1 + $0x10] sm:$0xff]
  %v35 = vld [vmem:[%s1 + $0x18] sm:$0xff]
  %v36 = vld [vmem:[%s1 + $0x20] sm:$0xff]
  %v37 = vld [vmem:[%s1 + $0x28] sm:$0xff]
  %v38 = vld [vmem:[%s1 + $0x30] sm:$0xff]
  %v39 = vld [vmem:[%s1 + $0x38] sm:$0xff]
  %41 = vset.pattern.permute.xlu0 0
  %42 = vperm.xlu0 %41, %v24
  %v43 = vpop.permute.xlu0 %42
  %46 = vset.pattern.permute.xlu0 0
  %47 = vperm.xlu0 %46, %v25
  %v48 = vpop.permute.xlu0 %47
  %51 = vset.pattern.permute.xlu0 0
  %52 = vperm.xlu0 %51, %v26
  %v53 = vpop.permute.xlu0 %52
  %56 = vset.pattern.permute.xlu0 0
  %57 = vperm.xlu0 %56, %v27
  %v58 = vpop.permute.xlu0 %57
  %61 = vset.pattern.permute.xlu0 0
  %62 = vperm.xlu0 %61, %v28
  %v63 = vpop.permute.xlu0 %62
  %66 = vset.pattern.permute.xlu0 0
  %67 = vperm.xlu0 %66, %v29
  %v68 = vpop.permute.xlu0 %67
  %71 = vset.pattern.permute.xlu0 0
  %72 = vperm.xlu0 %71, %v30
  %v73 = vpop.permute.xlu0 %72
  %76 = vset.pattern.permute.xlu0 0
  %77 = vperm.xlu0 %76, %v31
  %v78 = vpop.permute.xlu0 %77
  %vm80 = vcmask 261120
  %v82 = vsel %vm80, %v32, 0
  %v85 = vsel %vm80, %v33, 0
  %v88 = vsel %vm80, %v34, 0
  %v91 = vsel %vm80, %v35, 0
  %v94 = vsel %vm80, %v36, 0
  %v97 = vsel %vm80, %v37, 0
  %v100 = vsel %vm80, %v38, 0
  %v103 = vsel %vm80, %v39, 0
  %105 = vmatpush.msra.mxu0 0.0
  %106 = vmatpush.msra.mxu0 0.0
  %107 = vmatpush.msra.mxu0 0.0
  %108 = vmatpush.msra.mxu0 0.0
  %109 = vmatpush.msra.mxu0 0.0
  %110 = vmatpush.msra.mxu0 0.0
  %111 = vmatpush.msra.mxu0 0.0
  %112 = vmatpush.msra.mxu0 0.0
  %113 = vmatpush.msra.mxu0 0.0
  %114 = vmatpush.msra.mxu0 0.0
  %115 = vmatpush.msra.mxu0 0.0
  %116 = vmatpush.msra.mxu0 0.0
  %117 = vmatpush.msra.mxu0 %v23
  %118 = vmatpush.msra.mxu0 %v22
  %119 = vmatpush.msra.mxu0 %v21
  %120 = vmatpush.msra.mxu0 %v20
  %121 = vmatmul.f32.gmra.mxu0 %v82
  %v122 = vpop.f32.mrf.mxu0
  %v123 = vadd.f32 %v43, %v122
  %124 = vmatmul.f32.gmra.mxu0 %v85
  %v125 = vpop.f32.mrf.mxu0
  %v126 = vadd.f32 %v48, %v125
  %127 = vmatmul.f32.gmra.mxu0 %v88
  %v128 = vpop.f32.mrf.mxu0
  %v129 = vadd.f32 %v53, %v128
  %130 = vmatmul.f32.gmra.mxu0 %v91
  %v131 = vpop.f32.mrf.mxu0
  %v132 = vadd.f32 %v58, %v131
  %133 = vmatmul.f32.gmra.mxu0 %v94
  %v134 = vpop.f32.mrf.mxu0
  %v135 = vadd.f32 %v63, %v134
  %136 = vmatmul.f32.gmra.mxu0 %v97
  %v137 = vpop.f32.mrf.mxu0
  %v138 = vadd.f32 %v68, %v137
  %139 = vmatmul.f32.gmra.mxu0 %v100
  %v140 = vpop.f32.mrf.mxu0
  %v141 = vadd.f32 %v73, %v140
  %142 = vmatmul.f32.gmra.mxu0 %v103
  %v143 = vpop.f32.mrf.mxu0
  %v144 = vadd.f32 %v78, %v143
  %145 = vdwg.mxu0
  %s146 = scalar_lea.vmem %s1, 64
  %v147 = vld [vmem:[%s146] sm:$0xff]
  %v148 = vld [vmem:[%s146 + $0x8] sm:$0xff]
  %v149 = vld [vmem:[%s146 + $0x10] sm:$0xff]
  %v150 = vld [vmem:[%s146 + $0x18] sm:$0xff]
  %v151 = vld [vmem:[%s146 + $0x20] sm:$0xff]
  %v152 = vld [vmem:[%s146 + $0x28] sm:$0xff]
  %v153 = vld [vmem:[%s146 + $0x30] sm:$0xff]
  %v154 = vld [vmem:[%s146 + $0x38] sm:$0xff]
  %v156 = vsel %vm80, %v147, 0
  %v159 = vsel %vm80, %v148, 0
  %v162 = vsel %vm80, %v149, 0
  %v165 = vsel %vm80, %v150, 0
  %v168 = vsel %vm80, %v151, 0
  %v171 = vsel %vm80, %v152, 0
  %v174 = vsel %vm80, %v153, 0
  %v177 = vsel %vm80, %v154, 0
  %179 = vmatpush.msra.mxu0 0.0
  %180 = vmatpush.msra.mxu0 0.0
  %181 = vmatpush.msra.mxu0 0.0
  %182 = vmatpush.msra.mxu0 0.0
  %183 = vmatpush.msra.mxu0 0.0
  %184 = vmatpush.msra.mxu0 0.0
  %185 = vmatpush.msra.mxu0 0.0
  %186 = vmatpush.msra.mxu0 0.0
  %187 = vmatpush.msra.mxu0 0.0
  %188 = vmatpush.msra.mxu0 0.0
  %189 = vmatpush.msra.mxu0 0.0
  %190 = vmatpush.msra.mxu0 0.0
  %191 = vmatpush.msra.mxu0 %v23
  %192 = vmatpush.msra.mxu0 %v22
  %193 = vmatpush.msra.mxu0 %v21
  %194 = vmatpush.msra.mxu0 %v20
  %195 = vmatmul.f32.gmra.mxu0 %v156
  %v196 = vpop.f32.mrf.mxu0
  %v197 = vadd.f32 %v43, %v196
  %198 = vmatmul.f32.gmra.mxu0 %v159
  %v199 = vpop.f32.mrf.mxu0
  %v200 = vadd.f32 %v48, %v199
  %201 = vmatmul.f32.gmra.mxu0 %v162
  %v202 = vpop.f32.mrf.mxu0
  %v203 = vadd.f32 %v53, %v202
  %204 = vmatmul.f32.gmra.mxu0 %v165
  %v205 = vpop.f32.mrf.mxu0
  %v206 = vadd.f32 %v58, %v205
  %207 = vmatmul.f32.gmra.mxu0 %v168
  %v208 = vpop.f32.mrf.mxu0
  %v209 = vadd.f32 %v63, %v208
  %210 = vmatmul.f32.gmra.mxu0 %v171
  %v211 = vpop.f32.mrf.mxu0
  %v212 = vadd.f32 %v68, %v211
  %213 = vmatmul.f32.gmra.mxu0 %v174
  %v214 = vpop.f32.mrf.mxu0
  %v215 = vadd.f32 %v73, %v214
  %216 = vmatmul.f32.gmra.mxu0 %v177
  %v217 = vpop.f32.mrf.mxu0
  %v218 = vadd.f32 %v78, %v217
  %219 = vdwg.mxu0
  %s220 = scalar_lea.vmem %s1, 128
  %v221 = vld [vmem:[%s220] sm:$0xff]
  %v222 = vld [vmem:[%s220 + $0x8] sm:$0xff]
  %v223 = vld [vmem:[%s220 + $0x10] sm:$0xff]
  %v224 = vld [vmem:[%s220 + $0x18] sm:$0xff]
  %v225 = vld [vmem:[%s220 + $0x20] sm:$0xff]
  %v226 = vld [vmem:[%s220 + $0x28] sm:$0xff]
  %v227 = vld [vmem:[%s220 + $0x30] sm:$0xff]
  %v228 = vld [vmem:[%s220 + $0x38] sm:$0xff]
  %v230 = vsel %vm80, %v221, 0
  %v233 = vsel %vm80, %v222, 0
  %v236 = vsel %vm80, %v223, 0
  %v239 = vsel %vm80, %v224, 0
  %v242 = vsel %vm80, %v225, 0
  %v245 = vsel %vm80, %v226, 0
  %v248 = vsel %vm80, %v227, 0
  %v251 = vsel %vm80, %v228, 0
  %253 = vmatpush.msra.mxu0 0.0
  %254 = vmatpush.msra.mxu0 0.0
  %255 = vmatpush.msra.mxu0 0.0
  %256 = vmatpush.msra.mxu0 0.0
  %257 = vmatpush.msra.mxu0 0.0
  %258 = vmatpush.msra.mxu0 0.0
  %259 = vmatpush.msra.mxu0 0.0
  %260 = vmatpush.msra.mxu0 0.0
  %261 = vmatpush.msra.mxu0 0.0
  %262 = vmatpush.msra.mxu0 0.0
  %263 = vmatpush.msra.mxu0 0.0
  %264 = vmatpush.msra.mxu0 0.0
  %265 = vmatpush.msra.mxu0 %v23
  %266 = vmatpush.msra.mxu0 %v22
  %267 = vmatpush.msra.mxu0 %v21
  %268 = vmatpush.msra.mxu0 %v20
  %269 = vmatmul.f32.gmra.mxu0 %v230
  %v270 = vpop.f32.mrf.mxu0
  %v271 = vadd.f32 %v43, %v270
  %272 = vmatmul.f32.gmra.mxu0 %v233
  %v273 = vpop.f32.mrf.mxu0
  %v274 = vadd.f32 %v48, %v273
  %275 = vmatmul.f32.gmra.mxu0 %v236
  %v276 = vpop.f32.mrf.mxu0
  %v277 = vadd.f32 %v53, %v276
  %278 = vmatmul.f32.gmra.mxu0 %v239
  %v279 = vpop.f32.mrf.mxu0
  %v280 = vadd.f32 %v58, %v279
  %281 = vmatmul.f32.gmra.mxu0 %v242
  %v282 = vpop.f32.mrf.mxu0
  %v283 = vadd.f32 %v63, %v282
  %284 = vmatmul.f32.gmra.mxu0 %v245
  %v285 = vpop.f32.mrf.mxu0
  %v286 = vadd.f32 %v68, %v285
  %287 = vmatmul.f32.gmra.mxu0 %v248
  %v288 = vpop.f32.mrf.mxu0
  %v289 = vadd.f32 %v73, %v288
  %290 = vmatmul.f32.gmra.mxu0 %v251
  %v291 = vpop.f32.mrf.mxu0
  %v292 = vadd.f32 %v78, %v291
  %293 = vdwg.mxu0
  %s294 = scalar_lea.vmem %s1, 192
  %v295 = vld [vmem:[%s294] sm:$0xff]
  %v296 = vld [vmem:[%s294 + $0x8] sm:$0xff]
  %v297 = vld [vmem:[%s294 + $0x10] sm:$0xff]
  %v298 = vld [vmem:[%s294 + $0x18] sm:$0xff]
  %v299 = vld [vmem:[%s294 + $0x20] sm:$0xff]
  %v300 = vld [vmem:[%s294 + $0x28] sm:$0xff]
  %v301 = vld [vmem:[%s294 + $0x30] sm:$0xff]
  %v302 = vld [vmem:[%s294 + $0x38] sm:$0xff]
  %v304 = vsel %vm80, %v295, 0
  %v307 = vsel %vm80, %v296, 0
  %v310 = vsel %vm80, %v297, 0
  %v313 = vsel %vm80, %v298, 0
  %v316 = vsel %vm80, %v299, 0
  %v319 = vsel %vm80, %v300, 0
  %v322 = vsel %vm80, %v301, 0
  %v325 = vsel %vm80, %v302, 0
  %327 = vmatpush.msra.mxu0 0.0
  %328 = vmatpush.msra.mxu0 0.0
  %329 = vmatpush.msra.mxu0 0.0
  %330 = vmatpush.msra.mxu0 0.0
  %331 = vmatpush.msra.mxu0 0.0
  %332 = vmatpush.msra.mxu0 0.0
  %333 = vmatpush.msra.mxu0 0.0
  %334 = vmatpush.msra.mxu0 0.0
  %335 = vmatpush.msra.mxu0 0.0
  %336 = vmatpush.msra.mxu0 0.0
  %337 = vmatpush.msra.mxu0 0.0
  %338 = vmatpush.msra.mxu0 0.0
  %339 = vmatpush.msra.mxu0 %v23
  %340 = vmatpush.msra.mxu0 %v22
  %341 = vmatpush.msra.mxu0 %v21
  %342 = vmatpush.msra.mxu0 %v20
  %343 = vmatmul.f32.gmra.mxu0 %v304
  %v344 = vpop.f32.mrf.mxu0
  %v345 = vadd.f32 %v43, %v344
  %346 = vmatmul.f32.gmra.mxu0 %v307
  %v347 = vpop.f32.mrf.mxu0
  %v348 = vadd.f32 %v48, %v347
  %349 = vmatmul.f32.gmra.mxu0 %v310
  %v350 = vpop.f32.mrf.mxu0
  %v351 = vadd.f32 %v53, %v350
  %352 = vmatmul.f32.gmra.mxu0 %v313
  %v353 = vpop.f32.mrf.mxu0
  %v354 = vadd.f32 %v58, %v353
  %355 = vmatmul.f32.gmra.mxu0 %v316
  %v356 = vpop.f32.mrf.mxu0
  %v357 = vadd.f32 %v63, %v356
  %358 = vmatmul.f32.gmra.mxu0 %v319
  %v359 = vpop.f32.mrf.mxu0
  %v360 = vadd.f32 %v68, %v359
  %361 = vmatmul.f32.gmra.mxu0 %v322
  %v362 = vpop.f32.mrf.mxu0
  %v363 = vadd.f32 %v73, %v362
  %364 = vmatmul.f32.gmra.mxu0 %v325
  %v365 = vpop.f32.mrf.mxu0
  %v366 = vadd.f32 %v78, %v365
  %367 = vdwg.mxu0
  %s368 = scalar_lea.vmem %s1, 256
  %v369 = vld [vmem:[%s368] sm:$0xff]
  %v370 = vld [vmem:[%s368 + $0x8] sm:$0xff]
  %v371 = vld [vmem:[%s368 + $0x10] sm:$0xff]
  %v372 = vld [vmem:[%s368 + $0x18] sm:$0xff]
  %v373 = vld [vmem:[%s368 + $0x20] sm:$0xff]
  %v374 = vld [vmem:[%s368 + $0x28] sm:$0xff]
  %v375 = vld [vmem:[%s368 + $0x30] sm:$0xff]
  %v376 = vld [vmem:[%s368 + $0x38] sm:$0xff]
  %v378 = vsel %vm80, %v369, 0
  %v381 = vsel %vm80, %v370, 0
  %v384 = vsel %vm80, %v371, 0
  %v387 = vsel %vm80, %v372, 0
  %v390 = vsel %vm80, %v373, 0
  %v393 = vsel %vm80, %v374, 0
  %v396 = vsel %vm80, %v375, 0
  %v399 = vsel %vm80, %v376, 0
  %401 = vmatpush.msra.mxu0 0.0
  %402 = vmatpush.msra.mxu0 0.0
  %403 = vmatpush.msra.mxu0 0.0
  %404 = vmatpush.msra.mxu0 0.0
  %405 = vmatpush.msra.mxu0 0.0
  %406 = vmatpush.msra.mxu0 0.0
  %407 = vmatpush.msra.mxu0 0.0
  %408 = vmatpush.msra.mxu0 0.0
  %409 = vmatpush.msra.mxu0 0.0
  %410 = vmatpush.msra.mxu0 0.0
  %411 = vmatpush.msra.mxu0 0.0
  %412 = vmatpush.msra.mxu0 0.0
  %413 = vmatpush.msra.mxu0 %v23
  %414 = vmatpush.msra.mxu0 %v22
  %415 = vmatpush.msra.mxu0 %v21
  %416 = vmatpush.msra.mxu0 %v20
  %417 = vmatmul.f32.gmra.mxu0 %v378
  %v418 = vpop.f32.mrf.mxu0
  %v419 = vadd.f32 %v43, %v418
  %420 = vmatmul.f32.gmra.mxu0 %v381
  %v421 = vpop.f32.mrf.mxu0
  %v422 = vadd.f32 %v48, %v421
  %423 = vmatmul.f32.gmra.mxu0 %v384
  %v424 = vpop.f32.mrf.mxu0
  %v425 = vadd.f32 %v53, %v424
  %426 = vmatmul.f32.gmra.mxu0 %v387
  %v427 = vpop.f32.mrf.mxu0
  %v428 = vadd.f32 %v58, %v427
  %429 = vmatmul.f32.gmra.mxu0 %v390
  %v430 = vpop.f32.mrf.mxu0
  %v431 = vadd.f32 %v63, %v430
  %432 = vmatmul.f32.gmra.mxu0 %v393
  %v433 = vpop.f32.mrf.mxu0
  %v434 = vadd.f32 %v68, %v433
  %435 = vmatmul.f32.gmra.mxu0 %v396
  %v436 = vpop.f32.mrf.mxu0
  %v437 = vadd.f32 %v73, %v436
  %438 = vmatmul.f32.gmra.mxu0 %v399
  %v439 = vpop.f32.mrf.mxu0
  %v440 = vadd.f32 %v78, %v439
  %441 = vdwg.mxu0
  %s442 = scalar_lea.vmem %s1, 320
  %v443 = vld [vmem:[%s442] sm:$0xff]
  %v444 = vld [vmem:[%s442 + $0x8] sm:$0xff]
  %v445 = vld [vmem:[%s442 + $0x10] sm:$0xff]
  %v446 = vld [vmem:[%s442 + $0x18] sm:$0xff]
  %v447 = vld [vmem:[%s442 + $0x20] sm:$0xff]
  %v448 = vld [vmem:[%s442 + $0x28] sm:$0xff]
  %v449 = vld [vmem:[%s442 + $0x30] sm:$0xff]
  %v450 = vld [vmem:[%s442 + $0x38] sm:$0xff]
  %v452 = vsel %vm80, %v443, 0
  %v455 = vsel %vm80, %v444, 0
  %v458 = vsel %vm80, %v445, 0
  %v461 = vsel %vm80, %v446, 0
  %v464 = vsel %vm80, %v447, 0
  %v467 = vsel %vm80, %v448, 0
  %v470 = vsel %vm80, %v449, 0
  %v473 = vsel %vm80, %v450, 0
  %475 = vmatpush.msra.mxu0 0.0
  %476 = vmatpush.msra.mxu0 0.0
  %477 = vmatpush.msra.mxu0 0.0
  %478 = vmatpush.msra.mxu0 0.0
  %479 = vmatpush.msra.mxu0 0.0
  %480 = vmatpush.msra.mxu0 0.0
  %481 = vmatpush.msra.mxu0 0.0
  %482 = vmatpush.msra.mxu0 0.0
  %483 = vmatpush.msra.mxu0 0.0
  %484 = vmatpush.msra.mxu0 0.0
  %485 = vmatpush.msra.mxu0 0.0
  %486 = vmatpush.msra.mxu0 0.0
  %487 = vmatpush.msra.mxu0 %v23
  %488 = vmatpush.msra.mxu0 %v22
  %489 = vmatpush.msra.mxu0 %v21
  %490 = vmatpush.msra.mxu0 %v20
  %491 = vmatmul.f32.gmra.mxu0 %v452
  %v492 = vpop.f32.mrf.mxu0
  %v493 = vadd.f32 %v43, %v492
  %494 = vmatmul.f32.gmra.mxu0 %v455
  %v495 = vpop.f32.mrf.mxu0
  %v496 = vadd.f32 %v48, %v495
  %497 = vmatmul.f32.gmra.mxu0 %v458
  %v498 = vpop.f32.mrf.mxu0
  %v499 = vadd.f32 %v53, %v498
  %500 = vmatmul.f32.gmra.mxu0 %v461
  %v501 = vpop.f32.mrf.mxu0
  %v502 = vadd.f32 %v58, %v501
  %503 = vmatmul.f32.gmra.mxu0 %v464
  %v504 = vpop.f32.mrf.mxu0
  %v505 = vadd.f32 %v63, %v504
  %506 = vmatmul.f32.gmra.mxu0 %v467
  %v507 = vpop.f32.mrf.mxu0
  %v508 = vadd.f32 %v68, %v507
  %509 = vmatmul.f32.gmra.mxu0 %v470
  %v510 = vpop.f32.mrf.mxu0
  %v511 = vadd.f32 %v73, %v510
  %512 = vmatmul.f32.gmra.mxu0 %v473
  %v513 = vpop.f32.mrf.mxu0
  %v514 = vadd.f32 %v78, %v513
  %515 = vdwg.mxu0
  %s516 = scalar_lea.vmem %s1, 384
  %v517 = vld [vmem:[%s516] sm:$0xff]
  %v518 = vld [vmem:[%s516 + $0x8] sm:$0xff]
  %v519 = vld [vmem:[%s516 + $0x10] sm:$0xff]
  %v520 = vld [vmem:[%s516 + $0x18] sm:$0xff]
  %v521 = vld [vmem:[%s516 + $0x20] sm:$0xff]
  %v522 = vld [vmem:[%s516 + $0x28] sm:$0xff]
  %v523 = vld [vmem:[%s516 + $0x30] sm:$0xff]
  %v524 = vld [vmem:[%s516 + $0x38] sm:$0xff]
  %v526 = vsel %vm80, %v517, 0
  %v529 = vsel %vm80, %v518, 0
  %v532 = vsel %vm80, %v519, 0
  %v535 = vsel %vm80, %v520, 0
  %v538 = vsel %vm80, %v521, 0
  %v541 = vsel %vm80, %v522, 0
  %v544 = vsel %vm80, %v523, 0
  %v547 = vsel %vm80, %v524, 0
  %549 = vmatpush.msra.mxu0 0.0
  %550 = vmatpush.msra.mxu0 0.0
  %551 = vmatpush.msra.mxu0 0.0
  %552 = vmatpush.msra.mxu0 0.0
  %553 = vmatpush.msra.mxu0 0.0
  %554 = vmatpush.msra.mxu0 0.0
  %555 = vmatpush.msra.mxu0 0.0
  %556 = vmatpush.msra.mxu0 0.0
  %557 = vmatpush.msra.mxu0 0.0
  %558 = vmatpush.msra.mxu0 0.0
  %559 = vmatpush.msra.mxu0 0.0
  %560 = vmatpush.msra.mxu0 0.0
  %561 = vmatpush.msra.mxu0 %v23
  %562 = vmatpush.msra.mxu0 %v22
  %563 = vmatpush.msra.mxu0 %v21
  %564 = vmatpush.msra.mxu0 %v20
  %565 = vmatmul.f32.gmra.mxu0 %v526
  %v566 = vpop.f32.mrf.mxu0
  %v567 = vadd.f32 %v43, %v566
  %568 = vmatmul.f32.gmra.mxu0 %v529
  %v569 = vpop.f32.mrf.mxu0
  %v570 = vadd.f32 %v48, %v569
  %571 = vmatmul.f32.gmra.mxu0 %v532
  %v572 = vpop.f32.mrf.mxu0
  %v573 = vadd.f32 %v53, %v572
  %574 = vmatmul.f32.gmra.mxu0 %v535
  %v575 = vpop.f32.mrf.mxu0
  %v576 = vadd.f32 %v58, %v575
  %577 = vmatmul.f32.gmra.mxu0 %v538
  %v578 = vpop.f32.mrf.mxu0
  %v579 = vadd.f32 %v63, %v578
  %580 = vmatmul.f32.gmra.mxu0 %v541
  %v581 = vpop.f32.mrf.mxu0
  %v582 = vadd.f32 %v68, %v581
  %583 = vmatmul.f32.gmra.mxu0 %v544
  %v584 = vpop.f32.mrf.mxu0
  %v585 = vadd.f32 %v73, %v584
  %586 = vmatmul.f32.gmra.mxu0 %v547
  %v587 = vpop.f32.mrf.mxu0
  %v588 = vadd.f32 %v78, %v587
  %589 = vdwg.mxu0
  %s590 = scalar_lea.vmem %s1, 448
  %v591 = vld [vmem:[%s590] sm:$0xff]
  %v592 = vld [vmem:[%s590 + $0x8] sm:$0xff]
  %v593 = vld [vmem:[%s590 + $0x10] sm:$0xff]
  %v594 = vld [vmem:[%s590 + $0x18] sm:$0xff]
  %v595 = vld [vmem:[%s590 + $0x20] sm:$0xff]
  %v596 = vld [vmem:[%s590 + $0x28] sm:$0xff]
  %v597 = vld [vmem:[%s590 + $0x30] sm:$0xff]
  %v598 = vld [vmem:[%s590 + $0x38] sm:$0xff]
  %v600 = vsel %vm80, %v591, 0
  %v603 = vsel %vm80, %v592, 0
  %v606 = vsel %vm80, %v593, 0
  %v609 = vsel %vm80, %v594, 0
  %v612 = vsel %vm80, %v595, 0
  %v615 = vsel %vm80, %v596, 0
  %v618 = vsel %vm80, %v597, 0
  %v621 = vsel %vm80, %v598, 0
  %623 = vmatpush.msra.mxu0 0.0
  %624 = vmatpush.msra.mxu0 0.0
  %625 = vmatpush.msra.mxu0 0.0
  %626 = vmatpush.msra.mxu0 0.0
  %627 = vmatpush.msra.mxu0 0.0
  %628 = vmatpush.msra.mxu0 0.0
  %629 = vmatpush.msra.mxu0 0.0
  %630 = vmatpush.msra.mxu0 0.0
  %631 = vmatpush.msra.mxu0 0.0
  %632 = vmatpush.msra.mxu0 0.0
  %633 = vmatpush.msra.mxu0 0.0
  %634 = vmatpush.msra.mxu0 0.0
  %635 = vmatpush.msra.mxu0 %v23
  %636 = vmatpush.msra.mxu0 %v22
  %637 = vmatpush.msra.mxu0 %v21
  %638 = vmatpush.msra.mxu0 %v20
  %639 = vmatmul.f32.gmra.mxu0 %v600
  %v640 = vpop.f32.mrf.mxu0
  %v641 = vadd.f32 %v43, %v640
  %642 = vmatmul.f32.gmra.mxu0 %v603
  %v643 = vpop.f32.mrf.mxu0
  %v644 = vadd.f32 %v48, %v643
  %645 = vmatmul.f32.gmra.mxu0 %v606
  %v646 = vpop.f32.mrf.mxu0
  %v647 = vadd.f32 %v53, %v646
  %648 = vmatmul.f32.gmra.mxu0 %v609
  %v649 = vpop.f32.mrf.mxu0
  %v650 = vadd.f32 %v58, %v649
  %651 = vmatmul.f32.gmra.mxu0 %v612
  %v652 = vpop.f32.mrf.mxu0
  %v653 = vadd.f32 %v63, %v652
  %654 = vmatmul.f32.gmra.mxu0 %v615
  %v655 = vpop.f32.mrf.mxu0
  %v656 = vadd.f32 %v68, %v655
  %657 = vmatmul.f32.gmra.mxu0 %v618
  %v658 = vpop.f32.mrf.mxu0
  %v659 = vadd.f32 %v73, %v658
  %660 = vmatmul.f32.gmra.mxu0 %v621
  %v661 = vpop.f32.mrf.mxu0
  %v662 = vadd.f32 %v78, %v661
  %663 = vdwg.mxu0
  %s664 = scalar_lea.vmem %s1, 512
  %v665 = vld [vmem:[%s664] sm:$0xff]
  %v666 = vld [vmem:[%s664 + $0x8] sm:$0xff]
  %v667 = vld [vmem:[%s664 + $0x10] sm:$0xff]
  %v668 = vld [vmem:[%s664 + $0x18] sm:$0xff]
  %v669 = vld [vmem:[%s664 + $0x20] sm:$0xff]
  %v670 = vld [vmem:[%s664 + $0x28] sm:$0xff]
  %v671 = vld [vmem:[%s664 + $0x30] sm:$0xff]
  %v672 = vld [vmem:[%s664 + $0x38] sm:$0xff]
  %v674 = vsel %vm80, %v665, 0
  %v677 = vsel %vm80, %v666, 0
  %v680 = vsel %vm80, %v667, 0
  %v683 = vsel %vm80, %v668, 0
  %v686 = vsel %vm80, %v669, 0
  %v689 = vsel %vm80, %v670, 0
  %v692 = vsel %vm80, %v671, 0
  %v695 = vsel %vm80, %v672, 0
  %697 = vmatpush.msra.mxu0 0.0
  %698 = vmatpush.msra.mxu0 0.0
  %699 = vmatpush.msra.mxu0 0.0
  %700 = vmatpush.msra.mxu0 0.0
  %701 = vmatpush.msra.mxu0 0.0
  %702 = vmatpush.msra.mxu0 0.0
  %703 = vmatpush.msra.mxu0 0.0
  %704 = vmatpush.msra.mxu0 0.0
  %705 = vmatpush.msra.mxu0 0.0
  %706 = vmatpush.msra.mxu0 0.0
  %707 = vmatpush.msra.mxu0 0.0
  %708 = vmatpush.msra.mxu0 0.0
  %709 = vmatpush.msra.mxu0 %v23
  %710 = vmatpush.msra.mxu0 %v22
  %711 = vmatpush.msra.mxu0 %v21
  %712 = vmatpush.msra.mxu0 %v20
  %713 = vmatmul.f32.gmra.mxu0 %v674
  %v714 = vpop.f32.mrf.mxu0
  %v715 = vadd.f32 %v43, %v714
  %716 = vmatmul.f32.gmra.mxu0 %v677
  %v717 = vpop.f32.mrf.mxu0
  %v718 = vadd.f32 %v48, %v717
  %719 = vmatmul.f32.gmra.mxu0 %v680
  %v720 = vpop.f32.mrf.mxu0
  %v721 = vadd.f32 %v53, %v720
  %722 = vmatmul.f32.gmra.mxu0 %v683
  %v723 = vpop.f32.mrf.mxu0
  %v724 = vadd.f32 %v58, %v723
  %725 = vmatmul.f32.gmra.mxu0 %v686
  %v726 = vpop.f32.mrf.mxu0
  %v727 = vadd.f32 %v63, %v726
  %728 = vmatmul.f32.gmra.mxu0 %v689
  %v729 = vpop.f32.mrf.mxu0
  %v730 = vadd.f32 %v68, %v729
  %731 = vmatmul.f32.gmra.mxu0 %v692
  %v732 = vpop.f32.mrf.mxu0
  %v733 = vadd.f32 %v73, %v732
  %734 = vmatmul.f32.gmra.mxu0 %v695
  %v735 = vpop.f32.mrf.mxu0
  %v736 = vadd.f32 %v78, %v735
  %737 = vdwg.mxu0
  %s738 = scalar_lea.vmem %s1, 576
  %v739 = vld [vmem:[%s738] sm:$0xff]
  %v740 = vld [vmem:[%s738 + $0x8] sm:$0xff]
  %v741 = vld [vmem:[%s738 + $0x10] sm:$0xff]
  %v742 = vld [vmem:[%s738 + $0x18] sm:$0xff]
  %v743 = vld [vmem:[%s738 + $0x20] sm:$0xff]
  %v744 = vld [vmem:[%s738 + $0x28] sm:$0xff]
  %v745 = vld [vmem:[%s738 + $0x30] sm:$0xff]
  %v746 = vld [vmem:[%s738 + $0x38] sm:$0xff]
  %v748 = vsel %vm80, %v739, 0
  %v751 = vsel %vm80, %v740, 0
  %v754 = vsel %vm80, %v741, 0
  %v757 = vsel %vm80, %v742, 0
  %v760 = vsel %vm80, %v743, 0
  %v763 = vsel %vm80, %v744, 0
  %v766 = vsel %vm80, %v745, 0
  %v769 = vsel %vm80, %v746, 0
  %771 = vmatpush.msra.mxu0 0.0
  %772 = vmatpush.msra.mxu0 0.0
  %773 = vmatpush.msra.mxu0 0.0
  %774 = vmatpush.msra.mxu0 0.0
  %775 = vmatpush.msra.mxu0 0.0
  %776 = vmatpush.msra.mxu0 0.0
  %777 = vmatpush.msra.mxu0 0.0
  %778 = vmatpush.msra.mxu0 0.0
  %779 = vmatpush.msra.mxu0 0.0
  %780 = vmatpush.msra.mxu0 0.0
  %781 = vmatpush.msra.mxu0 0.0
  %782 = vmatpush.msra.mxu0 0.0
  %783 = vmatpush.msra.mxu0 %v23
  %784 = vmatpush.msra.mxu0 %v22
  %785 = vmatpush.msra.mxu0 %v21
  %786 = vmatpush.msra.mxu0 %v20
  %787 = vmatmul.f32.gmra.mxu0 %v748
  %v788 = vpop.f32.mrf.mxu0
  %v789 = vadd.f32 %v43, %v788
  %790 = vmatmul.f32.gmra.mxu0 %v751
  %v791 = vpop.f32.mrf.mxu0
  %v792 = vadd.f32 %v48, %v791
  %793 = vmatmul.f32.gmra.mxu0 %v754
  %v794 = vpop.f32.mrf.mxu0
  %v795 = vadd.f32 %v53, %v794
  %796 = vmatmul.f32.gmra.mxu0 %v757
  %v797 = vpop.f32.mrf.mxu0
  %v798 = vadd.f32 %v58, %v797
  %799 = vmatmul.f32.gmra.mxu0 %v760
  %v800 = vpop.f32.mrf.mxu0
  %v801 = vadd.f32 %v63, %v800
  %802 = vmatmul.f32.gmra.mxu0 %v763
  %v803 = vpop.f32.mrf.mxu0
  %v804 = vadd.f32 %v68, %v803
  %805 = vmatmul.f32.gmra.mxu0 %v766
  %v806 = vpop.f32.mrf.mxu0
  %v807 = vadd.f32 %v73, %v806
  %808 = vmatmul.f32.gmra.mxu0 %v769
  %v809 = vpop.f32.mrf.mxu0
  %v810 = vadd.f32 %v78, %v809
  %811 = vdwg.mxu0
  %s812 = scalar_lea.vmem %s1, 640
  %v813 = vld [vmem:[%s812] sm:$0xff]
  %v814 = vld [vmem:[%s812 + $0x8] sm:$0xff]
  %v815 = vld [vmem:[%s812 + $0x10] sm:$0xff]
  %v816 = vld [vmem:[%s812 + $0x18] sm:$0xff]
  %v817 = vld [vmem:[%s812 + $0x20] sm:$0xff]
  %v818 = vld [vmem:[%s812 + $0x28] sm:$0xff]
  %v819 = vld [vmem:[%s812 + $0x30] sm:$0xff]
  %v820 = vld [vmem:[%s812 + $0x38] sm:$0xff]
  %v822 = vsel %vm80, %v813, 0
  %v825 = vsel %vm80, %v814, 0
  %v828 = vsel %vm80, %v815, 0
  %v831 = vsel %vm80, %v816, 0
  %v834 = vsel %vm80, %v817, 0
  %v837 = vsel %vm80, %v818, 0
  %v840 = vsel %vm80, %v819, 0
  %v843 = vsel %vm80, %v820, 0
  %845 = vmatpush.msra.mxu0 0.0
  %846 = vmatpush.msra.mxu0 0.0
  %847 = vmatpush.msra.mxu0 0.0
  %848 = vmatpush.msra.mxu0 0.0
  %849 = vmatpush.msra.mxu0 0.0
  %850 = vmatpush.msra.mxu0 0.0
  %851 = vmatpush.msra.mxu0 0.0
  %852 = vmatpush.msra.mxu0 0.0
  %853 = vmatpush.msra.mxu0 0.0
  %854 = vmatpush.msra.mxu0 0.0
  %855 = vmatpush.msra.mxu0 0.0
  %856 = vmatpush.msra.mxu0 0.0
  %857 = vmatpush.msra.mxu0 %v23
  %858 = vmatpush.msra.mxu0 %v22
  %859 = vmatpush.msra.mxu0 %v21
  %860 = vmatpush.msra.mxu0 %v20
  %861 = vmatmul.f32.gmra.mxu0 %v822
  %v862 = vpop.f32.mrf.mxu0
  %v863 = vadd.f32 %v43, %v862
  %864 = vmatmul.f32.gmra.mxu0 %v825
  %v865 = vpop.f32.mrf.mxu0
  %v866 = vadd.f32 %v48, %v865
  %867 = vmatmul.f32.gmra.mxu0 %v828
  %v868 = vpop.f32.mrf.mxu0
  %v869 = vadd.f32 %v53, %v868
  %870 = vmatmul.f32.gmra.mxu0 %v831
  %v871 = vpop.f32.mrf.mxu0
  %v872 = vadd.f32 %v58, %v871
  %873 = vmatmul.f32.gmra.mxu0 %v834
  %v874 = vpop.f32.mrf.mxu0
  %v875 = vadd.f32 %v63, %v874
  %876 = vmatmul.f32.gmra.mxu0 %v837
  %v877 = vpop.f32.mrf.mxu0
  %v878 = vadd.f32 %v68, %v877
  %879 = vmatmul.f32.gmra.mxu0 %v840
  %v880 = vpop.f32.mrf.mxu0
  %v881 = vadd.f32 %v73, %v880
  %882 = vmatmul.f32.gmra.mxu0 %v843
  %v883 = vpop.f32.mrf.mxu0
  %v884 = vadd.f32 %v78, %v883
  %885 = vdwg.mxu0
  %s886 = scalar_lea.vmem %s1, 704
  %v887 = vld [vmem:[%s886] sm:$0xff]
  %v888 = vld [vmem:[%s886 + $0x8] sm:$0xff]
  %v889 = vld [vmem:[%s886 + $0x10] sm:$0xff]
  %v890 = vld [vmem:[%s886 + $0x18] sm:$0xff]
  %v891 = vld [vmem:[%s886 + $0x20] sm:$0xff]
  %v892 = vld [vmem:[%s886 + $0x28] sm:$0xff]
  %v893 = vld [vmem:[%s886 + $0x30] sm:$0xff]
  %v894 = vld [vmem:[%s886 + $0x38] sm:$0xff]
  %v896 = vsel %vm80, %v887, 0
  %v899 = vsel %vm80, %v888, 0
  %v902 = vsel %vm80, %v889, 0
  %v905 = vsel %vm80, %v890, 0
  %v908 = vsel %vm80, %v891, 0
  %v911 = vsel %vm80, %v892, 0
  %v914 = vsel %vm80, %v893, 0
  %v917 = vsel %vm80, %v894, 0
  %919 = vmatpush.msra.mxu0 0.0
  %920 = vmatpush.msra.mxu0 0.0
  %921 = vmatpush.msra.mxu0 0.0
  %922 = vmatpush.msra.mxu0 0.0
  %923 = vmatpush.msra.mxu0 0.0
  %924 = vmatpush.msra.mxu0 0.0
  %925 = vmatpush.msra.mxu0 0.0
  %926 = vmatpush.msra.mxu0 0.0
  %927 = vmatpush.msra.mxu0 0.0
  %928 = vmatpush.msra.mxu0 0.0
  %929 = vmatpush.msra.mxu0 0.0
  %930 = vmatpush.msra.mxu0 0.0
  %931 = vmatpush.msra.mxu0 %v23
  %932 = vmatpush.msra.mxu0 %v22
  %933 = vmatpush.msra.mxu0 %v21
  %934 = vmatpush.msra.mxu0 %v20
  %935 = vmatmul.f32.gmra.mxu0 %v896
  %v936 = vpop.f32.mrf.mxu0
  %v937 = vadd.f32 %v43, %v936
  %938 = vmatmul.f32.gmra.mxu0 %v899
  %v939 = vpop.f32.mrf.mxu0
  %v940 = vadd.f32 %v48, %v939
  %941 = vmatmul.f32.gmra.mxu0 %v902
  %v942 = vpop.f32.mrf.mxu0
  %v943 = vadd.f32 %v53, %v942
  %944 = vmatmul.f32.gmra.mxu0 %v905
  %v945 = vpop.f32.mrf.mxu0
  %v946 = vadd.f32 %v58, %v945
  %947 = vmatmul.f32.gmra.mxu0 %v908
  %v948 = vpop.f32.mrf.mxu0
  %v949 = vadd.f32 %v63, %v948
  %950 = vmatmul.f32.gmra.mxu0 %v911
  %v951 = vpop.f32.mrf.mxu0
  %v952 = vadd.f32 %v68, %v951
  %953 = vmatmul.f32.gmra.mxu0 %v914
  %v954 = vpop.f32.mrf.mxu0
  %v955 = vadd.f32 %v73, %v954
  %956 = vmatmul.f32.gmra.mxu0 %v917
  %v957 = vpop.f32.mrf.mxu0
  %v958 = vadd.f32 %v78, %v957
  %959 = vdwg.mxu0
  %s960 = scalar_lea.vmem %s1, 768
  %v961 = vld [vmem:[%s960] sm:$0xff]
  %v962 = vld [vmem:[%s960 + $0x8] sm:$0xff]
  %v963 = vld [vmem:[%s960 + $0x10] sm:$0xff]
  %v964 = vld [vmem:[%s960 + $0x18] sm:$0xff]
  %v965 = vld [vmem:[%s960 + $0x20] sm:$0xff]
  %v966 = vld [vmem:[%s960 + $0x28] sm:$0xff]
  %v967 = vld [vmem:[%s960 + $0x30] sm:$0xff]
  %v968 = vld [vmem:[%s960 + $0x38] sm:$0xff]
  %v970 = vsel %vm80, %v961, 0
  %v973 = vsel %vm80, %v962, 0
  %v976 = vsel %vm80, %v963, 0
  %v979 = vsel %vm80, %v964, 0
  %v982 = vsel %vm80, %v965, 0
  %v985 = vsel %vm80, %v966, 0
  %v988 = vsel %vm80, %v967, 0
  %v991 = vsel %vm80, %v968, 0
  %993 = vmatpush.msra.mxu0 0.0
  %994 = vmatpush.msra.mxu0 0.0
  %995 = vmatpush.msra.mxu0 0.0
  %996 = vmatpush.msra.mxu0 0.0
  %997 = vmatpush.msra.mxu0 0.0
  %998 = vmatpush.msra.mxu0 0.0
  %999 = vmatpush.msra.mxu0 0.0
  %1000 = vmatpush.msra.mxu0 0.0
  %1001 = vmatpush.msra.mxu0 0.0
  %1002 = vmatpush.msra.mxu0 0.0
  %1003 = vmatpush.msra.mxu0 0.0
  %1004 = vmatpush.msra.mxu0 0.0
  %1005 = vmatpush.msra.mxu0 %v23
  %1006 = vmatpush.msra.mxu0 %v22
  %1007 = vmatpush.msra.mxu0 %v21
  %1008 = vmatpush.msra.mxu0 %v20
  %1009 = vmatmul.f32.gmra.mxu0 %v970
  %v1010 = vpop.f32.mrf.mxu0
  %v1011 = vadd.f32 %v43, %v1010
  %1012 = vmatmul.f32.gmra.mxu0 %v973
  %v1013 = vpop.f32.mrf.mxu0
  %v1014 = vadd.f32 %v48, %v1013
  %1015 = vmatmul.f32.gmra.mxu0 %v976
  %v1016 = vpop.f32.mrf.mxu0
  %v1017 = vadd.f32 %v53, %v1016
  %1018 = vmatmul.f32.gmra.mxu0 %v979
  %v1019 = vpop.f32.mrf.mxu0
  %v1020 = vadd.f32 %v58, %v1019
  %1021 = vmatmul.f32.gmra.mxu0 %v982
  %v1022 = vpop.f32.mrf.mxu0
  %v1023 = vadd.f32 %v63, %v1022
  %1024 = vmatmul.f32.gmra.mxu0 %v985
  %v1025 = vpop.f32.mrf.mxu0
  %v1026 = vadd.f32 %v68, %v1025
  %1027 = vmatmul.f32.gmra.mxu0 %v988
  %v1028 = vpop.f32.mrf.mxu0
  %v1029 = vadd.f32 %v73, %v1028
  %1030 = vmatmul.f32.gmra.mxu0 %v991
  %v1031 = vpop.f32.mrf.mxu0
  %v1032 = vadd.f32 %v78, %v1031
  %1033 = vdwg.mxu0
  %s1034 = scalar_lea.vmem %s1, 832
  %v1035 = vld [vmem:[%s1034] sm:$0xff]
  %v1036 = vld [vmem:[%s1034 + $0x8] sm:$0xff]
  %v1037 = vld [vmem:[%s1034 + $0x10] sm:$0xff]
  %v1038 = vld [vmem:[%s1034 + $0x18] sm:$0xff]
  %v1039 = vld [vmem:[%s1034 + $0x20] sm:$0xff]
  %v1040 = vld [vmem:[%s1034 + $0x28] sm:$0xff]
  %v1041 = vld [vmem:[%s1034 + $0x30] sm:$0xff]
  %v1042 = vld [vmem:[%s1034 + $0x38] sm:$0xff]
  %v1044 = vsel %vm80, %v1035, 0
  %v1047 = vsel %vm80, %v1036, 0
  %v1050 = vsel %vm80, %v1037, 0
  %v1053 = vsel %vm80, %v1038, 0
  %v1056 = vsel %vm80, %v1039, 0
  %v1059 = vsel %vm80, %v1040, 0
  %v1062 = vsel %vm80, %v1041, 0
  %v1065 = vsel %vm80, %v1042, 0
  %1067 = vmatpush.msra.mxu0 0.0
  %1068 = vmatpush.msra.mxu0 0.0
  %1069 = vmatpush.msra.mxu0 0.0
  %1070 = vmatpush.msra.mxu0 0.0
  %1071 = vmatpush.msra.mxu0 0.0
  %1072 = vmatpush.msra.mxu0 0.0
  %1073 = vmatpush.msra.mxu0 0.0
  %1074 = vmatpush.msra.mxu0 0.0
  %1075 = vmatpush.msra.mxu0 0.0
  %1076 = vmatpush.msra.mxu0 0.0
  %1077 = vmatpush.msra.mxu0 0.0
  %1078 = vmatpush.msra.mxu0 0.0
  %1079 = vmatpush.msra.mxu0 %v23
  %1080 = vmatpush.msra.mxu0 %v22
  %1081 = vmatpush.msra.mxu0 %v21
  %1082 = vmatpush.msra.mxu0 %v20
  %1083 = vmatmul.f32.gmra.mxu0 %v1044
  %v1084 = vpop.f32.mrf.mxu0
  %v1085 = vadd.f32 %v43, %v1084
  %1086 = vmatmul.f32.gmra.mxu0 %v1047
  %v1087 = vpop.f32.mrf.mxu0
  %v1088 = vadd.f32 %v48, %v1087
  %1089 = vmatmul.f32.gmra.mxu0 %v1050
  %v1090 = vpop.f32.mrf.mxu0
  %v1091 = vadd.f32 %v53, %v1090
  %1092 = vmatmul.f32.gmra.mxu0 %v1053
  %v1093 = vpop.f32.mrf.mxu0
  %v1094 = vadd.f32 %v58, %v1093
  %1095 = vmatmul.f32.gmra.mxu0 %v1056
  %v1096 = vpop.f32.mrf.mxu0
  %v1097 = vadd.f32 %v63, %v1096
  %1098 = vmatmul.f32.gmra.mxu0 %v1059
  %v1099 = vpop.f32.mrf.mxu0
  %v1100 = vadd.f32 %v68, %v1099
  %1101 = vmatmul.f32.gmra.mxu0 %v1062
  %v1102 = vpop.f32.mrf.mxu0
  %v1103 = vadd.f32 %v73, %v1102
  %1104 = vmatmul.f32.gmra.mxu0 %v1065
  %v1105 = vpop.f32.mrf.mxu0
  %v1106 = vadd.f32 %v78, %v1105
  %1107 = vdwg.mxu0
  %s1108 = scalar_lea.vmem %s1, 896
  %v1109 = vld [vmem:[%s1108] sm:$0xff]
  %v1110 = vld [vmem:[%s1108 + $0x8] sm:$0xff]
  %v1111 = vld [vmem:[%s1108 + $0x10] sm:$0xff]
  %v1112 = vld [vmem:[%s1108 + $0x18] sm:$0xff]
  %v1113 = vld [vmem:[%s1108 + $0x20] sm:$0xff]
  %v1114 = vld [vmem:[%s1108 + $0x28] sm:$0xff]
  %v1115 = vld [vmem:[%s1108 + $0x30] sm:$0xff]
  %v1116 = vld [vmem:[%s1108 + $0x38] sm:$0xff]
  %v1118 = vsel %vm80, %v1109, 0
  %v1121 = vsel %vm80, %v1110, 0
  %v1124 = vsel %vm80, %v1111, 0
  %v1127 = vsel %vm80, %v1112, 0
  %v1130 = vsel %vm80, %v1113, 0
  %v1133 = vsel %vm80, %v1114, 0
  %v1136 = vsel %vm80, %v1115, 0
  %v1139 = vsel %vm80, %v1116, 0
  %1141 = vmatpush.msra.mxu0 0.0
  %1142 = vmatpush.msra.mxu0 0.0
  %1143 = vmatpush.msra.mxu0 0.0
  %1144 = vmatpush.msra.mxu0 0.0
  %1145 = vmatpush.msra.mxu0 0.0
  %1146 = vmatpush.msra.mxu0 0.0
  %1147 = vmatpush.msra.mxu0 0.0
  %1148 = vmatpush.msra.mxu0 0.0
  %1149 = vmatpush.msra.mxu0 0.0
  %1150 = vmatpush.msra.mxu0 0.0
  %1151 = vmatpush.msra.mxu0 0.0
  %1152 = vmatpush.msra.mxu0 0.0
  %1153 = vmatpush.msra.mxu0 %v23
  %1154 = vmatpush.msra.mxu0 %v22
  %1155 = vmatpush.msra.mxu0 %v21
  %1156 = vmatpush.msra.mxu0 %v20
  %1157 = vmatmul.f32.gmra.mxu0 %v1118
  %v1158 = vpop.f32.mrf.mxu0
  %v1159 = vadd.f32 %v43, %v1158
  %1160 = vmatmul.f32.gmra.mxu0 %v1121
  %v1161 = vpop.f32.mrf.mxu0
  %v1162 = vadd.f32 %v48, %v1161
  %1163 = vmatmul.f32.gmra.mxu0 %v1124
  %v1164 = vpop.f32.mrf.mxu0
  %v1165 = vadd.f32 %v53, %v1164
  %1166 = vmatmul.f32.gmra.mxu0 %v1127
  %v1167 = vpop.f32.mrf.mxu0
  %v1168 = vadd.f32 %v58, %v1167
  %1169 = vmatmul.f32.gmra.mxu0 %v1130
  %v1170 = vpop.f32.mrf.mxu0
  %v1171 = vadd.f32 %v63, %v1170
  %1172 = vmatmul.f32.gmra.mxu0 %v1133
  %v1173 = vpop.f32.mrf.mxu0
  %v1174 = vadd.f32 %v68, %v1173
  %1175 = vmatmul.f32.gmra.mxu0 %v1136
  %v1176 = vpop.f32.mrf.mxu0
  %v1177 = vadd.f32 %v73, %v1176
  %1178 = vmatmul.f32.gmra.mxu0 %v1139
  %v1179 = vpop.f32.mrf.mxu0
  %v1180 = vadd.f32 %v78, %v1179
  %1181 = vdwg.mxu0
  %s1182 = scalar_lea.vmem %s1, 960
  %v1183 = vld [vmem:[%s1182] sm:$0xff]
  %v1184 = vld [vmem:[%s1182 + $0x8] sm:$0xff]
  %v1185 = vld [vmem:[%s1182 + $0x10] sm:$0xff]
  %v1186 = vld [vmem:[%s1182 + $0x18] sm:$0xff]
  %v1187 = vld [vmem:[%s1182 + $0x20] sm:$0xff]
  %v1188 = vld [vmem:[%s1182 + $0x28] sm:$0xff]
  %v1189 = vld [vmem:[%s1182 + $0x30] sm:$0xff]
  %v1190 = vld [vmem:[%s1182 + $0x38] sm:$0xff]
  %v1192 = vsel %vm80, %v1183, 0
  %v1195 = vsel %vm80, %v1184, 0
  %v1198 = vsel %vm80, %v1185, 0
  %v1201 = vsel %vm80, %v1186, 0
  %v1204 = vsel %vm80, %v1187, 0
  %v1207 = vsel %vm80, %v1188, 0
  %v1210 = vsel %vm80, %v1189, 0
  %v1213 = vsel %vm80, %v1190, 0
  %1215 = vmatpush.msra.mxu0 0.0
  %1216 = vmatpush.msra.mxu0 0.0
  %1217 = vmatpush.msra.mxu0 0.0
  %1218 = vmatpush.msra.mxu0 0.0
  %1219 = vmatpush.msra.mxu0 0.0
  %1220 = vmatpush.msra.mxu0 0.0
  %1221 = vmatpush.msra.mxu0 0.0
  %1222 = vmatpush.msra.mxu0 0.0
  %1223 = vmatpush.msra.mxu0 0.0
  %1224 = vmatpush.msra.mxu0 0.0
  %1225 = vmatpush.msra.mxu0 0.0
  %1226 = vmatpush.msra.mxu0 0.0
  %1227 = vmatpush.msra.mxu0 %v23
  %1228 = vmatpush.msra.mxu0 %v22
  %1229 = vmatpush.msra.mxu0 %v21
  %1230 = vmatpush.msra.mxu0 %v20
  %1231 = vmatmul.f32.gmra.mxu0 %v1192
  %v1232 = vpop.f32.mrf.mxu0
  %v1233 = vadd.f32 %v43, %v1232
  %1234 = vmatmul.f32.gmra.mxu0 %v1195
  %v1235 = vpop.f32.mrf.mxu0
  %v1236 = vadd.f32 %v48, %v1235
  %1237 = vmatmul.f32.gmra.mxu0 %v1198
  %v1238 = vpop.f32.mrf.mxu0
  %v1239 = vadd.f32 %v53, %v1238
  %1240 = vmatmul.f32.gmra.mxu0 %v1201
  %v1241 = vpop.f32.mrf.mxu0
  %v1242 = vadd.f32 %v58, %v1241
  %1243 = vmatmul.f32.gmra.mxu0 %v1204
  %v1244 = vpop.f32.mrf.mxu0
  %v1245 = vadd.f32 %v63, %v1244
  %1246 = vmatmul.f32.gmra.mxu0 %v1207
  %v1247 = vpop.f32.mrf.mxu0
  %v1248 = vadd.f32 %v68, %v1247
  %1249 = vmatmul.f32.gmra.mxu0 %v1210
  %v1250 = vpop.f32.mrf.mxu0
  %v1251 = vadd.f32 %v73, %v1250
  %1252 = vmatmul.f32.gmra.mxu0 %v1213
  %v1253 = vpop.f32.mrf.mxu0
  %v1254 = vadd.f32 %v78, %v1253
  %1255 = vdwg.mxu0
  %v1256 = vmul.f32 %v123, %v123
  %v1257 = vmul.f32 %v126, %v126
  %v1258 = vmul.f32 %v129, %v129
  %v1259 = vmul.f32 %v132, %v132
  %v1260 = vmul.f32 %v135, %v135
  %v1261 = vmul.f32 %v138, %v138
  %v1262 = vmul.f32 %v141, %v141
  %v1263 = vmul.f32 %v144, %v144
  %v1264 = vadd.f32 %v123, %v197
  %v1265 = vadd.f32 %v126, %v200
  %v1266 = vadd.f32 %v129, %v203
  %v1267 = vadd.f32 %v132, %v206
  %v1268 = vadd.f32 %v135, %v209
  %v1269 = vadd.f32 %v138, %v212
  %v1270 = vadd.f32 %v141, %v215
  %v1271 = vadd.f32 %v144, %v218
  %v1272 = vmul.f32 %v197, %v197
  %v1273 = vmul.f32 %v200, %v200
  %v1274 = vmul.f32 %v203, %v203
  %v1275 = vmul.f32 %v206, %v206
  %v1276 = vmul.f32 %v209, %v209
  %v1277 = vmul.f32 %v212, %v212
  %v1278 = vmul.f32 %v215, %v215
  %v1279 = vmul.f32 %v218, %v218
  %v1280 = vadd.f32 %v1256, %v1272
  %v1281 = vadd.f32 %v1257, %v1273
  %v1282 = vadd.f32 %v1258, %v1274
  %v1283 = vadd.f32 %v1259, %v1275
  %v1284 = vadd.f32 %v1260, %v1276
  %v1285 = vadd.f32 %v1261, %v1277
  %v1286 = vadd.f32 %v1262, %v1278
  %v1287 = vadd.f32 %v1263, %v1279
  %v1288 = vadd.f32 %v1264, %v271
  %v1289 = vadd.f32 %v1265, %v274
  %v1290 = vadd.f32 %v1266, %v277
  %v1291 = vadd.f32 %v1267, %v280
  %v1292 = vadd.f32 %v1268, %v283
  %v1293 = vadd.f32 %v1269, %v286
  %v1294 = vadd.f32 %v1270, %v289
  %v1295 = vadd.f32 %v1271, %v292
  %v1296 = vmul.f32 %v271, %v271
  %v1297 = vmul.f32 %v274, %v274
  %v1298 = vmul.f32 %v277, %v277
  %v1299 = vmul.f32 %v280, %v280
  %v1300 = vmul.f32 %v283, %v283
  %v1301 = vmul.f32 %v286, %v286
  %v1302 = vmul.f32 %v289, %v289
  %v1303 = vmul.f32 %v292, %v292
  %v1304 = vadd.f32 %v1280, %v1296
  %v1305 = vadd.f32 %v1281, %v1297
  %v1306 = vadd.f32 %v1282, %v1298
  %v1307 = vadd.f32 %v1283, %v1299
  %v1308 = vadd.f32 %v1284, %v1300
  %v1309 = vadd.f32 %v1285, %v1301
  %v1310 = vadd.f32 %v1286, %v1302
  %v1311 = vadd.f32 %v1287, %v1303
  %v1312 = vadd.f32 %v1288, %v345
  %v1313 = vadd.f32 %v1289, %v348
  %v1314 = vadd.f32 %v1290, %v351
  %v1315 = vadd.f32 %v1291, %v354
  %v1316 = vadd.f32 %v1292, %v357
  %v1317 = vadd.f32 %v1293, %v360
  %v1318 = vadd.f32 %v1294, %v363
  %v1319 = vadd.f32 %v1295, %v366
  %v1320 = vmul.f32 %v345, %v345
  %v1321 = vmul.f32 %v348, %v348
  %v1322 = vmul.f32 %v351, %v351
  %v1323 = vmul.f32 %v354, %v354
  %v1324 = vmul.f32 %v357, %v357
  %v1325 = vmul.f32 %v360, %v360
  %v1326 = vmul.f32 %v363, %v363
  %v1327 = vmul.f32 %v366, %v366
  %v1328 = vadd.f32 %v1304, %v1320
  %v1329 = vadd.f32 %v1305, %v1321
  %v1330 = vadd.f32 %v1306, %v1322
  %v1331 = vadd.f32 %v1307, %v1323
  %v1332 = vadd.f32 %v1308, %v1324
  %v1333 = vadd.f32 %v1309, %v1325
  %v1334 = vadd.f32 %v1310, %v1326
  %v1335 = vadd.f32 %v1311, %v1327
  %v1336 = vadd.f32 %v1312, %v419
  %v1337 = vadd.f32 %v1313, %v422
  %v1338 = vadd.f32 %v1314, %v425
  %v1339 = vadd.f32 %v1315, %v428
  %v1340 = vadd.f32 %v1316, %v431
  %v1341 = vadd.f32 %v1317, %v434
  %v1342 = vadd.f32 %v1318, %v437
  %v1343 = vadd.f32 %v1319, %v440
  %v1344 = vmul.f32 %v419, %v419
  %v1345 = vmul.f32 %v422, %v422
  %v1346 = vmul.f32 %v425, %v425
  %v1347 = vmul.f32 %v428, %v428
  %v1348 = vmul.f32 %v431, %v431
  %v1349 = vmul.f32 %v434, %v434
  %v1350 = vmul.f32 %v437, %v437
  %v1351 = vmul.f32 %v440, %v440
  %v1352 = vadd.f32 %v1328, %v1344
  %v1353 = vadd.f32 %v1329, %v1345
  %v1354 = vadd.f32 %v1330, %v1346
  %v1355 = vadd.f32 %v1331, %v1347
  %v1356 = vadd.f32 %v1332, %v1348
  %v1357 = vadd.f32 %v1333, %v1349
  %v1358 = vadd.f32 %v1334, %v1350
  %v1359 = vadd.f32 %v1335, %v1351
  %v1360 = vadd.f32 %v1336, %v493
  %v1361 = vadd.f32 %v1337, %v496
  %v1362 = vadd.f32 %v1338, %v499
  %v1363 = vadd.f32 %v1339, %v502
  %v1364 = vadd.f32 %v1340, %v505
  %v1365 = vadd.f32 %v1341, %v508
  %v1366 = vadd.f32 %v1342, %v511
  %v1367 = vadd.f32 %v1343, %v514
  %v1368 = vmul.f32 %v493, %v493
  %v1369 = vmul.f32 %v496, %v496
  %v1370 = vmul.f32 %v499, %v499
  %v1371 = vmul.f32 %v502, %v502
  %v1372 = vmul.f32 %v505, %v505
  %v1373 = vmul.f32 %v508, %v508
  %v1374 = vmul.f32 %v511, %v511
  %v1375 = vmul.f32 %v514, %v514
  %v1376 = vadd.f32 %v1352, %v1368
  %v1377 = vadd.f32 %v1353, %v1369
  %v1378 = vadd.f32 %v1354, %v1370
  %v1379 = vadd.f32 %v1355, %v1371
  %v1380 = vadd.f32 %v1356, %v1372
  %v1381 = vadd.f32 %v1357, %v1373
  %v1382 = vadd.f32 %v1358, %v1374
  %v1383 = vadd.f32 %v1359, %v1375
  %v1384 = vadd.f32 %v1360, %v567
  %v1385 = vadd.f32 %v1361, %v570
  %v1386 = vadd.f32 %v1362, %v573
  %v1387 = vadd.f32 %v1363, %v576
  %v1388 = vadd.f32 %v1364, %v579
  %v1389 = vadd.f32 %v1365, %v582
  %v1390 = vadd.f32 %v1366, %v585
  %v1391 = vadd.f32 %v1367, %v588
  %v1392 = vmul.f32 %v567, %v567
  %v1393 = vmul.f32 %v570, %v570
  %v1394 = vmul.f32 %v573, %v573
  %v1395 = vmul.f32 %v576, %v576
  %v1396 = vmul.f32 %v579, %v579
  %v1397 = vmul.f32 %v582, %v582
  %v1398 = vmul.f32 %v585, %v585
  %v1399 = vmul.f32 %v588, %v588
  %v1400 = vadd.f32 %v1376, %v1392
  %v1401 = vadd.f32 %v1377, %v1393
  %v1402 = vadd.f32 %v1378, %v1394
  %v1403 = vadd.f32 %v1379, %v1395
  %v1404 = vadd.f32 %v1380, %v1396
  %v1405 = vadd.f32 %v1381, %v1397
  %v1406 = vadd.f32 %v1382, %v1398
  %v1407 = vadd.f32 %v1383, %v1399
  %v1408 = vadd.f32 %v1384, %v641
  %v1409 = vadd.f32 %v1385, %v644
  %v1410 = vadd.f32 %v1386, %v647
  %v1411 = vadd.f32 %v1387, %v650
  %v1412 = vadd.f32 %v1388, %v653
  %v1413 = vadd.f32 %v1389, %v656
  %v1414 = vadd.f32 %v1390, %v659
  %v1415 = vadd.f32 %v1391, %v662
  %v1416 = vmul.f32 %v641, %v641
  %v1417 = vmul.f32 %v644, %v644
  %v1418 = vmul.f32 %v647, %v647
  %v1419 = vmul.f32 %v650, %v650
  %v1420 = vmul.f32 %v653, %v653
  %v1421 = vmul.f32 %v656, %v656
  %v1422 = vmul.f32 %v659, %v659
  %v1423 = vmul.f32 %v662, %v662
  %v1424 = vadd.f32 %v1400, %v1416
  %v1425 = vadd.f32 %v1401, %v1417
  %v1426 = vadd.f32 %v1402, %v1418
  %v1427 = vadd.f32 %v1403, %v1419
  %v1428 = vadd.f32 %v1404, %v1420
  %v1429 = vadd.f32 %v1405, %v1421
  %v1430 = vadd.f32 %v1406, %v1422
  %v1431 = vadd.f32 %v1407, %v1423
  %v1432 = vadd.f32 %v1408, %v715
  %v1433 = vadd.f32 %v1409, %v718
  %v1434 = vadd.f32 %v1410, %v721
  %v1435 = vadd.f32 %v1411, %v724
  %v1436 = vadd.f32 %v1412, %v727
  %v1437 = vadd.f32 %v1413, %v730
  %v1438 = vadd.f32 %v1414, %v733
  %v1439 = vadd.f32 %v1415, %v736
  %v1440 = vmul.f32 %v715, %v715
  %v1441 = vmul.f32 %v718, %v718
  %v1442 = vmul.f32 %v721, %v721
  %v1443 = vmul.f32 %v724, %v724
  %v1444 = vmul.f32 %v727, %v727
  %v1445 = vmul.f32 %v730, %v730
  %v1446 = vmul.f32 %v733, %v733
  %v1447 = vmul.f32 %v736, %v736
  %v1448 = vadd.f32 %v1424, %v1440
  %v1449 = vadd.f32 %v1425, %v1441
  %v1450 = vadd.f32 %v1426, %v1442
  %v1451 = vadd.f32 %v1427, %v1443
  %v1452 = vadd.f32 %v1428, %v1444
  %v1453 = vadd.f32 %v1429, %v1445
  %v1454 = vadd.f32 %v1430, %v1446
  %v1455 = vadd.f32 %v1431, %v1447
  %v1456 = vadd.f32 %v1432, %v789
  %v1457 = vadd.f32 %v1433, %v792
  %v1458 = vadd.f32 %v1434, %v795
  %v1459 = vadd.f32 %v1435, %v798
  %v1460 = vadd.f32 %v1436, %v801
  %v1461 = vadd.f32 %v1437, %v804
  %v1462 = vadd.f32 %v1438, %v807
  %v1463 = vadd.f32 %v1439, %v810
  %v1464 = vmul.f32 %v789, %v789
  %v1465 = vmul.f32 %v792, %v792
  %v1466 = vmul.f32 %v795, %v795
  %v1467 = vmul.f32 %v798, %v798
  %v1468 = vmul.f32 %v801, %v801
  %v1469 = vmul.f32 %v804, %v804
  %v1470 = vmul.f32 %v807, %v807
  %v1471 = vmul.f32 %v810, %v810
  %v1472 = vadd.f32 %v1448, %v1464
  %v1473 = vadd.f32 %v1449, %v1465
  %v1474 = vadd.f32 %v1450, %v1466
  %v1475 = vadd.f32 %v1451, %v1467
  %v1476 = vadd.f32 %v1452, %v1468
  %v1477 = vadd.f32 %v1453, %v1469
  %v1478 = vadd.f32 %v1454, %v1470
  %v1479 = vadd.f32 %v1455, %v1471
  %v1480 = vadd.f32 %v1456, %v863
  %v1481 = vadd.f32 %v1457, %v866
  %v1482 = vadd.f32 %v1458, %v869
  %v1483 = vadd.f32 %v1459, %v872
  %v1484 = vadd.f32 %v1460, %v875
  %v1485 = vadd.f32 %v1461, %v878
  %v1486 = vadd.f32 %v1462, %v881
  %v1487 = vadd.f32 %v1463, %v884
  %v1488 = vmul.f32 %v863, %v863
  %v1489 = vmul.f32 %v866, %v866
  %v1490 = vmul.f32 %v869, %v869
  %v1491 = vmul.f32 %v872, %v872
  %v1492 = vmul.f32 %v875, %v875
  %v1493 = vmul.f32 %v878, %v878
  %v1494 = vmul.f32 %v881, %v881
  %v1495 = vmul.f32 %v884, %v884
  %v1496 = vadd.f32 %v1472, %v1488
  %v1497 = vadd.f32 %v1473, %v1489
  %v1498 = vadd.f32 %v1474, %v1490
  %v1499 = vadd.f32 %v1475, %v1491
  %v1500 = vadd.f32 %v1476, %v1492
  %v1501 = vadd.f32 %v1477, %v1493
  %v1502 = vadd.f32 %v1478, %v1494
  %v1503 = vadd.f32 %v1479, %v1495
  %v1504 = vadd.f32 %v1480, %v937
  %v1505 = vadd.f32 %v1481, %v940
  %v1506 = vadd.f32 %v1482, %v943
  %v1507 = vadd.f32 %v1483, %v946
  %v1508 = vadd.f32 %v1484, %v949
  %v1509 = vadd.f32 %v1485, %v952
  %v1510 = vadd.f32 %v1486, %v955
  %v1511 = vadd.f32 %v1487, %v958
  %v1512 = vmul.f32 %v937, %v937
  %v1513 = vmul.f32 %v940, %v940
  %v1514 = vmul.f32 %v943, %v943
  %v1515 = vmul.f32 %v946, %v946
  %v1516 = vmul.f32 %v949, %v949
  %v1517 = vmul.f32 %v952, %v952
  %v1518 = vmul.f32 %v955, %v955
  %v1519 = vmul.f32 %v958, %v958
  %v1520 = vadd.f32 %v1496, %v1512
  %v1521 = vadd.f32 %v1497, %v1513
  %v1522 = vadd.f32 %v1498, %v1514
  %v1523 = vadd.f32 %v1499, %v1515
  %v1524 = vadd.f32 %v1500, %v1516
  %v1525 = vadd.f32 %v1501, %v1517
  %v1526 = vadd.f32 %v1502, %v1518
  %v1527 = vadd.f32 %v1503, %v1519
  %v1528 = vadd.f32 %v1504, %v1011
  %v1529 = vadd.f32 %v1505, %v1014
  %v1530 = vadd.f32 %v1506, %v1017
  %v1531 = vadd.f32 %v1507, %v1020
  %v1532 = vadd.f32 %v1508, %v1023
  %v1533 = vadd.f32 %v1509, %v1026
  %v1534 = vadd.f32 %v1510, %v1029
  %v1535 = vadd.f32 %v1511, %v1032
  %v1536 = vmul.f32 %v1011, %v1011
  %v1537 = vmul.f32 %v1014, %v1014
  %v1538 = vmul.f32 %v1017, %v1017
  %v1539 = vmul.f32 %v1020, %v1020
  %v1540 = vmul.f32 %v1023, %v1023
  %v1541 = vmul.f32 %v1026, %v1026
  %v1542 = vmul.f32 %v1029, %v1029
  %v1543 = vmul.f32 %v1032, %v1032
  %v1544 = vadd.f32 %v1520, %v1536
  %v1545 = vadd.f32 %v1521, %v1537
  %v1546 = vadd.f32 %v1522, %v1538
  %v1547 = vadd.f32 %v1523, %v1539
  %v1548 = vadd.f32 %v1524, %v1540
  %v1549 = vadd.f32 %v1525, %v1541
  %v1550 = vadd.f32 %v1526, %v1542
  %v1551 = vadd.f32 %v1527, %v1543
  %v1552 = vadd.f32 %v1528, %v1085
  %v1553 = vadd.f32 %v1529, %v1088
  %v1554 = vadd.f32 %v1530, %v1091
  %v1555 = vadd.f32 %v1531, %v1094
  %v1556 = vadd.f32 %v1532, %v1097
  %v1557 = vadd.f32 %v1533, %v1100
  %v1558 = vadd.f32 %v1534, %v1103
  %v1559 = vadd.f32 %v1535, %v1106
  %v1560 = vmul.f32 %v1085, %v1085
  %v1561 = vmul.f32 %v1088, %v1088
  %v1562 = vmul.f32 %v1091, %v1091
  %v1563 = vmul.f32 %v1094, %v1094
  %v1564 = vmul.f32 %v1097, %v1097
  %v1565 = vmul.f32 %v1100, %v1100
  %v1566 = vmul.f32 %v1103, %v1103
  %v1567 = vmul.f32 %v1106, %v1106
  %v1568 = vadd.f32 %v1544, %v1560
  %v1569 = vadd.f32 %v1545, %v1561
  %v1570 = vadd.f32 %v1546, %v1562
  %v1571 = vadd.f32 %v1547, %v1563
  %v1572 = vadd.f32 %v1548, %v1564
  %v1573 = vadd.f32 %v1549, %v1565
  %v1574 = vadd.f32 %v1550, %v1566
  %v1575 = vadd.f32 %v1551, %v1567
  %v1576 = vadd.f32 %v1552, %v1159
  %v1577 = vadd.f32 %v1553, %v1162
  %v1578 = vadd.f32 %v1554, %v1165
  %v1579 = vadd.f32 %v1555, %v1168
  %v1580 = vadd.f32 %v1556, %v1171
  %v1581 = vadd.f32 %v1557, %v1174
  %v1582 = vadd.f32 %v1558, %v1177
  %v1583 = vadd.f32 %v1559, %v1180
  %v1584 = vmul.f32 %v1159, %v1159
  %v1585 = vmul.f32 %v1162, %v1162
  %v1586 = vmul.f32 %v1165, %v1165
  %v1587 = vmul.f32 %v1168, %v1168
  %v1588 = vmul.f32 %v1171, %v1171
  %v1589 = vmul.f32 %v1174, %v1174
  %v1590 = vmul.f32 %v1177, %v1177
  %v1591 = vmul.f32 %v1180, %v1180
  %v1592 = vadd.f32 %v1568, %v1584
  %v1593 = vadd.f32 %v1569, %v1585
  %v1594 = vadd.f32 %v1570, %v1586
  %v1595 = vadd.f32 %v1571, %v1587
  %v1596 = vadd.f32 %v1572, %v1588
  %v1597 = vadd.f32 %v1573, %v1589
  %v1598 = vadd.f32 %v1574, %v1590
  %v1599 = vadd.f32 %v1575, %v1591
  %v1600 = vadd.f32 %v1576, %v1233
  %v1601 = vadd.f32 %v1577, %v1236
  %v1602 = vadd.f32 %v1578, %v1239
  %v1603 = vadd.f32 %v1579, %v1242
  %v1604 = vadd.f32 %v1580, %v1245
  %v1605 = vadd.f32 %v1581, %v1248
  %v1606 = vadd.f32 %v1582, %v1251
  %v1607 = vadd.f32 %v1583, %v1254
  %v1608 = vmul.f32 %v1233, %v1233
  %v1609 = vmul.f32 %v1236, %v1236
  %v1610 = vmul.f32 %v1239, %v1239
  %v1611 = vmul.f32 %v1242, %v1242
  %v1612 = vmul.f32 %v1245, %v1245
  %v1613 = vmul.f32 %v1248, %v1248
  %v1614 = vmul.f32 %v1251, %v1251
  %v1615 = vmul.f32 %v1254, %v1254
  %v1616 = vadd.f32 %v1592, %v1608
  %v1617 = vadd.f32 %v1593, %v1609
  %v1618 = vadd.f32 %v1594, %v1610
  %v1619 = vadd.f32 %v1595, %v1611
  %v1620 = vadd.f32 %v1596, %v1612
  %v1621 = vadd.f32 %v1597, %v1613
  %v1622 = vadd.f32 %v1598, %v1614
  %v1623 = vadd.f32 %v1599, %v1615
  %vm1624 = vcmask 15360
  %v1625 = vsel %vm1624, %v1600, 0.0
  %1626 = vadd.xlane.f32.xlu0 %v1625
  %v1627 = vpop.xlane.xlu0 %1626
  %v1628 = vsel %vm1624, %v1601, 0.0
  %1629 = vadd.xlane.f32.xlu0 %v1628
  %v1630 = vpop.xlane.xlu0 %1629
  %v1631 = vsel %vm1624, %v1602, 0.0
  %1632 = vadd.xlane.f32.xlu0 %v1631
  %v1633 = vpop.xlane.xlu0 %1632
  %v1634 = vsel %vm1624, %v1603, 0.0
  %1635 = vadd.xlane.f32.xlu0 %v1634
  %v1636 = vpop.xlane.xlu0 %1635
  %v1637 = vsel %vm1624, %v1604, 0.0
  %1638 = vadd.xlane.f32.xlu0 %v1637
  %v1639 = vpop.xlane.xlu0 %1638
  %v1640 = vsel %vm1624, %v1605, 0.0
  %1641 = vadd.xlane.f32.xlu0 %v1640
  %v1642 = vpop.xlane.xlu0 %1641
  %v1643 = vsel %vm1624, %v1606, 0.0
  %1644 = vadd.xlane.f32.xlu0 %v1643
  %v1645 = vpop.xlane.xlu0 %1644
  %v1646 = vsel %vm1624, %v1607, 0.0
  %1647 = vadd.xlane.f32.xlu0 %v1646
  %v1648 = vpop.xlane.xlu0 %1647
  %v1649 = vrcp.pop 32.0
  %v1650 = vmul.f32 32.0, %v1649
  %v1651 = vsub.f32 1.0, %v1650
  %v1652 = vmul.f32 %v1649, %v1651
  %v1653 = vadd.f32 %v1649, %v1652
  %vm1654 = vweird.f32 %v1649
  %v1655 = vsel %vm1654, %v1649, %v1653
  %v1656 = vmul.f32 %v1627, %v1655
  %v1657 = vmul.f32 %v1630, %v1655
  %v1658 = vmul.f32 %v1633, %v1655
  %v1659 = vmul.f32 %v1636, %v1655
  %v1660 = vmul.f32 %v1639, %v1655
  %v1661 = vmul.f32 %v1642, %v1655
  %v1662 = vmul.f32 %v1645, %v1655
  %v1663 = vmul.f32 %v1648, %v1655
  %v1664 = vsel %vm1624, %v1616, 0.0
  %1665 = vadd.xlane.f32.xlu0 %v1664
  %v1666 = vpop.xlane.xlu0 %1665
  %v1667 = vsel %vm1624, %v1617, 0.0
  %1668 = vadd.xlane.f32.xlu0 %v1667
  %v1669 = vpop.xlane.xlu0 %1668
  %v1670 = vsel %vm1624, %v1618, 0.0
  %1671 = vadd.xlane.f32.xlu0 %v1670
  %v1672 = vpop.xlane.xlu0 %1671
  %v1673 = vsel %vm1624, %v1619, 0.0
  %1674 = vadd.xlane.f32.xlu0 %v1673
  %v1675 = vpop.xlane.xlu0 %1674
  %v1676 = vsel %vm1624, %v1620, 0.0
  %1677 = vadd.xlane.f32.xlu0 %v1676
  %v1678 = vpop.xlane.xlu0 %1677
  %v1679 = vsel %vm1624, %v1621, 0.0
  %1680 = vadd.xlane.f32.xlu0 %v1679
  %v1681 = vpop.xlane.xlu0 %1680
  %v1682 = vsel %vm1624, %v1622, 0.0
  %1683 = vadd.xlane.f32.xlu0 %v1682
  %v1684 = vpop.xlane.xlu0 %1683
  %v1685 = vsel %vm1624, %v1623, 0.0
  %1686 = vadd.xlane.f32.xlu0 %v1685
  %v1687 = vpop.xlane.xlu0 %1686
  %v1688 = vmul.f32 %v1666, %v1655
  %v1689 = vmul.f32 %v1669, %v1655
  %v1690 = vmul.f32 %v1672, %v1655
  %v1691 = vmul.f32 %v1675, %v1655
  %v1692 = vmul.f32 %v1678, %v1655
  %v1693 = vmul.f32 %v1681, %v1655
  %v1694 = vmul.f32 %v1684, %v1655
  %v1695 = vmul.f32 %v1687, %v1655
  %v1696 = vmul.f32 %v1656, %v1656
  %v1697 = vmul.f32 %v1657, %v1657
  %v1698 = vmul.f32 %v1658, %v1658
  %v1699 = vmul.f32 %v1659, %v1659
  %v1700 = vmul.f32 %v1660, %v1660
  %v1701 = vmul.f32 %v1661, %v1661
  %v1702 = vmul.f32 %v1662, %v1662
  %v1703 = vmul.f32 %v1663, %v1663
  %v1704 = vsub.f32 %v1688, %v1696
  %v1705 = vsub.f32 %v1689, %v1697
  %v1706 = vsub.f32 %v1690, %v1698
  %v1707 = vsub.f32 %v1691, %v1699
  %v1708 = vsub.f32 %v1692, %v1700
  %v1709 = vsub.f32 %v1693, %v1701
  %v1710 = vsub.f32 %v1694, %v1702
  %v1711 = vsub.f32 %v1695, %v1703
  %v1712 = vmax.f32 %v1704, 0.0
  %v1713 = vmax.f32 %v1705, 0.0
  %v1714 = vmax.f32 %v1706, 0.0
  %v1715 = vmax.f32 %v1707, 0.0
  %v1716 = vmax.f32 %v1708, 0.0
  %v1717 = vmax.f32 %v1709, 0.0
  %v1718 = vmax.f32 %v1710, 0.0
  %v1719 = vmax.f32 %v1711, 0.0
  %v1720 = vld [vmem:[%s3] sm:$0xff]
  %v1721 = vld [vmem:[%s3 + $0x8] sm:$0xff]
  %v1722 = vld [vmem:[%s3 + $0x10] sm:$0xff]
  %v1723 = vld [vmem:[%s3 + $0x18] sm:$0xff]
  %v1724 = vld [vmem:[%s3 + $0x20] sm:$0xff]
  %v1725 = vld [vmem:[%s3 + $0x28] sm:$0xff]
  %v1726 = vld [vmem:[%s3 + $0x30] sm:$0xff]
  %v1727 = vld [vmem:[%s3 + $0x38] sm:$0xff]
  %v1728 = vadd.f32 %v1712, 1e-05
  %v1729 = vadd.f32 %v1713, 1e-05
  %v1730 = vadd.f32 %v1714, 1e-05
  %v1731 = vadd.f32 %v1715, 1e-05
  %v1732 = vadd.f32 %v1716, 1e-05
  %v1733 = vadd.f32 %v1717, 1e-05
  %v1734 = vadd.f32 %v1718, 1e-05
  %v1735 = vadd.f32 %v1719, 1e-05
  %v1736 = vrsqrt.pop %v1728
  %v1737 = vmul.f32 %v1736, %v1728
  %v1738 = vmul.f32 %v1737, %v1736
  %v1739 = vmul.f32 0.5, %v1738
  %v1740 = vsub.f32 1.5, %v1739
  %v1741 = vmul.f32 %v1736, %v1740
  %vm1742 = vweird.f32 %v1728
  %vm1743 = vweird.f32 %v1736
  %vm1744 = vmor %vm1742, %vm1743
  %v1745 = vsel %vm1744, %v1736, %v1741
  %v1746 = vrsqrt.pop %v1729
  %v1747 = vmul.f32 %v1746, %v1729
  %v1748 = vmul.f32 %v1747, %v1746
  %v1749 = vmul.f32 0.5, %v1748
  %v1750 = vsub.f32 1.5, %v1749
  %v1751 = vmul.f32 %v1746, %v1750
  %vm1752 = vweird.f32 %v1729
  %vm1753 = vweird.f32 %v1746
  %vm1754 = vmor %vm1752, %vm1753
  %v1755 = vsel %vm1754, %v1746, %v1751
  %v1756 = vrsqrt.pop %v1730
  %v1757 = vmul.f32 %v1756, %v1730
  %v1758 = vmul.f32 %v1757, %v1756
  %v1759 = vmul.f32 0.5, %v1758
  %v1760 = vsub.f32 1.5, %v1759
  %v1761 = vmul.f32 %v1756, %v1760
  %vm1762 = vweird.f32 %v1730
  %vm1763 = vweird.f32 %v1756
  %vm1764 = vmor %vm1762, %vm1763
  %v1765 = vsel %vm1764, %v1756, %v1761
  %v1766 = vrsqrt.pop %v1731
  %v1767 = vmul.f32 %v1766, %v1731
  %v1768 = vmul.f32 %v1767, %v1766
  %v1769 = vmul.f32 0.5, %v1768
  %v1770 = vsub.f32 1.5, %v1769
  %v1771 = vmul.f32 %v1766, %v1770
  %vm1772 = vweird.f32 %v1731
  %vm1773 = vweird.f32 %v1766
  %vm1774 = vmor %vm1772, %vm1773
  %v1775 = vsel %vm1774, %v1766, %v1771
  %v1776 = vrsqrt.pop %v1732
  %v1777 = vmul.f32 %v1776, %v1732
  %v1778 = vmul.f32 %v1777, %v1776
  %v1779 = vmul.f32 0.5, %v1778
  %v1780 = vsub.f32 1.5, %v1779
  %v1781 = vmul.f32 %v1776, %v1780
  %vm1782 = vweird.f32 %v1732
  %vm1783 = vweird.f32 %v1776
  %vm1784 = vmor %vm1782, %vm1783
  %v1785 = vsel %vm1784, %v1776, %v1781
  %v1786 = vrsqrt.pop %v1733
  %v1787 = vmul.f32 %v1786, %v1733
  %v1788 = vmul.f32 %v1787, %v1786
  %v1789 = vmul.f32 0.5, %v1788
  %v1790 = vsub.f32 1.5, %v1789
  %v1791 = vmul.f32 %v1786, %v1790
  %vm1792 = vweird.f32 %v1733
  %vm1793 = vweird.f32 %v1786
  %vm1794 = vmor %vm1792, %vm1793
  %v1795 = vsel %vm1794, %v1786, %v1791
  %v1796 = vrsqrt.pop %v1734
  %v1797 = vmul.f32 %v1796, %v1734
  %v1798 = vmul.f32 %v1797, %v1796
  %v1799 = vmul.f32 0.5, %v1798
  %v1800 = vsub.f32 1.5, %v1799
  %v1801 = vmul.f32 %v1796, %v1800
  %vm1802 = vweird.f32 %v1734
  %vm1803 = vweird.f32 %v1796
  %vm1804 = vmor %vm1802, %vm1803
  %v1805 = vsel %vm1804, %v1796, %v1801
  %v1806 = vrsqrt.pop %v1735
  %v1807 = vmul.f32 %v1806, %v1735
  %v1808 = vmul.f32 %v1807, %v1806
  %v1809 = vmul.f32 0.5, %v1808
  %v1810 = vsub.f32 1.5, %v1809
  %v1811 = vmul.f32 %v1806, %v1810
  %vm1812 = vweird.f32 %v1735
  %vm1813 = vweird.f32 %v1806
  %vm1814 = vmor %vm1812, %vm1813
  %v1815 = vsel %vm1814, %v1806, %v1811
  %v1816 = vmul.f32 %v1720, %v1745
  %v1817 = vmul.f32 %v1721, %v1755
  %v1818 = vmul.f32 %v1722, %v1765
  %v1819 = vmul.f32 %v1723, %v1775
  %v1820 = vmul.f32 %v1724, %v1785
  %v1821 = vmul.f32 %v1725, %v1795
  %v1822 = vmul.f32 %v1726, %v1805
  %v1823 = vmul.f32 %v1727, %v1815
  %v1824 = vld [vmem:[%s4] sm:$0xff]
  %v1825 = vld [vmem:[%s4 + $0x8] sm:$0xff]
  %v1826 = vld [vmem:[%s4 + $0x10] sm:$0xff]
  %v1827 = vld [vmem:[%s4 + $0x18] sm:$0xff]
  %v1828 = vld [vmem:[%s4 + $0x20] sm:$0xff]
  %v1829 = vld [vmem:[%s4 + $0x28] sm:$0xff]
  %v1830 = vld [vmem:[%s4 + $0x30] sm:$0xff]
  %v1831 = vld [vmem:[%s4 + $0x38] sm:$0xff]
  %v1832 = vmul.f32 %v1656, %v1816
  %v1833 = vmul.f32 %v1657, %v1817
  %v1834 = vmul.f32 %v1658, %v1818
  %v1835 = vmul.f32 %v1659, %v1819
  %v1836 = vmul.f32 %v1660, %v1820
  %v1837 = vmul.f32 %v1661, %v1821
  %v1838 = vmul.f32 %v1662, %v1822
  %v1839 = vmul.f32 %v1663, %v1823
  %v1840 = vsub.f32 %v1824, %v1832
  %v1841 = vsub.f32 %v1825, %v1833
  %v1842 = vsub.f32 %v1826, %v1834
  %v1843 = vsub.f32 %v1827, %v1835
  %v1844 = vsub.f32 %v1828, %v1836
  %v1845 = vsub.f32 %v1829, %v1837
  %v1846 = vsub.f32 %v1830, %v1838
  %v1847 = vsub.f32 %v1831, %v1839
  %1849 = vset.pattern.permute.xlu0 0
  %1850 = vperm.xlu0 %1849, %v1816
  %v1851 = vpop.permute.xlu0 %1850
  %1854 = vset.pattern.permute.xlu0 0
  %1855 = vperm.xlu0 %1854, %v1817
  %v1856 = vpop.permute.xlu0 %1855
  %1859 = vset.pattern.permute.xlu0 0
  %1860 = vperm.xlu0 %1859, %v1818
  %v1861 = vpop.permute.xlu0 %1860
  %1864 = vset.pattern.permute.xlu0 0
  %1865 = vperm.xlu0 %1864, %v1819
  %v1866 = vpop.permute.xlu0 %1865
  %1869 = vset.pattern.permute.xlu0 0
  %1870 = vperm.xlu0 %1869, %v1820
  %v1871 = vpop.permute.xlu0 %1870
  %1874 = vset.pattern.permute.xlu0 0
  %1875 = vperm.xlu0 %1874, %v1821
  %v1876 = vpop.permute.xlu0 %1875
  %1879 = vset.pattern.permute.xlu0 0
  %1880 = vperm.xlu0 %1879, %v1822
  %v1881 = vpop.permute.xlu0 %1880
  %1884 = vset.pattern.permute.xlu0 0
  %1885 = vperm.xlu0 %1884, %v1823
  %v1886 = vpop.permute.xlu0 %1885
  %v1888 = vmul.f32 %v123, %v1851
  %v1889 = vmul.f32 %v126, %v1856
  %v1890 = vmul.f32 %v129, %v1861
  %v1891 = vmul.f32 %v132, %v1866
  %v1892 = vmul.f32 %v135, %v1871
  %v1893 = vmul.f32 %v138, %v1876
  %v1894 = vmul.f32 %v141, %v1881
  %v1895 = vmul.f32 %v144, %v1886
  %1897 = vset.pattern.permute.xlu0 0
  %1898 = vperm.xlu0 %1897, %v1840
  %v1899 = vpop.permute.xlu0 %1898
  %1902 = vset.pattern.permute.xlu0 0
  %1903 = vperm.xlu0 %1902, %v1841
  %v1904 = vpop.permute.xlu0 %1903
  %1907 = vset.pattern.permute.xlu0 0
  %1908 = vperm.xlu0 %1907, %v1842
  %v1909 = vpop.permute.xlu0 %1908
  %1912 = vset.pattern.permute.xlu0 0
  %1913 = vperm.xlu0 %1912, %v1843
  %v1914 = vpop.permute.xlu0 %1913
  %1917 = vset.pattern.permute.xlu0 0
  %1918 = vperm.xlu0 %1917, %v1844
  %v1919 = vpop.permute.xlu0 %1918
  %1922 = vset.pattern.permute.xlu0 0
  %1923 = vperm.xlu0 %1922, %v1845
  %v1924 = vpop.permute.xlu0 %1923
  %1927 = vset.pattern.permute.xlu0 0
  %1928 = vperm.xlu0 %1927, %v1846
  %v1929 = vpop.permute.xlu0 %1928
  %1932 = vset.pattern.permute.xlu0 0
  %1933 = vperm.xlu0 %1932, %v1847
  %v1934 = vpop.permute.xlu0 %1933
  %v1936 = vadd.f32 %v1888, %v1899
  %v1937 = vadd.f32 %v1889, %v1904
  %v1938 = vadd.f32 %v1890, %v1909
  %v1939 = vadd.f32 %v1891, %v1914
  %v1940 = vadd.f32 %v1892, %v1919
  %v1941 = vadd.f32 %v1893, %v1924
  %v1942 = vadd.f32 %v1894, %v1929
  %v1943 = vadd.f32 %v1895, %v1934
  %v1944 = vmax.f32 %v1936, 0.0
  %v1945 = vmax.f32 %v1937, 0.0
  %v1946 = vmax.f32 %v1938, 0.0
  %v1947 = vmax.f32 %v1939, 0.0
  %v1948 = vmax.f32 %v1940, 0.0
  %v1949 = vmax.f32 %v1941, 0.0
  %v1950 = vmax.f32 %v1942, 0.0
  %v1951 = vmax.f32 %v1943, 0.0
  %v1952 = vpack.c.bf16 %v1944, %v1944
  %v1953 = vpack.c.bf16 %v1945, %v1945
  %v1954 = vpack.c.bf16 %v1946, %v1946
  %v1955 = vpack.c.bf16 %v1947, %v1947
  %v1956 = vpack.c.bf16 %v1948, %v1948
  %v1957 = vpack.c.bf16 %v1949, %v1949
  %v1958 = vpack.c.bf16 %v1950, %v1950
  %v1959 = vpack.c.bf16 %v1951, %v1951
  %vm1960 = vcmask 11264
  %1961 = vst.msk [vmem:[%s5] sm:$0xf] %vm1960, %v1952
  %1962 = vst.msk [vmem:[%s5 + $0x4] sm:$0xf] %vm1960, %v1953
  %1963 = vst.msk [vmem:[%s5 + $0x8] sm:$0xf] %vm1960, %v1954
  %1964 = vst.msk [vmem:[%s5 + $0xc] sm:$0xf] %vm1960, %v1955
  %1965 = vst.msk [vmem:[%s5 + $0x10] sm:$0xf] %vm1960, %v1956
  %1966 = vst.msk [vmem:[%s5 + $0x14] sm:$0xf] %vm1960, %v1957
  %1967 = vst.msk [vmem:[%s5 + $0x18] sm:$0xf] %vm1960, %v1958
  %1968 = vst.msk [vmem:[%s5 + $0x1c] sm:$0xf] %vm1960, %v1959
  %v1969 = vmul.f32 %v197, %v1851
  %v1970 = vmul.f32 %v200, %v1856
  %v1971 = vmul.f32 %v203, %v1861
  %v1972 = vmul.f32 %v206, %v1866
  %v1973 = vmul.f32 %v209, %v1871
  %v1974 = vmul.f32 %v212, %v1876
  %v1975 = vmul.f32 %v215, %v1881
  %v1976 = vmul.f32 %v218, %v1886
  %v1977 = vadd.f32 %v1969, %v1899
  %v1978 = vadd.f32 %v1970, %v1904
  %v1979 = vadd.f32 %v1971, %v1909
  %v1980 = vadd.f32 %v1972, %v1914
  %v1981 = vadd.f32 %v1973, %v1919
  %v1982 = vadd.f32 %v1974, %v1924
  %v1983 = vadd.f32 %v1975, %v1929
  %v1984 = vadd.f32 %v1976, %v1934
  %v1985 = vmax.f32 %v1977, 0.0
  %v1986 = vmax.f32 %v1978, 0.0
  %v1987 = vmax.f32 %v1979, 0.0
  %v1988 = vmax.f32 %v1980, 0.0
  %v1989 = vmax.f32 %v1981, 0.0
  %v1990 = vmax.f32 %v1982, 0.0
  %v1991 = vmax.f32 %v1983, 0.0
  %v1992 = vmax.f32 %v1984, 0.0
  %v1993 = vpack.c.bf16 %v1985, %v1985
  %v1994 = vpack.c.bf16 %v1986, %v1986
  %v1995 = vpack.c.bf16 %v1987, %v1987
  %v1996 = vpack.c.bf16 %v1988, %v1988
  %v1997 = vpack.c.bf16 %v1989, %v1989
  %v1998 = vpack.c.bf16 %v1990, %v1990
  %v1999 = vpack.c.bf16 %v1991, %v1991
  %v2000 = vpack.c.bf16 %v1992, %v1992
  %s2001 = scalar_lea.vmem %s5, 32
  %2002 = vst.msk [vmem:[%s2001] sm:$0xf] %vm1960, %v1993
  %2003 = vst.msk [vmem:[%s2001 + $0x4] sm:$0xf] %vm1960, %v1994
  %2004 = vst.msk [vmem:[%s2001 + $0x8] sm:$0xf] %vm1960, %v1995
  %2005 = vst.msk [vmem:[%s2001 + $0xc] sm:$0xf] %vm1960, %v1996
  %2006 = vst.msk [vmem:[%s2001 + $0x10] sm:$0xf] %vm1960, %v1997
  %2007 = vst.msk [vmem:[%s2001 + $0x14] sm:$0xf] %vm1960, %v1998
  %2008 = vst.msk [vmem:[%s2001 + $0x18] sm:$0xf] %vm1960, %v1999
  %2009 = vst.msk [vmem:[%s2001 + $0x1c] sm:$0xf] %vm1960, %v2000
  %v2010 = vmul.f32 %v271, %v1851
  %v2011 = vmul.f32 %v274, %v1856
  %v2012 = vmul.f32 %v277, %v1861
  %v2013 = vmul.f32 %v280, %v1866
  %v2014 = vmul.f32 %v283, %v1871
  %v2015 = vmul.f32 %v286, %v1876
  %v2016 = vmul.f32 %v289, %v1881
  %v2017 = vmul.f32 %v292, %v1886
  %v2018 = vadd.f32 %v2010, %v1899
  %v2019 = vadd.f32 %v2011, %v1904
  %v2020 = vadd.f32 %v2012, %v1909
  %v2021 = vadd.f32 %v2013, %v1914
  %v2022 = vadd.f32 %v2014, %v1919
  %v2023 = vadd.f32 %v2015, %v1924
  %v2024 = vadd.f32 %v2016, %v1929
  %v2025 = vadd.f32 %v2017, %v1934
  %v2026 = vmax.f32 %v2018, 0.0
  %v2027 = vmax.f32 %v2019, 0.0
  %v2028 = vmax.f32 %v2020, 0.0
  %v2029 = vmax.f32 %v2021, 0.0
  %v2030 = vmax.f32 %v2022, 0.0
  %v2031 = vmax.f32 %v2023, 0.0
  %v2032 = vmax.f32 %v2024, 0.0
  %v2033 = vmax.f32 %v2025, 0.0
  %v2034 = vpack.c.bf16 %v2026, %v2026
  %v2035 = vpack.c.bf16 %v2027, %v2027
  %v2036 = vpack.c.bf16 %v2028, %v2028
  %v2037 = vpack.c.bf16 %v2029, %v2029
  %v2038 = vpack.c.bf16 %v2030, %v2030
  %v2039 = vpack.c.bf16 %v2031, %v2031
  %v2040 = vpack.c.bf16 %v2032, %v2032
  %v2041 = vpack.c.bf16 %v2033, %v2033
  %s2042 = scalar_lea.vmem %s5, 64
  %2043 = vst.msk [vmem:[%s2042] sm:$0xf] %vm1960, %v2034
  %2044 = vst.msk [vmem:[%s2042 + $0x4] sm:$0xf] %vm1960, %v2035
  %2045 = vst.msk [vmem:[%s2042 + $0x8] sm:$0xf] %vm1960, %v2036
  %2046 = vst.msk [vmem:[%s2042 + $0xc] sm:$0xf] %vm1960, %v2037
  %2047 = vst.msk [vmem:[%s2042 + $0x10] sm:$0xf] %vm1960, %v2038
  %2048 = vst.msk [vmem:[%s2042 + $0x14] sm:$0xf] %vm1960, %v2039
  %2049 = vst.msk [vmem:[%s2042 + $0x18] sm:$0xf] %vm1960, %v2040
  %2050 = vst.msk [vmem:[%s2042 + $0x1c] sm:$0xf] %vm1960, %v2041
  %v2051 = vmul.f32 %v345, %v1851
  %v2052 = vmul.f32 %v348, %v1856
  %v2053 = vmul.f32 %v351, %v1861
  %v2054 = vmul.f32 %v354, %v1866
  %v2055 = vmul.f32 %v357, %v1871
  %v2056 = vmul.f32 %v360, %v1876
  %v2057 = vmul.f32 %v363, %v1881
  %v2058 = vmul.f32 %v366, %v1886
  %v2059 = vadd.f32 %v2051, %v1899
  %v2060 = vadd.f32 %v2052, %v1904
  %v2061 = vadd.f32 %v2053, %v1909
  %v2062 = vadd.f32 %v2054, %v1914
  %v2063 = vadd.f32 %v2055, %v1919
  %v2064 = vadd.f32 %v2056, %v1924
  %v2065 = vadd.f32 %v2057, %v1929
  %v2066 = vadd.f32 %v2058, %v1934
  %v2067 = vmax.f32 %v2059, 0.0
  %v2068 = vmax.f32 %v2060, 0.0
  %v2069 = vmax.f32 %v2061, 0.0
  %v2070 = vmax.f32 %v2062, 0.0
  %v2071 = vmax.f32 %v2063, 0.0
  %v2072 = vmax.f32 %v2064, 0.0
  %v2073 = vmax.f32 %v2065, 0.0
  %v2074 = vmax.f32 %v2066, 0.0
  %v2075 = vpack.c.bf16 %v2067, %v2067
  %v2076 = vpack.c.bf16 %v2068, %v2068
  %v2077 = vpack.c.bf16 %v2069, %v2069
  %v2078 = vpack.c.bf16 %v2070, %v2070
  %v2079 = vpack.c.bf16 %v2071, %v2071
  %v2080 = vpack.c.bf16 %v2072, %v2072
  %v2081 = vpack.c.bf16 %v2073, %v2073
  %v2082 = vpack.c.bf16 %v2074, %v2074
  %s2083 = scalar_lea.vmem %s5, 96
  %2084 = vst.msk [vmem:[%s2083] sm:$0xf] %vm1960, %v2075
  %2085 = vst.msk [vmem:[%s2083 + $0x4] sm:$0xf] %vm1960, %v2076
  %2086 = vst.msk [vmem:[%s2083 + $0x8] sm:$0xf] %vm1960, %v2077
  %2087 = vst.msk [vmem:[%s2083 + $0xc] sm:$0xf] %vm1960, %v2078
  %2088 = vst.msk [vmem:[%s2083 + $0x10] sm:$0xf] %vm1960, %v2079
  %2089 = vst.msk [vmem:[%s2083 + $0x14] sm:$0xf] %vm1960, %v2080
  %2090 = vst.msk [vmem:[%s2083 + $0x18] sm:$0xf] %vm1960, %v2081
  %2091 = vst.msk [vmem:[%s2083 + $0x1c] sm:$0xf] %vm1960, %v2082
  %v2092 = vmul.f32 %v419, %v1851
  %v2093 = vmul.f32 %v422, %v1856
  %v2094 = vmul.f32 %v425, %v1861
  %v2095 = vmul.f32 %v428, %v1866
  %v2096 = vmul.f32 %v431, %v1871
  %v2097 = vmul.f32 %v434, %v1876
  %v2098 = vmul.f32 %v437, %v1881
  %v2099 = vmul.f32 %v440, %v1886
  %v2100 = vadd.f32 %v2092, %v1899
  %v2101 = vadd.f32 %v2093, %v1904
  %v2102 = vadd.f32 %v2094, %v1909
  %v2103 = vadd.f32 %v2095, %v1914
  %v2104 = vadd.f32 %v2096, %v1919
  %v2105 = vadd.f32 %v2097, %v1924
  %v2106 = vadd.f32 %v2098, %v1929
  %v2107 = vadd.f32 %v2099, %v1934
  %v2108 = vmax.f32 %v2100, 0.0
  %v2109 = vmax.f32 %v2101, 0.0
  %v2110 = vmax.f32 %v2102, 0.0
  %v2111 = vmax.f32 %v2103, 0.0
  %v2112 = vmax.f32 %v2104, 0.0
  %v2113 = vmax.f32 %v2105, 0.0
  %v2114 = vmax.f32 %v2106, 0.0
  %v2115 = vmax.f32 %v2107, 0.0
  %v2116 = vpack.c.bf16 %v2108, %v2108
  %v2117 = vpack.c.bf16 %v2109, %v2109
  %v2118 = vpack.c.bf16 %v2110, %v2110
  %v2119 = vpack.c.bf16 %v2111, %v2111
  %v2120 = vpack.c.bf16 %v2112, %v2112
  %v2121 = vpack.c.bf16 %v2113, %v2113
  %v2122 = vpack.c.bf16 %v2114, %v2114
  %v2123 = vpack.c.bf16 %v2115, %v2115
  %s2124 = scalar_lea.vmem %s5, 128
  %2125 = vst.msk [vmem:[%s2124] sm:$0xf] %vm1960, %v2116
  %2126 = vst.msk [vmem:[%s2124 + $0x4] sm:$0xf] %vm1960, %v2117
  %2127 = vst.msk [vmem:[%s2124 + $0x8] sm:$0xf] %vm1960, %v2118
  %2128 = vst.msk [vmem:[%s2124 + $0xc] sm:$0xf] %vm1960, %v2119
  %2129 = vst.msk [vmem:[%s2124 + $0x10] sm:$0xf] %vm1960, %v2120
  %2130 = vst.msk [vmem:[%s2124 + $0x14] sm:$0xf] %vm1960, %v2121
  %2131 = vst.msk [vmem:[%s2124 + $0x18] sm:$0xf] %vm1960, %v2122
  %2132 = vst.msk [vmem:[%s2124 + $0x1c] sm:$0xf] %vm1960, %v2123
  %v2133 = vmul.f32 %v493, %v1851
  %v2134 = vmul.f32 %v496, %v1856
  %v2135 = vmul.f32 %v499, %v1861
  %v2136 = vmul.f32 %v502, %v1866
  %v2137 = vmul.f32 %v505, %v1871
  %v2138 = vmul.f32 %v508, %v1876
  %v2139 = vmul.f32 %v511, %v1881
  %v2140 = vmul.f32 %v514, %v1886
  %v2141 = vadd.f32 %v2133, %v1899
  %v2142 = vadd.f32 %v2134, %v1904
  %v2143 = vadd.f32 %v2135, %v1909
  %v2144 = vadd.f32 %v2136, %v1914
  %v2145 = vadd.f32 %v2137, %v1919
  %v2146 = vadd.f32 %v2138, %v1924
  %v2147 = vadd.f32 %v2139, %v1929
  %v2148 = vadd.f32 %v2140, %v1934
  %v2149 = vmax.f32 %v2141, 0.0
  %v2150 = vmax.f32 %v2142, 0.0
  %v2151 = vmax.f32 %v2143, 0.0
  %v2152 = vmax.f32 %v2144, 0.0
  %v2153 = vmax.f32 %v2145, 0.0
  %v2154 = vmax.f32 %v2146, 0.0
  %v2155 = vmax.f32 %v2147, 0.0
  %v2156 = vmax.f32 %v2148, 0.0
  %v2157 = vpack.c.bf16 %v2149, %v2149
  %v2158 = vpack.c.bf16 %v2150, %v2150
  %v2159 = vpack.c.bf16 %v2151, %v2151
  %v2160 = vpack.c.bf16 %v2152, %v2152
  %v2161 = vpack.c.bf16 %v2153, %v2153
  %v2162 = vpack.c.bf16 %v2154, %v2154
  %v2163 = vpack.c.bf16 %v2155, %v2155
  %v2164 = vpack.c.bf16 %v2156, %v2156
  %s2165 = scalar_lea.vmem %s5, 160
  %2166 = vst.msk [vmem:[%s2165] sm:$0xf] %vm1960, %v2157
  %2167 = vst.msk [vmem:[%s2165 + $0x4] sm:$0xf] %vm1960, %v2158
  %2168 = vst.msk [vmem:[%s2165 + $0x8] sm:$0xf] %vm1960, %v2159
  %2169 = vst.msk [vmem:[%s2165 + $0xc] sm:$0xf] %vm1960, %v2160
  %2170 = vst.msk [vmem:[%s2165 + $0x10] sm:$0xf] %vm1960, %v2161
  %2171 = vst.msk [vmem:[%s2165 + $0x14] sm:$0xf] %vm1960, %v2162
  %2172 = vst.msk [vmem:[%s2165 + $0x18] sm:$0xf] %vm1960, %v2163
  %2173 = vst.msk [vmem:[%s2165 + $0x1c] sm:$0xf] %vm1960, %v2164
  %v2174 = vmul.f32 %v567, %v1851
  %v2175 = vmul.f32 %v570, %v1856
  %v2176 = vmul.f32 %v573, %v1861
  %v2177 = vmul.f32 %v576, %v1866
  %v2178 = vmul.f32 %v579, %v1871
  %v2179 = vmul.f32 %v582, %v1876
  %v2180 = vmul.f32 %v585, %v1881
  %v2181 = vmul.f32 %v588, %v1886
  %v2182 = vadd.f32 %v2174, %v1899
  %v2183 = vadd.f32 %v2175, %v1904
  %v2184 = vadd.f32 %v2176, %v1909
  %v2185 = vadd.f32 %v2177, %v1914
  %v2186 = vadd.f32 %v2178, %v1919
  %v2187 = vadd.f32 %v2179, %v1924
  %v2188 = vadd.f32 %v2180, %v1929
  %v2189 = vadd.f32 %v2181, %v1934
  %v2190 = vmax.f32 %v2182, 0.0
  %v2191 = vmax.f32 %v2183, 0.0
  %v2192 = vmax.f32 %v2184, 0.0
  %v2193 = vmax.f32 %v2185, 0.0
  %v2194 = vmax.f32 %v2186, 0.0
  %v2195 = vmax.f32 %v2187, 0.0
  %v2196 = vmax.f32 %v2188, 0.0
  %v2197 = vmax.f32 %v2189, 0.0
  %v2198 = vpack.c.bf16 %v2190, %v2190
  %v2199 = vpack.c.bf16 %v2191, %v2191
  %v2200 = vpack.c.bf16 %v2192, %v2192
  %v2201 = vpack.c.bf16 %v2193, %v2193
  %v2202 = vpack.c.bf16 %v2194, %v2194
  %v2203 = vpack.c.bf16 %v2195, %v2195
  %v2204 = vpack.c.bf16 %v2196, %v2196
  %v2205 = vpack.c.bf16 %v2197, %v2197
  %s2206 = scalar_lea.vmem %s5, 192
  %2207 = vst.msk [vmem:[%s2206] sm:$0xf] %vm1960, %v2198
  %2208 = vst.msk [vmem:[%s2206 + $0x4] sm:$0xf] %vm1960, %v2199
  %2209 = vst.msk [vmem:[%s2206 + $0x8] sm:$0xf] %vm1960, %v2200
  %2210 = vst.msk [vmem:[%s2206 + $0xc] sm:$0xf] %vm1960, %v2201
  %2211 = vst.msk [vmem:[%s2206 + $0x10] sm:$0xf] %vm1960, %v2202
  %2212 = vst.msk [vmem:[%s2206 + $0x14] sm:$0xf] %vm1960, %v2203
  %2213 = vst.msk [vmem:[%s2206 + $0x18] sm:$0xf] %vm1960, %v2204
  %2214 = vst.msk [vmem:[%s2206 + $0x1c] sm:$0xf] %vm1960, %v2205
  %v2215 = vmul.f32 %v641, %v1851
  %v2216 = vmul.f32 %v644, %v1856
  %v2217 = vmul.f32 %v647, %v1861
  %v2218 = vmul.f32 %v650, %v1866
  %v2219 = vmul.f32 %v653, %v1871
  %v2220 = vmul.f32 %v656, %v1876
  %v2221 = vmul.f32 %v659, %v1881
  %v2222 = vmul.f32 %v662, %v1886
  %v2223 = vadd.f32 %v2215, %v1899
  %v2224 = vadd.f32 %v2216, %v1904
  %v2225 = vadd.f32 %v2217, %v1909
  %v2226 = vadd.f32 %v2218, %v1914
  %v2227 = vadd.f32 %v2219, %v1919
  %v2228 = vadd.f32 %v2220, %v1924
  %v2229 = vadd.f32 %v2221, %v1929
  %v2230 = vadd.f32 %v2222, %v1934
  %v2231 = vmax.f32 %v2223, 0.0
  %v2232 = vmax.f32 %v2224, 0.0
  %v2233 = vmax.f32 %v2225, 0.0
  %v2234 = vmax.f32 %v2226, 0.0
  %v2235 = vmax.f32 %v2227, 0.0
  %v2236 = vmax.f32 %v2228, 0.0
  %v2237 = vmax.f32 %v2229, 0.0
  %v2238 = vmax.f32 %v2230, 0.0
  %v2239 = vpack.c.bf16 %v2231, %v2231
  %v2240 = vpack.c.bf16 %v2232, %v2232
  %v2241 = vpack.c.bf16 %v2233, %v2233
  %v2242 = vpack.c.bf16 %v2234, %v2234
  %v2243 = vpack.c.bf16 %v2235, %v2235
  %v2244 = vpack.c.bf16 %v2236, %v2236
  %v2245 = vpack.c.bf16 %v2237, %v2237
  %v2246 = vpack.c.bf16 %v2238, %v2238
  %s2247 = scalar_lea.vmem %s5, 224
  %2248 = vst.msk [vmem:[%s2247] sm:$0xf] %vm1960, %v2239
  %2249 = vst.msk [vmem:[%s2247 + $0x4] sm:$0xf] %vm1960, %v2240
  %2250 = vst.msk [vmem:[%s2247 + $0x8] sm:$0xf] %vm1960, %v2241
  %2251 = vst.msk [vmem:[%s2247 + $0xc] sm:$0xf] %vm1960, %v2242
  %2252 = vst.msk [vmem:[%s2247 + $0x10] sm:$0xf] %vm1960, %v2243
  %2253 = vst.msk [vmem:[%s2247 + $0x14] sm:$0xf] %vm1960, %v2244
  %2254 = vst.msk [vmem:[%s2247 + $0x18] sm:$0xf] %vm1960, %v2245
  %2255 = vst.msk [vmem:[%s2247 + $0x1c] sm:$0xf] %vm1960, %v2246
  %v2256 = vmul.f32 %v715, %v1851
  %v2257 = vmul.f32 %v718, %v1856
  %v2258 = vmul.f32 %v721, %v1861
  %v2259 = vmul.f32 %v724, %v1866
  %v2260 = vmul.f32 %v727, %v1871
  %v2261 = vmul.f32 %v730, %v1876
  %v2262 = vmul.f32 %v733, %v1881
  %v2263 = vmul.f32 %v736, %v1886
  %v2264 = vadd.f32 %v2256, %v1899
  %v2265 = vadd.f32 %v2257, %v1904
  %v2266 = vadd.f32 %v2258, %v1909
  %v2267 = vadd.f32 %v2259, %v1914
  %v2268 = vadd.f32 %v2260, %v1919
  %v2269 = vadd.f32 %v2261, %v1924
  %v2270 = vadd.f32 %v2262, %v1929
  %v2271 = vadd.f32 %v2263, %v1934
  %v2272 = vmax.f32 %v2264, 0.0
  %v2273 = vmax.f32 %v2265, 0.0
  %v2274 = vmax.f32 %v2266, 0.0
  %v2275 = vmax.f32 %v2267, 0.0
  %v2276 = vmax.f32 %v2268, 0.0
  %v2277 = vmax.f32 %v2269, 0.0
  %v2278 = vmax.f32 %v2270, 0.0
  %v2279 = vmax.f32 %v2271, 0.0
  %v2280 = vpack.c.bf16 %v2272, %v2272
  %v2281 = vpack.c.bf16 %v2273, %v2273
  %v2282 = vpack.c.bf16 %v2274, %v2274
  %v2283 = vpack.c.bf16 %v2275, %v2275
  %v2284 = vpack.c.bf16 %v2276, %v2276
  %v2285 = vpack.c.bf16 %v2277, %v2277
  %v2286 = vpack.c.bf16 %v2278, %v2278
  %v2287 = vpack.c.bf16 %v2279, %v2279
  %s2288 = scalar_lea.vmem %s5, 256
  %2289 = vst.msk [vmem:[%s2288] sm:$0xf] %vm1960, %v2280
  %2290 = vst.msk [vmem:[%s2288 + $0x4] sm:$0xf] %vm1960, %v2281
  %2291 = vst.msk [vmem:[%s2288 + $0x8] sm:$0xf] %vm1960, %v2282
  %2292 = vst.msk [vmem:[%s2288 + $0xc] sm:$0xf] %vm1960, %v2283
  %2293 = vst.msk [vmem:[%s2288 + $0x10] sm:$0xf] %vm1960, %v2284
  %2294 = vst.msk [vmem:[%s2288 + $0x14] sm:$0xf] %vm1960, %v2285
  %2295 = vst.msk [vmem:[%s2288 + $0x18] sm:$0xf] %vm1960, %v2286
  %2296 = vst.msk [vmem:[%s2288 + $0x1c] sm:$0xf] %vm1960, %v2287
  %v2297 = vmul.f32 %v789, %v1851
  %v2298 = vmul.f32 %v792, %v1856
  %v2299 = vmul.f32 %v795, %v1861
  %v2300 = vmul.f32 %v798, %v1866
  %v2301 = vmul.f32 %v801, %v1871
  %v2302 = vmul.f32 %v804, %v1876
  %v2303 = vmul.f32 %v807, %v1881
  %v2304 = vmul.f32 %v810, %v1886
  %v2305 = vadd.f32 %v2297, %v1899
  %v2306 = vadd.f32 %v2298, %v1904
  %v2307 = vadd.f32 %v2299, %v1909
  %v2308 = vadd.f32 %v2300, %v1914
  %v2309 = vadd.f32 %v2301, %v1919
  %v2310 = vadd.f32 %v2302, %v1924
  %v2311 = vadd.f32 %v2303, %v1929
  %v2312 = vadd.f32 %v2304, %v1934
  %v2313 = vmax.f32 %v2305, 0.0
  %v2314 = vmax.f32 %v2306, 0.0
  %v2315 = vmax.f32 %v2307, 0.0
  %v2316 = vmax.f32 %v2308, 0.0
  %v2317 = vmax.f32 %v2309, 0.0
  %v2318 = vmax.f32 %v2310, 0.0
  %v2319 = vmax.f32 %v2311, 0.0
  %v2320 = vmax.f32 %v2312, 0.0
  %v2321 = vpack.c.bf16 %v2313, %v2313
  %v2322 = vpack.c.bf16 %v2314, %v2314
  %v2323 = vpack.c.bf16 %v2315, %v2315
  %v2324 = vpack.c.bf16 %v2316, %v2316
  %v2325 = vpack.c.bf16 %v2317, %v2317
  %v2326 = vpack.c.bf16 %v2318, %v2318
  %v2327 = vpack.c.bf16 %v2319, %v2319
  %v2328 = vpack.c.bf16 %v2320, %v2320
  %s2329 = scalar_lea.vmem %s5, 288
  %2330 = vst.msk [vmem:[%s2329] sm:$0xf] %vm1960, %v2321
  %2331 = vst.msk [vmem:[%s2329 + $0x4] sm:$0xf] %vm1960, %v2322
  %2332 = vst.msk [vmem:[%s2329 + $0x8] sm:$0xf] %vm1960, %v2323
  %2333 = vst.msk [vmem:[%s2329 + $0xc] sm:$0xf] %vm1960, %v2324
  %2334 = vst.msk [vmem:[%s2329 + $0x10] sm:$0xf] %vm1960, %v2325
  %2335 = vst.msk [vmem:[%s2329 + $0x14] sm:$0xf] %vm1960, %v2326
  %2336 = vst.msk [vmem:[%s2329 + $0x18] sm:$0xf] %vm1960, %v2327
  %2337 = vst.msk [vmem:[%s2329 + $0x1c] sm:$0xf] %vm1960, %v2328
  %v2338 = vmul.f32 %v863, %v1851
  %v2339 = vmul.f32 %v866, %v1856
  %v2340 = vmul.f32 %v869, %v1861
  %v2341 = vmul.f32 %v872, %v1866
  %v2342 = vmul.f32 %v875, %v1871
  %v2343 = vmul.f32 %v878, %v1876
  %v2344 = vmul.f32 %v881, %v1881
  %v2345 = vmul.f32 %v884, %v1886
  %v2346 = vadd.f32 %v2338, %v1899
  %v2347 = vadd.f32 %v2339, %v1904
  %v2348 = vadd.f32 %v2340, %v1909
  %v2349 = vadd.f32 %v2341, %v1914
  %v2350 = vadd.f32 %v2342, %v1919
  %v2351 = vadd.f32 %v2343, %v1924
  %v2352 = vadd.f32 %v2344, %v1929
  %v2353 = vadd.f32 %v2345, %v1934
  %v2354 = vmax.f32 %v2346, 0.0
  %v2355 = vmax.f32 %v2347, 0.0
  %v2356 = vmax.f32 %v2348, 0.0
  %v2357 = vmax.f32 %v2349, 0.0
  %v2358 = vmax.f32 %v2350, 0.0
  %v2359 = vmax.f32 %v2351, 0.0
  %v2360 = vmax.f32 %v2352, 0.0
  %v2361 = vmax.f32 %v2353, 0.0
  %v2362 = vpack.c.bf16 %v2354, %v2354
  %v2363 = vpack.c.bf16 %v2355, %v2355
  %v2364 = vpack.c.bf16 %v2356, %v2356
  %v2365 = vpack.c.bf16 %v2357, %v2357
  %v2366 = vpack.c.bf16 %v2358, %v2358
  %v2367 = vpack.c.bf16 %v2359, %v2359
  %v2368 = vpack.c.bf16 %v2360, %v2360
  %v2369 = vpack.c.bf16 %v2361, %v2361
  %s2370 = scalar_lea.vmem %s5, 320
  %2371 = vst.msk [vmem:[%s2370] sm:$0xf] %vm1960, %v2362
  %2372 = vst.msk [vmem:[%s2370 + $0x4] sm:$0xf] %vm1960, %v2363
  %2373 = vst.msk [vmem:[%s2370 + $0x8] sm:$0xf] %vm1960, %v2364
  %2374 = vst.msk [vmem:[%s2370 + $0xc] sm:$0xf] %vm1960, %v2365
  %2375 = vst.msk [vmem:[%s2370 + $0x10] sm:$0xf] %vm1960, %v2366
  %2376 = vst.msk [vmem:[%s2370 + $0x14] sm:$0xf] %vm1960, %v2367
  %2377 = vst.msk [vmem:[%s2370 + $0x18] sm:$0xf] %vm1960, %v2368
  %2378 = vst.msk [vmem:[%s2370 + $0x1c] sm:$0xf] %vm1960, %v2369
  %v2379 = vmul.f32 %v937, %v1851
  %v2380 = vmul.f32 %v940, %v1856
  %v2381 = vmul.f32 %v943, %v1861
  %v2382 = vmul.f32 %v946, %v1866
  %v2383 = vmul.f32 %v949, %v1871
  %v2384 = vmul.f32 %v952, %v1876
  %v2385 = vmul.f32 %v955, %v1881
  %v2386 = vmul.f32 %v958, %v1886
  %v2387 = vadd.f32 %v2379, %v1899
  %v2388 = vadd.f32 %v2380, %v1904
  %v2389 = vadd.f32 %v2381, %v1909
  %v2390 = vadd.f32 %v2382, %v1914
  %v2391 = vadd.f32 %v2383, %v1919
  %v2392 = vadd.f32 %v2384, %v1924
  %v2393 = vadd.f32 %v2385, %v1929
  %v2394 = vadd.f32 %v2386, %v1934
  %v2395 = vmax.f32 %v2387, 0.0
  %v2396 = vmax.f32 %v2388, 0.0
  %v2397 = vmax.f32 %v2389, 0.0
  %v2398 = vmax.f32 %v2390, 0.0
  %v2399 = vmax.f32 %v2391, 0.0
  %v2400 = vmax.f32 %v2392, 0.0
  %v2401 = vmax.f32 %v2393, 0.0
  %v2402 = vmax.f32 %v2394, 0.0
  %v2403 = vpack.c.bf16 %v2395, %v2395
  %v2404 = vpack.c.bf16 %v2396, %v2396
  %v2405 = vpack.c.bf16 %v2397, %v2397
  %v2406 = vpack.c.bf16 %v2398, %v2398
  %v2407 = vpack.c.bf16 %v2399, %v2399
  %v2408 = vpack.c.bf16 %v2400, %v2400
  %v2409 = vpack.c.bf16 %v2401, %v2401
  %v2410 = vpack.c.bf16 %v2402, %v2402
  %s2411 = scalar_lea.vmem %s5, 352
  %2412 = vst.msk [vmem:[%s2411] sm:$0xf] %vm1960, %v2403
  %2413 = vst.msk [vmem:[%s2411 + $0x4] sm:$0xf] %vm1960, %v2404
  %2414 = vst.msk [vmem:[%s2411 + $0x8] sm:$0xf] %vm1960, %v2405
  %2415 = vst.msk [vmem:[%s2411 + $0xc] sm:$0xf] %vm1960, %v2406
  %2416 = vst.msk [vmem:[%s2411 + $0x10] sm:$0xf] %vm1960, %v2407
  %2417 = vst.msk [vmem:[%s2411 + $0x14] sm:$0xf] %vm1960, %v2408
  %2418 = vst.msk [vmem:[%s2411 + $0x18] sm:$0xf] %vm1960, %v2409
  %2419 = vst.msk [vmem:[%s2411 + $0x1c] sm:$0xf] %vm1960, %v2410
  %v2420 = vmul.f32 %v1011, %v1851
  %v2421 = vmul.f32 %v1014, %v1856
  %v2422 = vmul.f32 %v1017, %v1861
  %v2423 = vmul.f32 %v1020, %v1866
  %v2424 = vmul.f32 %v1023, %v1871
  %v2425 = vmul.f32 %v1026, %v1876
  %v2426 = vmul.f32 %v1029, %v1881
  %v2427 = vmul.f32 %v1032, %v1886
  %v2428 = vadd.f32 %v2420, %v1899
  %v2429 = vadd.f32 %v2421, %v1904
  %v2430 = vadd.f32 %v2422, %v1909
  %v2431 = vadd.f32 %v2423, %v1914
  %v2432 = vadd.f32 %v2424, %v1919
  %v2433 = vadd.f32 %v2425, %v1924
  %v2434 = vadd.f32 %v2426, %v1929
  %v2435 = vadd.f32 %v2427, %v1934
  %v2436 = vmax.f32 %v2428, 0.0
  %v2437 = vmax.f32 %v2429, 0.0
  %v2438 = vmax.f32 %v2430, 0.0
  %v2439 = vmax.f32 %v2431, 0.0
  %v2440 = vmax.f32 %v2432, 0.0
  %v2441 = vmax.f32 %v2433, 0.0
  %v2442 = vmax.f32 %v2434, 0.0
  %v2443 = vmax.f32 %v2435, 0.0
  %v2444 = vpack.c.bf16 %v2436, %v2436
  %v2445 = vpack.c.bf16 %v2437, %v2437
  %v2446 = vpack.c.bf16 %v2438, %v2438
  %v2447 = vpack.c.bf16 %v2439, %v2439
  %v2448 = vpack.c.bf16 %v2440, %v2440
  %v2449 = vpack.c.bf16 %v2441, %v2441
  %v2450 = vpack.c.bf16 %v2442, %v2442
  %v2451 = vpack.c.bf16 %v2443, %v2443
  %s2452 = scalar_lea.vmem %s5, 384
  %2453 = vst.msk [vmem:[%s2452] sm:$0xf] %vm1960, %v2444
  %2454 = vst.msk [vmem:[%s2452 + $0x4] sm:$0xf] %vm1960, %v2445
  %2455 = vst.msk [vmem:[%s2452 + $0x8] sm:$0xf] %vm1960, %v2446
  %2456 = vst.msk [vmem:[%s2452 + $0xc] sm:$0xf] %vm1960, %v2447
  %2457 = vst.msk [vmem:[%s2452 + $0x10] sm:$0xf] %vm1960, %v2448
  %2458 = vst.msk [vmem:[%s2452 + $0x14] sm:$0xf] %vm1960, %v2449
  %2459 = vst.msk [vmem:[%s2452 + $0x18] sm:$0xf] %vm1960, %v2450
  %2460 = vst.msk [vmem:[%s2452 + $0x1c] sm:$0xf] %vm1960, %v2451
  %v2461 = vmul.f32 %v1085, %v1851
  %v2462 = vmul.f32 %v1088, %v1856
  %v2463 = vmul.f32 %v1091, %v1861
  %v2464 = vmul.f32 %v1094, %v1866
  %v2465 = vmul.f32 %v1097, %v1871
  %v2466 = vmul.f32 %v1100, %v1876
  %v2467 = vmul.f32 %v1103, %v1881
  %v2468 = vmul.f32 %v1106, %v1886
  %v2469 = vadd.f32 %v2461, %v1899
  %v2470 = vadd.f32 %v2462, %v1904
  %v2471 = vadd.f32 %v2463, %v1909
  %v2472 = vadd.f32 %v2464, %v1914
  %v2473 = vadd.f32 %v2465, %v1919
  %v2474 = vadd.f32 %v2466, %v1924
  %v2475 = vadd.f32 %v2467, %v1929
  %v2476 = vadd.f32 %v2468, %v1934
  %v2477 = vmax.f32 %v2469, 0.0
  %v2478 = vmax.f32 %v2470, 0.0
  %v2479 = vmax.f32 %v2471, 0.0
  %v2480 = vmax.f32 %v2472, 0.0
  %v2481 = vmax.f32 %v2473, 0.0
  %v2482 = vmax.f32 %v2474, 0.0
  %v2483 = vmax.f32 %v2475, 0.0
  %v2484 = vmax.f32 %v2476, 0.0
  %v2485 = vpack.c.bf16 %v2477, %v2477
  %v2486 = vpack.c.bf16 %v2478, %v2478
  %v2487 = vpack.c.bf16 %v2479, %v2479
  %v2488 = vpack.c.bf16 %v2480, %v2480
  %v2489 = vpack.c.bf16 %v2481, %v2481
  %v2490 = vpack.c.bf16 %v2482, %v2482
  %v2491 = vpack.c.bf16 %v2483, %v2483
  %v2492 = vpack.c.bf16 %v2484, %v2484
  %s2493 = scalar_lea.vmem %s5, 416
  %2494 = vst.msk [vmem:[%s2493] sm:$0xf] %vm1960, %v2485
  %2495 = vst.msk [vmem:[%s2493 + $0x4] sm:$0xf] %vm1960, %v2486
  %2496 = vst.msk [vmem:[%s2493 + $0x8] sm:$0xf] %vm1960, %v2487
  %2497 = vst.msk [vmem:[%s2493 + $0xc] sm:$0xf] %vm1960, %v2488
  %2498 = vst.msk [vmem:[%s2493 + $0x10] sm:$0xf] %vm1960, %v2489
  %2499 = vst.msk [vmem:[%s2493 + $0x14] sm:$0xf] %vm1960, %v2490
  %2500 = vst.msk [vmem:[%s2493 + $0x18] sm:$0xf] %vm1960, %v2491
  %2501 = vst.msk [vmem:[%s2493 + $0x1c] sm:$0xf] %vm1960, %v2492
  %v2502 = vmul.f32 %v1159, %v1851
  %v2503 = vmul.f32 %v1162, %v1856
  %v2504 = vmul.f32 %v1165, %v1861
  %v2505 = vmul.f32 %v1168, %v1866
  %v2506 = vmul.f32 %v1171, %v1871
  %v2507 = vmul.f32 %v1174, %v1876
  %v2508 = vmul.f32 %v1177, %v1881
  %v2509 = vmul.f32 %v1180, %v1886
  %v2510 = vadd.f32 %v2502, %v1899
  %v2511 = vadd.f32 %v2503, %v1904
  %v2512 = vadd.f32 %v2504, %v1909
  %v2513 = vadd.f32 %v2505, %v1914
  %v2514 = vadd.f32 %v2506, %v1919
  %v2515 = vadd.f32 %v2507, %v1924
  %v2516 = vadd.f32 %v2508, %v1929
  %v2517 = vadd.f32 %v2509, %v1934
  %v2518 = vmax.f32 %v2510, 0.0
  %v2519 = vmax.f32 %v2511, 0.0
  %v2520 = vmax.f32 %v2512, 0.0
  %v2521 = vmax.f32 %v2513, 0.0
  %v2522 = vmax.f32 %v2514, 0.0
  %v2523 = vmax.f32 %v2515, 0.0
  %v2524 = vmax.f32 %v2516, 0.0
  %v2525 = vmax.f32 %v2517, 0.0
  %v2526 = vpack.c.bf16 %v2518, %v2518
  %v2527 = vpack.c.bf16 %v2519, %v2519
  %v2528 = vpack.c.bf16 %v2520, %v2520
  %v2529 = vpack.c.bf16 %v2521, %v2521
  %v2530 = vpack.c.bf16 %v2522, %v2522
  %v2531 = vpack.c.bf16 %v2523, %v2523
  %v2532 = vpack.c.bf16 %v2524, %v2524
  %v2533 = vpack.c.bf16 %v2525, %v2525
  %s2534 = scalar_lea.vmem %s5, 448
  %2535 = vst.msk [vmem:[%s2534] sm:$0xf] %vm1960, %v2526
  %2536 = vst.msk [vmem:[%s2534 + $0x4] sm:$0xf] %vm1960, %v2527
  %2537 = vst.msk [vmem:[%s2534 + $0x8] sm:$0xf] %vm1960, %v2528
  %2538 = vst.msk [vmem:[%s2534 + $0xc] sm:$0xf] %vm1960, %v2529
  %2539 = vst.msk [vmem:[%s2534 + $0x10] sm:$0xf] %vm1960, %v2530
  %2540 = vst.msk [vmem:[%s2534 + $0x14] sm:$0xf] %vm1960, %v2531
  %2541 = vst.msk [vmem:[%s2534 + $0x18] sm:$0xf] %vm1960, %v2532
  %2542 = vst.msk [vmem:[%s2534 + $0x1c] sm:$0xf] %vm1960, %v2533
  %v2543 = vmul.f32 %v1233, %v1851
  %v2544 = vmul.f32 %v1236, %v1856
  %v2545 = vmul.f32 %v1239, %v1861
  %v2546 = vmul.f32 %v1242, %v1866
  %v2547 = vmul.f32 %v1245, %v1871
  %v2548 = vmul.f32 %v1248, %v1876
  %v2549 = vmul.f32 %v1251, %v1881
  %v2550 = vmul.f32 %v1254, %v1886
  %v2551 = vadd.f32 %v2543, %v1899
  %v2552 = vadd.f32 %v2544, %v1904
  %v2553 = vadd.f32 %v2545, %v1909
  %v2554 = vadd.f32 %v2546, %v1914
  %v2555 = vadd.f32 %v2547, %v1919
  %v2556 = vadd.f32 %v2548, %v1924
  %v2557 = vadd.f32 %v2549, %v1929
  %v2558 = vadd.f32 %v2550, %v1934
  %v2559 = vmax.f32 %v2551, 0.0
  %v2560 = vmax.f32 %v2552, 0.0
  %v2561 = vmax.f32 %v2553, 0.0
  %v2562 = vmax.f32 %v2554, 0.0
  %v2563 = vmax.f32 %v2555, 0.0
  %v2564 = vmax.f32 %v2556, 0.0
  %v2565 = vmax.f32 %v2557, 0.0
  %v2566 = vmax.f32 %v2558, 0.0
  %v2567 = vpack.c.bf16 %v2559, %v2559
  %v2568 = vpack.c.bf16 %v2560, %v2560
  %v2569 = vpack.c.bf16 %v2561, %v2561
  %v2570 = vpack.c.bf16 %v2562, %v2562
  %v2571 = vpack.c.bf16 %v2563, %v2563
  %v2572 = vpack.c.bf16 %v2564, %v2564
  %v2573 = vpack.c.bf16 %v2565, %v2565
  %v2574 = vpack.c.bf16 %v2566, %v2566
  %s2575 = scalar_lea.vmem %s5, 480
  %2576 = vst.msk [vmem:[%s2575] sm:$0xf] %vm1960, %v2567
  %2577 = vst.msk [vmem:[%s2575 + $0x4] sm:$0xf] %vm1960, %v2568
  %2578 = vst.msk [vmem:[%s2575 + $0x8] sm:$0xf] %vm1960, %v2569
  %2579 = vst.msk [vmem:[%s2575 + $0xc] sm:$0xf] %vm1960, %v2570
  %2580 = vst.msk [vmem:[%s2575 + $0x10] sm:$0xf] %vm1960, %v2571
  %2581 = vst.msk [vmem:[%s2575 + $0x14] sm:$0xf] %vm1960, %v2572
  %2582 = vst.msk [vmem:[%s2575 + $0x18] sm:$0xf] %vm1960, %v2573
  %2583 = vst.msk [vmem:[%s2575 + $0x1c] sm:$0xf] %vm1960, %v2574
  // Predicated region
  $region22: #{generator_forward.4} parent=0 // pred_check
    _
  $region23: #{generator_forward.4} parent=0 // pred_check_branch
    %2585 = sbr.rel (0) target = $region25
  $region24: #{generator_forward.4} parent=0 // pred_region
    _
  $region25: #{generator_forward.4} parent=0 // pred_fallthru
    _
  // Predicated region
  $region26: #{generator_forward.4} parent=0 // pred_check
    _
  $region27: #{generator_forward.4} parent=0 // pred_check_branch
    %2587 = sbr.rel (0) target = $region29
  $region28: #{generator_forward.4} parent=0 // pred_region
    _
  $region29: #{generator_forward.4} parent=0 // pred_fallthru
    _

// kernel: generator_forward.7
$region0: #{generator_forward.7}
  #allocation0 [shape = 'u32[]', space=smem, size = 0x4, offset = 0x4, fixed_abs, tag = 'smem constant byte address 0x4 - core index']
  #allocation1 [shape = 'u32[72,128]{1,0:T(1,128)}', space=vmem, size = 0x9000, scoped, tag = 'internal scratch']
  %s0 = inlined_call_operand.vmem [shape: bf16[16,512], index: 0, kind: input, shape index: {}]
  %s1 = inlined_call_operand.vmem [shape: f32[16,3,16], index: 1, kind: input, shape index: {}]
  %s2 = inlined_call_operand.vmem [shape: f32[3,1], index: 2, kind: input, shape index: {}]
  %s3 = inlined_call_operand.vmem [shape: f32[3,1], index: 3, kind: input, shape index: {}]
  %s4 = inlined_call_operand.vmem [shape: f32[3,1], index: 4, kind: input, shape index: {}]
  %s5 = inlined_call_operand.vmem [shape: f32[4,3,512], index: 5, kind: output, shape index: {}]
  %s6 = sld [smem:[#allocation0]]
  $region30: #{generator_forward.7} parent=0
    _
  %s8 = ssub.s32 1, %s6
  %s9 = scalar_select 0, %s8, %s6
  // Predicated region
  $region2: #{generator_forward.7} parent=0 // pred_check
    _
  $region3: #{generator_forward.7} parent=0 // pred_check_branch
    %11 = sbr.rel (0) target = $region5
  $region4: #{generator_forward.7} parent=0 // pred_region
    _
  $region5: #{generator_forward.7} parent=0 // pred_fallthru
    _
  // Predicated region
  $region6: #{generator_forward.7} parent=0 // pred_check
    _
  $region7: #{generator_forward.7} parent=0 // pred_check_branch
    %13 = sbr.rel (0) target = $region9
  $region8: #{generator_forward.7} parent=0 // pred_region
    _
  $region9: #{generator_forward.7} parent=0 // pred_fallthru
    _
  // Predicated region
  $region10: #{generator_forward.7} parent=0 // pred_check
    _
  $region11: #{generator_forward.7} parent=0 // pred_check_branch
    %15 = sbr.rel (0) target = $region13
  $region12: #{generator_forward.7} parent=0 // pred_region
    _
  $region13: #{generator_forward.7} parent=0 // pred_fallthru
    _
  // Predicated region
  $region14: #{generator_forward.7} parent=0 // pred_check
    _
  $region15: #{generator_forward.7} parent=0 // pred_check_branch
    %17 = sbr.rel (0) target = $region17
  $region16: #{generator_forward.7} parent=0 // pred_region
    _
  $region17: #{generator_forward.7} parent=0 // pred_fallthru
    _
  // Predicated region
  $region18: #{generator_forward.7} parent=0 // pred_check
    _
  $region19: #{generator_forward.7} parent=0 // pred_check_branch
    %19 = sbr.rel (0) target = $region21
  $region20: #{generator_forward.7} parent=0 // pred_region
    _
  $region21: #{generator_forward.7} parent=0 // pred_fallthru
    _
  %v20 = vld [vmem:[%s0] sm:$0xff]
  %v21 = vld [vmem:[%s0 + $0x8] sm:$0xff]
  %v22 = vld [vmem:[%s0 + $0x10] sm:$0xff]
  %v23 = vld [vmem:[%s0 + $0x18] sm:$0xff]
  %v24 = vunpack.c.l.bf16 %v20
  %v25 = vunpack.c.h.bf16 %v20
  %v26 = vunpack.c.l.bf16 %v21
  %v27 = vunpack.c.h.bf16 %v21
  %v28 = vunpack.c.l.bf16 %v22
  %v29 = vunpack.c.h.bf16 %v22
  %v30 = vunpack.c.l.bf16 %v23
  %v31 = vunpack.c.h.bf16 %v23
  %v32 = vlaneseq
  %v33 = vand.u32 %v32, 127
  %v34 = vadd.s32 %v33, 128
  %v35 = vadd.s32 %v33, 256
  %v36 = vadd.s32 %v33, 384
  %v37 = vand.u32 %v33, 15
  %v38 = vand.u32 %v34, 15
  %v39 = vand.u32 %v35, 15
  %v40 = vand.u32 %v36, 15
  %v41 = vshra.s32 %v33, 4
  %v42 = vshra.s32 %v34, 4
  %v43 = vshra.s32 %v35, 4
  %v44 = vshra.s32 %v36, 4
  %v45 = vand.u32 %v41, 15
  %v46 = vand.u32 %v42, 15
  %v47 = vand.u32 %v43, 15
  %v48 = vand.u32 %v44, 15
  %57 = vrot.lane.b32.xlu0 %v24, 17
  %v58 = vpop.permute.xlu0 %57
  %59 = vrot.lane.b32.xlu0 %v25, 17
  %v60 = vpop.permute.xlu0 %59
  %61 = vrot.lane.b32.xlu0 %v26, 17
  %v62 = vpop.permute.xlu0 %61
  %63 = vrot.lane.b32.xlu0 %v27, 17
  %v64 = vpop.permute.xlu0 %63
  %65 = vrot.lane.b32.xlu0 %v28, 17
  %v66 = vpop.permute.xlu0 %65
  %67 = vrot.lane.b32.xlu0 %v29, 17
  %v68 = vpop.permute.xlu0 %67
  %69 = vrot.lane.b32.xlu0 %v30, 17
  %v70 = vpop.permute.xlu0 %69
  %71 = vrot.lane.b32.xlu0 %v31, 17
  %v72 = vpop.permute.xlu0 %71
  %vm73 = vcmask 138240
  %v74 = vsel %vm73, %v58, %v60
  %v75 = vsel %vm73, %v60, %v62
  %v76 = vsel %vm73, %v62, %v64
  %v77 = vsel %vm73, %v66, %v68
  %v78 = vsel %vm73, %v68, %v70
  %v79 = vsel %vm73, %v70, %v72
  %v88 = vsel %vm73, 0.0, %v58
  %v89 = vsel %vm73, 0.0, %v66
  %vm90 = vcmp.ge.s32.totalorder %v45, 1
  %vm91 = vcmp.ge.s32.totalorder %v46, 1
  %vm92 = vcmp.ge.s32.totalorder %v47, 1
  %vm93 = vcmp.ge.s32.totalorder %v48, 1
  %vm94 = vcmp.ge.s32.totalorder %v37, 1
  %vm95 = vcmp.ge.s32.totalorder %v38, 1
  %vm96 = vcmp.ge.s32.totalorder %v39, 1
  %vm97 = vcmp.ge.s32.totalorder %v40, 1
  %vm98 = vmand %vm90, %vm94
  %vm99 = vmand %vm91, %vm95
  %vm100 = vmand %vm92, %vm96
  %vm101 = vmand %vm93, %vm97
  %v102 = vsel %vm98, 1, 0
  %v103 = vsel %vm99, 1, 0
  %v104 = vsel %vm100, 1, 0
  %v105 = vsel %vm101, 1, 0
  %v106 = vcvt.s32.f32 %v102
  %v107 = vcvt.s32.f32 %v103
  %v108 = vcvt.s32.f32 %v104
  %v109 = vcvt.s32.f32 %v105
  %v110 = vmul.f32 %v88, %v106
  %v111 = vmul.f32 %v74, %v107
  %v112 = vmul.f32 %v75, %v108
  %v113 = vmul.f32 %v76, %v109
  %v114 = vmul.f32 %v89, %v106
  %v115 = vmul.f32 %v77, %v107
  %v116 = vmul.f32 %v78, %v108
  %v117 = vmul.f32 %v79, %v109
  %118 = vrot.lane.b32.xlu0 %v24, 16
  %v119 = vpop.permute.xlu0 %118
  %120 = vrot.lane.b32.xlu0 %v25, 16
  %v121 = vpop.permute.xlu0 %120
  %122 = vrot.lane.b32.xlu0 %v26, 16
  %v123 = vpop.permute.xlu0 %122
  %124 = vrot.lane.b32.xlu0 %v27, 16
  %v125 = vpop.permute.xlu0 %124
  %126 = vrot.lane.b32.xlu0 %v28, 16
  %v127 = vpop.permute.xlu0 %126
  %128 = vrot.lane.b32.xlu0 %v29, 16
  %v129 = vpop.permute.xlu0 %128
  %130 = vrot.lane.b32.xlu0 %v30, 16
  %v131 = vpop.permute.xlu0 %130
  %132 = vrot.lane.b32.xlu0 %v31, 16
  %v133 = vpop.permute.xlu0 %132
  %vm134 = vcmask 130048
  %v135 = vsel %vm134, %v119, %v121
  %v136 = vsel %vm134, %v121, %v123
  %v137 = vsel %vm134, %v123, %v125
  %v138 = vsel %vm134, %v127, %v129
  %v139 = vsel %vm134, %v129, %v131
  %v140 = vsel %vm134, %v131, %v133
  %v149 = vsel %vm134, 0.0, %v119
  %v150 = vsel %vm134, 0.0, %v127
  %v151 = vsel %vm90, 1, 0
  %v152 = vsel %vm91, 1, 0
  %v153 = vsel %vm92, 1, 0
  %v154 = vsel %vm93, 1, 0
  %v155 = vcvt.s32.f32 %v151
  %v156 = vcvt.s32.f32 %v152
  %v157 = vcvt.s32.f32 %v153
  %v158 = vcvt.s32.f32 %v154
  %v159 = vmul.f32 %v149, %v155
  %v160 = vmul.f32 %v135, %v156
  %v161 = vmul.f32 %v136, %v157
  %v162 = vmul.f32 %v137, %v158
  %v163 = vmul.f32 %v150, %v155
  %v164 = vmul.f32 %v138, %v156
  %v165 = vmul.f32 %v139, %v157
  %v166 = vmul.f32 %v140, %v158
  %167 = vrot.lane.b32.xlu0 %v24, 15
  %v168 = vpop.permute.xlu0 %167
  %169 = vrot.lane.b32.xlu0 %v25, 15
  %v170 = vpop.permute.xlu0 %169
  %171 = vrot.lane.b32.xlu0 %v26, 15
  %v172 = vpop.permute.xlu0 %171
  %173 = vrot.lane.b32.xlu0 %v27, 15
  %v174 = vpop.permute.xlu0 %173
  %175 = vrot.lane.b32.xlu0 %v28, 15
  %v176 = vpop.permute.xlu0 %175
  %177 = vrot.lane.b32.xlu0 %v29, 15
  %v178 = vpop.permute.xlu0 %177
  %179 = vrot.lane.b32.xlu0 %v30, 15
  %v180 = vpop.permute.xlu0 %179
  %181 = vrot.lane.b32.xlu0 %v31, 15
  %v182 = vpop.permute.xlu0 %181
  %vm183 = vcmask 121856
  %v184 = vsel %vm183, %v168, %v170
  %v185 = vsel %vm183, %v170, %v172
  %v186 = vsel %vm183, %v172, %v174
  %v187 = vsel %vm183, %v176, %v178
  %v188 = vsel %vm183, %v178, %v180
  %v189 = vsel %vm183, %v180, %v182
  %v198 = vsel %vm183, 0.0, %v168
  %v199 = vsel %vm183, 0.0, %v176
  %vm200 = vcmp.lt.s32.totalorder %v37, 15
  %vm201 = vcmp.lt.s32.totalorder %v38, 15
  %vm202 = vcmp.lt.s32.totalorder %v39, 15
  %vm203 = vcmp.lt.s32.totalorder %v40, 15
  %vm204 = vmand %vm90, %vm200
  %vm205 = vmand %vm91, %vm201
  %vm206 = vmand %vm92, %vm202
  %vm207 = vmand %vm93, %vm203
  %v208 = vsel %vm204, 1, 0
  %v209 = vsel %vm205, 1, 0
  %v210 = vsel %vm206, 1, 0
  %v211 = vsel %vm207, 1, 0
  %v212 = vcvt.s32.f32 %v208
  %v213 = vcvt.s32.f32 %v209
  %v214 = vcvt.s32.f32 %v210
  %v215 = vcvt.s32.f32 %v211
  %v216 = vmul.f32 %v198, %v212
  %v217 = vmul.f32 %v184, %v213
  %v218 = vmul.f32 %v185, %v214
  %v219 = vmul.f32 %v186, %v215
  %v220 = vmul.f32 %v199, %v212
  %v221 = vmul.f32 %v187, %v213
  %v222 = vmul.f32 %v188, %v214
  %v223 = vmul.f32 %v189, %v215
  %224 = vrot.lane.b32.xlu0 %v24, 1
  %v225 = vpop.permute.xlu0 %224
  %226 = vrot.lane.b32.xlu0 %v25, 1
  %v227 = vpop.permute.xlu0 %226
  %228 = vrot.lane.b32.xlu0 %v26, 1
  %v229 = vpop.permute.xlu0 %228
  %230 = vrot.lane.b32.xlu0 %v27, 1
  %v231 = vpop.permute.xlu0 %230
  %232 = vrot.lane.b32.xlu0 %v28, 1
  %v233 = vpop.permute.xlu0 %232
  %234 = vrot.lane.b32.xlu0 %v29, 1
  %v235 = vpop.permute.xlu0 %234
  %236 = vrot.lane.b32.xlu0 %v30, 1
  %v237 = vpop.permute.xlu0 %236
  %238 = vrot.lane.b32.xlu0 %v31, 1
  %v239 = vpop.permute.xlu0 %238
  %vm240 = vcmask 7168
  %v241 = vsel %vm240, %v225, %v227
  %v242 = vsel %vm240, %v227, %v229
  %v243 = vsel %vm240, %v229, %v231
  %v244 = vsel %vm240, %v233, %v235
  %v245 = vsel %vm240, %v235, %v237
  %v246 = vsel %vm240, %v237, %v239
  %v255 = vsel %vm240, 0.0, %v225
  %v256 = vsel %vm240, 0.0, %v233
  %v257 = vsel %vm94, 1, 0
  %v258 = vsel %vm95, 1, 0
  %v259 = vsel %vm96, 1, 0
  %v260 = vsel %vm97, 1, 0
  %v261 = vcvt.s32.f32 %v257
  %v262 = vcvt.s32.f32 %v258
  %v263 = vcvt.s32.f32 %v259
  %v264 = vcvt.s32.f32 %v260
  %v265 = vmul.f32 %v255, %v261
  %v266 = vmul.f32 %v241, %v262
  %v267 = vmul.f32 %v242, %v263
  %v268 = vmul.f32 %v243, %v264
  %v269 = vmul.f32 %v256, %v261
  %v270 = vmul.f32 %v244, %v262
  %v271 = vmul.f32 %v245, %v263
  %v272 = vmul.f32 %v246, %v264
  %273 = vrot.lane.b32.xlu0 %v24, 127
  %v274 = vpop.permute.xlu0 %273
  %275 = vrot.lane.b32.xlu0 %v25, 127
  %v276 = vpop.permute.xlu0 %275
  %277 = vrot.lane.b32.xlu0 %v26, 127
  %v278 = vpop.permute.xlu0 %277
  %279 = vrot.lane.b32.xlu0 %v27, 127
  %v280 = vpop.permute.xlu0 %279
  %281 = vrot.lane.b32.xlu0 %v28, 127
  %v282 = vpop.permute.xlu0 %281
  %283 = vrot.lane.b32.xlu0 %v29, 127
  %v284 = vpop.permute.xlu0 %283
  %285 = vrot.lane.b32.xlu0 %v30, 127
  %v286 = vpop.permute.xlu0 %285
  %287 = vrot.lane.b32.xlu0 %v31, 127
  %v288 = vpop.permute.xlu0 %287
  %vm289 = vcmask 1039360
  %v290 = vsel %vm289, %v274, %v276
  %v291 = vsel %vm289, %v276, %v278
  %v292 = vsel %vm289, %v278, %v280
  %v293 = vsel %vm289, %v282, %v284
  %v294 = vsel %vm289, %v284, %v286
  %v295 = vsel %vm289, %v286, %v288
  %v304 = vsel %vm289, %v280, 0.0
  %v305 = vsel %vm289, %v288, 0.0
  %v306 = vsel %vm200, 1, 0
  %v307 = vsel %vm201, 1, 0
  %v308 = vsel %vm202, 1, 0
  %v309 = vsel %vm203, 1, 0
  %v310 = vcvt.s32.f32 %v306
  %v311 = vcvt.s32.f32 %v307
  %v312 = vcvt.s32.f32 %v308
  %v313 = vcvt.s32.f32 %v309
  %v314 = vmul.f32 %v290, %v310
  %v315 = vmul.f32 %v291, %v311
  %v316 = vmul.f32 %v292, %v312
  %v317 = vmul.f32 %v304, %v313
  %v318 = vmul.f32 %v293, %v310
  %v319 = vmul.f32 %v294, %v311
  %v320 = vmul.f32 %v295, %v312
  %v321 = vmul.f32 %v305, %v313
  %322 = vrot.lane.b32.xlu0 %v24, 113
  %v323 = vpop.permute.xlu0 %322
  %324 = vrot.lane.b32.xlu0 %v25, 113
  %v325 = vpop.permute.xlu0 %324
  %326 = vrot.lane.b32.xlu0 %v26, 113
  %v327 = vpop.permute.xlu0 %326
  %328 = vrot.lane.b32.xlu0 %v27, 113
  %v329 = vpop.permute.xlu0 %328
  %330 = vrot.lane.b32.xlu0 %v28, 113
  %v331 = vpop.permute.xlu0 %330
  %332 = vrot.lane.b32.xlu0 %v29, 113
  %v333 = vpop.permute.xlu0 %332
  %334 = vrot.lane.b32.xlu0 %v30, 113
  %v335 = vpop.permute.xlu0 %334
  %336 = vrot.lane.b32.xlu0 %v31, 113
  %v337 = vpop.permute.xlu0 %336
  %vm338 = vcmask 924672
  %v339 = vsel %vm338, %v323, %v325
  %v340 = vsel %vm338, %v325, %v327
  %v341 = vsel %vm338, %v327, %v329
  %v342 = vsel %vm338, %v331, %v333
  %v343 = vsel %vm338, %v333, %v335
  %v344 = vsel %vm338, %v335, %v337
  %v353 = vsel %vm338, %v329, 0.0
  %v354 = vsel %vm338, %v337, 0.0
  %vm355 = vcmp.lt.s32.totalorder %v45, 15
  %vm356 = vcmp.lt.s32.totalorder %v46, 15
  %vm357 = vcmp.lt.s32.totalorder %v47, 15
  %vm358 = vcmp.lt.s32.totalorder %v48, 15
  %vm359 = vmand %vm355, %vm94
  %vm360 = vmand %vm356, %vm95
  %vm361 = vmand %vm357, %vm96
  %vm362 = vmand %vm358, %vm97
  %v363 = vsel %vm359, 1, 0
  %v364 = vsel %vm360, 1, 0
  %v365 = vsel %vm361, 1, 0
  %v366 = vsel %vm362, 1, 0
  %v367 = vcvt.s32.f32 %v363
  %v368 = vcvt.s32.f32 %v364
  %v369 = vcvt.s32.f32 %v365
  %v370 = vcvt.s32.f32 %v366
  %v371 = vmul.f32 %v339, %v367
  %v372 = vmul.f32 %v340, %v368
  %v373 = vmul.f32 %v341, %v369
  %v374 = vmul.f32 %v353, %v370
  %v375 = vmul.f32 %v342, %v367
  %v376 = vmul.f32 %v343, %v368
  %v377 = vmul.f32 %v344, %v369
  %v378 = vmul.f32 %v354, %v370
  %379 = vrot.lane.b32.xlu0 %v24, 112
  %v380 = vpop.permute.xlu0 %379
  %381 = vrot.lane.b32.xlu0 %v25, 112
  %v382 = vpop.permute.xlu0 %381
  %383 = vrot.lane.b32.xlu0 %v26, 112
  %v384 = vpop.permute.xlu0 %383
  %385 = vrot.lane.b32.xlu0 %v27, 112
  %v386 = vpop.permute.xlu0 %385
  %387 = vrot.lane.b32.xlu0 %v28, 112
  %v388 = vpop.permute.xlu0 %387
  %389 = vrot.lane.b32.xlu0 %v29, 112
  %v390 = vpop.permute.xlu0 %389
  %391 = vrot.lane.b32.xlu0 %v30, 112
  %v392 = vpop.permute.xlu0 %391
  %393 = vrot.lane.b32.xlu0 %v31, 112
  %v394 = vpop.permute.xlu0 %393
  %vm395 = vcmask 916480
  %v396 = vsel %vm395, %v380, %v382
  %v397 = vsel %vm395, %v382, %v384
  %v398 = vsel %vm395, %v384, %v386
  %v399 = vsel %vm395, %v388, %v390
  %v400 = vsel %vm395, %v390, %v392
  %v401 = vsel %vm395, %v392, %v394
  %v410 = vsel %vm395, %v386, 0.0
  %v411 = vsel %vm395, %v394, 0.0
  %v412 = vsel %vm355, 1, 0
  %v413 = vsel %vm356, 1, 0
  %v414 = vsel %vm357, 1, 0
  %v415 = vsel %vm358, 1, 0
  %v416 = vcvt.s32.f32 %v412
  %v417 = vcvt.s32.f32 %v413
  %v418 = vcvt.s32.f32 %v414
  %v419 = vcvt.s32.f32 %v415
  %v420 = vmul.f32 %v396, %v416
  %v421 = vmul.f32 %v397, %v417
  %v422 = vmul.f32 %v398, %v418
  %v423 = vmul.f32 %v410, %v419
  %v424 = vmul.f32 %v399, %v416
  %v425 = vmul.f32 %v400, %v417
  %v426 = vmul.f32 %v401, %v418
  %v427 = vmul.f32 %v411, %v419
  %428 = vrot.lane.b32.xlu0 %v24, 111
  %v429 = vpop.permute.xlu0 %428
  %430 = vrot.lane.b32.xlu0 %v25, 111
  %v431 = vpop.permute.xlu0 %430
  %432 = vrot.lane.b32.xlu0 %v26, 111
  %v433 = vpop.permute.xlu0 %432
  %434 = vrot.lane.b32.xlu0 %v27, 111
  %v435 = vpop.permute.xlu0 %434
  %436 = vrot.lane.b32.xlu0 %v28, 111
  %v437 = vpop.permute.xlu0 %436
  %438 = vrot.lane.b32.xlu0 %v29, 111
  %v439 = vpop.permute.xlu0 %438
  %440 = vrot.lane.b32.xlu0 %v30, 111
  %v441 = vpop.permute.xlu0 %440
  %442 = vrot.lane.b32.xlu0 %v31, 111
  %v443 = vpop.permute.xlu0 %442
  %vm444 = vcmask 908288
  %v445 = vsel %vm444, %v429, %v431
  %v446 = vsel %vm444, %v431, %v433
  %v447 = vsel %vm444, %v433, %v435
  %v448 = vsel %vm444, %v437, %v439
  %v449 = vsel %vm444, %v439, %v441
  %v450 = vsel %vm444, %v441, %v443
  %v459 = vsel %vm444, %v435, 0.0
  %v460 = vsel %vm444, %v443, 0.0
  %vm461 = vmand %vm355, %vm200
  %vm462 = vmand %vm356, %vm201
  %vm463 = vmand %vm357, %vm202
  %vm464 = vmand %vm358, %vm203
  %v465 = vsel %vm461, 1, 0
  %v466 = vsel %vm462, 1, 0
  %v467 = vsel %vm463, 1, 0
  %v468 = vsel %vm464, 1, 0
  %v469 = vcvt.s32.f32 %v465
  %v470 = vcvt.s32.f32 %v466
  %v471 = vcvt.s32.f32 %v467
  %v472 = vcvt.s32.f32 %v468
  %v473 = vmul.f32 %v445, %v469
  %v474 = vmul.f32 %v446, %v470
  %v475 = vmul.f32 %v447, %v471
  %v476 = vmul.f32 %v459, %v472
  %v477 = vmul.f32 %v448, %v469
  %v478 = vmul.f32 %v449, %v470
  %v479 = vmul.f32 %v450, %v471
  %v480 = vmul.f32 %v460, %v472
  %v481 = vld [vmem:[%s2] sm:$0x7]
  %v482 = vld [vmem:[%s1] sm:$0x7]
  %s483 = scalar_lea.vmem %s1, 4
  %v484 = vld [vmem:[%s483] sm:$0x7]
  %v486 = vsel %vm134, %v484, 0
  %488 = vmatpush.msra.mxu0 0.0
  %489 = vmatpush.msra.mxu0 0.0
  %490 = vmatpush.msra.mxu0 0.0
  %491 = vmatpush.msra.mxu0 0.0
  %492 = vmatpush.msra.mxu0 0.0
  %493 = vmatpush.msra.mxu0 0.0
  %494 = vmatpush.msra.mxu0 0.0
  %495 = vmatpush.msra.mxu0 0.0
  %496 = vmatpush.msra.mxu0 0.0
  %497 = vmatpush.msra.mxu0 0.0
  %498 = vmatpush.msra.mxu0 0.0
  %499 = vmatpush.msra.mxu0 0.0
  %500 = vmatpush.msra.mxu0 0.0
  %501 = vmatpush.msra.mxu0 0.0
  %502 = vmatpush.msra.mxu0 %v269
  %503 = vmatpush.msra.mxu0 %v265
  %504 = vmatmul.f32.gmra.mxu0 %v486
  %v505 = vpop.f32.mrf.mxu0
  %v506 = vadd.f32 0.0, %v505
  %507 = vdwg.mxu0
  %508 = vmatpush.msra.mxu0 0.0
  %509 = vmatpush.msra.mxu0 0.0
  %510 = vmatpush.msra.mxu0 0.0
  %511 = vmatpush.msra.mxu0 0.0
  %512 = vmatpush.msra.mxu0 0.0
  %513 = vmatpush.msra.mxu0 0.0
  %514 = vmatpush.msra.mxu0 0.0
  %515 = vmatpush.msra.mxu0 0.0
  %516 = vmatpush.msra.mxu0 0.0
  %517 = vmatpush.msra.mxu0 0.0
  %518 = vmatpush.msra.mxu0 0.0
  %519 = vmatpush.msra.mxu0 0.0
  %520 = vmatpush.msra.mxu0 0.0
  %521 = vmatpush.msra.mxu0 0.0
  %522 = vmatpush.msra.mxu0 %v270
  %523 = vmatpush.msra.mxu0 %v266
  %524 = vmatmul.f32.gmra.mxu0 %v486
  %v525 = vpop.f32.mrf.mxu0
  %v526 = vadd.f32 0.0, %v525
  %527 = vdwg.mxu0
  %528 = vmatpush.msra.mxu0 0.0
  %529 = vmatpush.msra.mxu0 0.0
  %530 = vmatpush.msra.mxu0 0.0
  %531 = vmatpush.msra.mxu0 0.0
  %532 = vmatpush.msra.mxu0 0.0
  %533 = vmatpush.msra.mxu0 0.0
  %534 = vmatpush.msra.mxu0 0.0
  %535 = vmatpush.msra.mxu0 0.0
  %536 = vmatpush.msra.mxu0 0.0
  %537 = vmatpush.msra.mxu0 0.0
  %538 = vmatpush.msra.mxu0 0.0
  %539 = vmatpush.msra.mxu0 0.0
  %540 = vmatpush.msra.mxu0 0.0
  %541 = vmatpush.msra.mxu0 0.0
  %542 = vmatpush.msra.mxu0 %v271
  %543 = vmatpush.msra.mxu0 %v267
  %544 = vmatmul.f32.gmra.mxu0 %v486
  %v545 = vpop.f32.mrf.mxu0
  %v546 = vadd.f32 0.0, %v545
  %547 = vdwg.mxu0
  %548 = vmatpush.msra.mxu0 0.0
  %549 = vmatpush.msra.mxu0 0.0
  %550 = vmatpush.msra.mxu0 0.0
  %551 = vmatpush.msra.mxu0 0.0
  %552 = vmatpush.msra.mxu0 0.0
  %553 = vmatpush.msra.mxu0 0.0
  %554 = vmatpush.msra.mxu0 0.0
  %555 = vmatpush.msra.mxu0 0.0
  %556 = vmatpush.msra.mxu0 0.0
  %557 = vmatpush.msra.mxu0 0.0
  %558 = vmatpush.msra.mxu0 0.0
  %559 = vmatpush.msra.mxu0 0.0
  %560 = vmatpush.msra.mxu0 0.0
  %561 = vmatpush.msra.mxu0 0.0
  %562 = vmatpush.msra.mxu0 %v272
  %563 = vmatpush.msra.mxu0 %v268
  %564 = vmatmul.f32.gmra.mxu0 %v486
  %v565 = vpop.f32.mrf.mxu0
  %v566 = vadd.f32 0.0, %v565
  %567 = vdwg.mxu0
  %v569 = vsel %vm134, %v482, 0
  %571 = vmatpush.msra.mxu0 0.0
  %572 = vmatpush.msra.mxu0 0.0
  %573 = vmatpush.msra.mxu0 0.0
  %574 = vmatpush.msra.mxu0 0.0
  %575 = vmatpush.msra.mxu0 0.0
  %576 = vmatpush.msra.mxu0 0.0
  %577 = vmatpush.msra.mxu0 0.0
  %578 = vmatpush.msra.mxu0 0.0
  %579 = vmatpush.msra.mxu0 0.0
  %580 = vmatpush.msra.mxu0 0.0
  %581 = vmatpush.msra.mxu0 0.0
  %582 = vmatpush.msra.mxu0 0.0
  %583 = vmatpush.msra.mxu0 0.0
  %584 = vmatpush.msra.mxu0 0.0
  %585 = vmatpush.msra.mxu0 %v28
  %586 = vmatpush.msra.mxu0 %v24
  %587 = vmatmul.f32.gmra.mxu0 %v569
  %v588 = vpop.f32.mrf.mxu0
  %v589 = vadd.f32 %v506, %v588
  %590 = vdwg.mxu0
  %591 = vmatpush.msra.mxu0 0.0
  %592 = vmatpush.msra.mxu0 0.0
  %593 = vmatpush.msra.mxu0 0.0
  %594 = vmatpush.msra.mxu0 0.0
  %595 = vmatpush.msra.mxu0 0.0
  %596 = vmatpush.msra.mxu0 0.0
  %597 = vmatpush.msra.mxu0 0.0
  %598 = vmatpush.msra.mxu0 0.0
  %599 = vmatpush.msra.mxu0 0.0
  %600 = vmatpush.msra.mxu0 0.0
  %601 = vmatpush.msra.mxu0 0.0
  %602 = vmatpush.msra.mxu0 0.0
  %603 = vmatpush.msra.mxu0 0.0
  %604 = vmatpush.msra.mxu0 0.0
  %605 = vmatpush.msra.mxu0 %v29
  %606 = vmatpush.msra.mxu0 %v25
  %607 = vmatmul.f32.gmra.mxu0 %v569
  %v608 = vpop.f32.mrf.mxu0
  %v609 = vadd.f32 %v526, %v608
  %610 = vdwg.mxu0
  %611 = vmatpush.msra.mxu0 0.0
  %612 = vmatpush.msra.mxu0 0.0
  %613 = vmatpush.msra.mxu0 0.0
  %614 = vmatpush.msra.mxu0 0.0
  %615 = vmatpush.msra.mxu0 0.0
  %616 = vmatpush.msra.mxu0 0.0
  %617 = vmatpush.msra.mxu0 0.0
  %618 = vmatpush.msra.mxu0 0.0
  %619 = vmatpush.msra.mxu0 0.0
  %620 = vmatpush.msra.mxu0 0.0
  %621 = vmatpush.msra.mxu0 0.0
  %622 = vmatpush.msra.mxu0 0.0
  %623 = vmatpush.msra.mxu0 0.0
  %624 = vmatpush.msra.mxu0 0.0
  %625 = vmatpush.msra.mxu0 %v30
  %626 = vmatpush.msra.mxu0 %v26
  %627 = vmatmul.f32.gmra.mxu0 %v569
  %v628 = vpop.f32.mrf.mxu0
  %v629 = vadd.f32 %v546, %v628
  %630 = vdwg.mxu0
  %631 = vmatpush.msra.mxu0 0.0
  %632 = vmatpush.msra.mxu0 0.0
  %633 = vmatpush.msra.mxu0 0.0
  %634 = vmatpush.msra.mxu0 0.0
  %635 = vmatpush.msra.mxu0 0.0
  %636 = vmatpush.msra.mxu0 0.0
  %637 = vmatpush.msra.mxu0 0.0
  %638 = vmatpush.msra.mxu0 0.0
  %639 = vmatpush.msra.mxu0 0.0
  %640 = vmatpush.msra.mxu0 0.0
  %641 = vmatpush.msra.mxu0 0.0
  %642 = vmatpush.msra.mxu0 0.0
  %643 = vmatpush.msra.mxu0 0.0
  %644 = vmatpush.msra.mxu0 0.0
  %645 = vmatpush.msra.mxu0 %v31
  %646 = vmatpush.msra.mxu0 %v27
  %647 = vmatmul.f32.gmra.mxu0 %v569
  %v648 = vpop.f32.mrf.mxu0
  %v649 = vadd.f32 %v566, %v648
  %650 = vdwg.mxu0
  %s651 = scalar_lea.vmem %s1, 8
  %v652 = vld [vmem:[%s651] sm:$0x7]
  %v654 = vsel %vm134, %v652, 0
  %656 = vmatpush.msra.mxu0 0.0
  %657 = vmatpush.msra.mxu0 0.0
  %658 = vmatpush.msra.mxu0 0.0
  %659 = vmatpush.msra.mxu0 0.0
  %660 = vmatpush.msra.mxu0 0.0
  %661 = vmatpush.msra.mxu0 0.0
  %662 = vmatpush.msra.mxu0 0.0
  %663 = vmatpush.msra.mxu0 0.0
  %664 = vmatpush.msra.mxu0 0.0
  %665 = vmatpush.msra.mxu0 0.0
  %666 = vmatpush.msra.mxu0 0.0
  %667 = vmatpush.msra.mxu0 0.0
  %668 = vmatpush.msra.mxu0 0.0
  %669 = vmatpush.msra.mxu0 0.0
  %670 = vmatpush.msra.mxu0 %v163
  %671 = vmatpush.msra.mxu0 %v159
  %672 = vmatmul.f32.gmra.mxu0 %v654
  %v673 = vpop.f32.mrf.mxu0
  %v674 = vadd.f32 0.0, %v673
  %675 = vdwg.mxu0
  %676 = vmatpush.msra.mxu0 0.0
  %677 = vmatpush.msra.mxu0 0.0
  %678 = vmatpush.msra.mxu0 0.0
  %679 = vmatpush.msra.mxu0 0.0
  %680 = vmatpush.msra.mxu0 0.0
  %681 = vmatpush.msra.mxu0 0.0
  %682 = vmatpush.msra.mxu0 0.0
  %683 = vmatpush.msra.mxu0 0.0
  %684 = vmatpush.msra.mxu0 0.0
  %685 = vmatpush.msra.mxu0 0.0
  %686 = vmatpush.msra.mxu0 0.0
  %687 = vmatpush.msra.mxu0 0.0
  %688 = vmatpush.msra.mxu0 0.0
  %689 = vmatpush.msra.mxu0 0.0
  %690 = vmatpush.msra.mxu0 %v164
  %691 = vmatpush.msra.mxu0 %v160
  %692 = vmatmul.f32.gmra.mxu0 %v654
  %v693 = vpop.f32.mrf.mxu0
  %v694 = vadd.f32 0.0, %v693
  %695 = vdwg.mxu0
  %696 = vmatpush.msra.mxu0 0.0
  %697 = vmatpush.msra.mxu0 0.0
  %698 = vmatpush.msra.mxu0 0.0
  %699 = vmatpush.msra.mxu0 0.0
  %700 = vmatpush.msra.mxu0 0.0
  %701 = vmatpush.msra.mxu0 0.0
  %702 = vmatpush.msra.mxu0 0.0
  %703 = vmatpush.msra.mxu0 0.0
  %704 = vmatpush.msra.mxu0 0.0
  %705 = vmatpush.msra.mxu0 0.0
  %706 = vmatpush.msra.mxu0 0.0
  %707 = vmatpush.msra.mxu0 0.0
  %708 = vmatpush.msra.mxu0 0.0
  %709 = vmatpush.msra.mxu0 0.0
  %710 = vmatpush.msra.mxu0 %v165
  %711 = vmatpush.msra.mxu0 %v161
  %712 = vmatmul.f32.gmra.mxu0 %v654
  %v713 = vpop.f32.mrf.mxu0
  %v714 = vadd.f32 0.0, %v713
  %715 = vdwg.mxu0
  %716 = vmatpush.msra.mxu0 0.0
  %717 = vmatpush.msra.mxu0 0.0
  %718 = vmatpush.msra.mxu0 0.0
  %719 = vmatpush.msra.mxu0 0.0
  %720 = vmatpush.msra.mxu0 0.0
  %721 = vmatpush.msra.mxu0 0.0
  %722 = vmatpush.msra.mxu0 0.0
  %723 = vmatpush.msra.mxu0 0.0
  %724 = vmatpush.msra.mxu0 0.0
  %725 = vmatpush.msra.mxu0 0.0
  %726 = vmatpush.msra.mxu0 0.0
  %727 = vmatpush.msra.mxu0 0.0
  %728 = vmatpush.msra.mxu0 0.0
  %729 = vmatpush.msra.mxu0 0.0
  %730 = vmatpush.msra.mxu0 %v166
  %731 = vmatpush.msra.mxu0 %v162
  %732 = vmatmul.f32.gmra.mxu0 %v654
  %v733 = vpop.f32.mrf.mxu0
  %v734 = vadd.f32 0.0, %v733
  %735 = vdwg.mxu0
  %v736 = vadd.f32 %v589, %v674
  %v737 = vadd.f32 %v609, %v694
  %v738 = vadd.f32 %v629, %v714
  %v739 = vadd.f32 %v649, %v734
  %s740 = scalar_lea.vmem %s1, 12
  %v741 = vld [vmem:[%s740] sm:$0x7]
  %v743 = vsel %vm134, %v741, 0
  %745 = vmatpush.msra.mxu0 0.0
  %746 = vmatpush.msra.mxu0 0.0
  %747 = vmatpush.msra.mxu0 0.0
  %748 = vmatpush.msra.mxu0 0.0
  %749 = vmatpush.msra.mxu0 0.0
  %750 = vmatpush.msra.mxu0 0.0
  %751 = vmatpush.msra.mxu0 0.0
  %752 = vmatpush.msra.mxu0 0.0
  %753 = vmatpush.msra.mxu0 0.0
  %754 = vmatpush.msra.mxu0 0.0
  %755 = vmatpush.msra.mxu0 0.0
  %756 = vmatpush.msra.mxu0 0.0
  %757 = vmatpush.msra.mxu0 0.0
  %758 = vmatpush.msra.mxu0 0.0
  %759 = vmatpush.msra.mxu0 %v114
  %760 = vmatpush.msra.mxu0 %v110
  %761 = vmatmul.f32.gmra.mxu0 %v743
  %v762 = vpop.f32.mrf.mxu0
  %v763 = vadd.f32 0.0, %v762
  %764 = vdwg.mxu0
  %765 = vmatpush.msra.mxu0 0.0
  %766 = vmatpush.msra.mxu0 0.0
  %767 = vmatpush.msra.mxu0 0.0
  %768 = vmatpush.msra.mxu0 0.0
  %769 = vmatpush.msra.mxu0 0.0
  %770 = vmatpush.msra.mxu0 0.0
  %771 = vmatpush.msra.mxu0 0.0
  %772 = vmatpush.msra.mxu0 0.0
  %773 = vmatpush.msra.mxu0 0.0
  %774 = vmatpush.msra.mxu0 0.0
  %775 = vmatpush.msra.mxu0 0.0
  %776 = vmatpush.msra.mxu0 0.0
  %777 = vmatpush.msra.mxu0 0.0
  %778 = vmatpush.msra.mxu0 0.0
  %779 = vmatpush.msra.mxu0 %v115
  %780 = vmatpush.msra.mxu0 %v111
  %781 = vmatmul.f32.gmra.mxu0 %v743
  %v782 = vpop.f32.mrf.mxu0
  %v783 = vadd.f32 0.0, %v782
  %784 = vdwg.mxu0
  %785 = vmatpush.msra.mxu0 0.0
  %786 = vmatpush.msra.mxu0 0.0
  %787 = vmatpush.msra.mxu0 0.0
  %788 = vmatpush.msra.mxu0 0.0
  %789 = vmatpush.msra.mxu0 0.0
  %790 = vmatpush.msra.mxu0 0.0
  %791 = vmatpush.msra.mxu0 0.0
  %792 = vmatpush.msra.mxu0 0.0
  %793 = vmatpush.msra.mxu0 0.0
  %794 = vmatpush.msra.mxu0 0.0
  %795 = vmatpush.msra.mxu0 0.0
  %796 = vmatpush.msra.mxu0 0.0
  %797 = vmatpush.msra.mxu0 0.0
  %798 = vmatpush.msra.mxu0 0.0
  %799 = vmatpush.msra.mxu0 %v116
  %800 = vmatpush.msra.mxu0 %v112
  %801 = vmatmul.f32.gmra.mxu0 %v743
  %v802 = vpop.f32.mrf.mxu0
  %v803 = vadd.f32 0.0, %v802
  %804 = vdwg.mxu0
  %805 = vmatpush.msra.mxu0 0.0
  %806 = vmatpush.msra.mxu0 0.0
  %807 = vmatpush.msra.mxu0 0.0
  %808 = vmatpush.msra.mxu0 0.0
  %809 = vmatpush.msra.mxu0 0.0
  %810 = vmatpush.msra.mxu0 0.0
  %811 = vmatpush.msra.mxu0 0.0
  %812 = vmatpush.msra.mxu0 0.0
  %813 = vmatpush.msra.mxu0 0.0
  %814 = vmatpush.msra.mxu0 0.0
  %815 = vmatpush.msra.mxu0 0.0
  %816 = vmatpush.msra.mxu0 0.0
  %817 = vmatpush.msra.mxu0 0.0
  %818 = vmatpush.msra.mxu0 0.0
  %819 = vmatpush.msra.mxu0 %v117
  %820 = vmatpush.msra.mxu0 %v113
  %821 = vmatmul.f32.gmra.mxu0 %v743
  %v822 = vpop.f32.mrf.mxu0
  %v823 = vadd.f32 0.0, %v822
  %824 = vdwg.mxu0
  %v825 = vadd.f32 %v736, %v763
  %v826 = vadd.f32 %v737, %v783
  %v827 = vadd.f32 %v738, %v803
  %v828 = vadd.f32 %v739, %v823
  %830 = vset.pattern.permute.xlu0 0
  %831 = vperm.xlu0 %830, %v481
  %v832 = vpop.permute.xlu0 %831
  %v834 = vadd.f32 %v825, %v832
  %v835 = vadd.f32 %v826, %v832
  %v836 = vadd.f32 %v827, %v832
  %v837 = vadd.f32 %v828, %v832
  %s838 = scalar_lea.vmem %s1, 16
  %v839 = vld [vmem:[%s838] sm:$0x7]
  %s840 = scalar_lea.vmem %s1, 20
  %v841 = vld [vmem:[%s840] sm:$0x7]
  %v843 = vsel %vm134, %v841, 0
  %845 = vmatpush.msra.mxu0 0.0
  %846 = vmatpush.msra.mxu0 0.0
  %847 = vmatpush.msra.mxu0 0.0
  %848 = vmatpush.msra.mxu0 0.0
  %849 = vmatpush.msra.mxu0 0.0
  %850 = vmatpush.msra.mxu0 0.0
  %851 = vmatpush.msra.mxu0 0.0
  %852 = vmatpush.msra.mxu0 0.0
  %853 = vmatpush.msra.mxu0 0.0
  %854 = vmatpush.msra.mxu0 0.0
  %855 = vmatpush.msra.mxu0 0.0
  %856 = vmatpush.msra.mxu0 0.0
  %857 = vmatpush.msra.mxu0 0.0
  %858 = vmatpush.msra.mxu0 0.0
  %859 = vmatpush.msra.mxu0 %v28
  %860 = vmatpush.msra.mxu0 %v24
  %861 = vmatmul.f32.gmra.mxu0 %v843
  %v862 = vpop.f32.mrf.mxu0
  %v863 = vadd.f32 0.0, %v862
  %864 = vdwg.mxu0
  %865 = vmatpush.msra.mxu0 0.0
  %866 = vmatpush.msra.mxu0 0.0
  %867 = vmatpush.msra.mxu0 0.0
  %868 = vmatpush.msra.mxu0 0.0
  %869 = vmatpush.msra.mxu0 0.0
  %870 = vmatpush.msra.mxu0 0.0
  %871 = vmatpush.msra.mxu0 0.0
  %872 = vmatpush.msra.mxu0 0.0
  %873 = vmatpush.msra.mxu0 0.0
  %874 = vmatpush.msra.mxu0 0.0
  %875 = vmatpush.msra.mxu0 0.0
  %876 = vmatpush.msra.mxu0 0.0
  %877 = vmatpush.msra.mxu0 0.0
  %878 = vmatpush.msra.mxu0 0.0
  %879 = vmatpush.msra.mxu0 %v29
  %880 = vmatpush.msra.mxu0 %v25
  %881 = vmatmul.f32.gmra.mxu0 %v843
  %v882 = vpop.f32.mrf.mxu0
  %v883 = vadd.f32 0.0, %v882
  %884 = vdwg.mxu0
  %885 = vmatpush.msra.mxu0 0.0
  %886 = vmatpush.msra.mxu0 0.0
  %887 = vmatpush.msra.mxu0 0.0
  %888 = vmatpush.msra.mxu0 0.0
  %889 = vmatpush.msra.mxu0 0.0
  %890 = vmatpush.msra.mxu0 0.0
  %891 = vmatpush.msra.mxu0 0.0
  %892 = vmatpush.msra.mxu0 0.0
  %893 = vmatpush.msra.mxu0 0.0
  %894 = vmatpush.msra.mxu0 0.0
  %895 = vmatpush.msra.mxu0 0.0
  %896 = vmatpush.msra.mxu0 0.0
  %897 = vmatpush.msra.mxu0 0.0
  %898 = vmatpush.msra.mxu0 0.0
  %899 = vmatpush.msra.mxu0 %v30
  %900 = vmatpush.msra.mxu0 %v26
  %901 = vmatmul.f32.gmra.mxu0 %v843
  %v902 = vpop.f32.mrf.mxu0
  %v903 = vadd.f32 0.0, %v902
  %904 = vdwg.mxu0
  %905 = vmatpush.msra.mxu0 0.0
  %906 = vmatpush.msra.mxu0 0.0
  %907 = vmatpush.msra.mxu0 0.0
  %908 = vmatpush.msra.mxu0 0.0
  %909 = vmatpush.msra.mxu0 0.0
  %910 = vmatpush.msra.mxu0 0.0
  %911 = vmatpush.msra.mxu0 0.0
  %912 = vmatpush.msra.mxu0 0.0
  %913 = vmatpush.msra.mxu0 0.0
  %914 = vmatpush.msra.mxu0 0.0
  %915 = vmatpush.msra.mxu0 0.0
  %916 = vmatpush.msra.mxu0 0.0
  %917 = vmatpush.msra.mxu0 0.0
  %918 = vmatpush.msra.mxu0 0.0
  %919 = vmatpush.msra.mxu0 %v31
  %920 = vmatpush.msra.mxu0 %v27
  %921 = vmatmul.f32.gmra.mxu0 %v843
  %v922 = vpop.f32.mrf.mxu0
  %v923 = vadd.f32 0.0, %v922
  %924 = vdwg.mxu0
  %v926 = vsel %vm134, %v839, 0
  %928 = vmatpush.msra.mxu0 0.0
  %929 = vmatpush.msra.mxu0 0.0
  %930 = vmatpush.msra.mxu0 0.0
  %931 = vmatpush.msra.mxu0 0.0
  %932 = vmatpush.msra.mxu0 0.0
  %933 = vmatpush.msra.mxu0 0.0
  %934 = vmatpush.msra.mxu0 0.0
  %935 = vmatpush.msra.mxu0 0.0
  %936 = vmatpush.msra.mxu0 0.0
  %937 = vmatpush.msra.mxu0 0.0
  %938 = vmatpush.msra.mxu0 0.0
  %939 = vmatpush.msra.mxu0 0.0
  %940 = vmatpush.msra.mxu0 0.0
  %941 = vmatpush.msra.mxu0 0.0
  %942 = vmatpush.msra.mxu0 %v318
  %943 = vmatpush.msra.mxu0 %v314
  %944 = vmatmul.f32.gmra.mxu0 %v926
  %v945 = vpop.f32.mrf.mxu0
  %v946 = vadd.f32 %v863, %v945
  %947 = vdwg.mxu0
  %948 = vmatpush.msra.mxu0 0.0
  %949 = vmatpush.msra.mxu0 0.0
  %950 = vmatpush.msra.mxu0 0.0
  %951 = vmatpush.msra.mxu0 0.0
  %952 = vmatpush.msra.mxu0 0.0
  %953 = vmatpush.msra.mxu0 0.0
  %954 = vmatpush.msra.mxu0 0.0
  %955 = vmatpush.msra.mxu0 0.0
  %956 = vmatpush.msra.mxu0 0.0
  %957 = vmatpush.msra.mxu0 0.0
  %958 = vmatpush.msra.mxu0 0.0
  %959 = vmatpush.msra.mxu0 0.0
  %960 = vmatpush.msra.mxu0 0.0
  %961 = vmatpush.msra.mxu0 0.0
  %962 = vmatpush.msra.mxu0 %v319
  %963 = vmatpush.msra.mxu0 %v315
  %964 = vmatmul.f32.gmra.mxu0 %v926
  %v965 = vpop.f32.mrf.mxu0
  %v966 = vadd.f32 %v883, %v965
  %967 = vdwg.mxu0
  %968 = vmatpush.msra.mxu0 0.0
  %969 = vmatpush.msra.mxu0 0.0
  %970 = vmatpush.msra.mxu0 0.0
  %971 = vmatpush.msra.mxu0 0.0
  %972 = vmatpush.msra.mxu0 0.0
  %973 = vmatpush.msra.mxu0 0.0
  %974 = vmatpush.msra.mxu0 0.0
  %975 = vmatpush.msra.mxu0 0.0
  %976 = vmatpush.msra.mxu0 0.0
  %977 = vmatpush.msra.mxu0 0.0
  %978 = vmatpush.msra.mxu0 0.0
  %979 = vmatpush.msra.mxu0 0.0
  %980 = vmatpush.msra.mxu0 0.0
  %981 = vmatpush.msra.mxu0 0.0
  %982 = vmatpush.msra.mxu0 %v320
  %983 = vmatpush.msra.mxu0 %v316
  %984 = vmatmul.f32.gmra.mxu0 %v926
  %v985 = vpop.f32.mrf.mxu0
  %v986 = vadd.f32 %v903, %v985
  %987 = vdwg.mxu0
  %988 = vmatpush.msra.mxu0 0.0
  %989 = vmatpush.msra.mxu0 0.0
  %990 = vmatpush.msra.mxu0 0.0
  %991 = vmatpush.msra.mxu0 0.0
  %992 = vmatpush.msra.mxu0 0.0
  %993 = vmatpush.msra.mxu0 0.0
  %994 = vmatpush.msra.mxu0 0.0
  %995 = vmatpush.msra.mxu0 0.0
  %996 = vmatpush.msra.mxu0 0.0
  %997 = vmatpush.msra.mxu0 0.0
  %998 = vmatpush.msra.mxu0 0.0
  %999 = vmatpush.msra.mxu0 0.0
  %1000 = vmatpush.msra.mxu0 0.0
  %1001 = vmatpush.msra.mxu0 0.0
  %1002 = vmatpush.msra.mxu0 %v321
  %1003 = vmatpush.msra.mxu0 %v317
  %1004 = vmatmul.f32.gmra.mxu0 %v926
  %v1005 = vpop.f32.mrf.mxu0
  %v1006 = vadd.f32 %v923, %v1005
  %1007 = vdwg.mxu0
  %s1008 = scalar_lea.vmem %s1, 24
  %v1009 = vld [vmem:[%s1008] sm:$0x7]
  %v1011 = vsel %vm134, %v1009, 0
  %1013 = vmatpush.msra.mxu0 0.0
  %1014 = vmatpush.msra.mxu0 0.0
  %1015 = vmatpush.msra.mxu0 0.0
  %1016 = vmatpush.msra.mxu0 0.0
  %1017 = vmatpush.msra.mxu0 0.0
  %1018 = vmatpush.msra.mxu0 0.0
  %1019 = vmatpush.msra.mxu0 0.0
  %1020 = vmatpush.msra.mxu0 0.0
  %1021 = vmatpush.msra.mxu0 0.0
  %1022 = vmatpush.msra.mxu0 0.0
  %1023 = vmatpush.msra.mxu0 0.0
  %1024 = vmatpush.msra.mxu0 0.0
  %1025 = vmatpush.msra.mxu0 0.0
  %1026 = vmatpush.msra.mxu0 0.0
  %1027 = vmatpush.msra.mxu0 %v220
  %1028 = vmatpush.msra.mxu0 %v216
  %1029 = vmatmul.f32.gmra.mxu0 %v1011
  %v1030 = vpop.f32.mrf.mxu0
  %v1031 = vadd.f32 0.0, %v1030
  %1032 = vdwg.mxu0
  %1033 = vmatpush.msra.mxu0 0.0
  %1034 = vmatpush.msra.mxu0 0.0
  %1035 = vmatpush.msra.mxu0 0.0
  %1036 = vmatpush.msra.mxu0 0.0
  %1037 = vmatpush.msra.mxu0 0.0
  %1038 = vmatpush.msra.mxu0 0.0
  %1039 = vmatpush.msra.mxu0 0.0
  %1040 = vmatpush.msra.mxu0 0.0
  %1041 = vmatpush.msra.mxu0 0.0
  %1042 = vmatpush.msra.mxu0 0.0
  %1043 = vmatpush.msra.mxu0 0.0
  %1044 = vmatpush.msra.mxu0 0.0
  %1045 = vmatpush.msra.mxu0 0.0
  %1046 = vmatpush.msra.mxu0 0.0
  %1047 = vmatpush.msra.mxu0 %v221
  %1048 = vmatpush.msra.mxu0 %v217
  %1049 = vmatmul.f32.gmra.mxu0 %v1011
  %v1050 = vpop.f32.mrf.mxu0
  %v1051 = vadd.f32 0.0, %v1050
  %1052 = vdwg.mxu0
  %1053 = vmatpush.msra.mxu0 0.0
  %1054 = vmatpush.msra.mxu0 0.0
  %1055 = vmatpush.msra.mxu0 0.0
  %1056 = vmatpush.msra.mxu0 0.0
  %1057 = vmatpush.msra.mxu0 0.0
  %1058 = vmatpush.msra.mxu0 0.0
  %1059 = vmatpush.msra.mxu0 0.0
  %1060 = vmatpush.msra.mxu0 0.0
  %1061 = vmatpush.msra.mxu0 0.0
  %1062 = vmatpush.msra.mxu0 0.0
  %1063 = vmatpush.msra.mxu0 0.0
  %1064 = vmatpush.msra.mxu0 0.0
  %1065 = vmatpush.msra.mxu0 0.0
  %1066 = vmatpush.msra.mxu0 0.0
  %1067 = vmatpush.msra.mxu0 %v222
  %1068 = vmatpush.msra.mxu0 %v218
  %1069 = vmatmul.f32.gmra.mxu0 %v1011
  %v1070 = vpop.f32.mrf.mxu0
  %v1071 = vadd.f32 0.0, %v1070
  %1072 = vdwg.mxu0
  %1073 = vmatpush.msra.mxu0 0.0
  %1074 = vmatpush.msra.mxu0 0.0
  %1075 = vmatpush.msra.mxu0 0.0
  %1076 = vmatpush.msra.mxu0 0.0
  %1077 = vmatpush.msra.mxu0 0.0
  %1078 = vmatpush.msra.mxu0 0.0
  %1079 = vmatpush.msra.mxu0 0.0
  %1080 = vmatpush.msra.mxu0 0.0
  %1081 = vmatpush.msra.mxu0 0.0
  %1082 = vmatpush.msra.mxu0 0.0
  %1083 = vmatpush.msra.mxu0 0.0
  %1084 = vmatpush.msra.mxu0 0.0
  %1085 = vmatpush.msra.mxu0 0.0
  %1086 = vmatpush.msra.mxu0 0.0
  %1087 = vmatpush.msra.mxu0 %v223
  %1088 = vmatpush.msra.mxu0 %v219
  %1089 = vmatmul.f32.gmra.mxu0 %v1011
  %v1090 = vpop.f32.mrf.mxu0
  %v1091 = vadd.f32 0.0, %v1090
  %1092 = vdwg.mxu0
  %v1093 = vadd.f32 %v946, %v1031
  %v1094 = vadd.f32 %v966, %v1051
  %v1095 = vadd.f32 %v986, %v1071
  %v1096 = vadd.f32 %v1006, %v1091
  %s1097 = scalar_lea.vmem %s1, 28
  %v1098 = vld [vmem:[%s1097] sm:$0x7]
  %v1100 = vsel %vm134, %v1098, 0
  %1102 = vmatpush.msra.mxu0 0.0
  %1103 = vmatpush.msra.mxu0 0.0
  %1104 = vmatpush.msra.mxu0 0.0
  %1105 = vmatpush.msra.mxu0 0.0
  %1106 = vmatpush.msra.mxu0 0.0
  %1107 = vmatpush.msra.mxu0 0.0
  %1108 = vmatpush.msra.mxu0 0.0
  %1109 = vmatpush.msra.mxu0 0.0
  %1110 = vmatpush.msra.mxu0 0.0
  %1111 = vmatpush.msra.mxu0 0.0
  %1112 = vmatpush.msra.mxu0 0.0
  %1113 = vmatpush.msra.mxu0 0.0
  %1114 = vmatpush.msra.mxu0 0.0
  %1115 = vmatpush.msra.mxu0 0.0
  %1116 = vmatpush.msra.mxu0 %v163
  %1117 = vmatpush.msra.mxu0 %v159
  %1118 = vmatmul.f32.gmra.mxu0 %v1100
  %v1119 = vpop.f32.mrf.mxu0
  %v1120 = vadd.f32 0.0, %v1119
  %1121 = vdwg.mxu0
  %1122 = vmatpush.msra.mxu0 0.0
  %1123 = vmatpush.msra.mxu0 0.0
  %1124 = vmatpush.msra.mxu0 0.0
  %1125 = vmatpush.msra.mxu0 0.0
  %1126 = vmatpush.msra.mxu0 0.0
  %1127 = vmatpush.msra.mxu0 0.0
  %1128 = vmatpush.msra.mxu0 0.0
  %1129 = vmatpush.msra.mxu0 0.0
  %1130 = vmatpush.msra.mxu0 0.0
  %1131 = vmatpush.msra.mxu0 0.0
  %1132 = vmatpush.msra.mxu0 0.0
  %1133 = vmatpush.msra.mxu0 0.0
  %1134 = vmatpush.msra.mxu0 0.0
  %1135 = vmatpush.msra.mxu0 0.0
  %1136 = vmatpush.msra.mxu0 %v164
  %1137 = vmatpush.msra.mxu0 %v160
  %1138 = vmatmul.f32.gmra.mxu0 %v1100
  %v1139 = vpop.f32.mrf.mxu0
  %v1140 = vadd.f32 0.0, %v1139
  %1141 = vdwg.mxu0
  %1142 = vmatpush.msra.mxu0 0.0
  %1143 = vmatpush.msra.mxu0 0.0
  %1144 = vmatpush.msra.mxu0 0.0
  %1145 = vmatpush.msra.mxu0 0.0
  %1146 = vmatpush.msra.mxu0 0.0
  %1147 = vmatpush.msra.mxu0 0.0
  %1148 = vmatpush.msra.mxu0 0.0
  %1149 = vmatpush.msra.mxu0 0.0
  %1150 = vmatpush.msra.mxu0 0.0
  %1151 = vmatpush.msra.mxu0 0.0
  %1152 = vmatpush.msra.mxu0 0.0
  %1153 = vmatpush.msra.mxu0 0.0
  %1154 = vmatpush.msra.mxu0 0.0
  %1155 = vmatpush.msra.mxu0 0.0
  %1156 = vmatpush.msra.mxu0 %v165
  %1157 = vmatpush.msra.mxu0 %v161
  %1158 = vmatmul.f32.gmra.mxu0 %v1100
  %v1159 = vpop.f32.mrf.mxu0
  %v1160 = vadd.f32 0.0, %v1159
  %1161 = vdwg.mxu0
  %1162 = vmatpush.msra.mxu0 0.0
  %1163 = vmatpush.msra.mxu0 0.0
  %1164 = vmatpush.msra.mxu0 0.0
  %1165 = vmatpush.msra.mxu0 0.0
  %1166 = vmatpush.msra.mxu0 0.0
  %1167 = vmatpush.msra.mxu0 0.0
  %1168 = vmatpush.msra.mxu0 0.0
  %1169 = vmatpush.msra.mxu0 0.0
  %1170 = vmatpush.msra.mxu0 0.0
  %1171 = vmatpush.msra.mxu0 0.0
  %1172 = vmatpush.msra.mxu0 0.0
  %1173 = vmatpush.msra.mxu0 0.0
  %1174 = vmatpush.msra.mxu0 0.0
  %1175 = vmatpush.msra.mxu0 0.0
  %1176 = vmatpush.msra.mxu0 %v166
  %1177 = vmatpush.msra.mxu0 %v162
  %1178 = vmatmul.f32.gmra.mxu0 %v1100
  %v1179 = vpop.f32.mrf.mxu0
  %v1180 = vadd.f32 0.0, %v1179
  %1181 = vdwg.mxu0
  %v1182 = vadd.f32 %v1093, %v1120
  %v1183 = vadd.f32 %v1094, %v1140
  %v1184 = vadd.f32 %v1095, %v1160
  %v1185 = vadd.f32 %v1096, %v1180
  %v1186 = vadd.f32 %v1182, %v832
  %v1187 = vadd.f32 %v1183, %v832
  %v1188 = vadd.f32 %v1184, %v832
  %v1189 = vadd.f32 %v1185, %v832
  %s1190 = scalar_lea.vmem %s1, 32
  %v1191 = vld [vmem:[%s1190] sm:$0x7]
  %s1192 = scalar_lea.vmem %s1, 36
  %v1193 = vld [vmem:[%s1192] sm:$0x7]
  %v1195 = vsel %vm134, %v1193, 0
  %1197 = vmatpush.msra.mxu0 0.0
  %1198 = vmatpush.msra.mxu0 0.0
  %1199 = vmatpush.msra.mxu0 0.0
  %1200 = vmatpush.msra.mxu0 0.0
  %1201 = vmatpush.msra.mxu0 0.0
  %1202 = vmatpush.msra.mxu0 0.0
  %1203 = vmatpush.msra.mxu0 0.0
  %1204 = vmatpush.msra.mxu0 0.0
  %1205 = vmatpush.msra.mxu0 0.0
  %1206 = vmatpush.msra.mxu0 0.0
  %1207 = vmatpush.msra.mxu0 0.0
  %1208 = vmatpush.msra.mxu0 0.0
  %1209 = vmatpush.msra.mxu0 0.0
  %1210 = vmatpush.msra.mxu0 0.0
  %1211 = vmatpush.msra.mxu0 %v375
  %1212 = vmatpush.msra.mxu0 %v371
  %1213 = vmatmul.f32.gmra.mxu0 %v1195
  %v1214 = vpop.f32.mrf.mxu0
  %v1215 = vadd.f32 0.0, %v1214
  %1216 = vdwg.mxu0
  %1217 = vmatpush.msra.mxu0 0.0
  %1218 = vmatpush.msra.mxu0 0.0
  %1219 = vmatpush.msra.mxu0 0.0
  %1220 = vmatpush.msra.mxu0 0.0
  %1221 = vmatpush.msra.mxu0 0.0
  %1222 = vmatpush.msra.mxu0 0.0
  %1223 = vmatpush.msra.mxu0 0.0
  %1224 = vmatpush.msra.mxu0 0.0
  %1225 = vmatpush.msra.mxu0 0.0
  %1226 = vmatpush.msra.mxu0 0.0
  %1227 = vmatpush.msra.mxu0 0.0
  %1228 = vmatpush.msra.mxu0 0.0
  %1229 = vmatpush.msra.mxu0 0.0
  %1230 = vmatpush.msra.mxu0 0.0
  %1231 = vmatpush.msra.mxu0 %v376
  %1232 = vmatpush.msra.mxu0 %v372
  %1233 = vmatmul.f32.gmra.mxu0 %v1195
  %v1234 = vpop.f32.mrf.mxu0
  %v1235 = vadd.f32 0.0, %v1234
  %1236 = vdwg.mxu0
  %1237 = vmatpush.msra.mxu0 0.0
  %1238 = vmatpush.msra.mxu0 0.0
  %1239 = vmatpush.msra.mxu0 0.0
  %1240 = vmatpush.msra.mxu0 0.0
  %1241 = vmatpush.msra.mxu0 0.0
  %1242 = vmatpush.msra.mxu0 0.0
  %1243 = vmatpush.msra.mxu0 0.0
  %1244 = vmatpush.msra.mxu0 0.0
  %1245 = vmatpush.msra.mxu0 0.0
  %1246 = vmatpush.msra.mxu0 0.0
  %1247 = vmatpush.msra.mxu0 0.0
  %1248 = vmatpush.msra.mxu0 0.0
  %1249 = vmatpush.msra.mxu0 0.0
  %1250 = vmatpush.msra.mxu0 0.0
  %1251 = vmatpush.msra.mxu0 %v377
  %1252 = vmatpush.msra.mxu0 %v373
  %1253 = vmatmul.f32.gmra.mxu0 %v1195
  %v1254 = vpop.f32.mrf.mxu0
  %v1255 = vadd.f32 0.0, %v1254
  %1256 = vdwg.mxu0
  %1257 = vmatpush.msra.mxu0 0.0
  %1258 = vmatpush.msra.mxu0 0.0
  %1259 = vmatpush.msra.mxu0 0.0
  %1260 = vmatpush.msra.mxu0 0.0
  %1261 = vmatpush.msra.mxu0 0.0
  %1262 = vmatpush.msra.mxu0 0.0
  %1263 = vmatpush.msra.mxu0 0.0
  %1264 = vmatpush.msra.mxu0 0.0
  %1265 = vmatpush.msra.mxu0 0.0
  %1266 = vmatpush.msra.mxu0 0.0
  %1267 = vmatpush.msra.mxu0 0.0
  %1268 = vmatpush.msra.mxu0 0.0
  %1269 = vmatpush.msra.mxu0 0.0
  %1270 = vmatpush.msra.mxu0 0.0
  %1271 = vmatpush.msra.mxu0 %v378
  %1272 = vmatpush.msra.mxu0 %v374
  %1273 = vmatmul.f32.gmra.mxu0 %v1195
  %v1274 = vpop.f32.mrf.mxu0
  %v1275 = vadd.f32 0.0, %v1274
  %1276 = vdwg.mxu0
  %v1278 = vsel %vm134, %v1191, 0
  %1280 = vmatpush.msra.mxu0 0.0
  %1281 = vmatpush.msra.mxu0 0.0
  %1282 = vmatpush.msra.mxu0 0.0
  %1283 = vmatpush.msra.mxu0 0.0
  %1284 = vmatpush.msra.mxu0 0.0
  %1285 = vmatpush.msra.mxu0 0.0
  %1286 = vmatpush.msra.mxu0 0.0
  %1287 = vmatpush.msra.mxu0 0.0
  %1288 = vmatpush.msra.mxu0 0.0
  %1289 = vmatpush.msra.mxu0 0.0
  %1290 = vmatpush.msra.mxu0 0.0
  %1291 = vmatpush.msra.mxu0 0.0
  %1292 = vmatpush.msra.mxu0 0.0
  %1293 = vmatpush.msra.mxu0 0.0
  %1294 = vmatpush.msra.mxu0 %v424
  %1295 = vmatpush.msra.mxu0 %v420
  %1296 = vmatmul.f32.gmra.mxu0 %v1278
  %v1297 = vpop.f32.mrf.mxu0
  %v1298 = vadd.f32 %v1215, %v1297
  %1299 = vdwg.mxu0
  %1300 = vmatpush.msra.mxu0 0.0
  %1301 = vmatpush.msra.mxu0 0.0
  %1302 = vmatpush.msra.mxu0 0.0
  %1303 = vmatpush.msra.mxu0 0.0
  %1304 = vmatpush.msra.mxu0 0.0
  %1305 = vmatpush.msra.mxu0 0.0
  %1306 = vmatpush.msra.mxu0 0.0
  %1307 = vmatpush.msra.mxu0 0.0
  %1308 = vmatpush.msra.mxu0 0.0
  %1309 = vmatpush.msra.mxu0 0.0
  %1310 = vmatpush.msra.mxu0 0.0
  %1311 = vmatpush.msra.mxu0 0.0
  %1312 = vmatpush.msra.mxu0 0.0
  %1313 = vmatpush.msra.mxu0 0.0
  %1314 = vmatpush.msra.mxu0 %v425
  %1315 = vmatpush.msra.mxu0 %v421
  %1316 = vmatmul.f32.gmra.mxu0 %v1278
  %v1317 = vpop.f32.mrf.mxu0
  %v1318 = vadd.f32 %v1235, %v1317
  %1319 = vdwg.mxu0
  %1320 = vmatpush.msra.mxu0 0.0
  %1321 = vmatpush.msra.mxu0 0.0
  %1322 = vmatpush.msra.mxu0 0.0
  %1323 = vmatpush.msra.mxu0 0.0
  %1324 = vmatpush.msra.mxu0 0.0
  %1325 = vmatpush.msra.mxu0 0.0
  %1326 = vmatpush.msra.mxu0 0.0
  %1327 = vmatpush.msra.mxu0 0.0
  %1328 = vmatpush.msra.mxu0 0.0
  %1329 = vmatpush.msra.mxu0 0.0
  %1330 = vmatpush.msra.mxu0 0.0
  %1331 = vmatpush.msra.mxu0 0.0
  %1332 = vmatpush.msra.mxu0 0.0
  %1333 = vmatpush.msra.mxu0 0.0
  %1334 = vmatpush.msra.mxu0 %v426
  %1335 = vmatpush.msra.mxu0 %v422
  %1336 = vmatmul.f32.gmra.mxu0 %v1278
  %v1337 = vpop.f32.mrf.mxu0
  %v1338 = vadd.f32 %v1255, %v1337
  %1339 = vdwg.mxu0
  %1340 = vmatpush.msra.mxu0 0.0
  %1341 = vmatpush.msra.mxu0 0.0
  %1342 = vmatpush.msra.mxu0 0.0
  %1343 = vmatpush.msra.mxu0 0.0
  %1344 = vmatpush.msra.mxu0 0.0
  %1345 = vmatpush.msra.mxu0 0.0
  %1346 = vmatpush.msra.mxu0 0.0
  %1347 = vmatpush.msra.mxu0 0.0
  %1348 = vmatpush.msra.mxu0 0.0
  %1349 = vmatpush.msra.mxu0 0.0
  %1350 = vmatpush.msra.mxu0 0.0
  %1351 = vmatpush.msra.mxu0 0.0
  %1352 = vmatpush.msra.mxu0 0.0
  %1353 = vmatpush.msra.mxu0 0.0
  %1354 = vmatpush.msra.mxu0 %v427
  %1355 = vmatpush.msra.mxu0 %v423
  %1356 = vmatmul.f32.gmra.mxu0 %v1278
  %v1357 = vpop.f32.mrf.mxu0
  %v1358 = vadd.f32 %v1275, %v1357
  %1359 = vdwg.mxu0
  %s1360 = scalar_lea.vmem %s1, 40
  %v1361 = vld [vmem:[%s1360] sm:$0x7]
  %v1363 = vsel %vm134, %v1361, 0
  %1365 = vmatpush.msra.mxu0 0.0
  %1366 = vmatpush.msra.mxu0 0.0
  %1367 = vmatpush.msra.mxu0 0.0
  %1368 = vmatpush.msra.mxu0 0.0
  %1369 = vmatpush.msra.mxu0 0.0
  %1370 = vmatpush.msra.mxu0 0.0
  %1371 = vmatpush.msra.mxu0 0.0
  %1372 = vmatpush.msra.mxu0 0.0
  %1373 = vmatpush.msra.mxu0 0.0
  %1374 = vmatpush.msra.mxu0 0.0
  %1375 = vmatpush.msra.mxu0 0.0
  %1376 = vmatpush.msra.mxu0 0.0
  %1377 = vmatpush.msra.mxu0 0.0
  %1378 = vmatpush.msra.mxu0 0.0
  %1379 = vmatpush.msra.mxu0 %v28
  %1380 = vmatpush.msra.mxu0 %v24
  %1381 = vmatmul.f32.gmra.mxu0 %v1363
  %v1382 = vpop.f32.mrf.mxu0
  %v1383 = vadd.f32 0.0, %v1382
  %1384 = vdwg.mxu0
  %1385 = vmatpush.msra.mxu0 0.0
  %1386 = vmatpush.msra.mxu0 0.0
  %1387 = vmatpush.msra.mxu0 0.0
  %1388 = vmatpush.msra.mxu0 0.0
  %1389 = vmatpush.msra.mxu0 0.0
  %1390 = vmatpush.msra.mxu0 0.0
  %1391 = vmatpush.msra.mxu0 0.0
  %1392 = vmatpush.msra.mxu0 0.0
  %1393 = vmatpush.msra.mxu0 0.0
  %1394 = vmatpush.msra.mxu0 0.0
  %1395 = vmatpush.msra.mxu0 0.0
  %1396 = vmatpush.msra.mxu0 0.0
  %1397 = vmatpush.msra.mxu0 0.0
  %1398 = vmatpush.msra.mxu0 0.0
  %1399 = vmatpush.msra.mxu0 %v29
  %1400 = vmatpush.msra.mxu0 %v25
  %1401 = vmatmul.f32.gmra.mxu0 %v1363
  %v1402 = vpop.f32.mrf.mxu0
  %v1403 = vadd.f32 0.0, %v1402
  %1404 = vdwg.mxu0
  %1405 = vmatpush.msra.mxu0 0.0
  %1406 = vmatpush.msra.mxu0 0.0
  %1407 = vmatpush.msra.mxu0 0.0
  %1408 = vmatpush.msra.mxu0 0.0
  %1409 = vmatpush.msra.mxu0 0.0
  %1410 = vmatpush.msra.mxu0 0.0
  %1411 = vmatpush.msra.mxu0 0.0
  %1412 = vmatpush.msra.mxu0 0.0
  %1413 = vmatpush.msra.mxu0 0.0
  %1414 = vmatpush.msra.mxu0 0.0
  %1415 = vmatpush.msra.mxu0 0.0
  %1416 = vmatpush.msra.mxu0 0.0
  %1417 = vmatpush.msra.mxu0 0.0
  %1418 = vmatpush.msra.mxu0 0.0
  %1419 = vmatpush.msra.mxu0 %v30
  %1420 = vmatpush.msra.mxu0 %v26
  %1421 = vmatmul.f32.gmra.mxu0 %v1363
  %v1422 = vpop.f32.mrf.mxu0
  %v1423 = vadd.f32 0.0, %v1422
  %1424 = vdwg.mxu0
  %1425 = vmatpush.msra.mxu0 0.0
  %1426 = vmatpush.msra.mxu0 0.0
  %1427 = vmatpush.msra.mxu0 0.0
  %1428 = vmatpush.msra.mxu0 0.0
  %1429 = vmatpush.msra.mxu0 0.0
  %1430 = vmatpush.msra.mxu0 0.0
  %1431 = vmatpush.msra.mxu0 0.0
  %1432 = vmatpush.msra.mxu0 0.0
  %1433 = vmatpush.msra.mxu0 0.0
  %1434 = vmatpush.msra.mxu0 0.0
  %1435 = vmatpush.msra.mxu0 0.0
  %1436 = vmatpush.msra.mxu0 0.0
  %1437 = vmatpush.msra.mxu0 0.0
  %1438 = vmatpush.msra.mxu0 0.0
  %1439 = vmatpush.msra.mxu0 %v31
  %1440 = vmatpush.msra.mxu0 %v27
  %1441 = vmatmul.f32.gmra.mxu0 %v1363
  %v1442 = vpop.f32.mrf.mxu0
  %v1443 = vadd.f32 0.0, %v1442
  %1444 = vdwg.mxu0
  %v1445 = vadd.f32 %v1298, %v1383
  %v1446 = vadd.f32 %v1318, %v1403
  %v1447 = vadd.f32 %v1338, %v1423
  %v1448 = vadd.f32 %v1358, %v1443
  %s1449 = scalar_lea.vmem %s1, 44
  %v1450 = vld [vmem:[%s1449] sm:$0x7]
  %v1452 = vsel %vm134, %v1450, 0
  %1454 = vmatpush.msra.mxu0 0.0
  %1455 = vmatpush.msra.mxu0 0.0
  %1456 = vmatpush.msra.mxu0 0.0
  %1457 = vmatpush.msra.mxu0 0.0
  %1458 = vmatpush.msra.mxu0 0.0
  %1459 = vmatpush.msra.mxu0 0.0
  %1460 = vmatpush.msra.mxu0 0.0
  %1461 = vmatpush.msra.mxu0 0.0
  %1462 = vmatpush.msra.mxu0 0.0
  %1463 = vmatpush.msra.mxu0 0.0
  %1464 = vmatpush.msra.mxu0 0.0
  %1465 = vmatpush.msra.mxu0 0.0
  %1466 = vmatpush.msra.mxu0 0.0
  %1467 = vmatpush.msra.mxu0 0.0
  %1468 = vmatpush.msra.mxu0 %v269
  %1469 = vmatpush.msra.mxu0 %v265
  %1470 = vmatmul.f32.gmra.mxu0 %v1452
  %v1471 = vpop.f32.mrf.mxu0
  %v1472 = vadd.f32 0.0, %v1471
  %1473 = vdwg.mxu0
  %1474 = vmatpush.msra.mxu0 0.0
  %1475 = vmatpush.msra.mxu0 0.0
  %1476 = vmatpush.msra.mxu0 0.0
  %1477 = vmatpush.msra.mxu0 0.0
  %1478 = vmatpush.msra.mxu0 0.0
  %1479 = vmatpush.msra.mxu0 0.0
  %1480 = vmatpush.msra.mxu0 0.0
  %1481 = vmatpush.msra.mxu0 0.0
  %1482 = vmatpush.msra.mxu0 0.0
  %1483 = vmatpush.msra.mxu0 0.0
  %1484 = vmatpush.msra.mxu0 0.0
  %1485 = vmatpush.msra.mxu0 0.0
  %1486 = vmatpush.msra.mxu0 0.0
  %1487 = vmatpush.msra.mxu0 0.0
  %1488 = vmatpush.msra.mxu0 %v270
  %1489 = vmatpush.msra.mxu0 %v266
  %1490 = vmatmul.f32.gmra.mxu0 %v1452
  %v1491 = vpop.f32.mrf.mxu0
  %v1492 = vadd.f32 0.0, %v1491
  %1493 = vdwg.mxu0
  %1494 = vmatpush.msra.mxu0 0.0
  %1495 = vmatpush.msra.mxu0 0.0
  %1496 = vmatpush.msra.mxu0 0.0
  %1497 = vmatpush.msra.mxu0 0.0
  %1498 = vmatpush.msra.mxu0 0.0
  %1499 = vmatpush.msra.mxu0 0.0
  %1500 = vmatpush.msra.mxu0 0.0
  %1501 = vmatpush.msra.mxu0 0.0
  %1502 = vmatpush.msra.mxu0 0.0
  %1503 = vmatpush.msra.mxu0 0.0
  %1504 = vmatpush.msra.mxu0 0.0
  %1505 = vmatpush.msra.mxu0 0.0
  %1506 = vmatpush.msra.mxu0 0.0
  %1507 = vmatpush.msra.mxu0 0.0
  %1508 = vmatpush.msra.mxu0 %v271
  %1509 = vmatpush.msra.mxu0 %v267
  %1510 = vmatmul.f32.gmra.mxu0 %v1452
  %v1511 = vpop.f32.mrf.mxu0
  %v1512 = vadd.f32 0.0, %v1511
  %1513 = vdwg.mxu0
  %1514 = vmatpush.msra.mxu0 0.0
  %1515 = vmatpush.msra.mxu0 0.0
  %1516 = vmatpush.msra.mxu0 0.0
  %1517 = vmatpush.msra.mxu0 0.0
  %1518 = vmatpush.msra.mxu0 0.0
  %1519 = vmatpush.msra.mxu0 0.0
  %1520 = vmatpush.msra.mxu0 0.0
  %1521 = vmatpush.msra.mxu0 0.0
  %1522 = vmatpush.msra.mxu0 0.0
  %1523 = vmatpush.msra.mxu0 0.0
  %1524 = vmatpush.msra.mxu0 0.0
  %1525 = vmatpush.msra.mxu0 0.0
  %1526 = vmatpush.msra.mxu0 0.0
  %1527 = vmatpush.msra.mxu0 0.0
  %1528 = vmatpush.msra.mxu0 %v272
  %1529 = vmatpush.msra.mxu0 %v268
  %1530 = vmatmul.f32.gmra.mxu0 %v1452
  %v1531 = vpop.f32.mrf.mxu0
  %v1532 = vadd.f32 0.0, %v1531
  %1533 = vdwg.mxu0
  %v1534 = vadd.f32 %v1445, %v1472
  %v1535 = vadd.f32 %v1446, %v1492
  %v1536 = vadd.f32 %v1447, %v1512
  %v1537 = vadd.f32 %v1448, %v1532
  %v1538 = vadd.f32 %v1534, %v832
  %v1539 = vadd.f32 %v1535, %v832
  %v1540 = vadd.f32 %v1536, %v832
  %v1541 = vadd.f32 %v1537, %v832
  %s1542 = scalar_lea.vmem %s1, 48
  %v1543 = vld [vmem:[%s1542] sm:$0x7]
  %s1544 = scalar_lea.vmem %s1, 52
  %v1545 = vld [vmem:[%s1544] sm:$0x7]
  %v1547 = vsel %vm134, %v1545, 0
  %1549 = vmatpush.msra.mxu0 0.0
  %1550 = vmatpush.msra.mxu0 0.0
  %1551 = vmatpush.msra.mxu0 0.0
  %1552 = vmatpush.msra.mxu0 0.0
  %1553 = vmatpush.msra.mxu0 0.0
  %1554 = vmatpush.msra.mxu0 0.0
  %1555 = vmatpush.msra.mxu0 0.0
  %1556 = vmatpush.msra.mxu0 0.0
  %1557 = vmatpush.msra.mxu0 0.0
  %1558 = vmatpush.msra.mxu0 0.0
  %1559 = vmatpush.msra.mxu0 0.0
  %1560 = vmatpush.msra.mxu0 0.0
  %1561 = vmatpush.msra.mxu0 0.0
  %1562 = vmatpush.msra.mxu0 0.0
  %1563 = vmatpush.msra.mxu0 %v424
  %1564 = vmatpush.msra.mxu0 %v420
  %1565 = vmatmul.f32.gmra.mxu0 %v1547
  %v1566 = vpop.f32.mrf.mxu0
  %v1567 = vadd.f32 0.0, %v1566
  %1568 = vdwg.mxu0
  %1569 = vmatpush.msra.mxu0 0.0
  %1570 = vmatpush.msra.mxu0 0.0
  %1571 = vmatpush.msra.mxu0 0.0
  %1572 = vmatpush.msra.mxu0 0.0
  %1573 = vmatpush.msra.mxu0 0.0
  %1574 = vmatpush.msra.mxu0 0.0
  %1575 = vmatpush.msra.mxu0 0.0
  %1576 = vmatpush.msra.mxu0 0.0
  %1577 = vmatpush.msra.mxu0 0.0
  %1578 = vmatpush.msra.mxu0 0.0
  %1579 = vmatpush.msra.mxu0 0.0
  %1580 = vmatpush.msra.mxu0 0.0
  %1581 = vmatpush.msra.mxu0 0.0
  %1582 = vmatpush.msra.mxu0 0.0
  %1583 = vmatpush.msra.mxu0 %v425
  %1584 = vmatpush.msra.mxu0 %v421
  %1585 = vmatmul.f32.gmra.mxu0 %v1547
  %v1586 = vpop.f32.mrf.mxu0
  %v1587 = vadd.f32 0.0, %v1586
  %1588 = vdwg.mxu0
  %1589 = vmatpush.msra.mxu0 0.0
  %1590 = vmatpush.msra.mxu0 0.0
  %1591 = vmatpush.msra.mxu0 0.0
  %1592 = vmatpush.msra.mxu0 0.0
  %1593 = vmatpush.msra.mxu0 0.0
  %1594 = vmatpush.msra.mxu0 0.0
  %1595 = vmatpush.msra.mxu0 0.0
  %1596 = vmatpush.msra.mxu0 0.0
  %1597 = vmatpush.msra.mxu0 0.0
  %1598 = vmatpush.msra.mxu0 0.0
  %1599 = vmatpush.msra.mxu0 0.0
  %1600 = vmatpush.msra.mxu0 0.0
  %1601 = vmatpush.msra.mxu0 0.0
  %1602 = vmatpush.msra.mxu0 0.0
  %1603 = vmatpush.msra.mxu0 %v426
  %1604 = vmatpush.msra.mxu0 %v422
  %1605 = vmatmul.f32.gmra.mxu0 %v1547
  %v1606 = vpop.f32.mrf.mxu0
  %v1607 = vadd.f32 0.0, %v1606
  %1608 = vdwg.mxu0
  %1609 = vmatpush.msra.mxu0 0.0
  %1610 = vmatpush.msra.mxu0 0.0
  %1611 = vmatpush.msra.mxu0 0.0
  %1612 = vmatpush.msra.mxu0 0.0
  %1613 = vmatpush.msra.mxu0 0.0
  %1614 = vmatpush.msra.mxu0 0.0
  %1615 = vmatpush.msra.mxu0 0.0
  %1616 = vmatpush.msra.mxu0 0.0
  %1617 = vmatpush.msra.mxu0 0.0
  %1618 = vmatpush.msra.mxu0 0.0
  %1619 = vmatpush.msra.mxu0 0.0
  %1620 = vmatpush.msra.mxu0 0.0
  %1621 = vmatpush.msra.mxu0 0.0
  %1622 = vmatpush.msra.mxu0 0.0
  %1623 = vmatpush.msra.mxu0 %v427
  %1624 = vmatpush.msra.mxu0 %v423
  %1625 = vmatmul.f32.gmra.mxu0 %v1547
  %v1626 = vpop.f32.mrf.mxu0
  %v1627 = vadd.f32 0.0, %v1626
  %1628 = vdwg.mxu0
  %v1630 = vsel %vm134, %v1543, 0
  %1632 = vmatpush.msra.mxu0 0.0
  %1633 = vmatpush.msra.mxu0 0.0
  %1634 = vmatpush.msra.mxu0 0.0
  %1635 = vmatpush.msra.mxu0 0.0
  %1636 = vmatpush.msra.mxu0 0.0
  %1637 = vmatpush.msra.mxu0 0.0
  %1638 = vmatpush.msra.mxu0 0.0
  %1639 = vmatpush.msra.mxu0 0.0
  %1640 = vmatpush.msra.mxu0 0.0
  %1641 = vmatpush.msra.mxu0 0.0
  %1642 = vmatpush.msra.mxu0 0.0
  %1643 = vmatpush.msra.mxu0 0.0
  %1644 = vmatpush.msra.mxu0 0.0
  %1645 = vmatpush.msra.mxu0 0.0
  %1646 = vmatpush.msra.mxu0 %v477
  %1647 = vmatpush.msra.mxu0 %v473
  %1648 = vmatmul.f32.gmra.mxu0 %v1630
  %v1649 = vpop.f32.mrf.mxu0
  %v1650 = vadd.f32 %v1567, %v1649
  %1651 = vdwg.mxu0
  %1652 = vmatpush.msra.mxu0 0.0
  %1653 = vmatpush.msra.mxu0 0.0
  %1654 = vmatpush.msra.mxu0 0.0
  %1655 = vmatpush.msra.mxu0 0.0
  %1656 = vmatpush.msra.mxu0 0.0
  %1657 = vmatpush.msra.mxu0 0.0
  %1658 = vmatpush.msra.mxu0 0.0
  %1659 = vmatpush.msra.mxu0 0.0
  %1660 = vmatpush.msra.mxu0 0.0
  %1661 = vmatpush.msra.mxu0 0.0
  %1662 = vmatpush.msra.mxu0 0.0
  %1663 = vmatpush.msra.mxu0 0.0
  %1664 = vmatpush.msra.mxu0 0.0
  %1665 = vmatpush.msra.mxu0 0.0
  %1666 = vmatpush.msra.mxu0 %v478
  %1667 = vmatpush.msra.mxu0 %v474
  %1668 = vmatmul.f32.gmra.mxu0 %v1630
  %v1669 = vpop.f32.mrf.mxu0
  %v1670 = vadd.f32 %v1587, %v1669
  %1671 = vdwg.mxu0
  %1672 = vmatpush.msra.mxu0 0.0
  %1673 = vmatpush.msra.mxu0 0.0
  %1674 = vmatpush.msra.mxu0 0.0
  %1675 = vmatpush.msra.mxu0 0.0
  %1676 = vmatpush.msra.mxu0 0.0
  %1677 = vmatpush.msra.mxu0 0.0
  %1678 = vmatpush.msra.mxu0 0.0
  %1679 = vmatpush.msra.mxu0 0.0
  %1680 = vmatpush.msra.mxu0 0.0
  %1681 = vmatpush.msra.mxu0 0.0
  %1682 = vmatpush.msra.mxu0 0.0
  %1683 = vmatpush.msra.mxu0 0.0
  %1684 = vmatpush.msra.mxu0 0.0
  %1685 = vmatpush.msra.mxu0 0.0
  %1686 = vmatpush.msra.mxu0 %v479
  %1687 = vmatpush.msra.mxu0 %v475
  %1688 = vmatmul.f32.gmra.mxu0 %v1630
  %v1689 = vpop.f32.mrf.mxu0
  %v1690 = vadd.f32 %v1607, %v1689
  %1691 = vdwg.mxu0
  %1692 = vmatpush.msra.mxu0 0.0
  %1693 = vmatpush.msra.mxu0 0.0
  %1694 = vmatpush.msra.mxu0 0.0
  %1695 = vmatpush.msra.mxu0 0.0
  %1696 = vmatpush.msra.mxu0 0.0
  %1697 = vmatpush.msra.mxu0 0.0
  %1698 = vmatpush.msra.mxu0 0.0
  %1699 = vmatpush.msra.mxu0 0.0
  %1700 = vmatpush.msra.mxu0 0.0
  %1701 = vmatpush.msra.mxu0 0.0
  %1702 = vmatpush.msra.mxu0 0.0
  %1703 = vmatpush.msra.mxu0 0.0
  %1704 = vmatpush.msra.mxu0 0.0
  %1705 = vmatpush.msra.mxu0 0.0
  %1706 = vmatpush.msra.mxu0 %v480
  %1707 = vmatpush.msra.mxu0 %v476
  %1708 = vmatmul.f32.gmra.mxu0 %v1630
  %v1709 = vpop.f32.mrf.mxu0
  %v1710 = vadd.f32 %v1627, %v1709
  %1711 = vdwg.mxu0
  %s1712 = scalar_lea.vmem %s1, 56
  %v1713 = vld [vmem:[%s1712] sm:$0x7]
  %v1715 = vsel %vm134, %v1713, 0
  %1717 = vmatpush.msra.mxu0 0.0
  %1718 = vmatpush.msra.mxu0 0.0
  %1719 = vmatpush.msra.mxu0 0.0
  %1720 = vmatpush.msra.mxu0 0.0
  %1721 = vmatpush.msra.mxu0 0.0
  %1722 = vmatpush.msra.mxu0 0.0
  %1723 = vmatpush.msra.mxu0 0.0
  %1724 = vmatpush.msra.mxu0 0.0
  %1725 = vmatpush.msra.mxu0 0.0
  %1726 = vmatpush.msra.mxu0 0.0
  %1727 = vmatpush.msra.mxu0 0.0
  %1728 = vmatpush.msra.mxu0 0.0
  %1729 = vmatpush.msra.mxu0 0.0
  %1730 = vmatpush.msra.mxu0 0.0
  %1731 = vmatpush.msra.mxu0 %v318
  %1732 = vmatpush.msra.mxu0 %v314
  %1733 = vmatmul.f32.gmra.mxu0 %v1715
  %v1734 = vpop.f32.mrf.mxu0
  %v1735 = vadd.f32 0.0, %v1734
  %1736 = vdwg.mxu0
  %1737 = vmatpush.msra.mxu0 0.0
  %1738 = vmatpush.msra.mxu0 0.0
  %1739 = vmatpush.msra.mxu0 0.0
  %1740 = vmatpush.msra.mxu0 0.0
  %1741 = vmatpush.msra.mxu0 0.0
  %1742 = vmatpush.msra.mxu0 0.0
  %1743 = vmatpush.msra.mxu0 0.0
  %1744 = vmatpush.msra.mxu0 0.0
  %1745 = vmatpush.msra.mxu0 0.0
  %1746 = vmatpush.msra.mxu0 0.0
  %1747 = vmatpush.msra.mxu0 0.0
  %1748 = vmatpush.msra.mxu0 0.0
  %1749 = vmatpush.msra.mxu0 0.0
  %1750 = vmatpush.msra.mxu0 0.0
  %1751 = vmatpush.msra.mxu0 %v319
  %1752 = vmatpush.msra.mxu0 %v315
  %1753 = vmatmul.f32.gmra.mxu0 %v1715
  %v1754 = vpop.f32.mrf.mxu0
  %v1755 = vadd.f32 0.0, %v1754
  %1756 = vdwg.mxu0
  %1757 = vmatpush.msra.mxu0 0.0
  %1758 = vmatpush.msra.mxu0 0.0
  %1759 = vmatpush.msra.mxu0 0.0
  %1760 = vmatpush.msra.mxu0 0.0
  %1761 = vmatpush.msra.mxu0 0.0
  %1762 = vmatpush.msra.mxu0 0.0
  %1763 = vmatpush.msra.mxu0 0.0
  %1764 = vmatpush.msra.mxu0 0.0
  %1765 = vmatpush.msra.mxu0 0.0
  %1766 = vmatpush.msra.mxu0 0.0
  %1767 = vmatpush.msra.mxu0 0.0
  %1768 = vmatpush.msra.mxu0 0.0
  %1769 = vmatpush.msra.mxu0 0.0
  %1770 = vmatpush.msra.mxu0 0.0
  %1771 = vmatpush.msra.mxu0 %v320
  %1772 = vmatpush.msra.mxu0 %v316
  %1773 = vmatmul.f32.gmra.mxu0 %v1715
  %v1774 = vpop.f32.mrf.mxu0
  %v1775 = vadd.f32 0.0, %v1774
  %1776 = vdwg.mxu0
  %1777 = vmatpush.msra.mxu0 0.0
  %1778 = vmatpush.msra.mxu0 0.0
  %1779 = vmatpush.msra.mxu0 0.0
  %1780 = vmatpush.msra.mxu0 0.0
  %1781 = vmatpush.msra.mxu0 0.0
  %1782 = vmatpush.msra.mxu0 0.0
  %1783 = vmatpush.msra.mxu0 0.0
  %1784 = vmatpush.msra.mxu0 0.0
  %1785 = vmatpush.msra.mxu0 0.0
  %1786 = vmatpush.msra.mxu0 0.0
  %1787 = vmatpush.msra.mxu0 0.0
  %1788 = vmatpush.msra.mxu0 0.0
  %1789 = vmatpush.msra.mxu0 0.0
  %1790 = vmatpush.msra.mxu0 0.0
  %1791 = vmatpush.msra.mxu0 %v321
  %1792 = vmatpush.msra.mxu0 %v317
  %1793 = vmatmul.f32.gmra.mxu0 %v1715
  %v1794 = vpop.f32.mrf.mxu0
  %v1795 = vadd.f32 0.0, %v1794
  %1796 = vdwg.mxu0
  %v1797 = vadd.f32 %v1650, %v1735
  %v1798 = vadd.f32 %v1670, %v1755
  %v1799 = vadd.f32 %v1690, %v1775
  %v1800 = vadd.f32 %v1710, %v1795
  %s1801 = scalar_lea.vmem %s1, 60
  %v1802 = vld [vmem:[%s1801] sm:$0x7]
  %v1804 = vsel %vm134, %v1802, 0
  %1806 = vmatpush.msra.mxu0 0.0
  %1807 = vmatpush.msra.mxu0 0.0
  %1808 = vmatpush.msra.mxu0 0.0
  %1809 = vmatpush.msra.mxu0 0.0
  %1810 = vmatpush.msra.mxu0 0.0
  %1811 = vmatpush.msra.mxu0 0.0
  %1812 = vmatpush.msra.mxu0 0.0
  %1813 = vmatpush.msra.mxu0 0.0
  %1814 = vmatpush.msra.mxu0 0.0
  %1815 = vmatpush.msra.mxu0 0.0
  %1816 = vmatpush.msra.mxu0 0.0
  %1817 = vmatpush.msra.mxu0 0.0
  %1818 = vmatpush.msra.mxu0 0.0
  %1819 = vmatpush.msra.mxu0 0.0
  %1820 = vmatpush.msra.mxu0 %v28
  %1821 = vmatpush.msra.mxu0 %v24
  %1822 = vmatmul.f32.gmra.mxu0 %v1804
  %v1823 = vpop.f32.mrf.mxu0
  %v1824 = vadd.f32 0.0, %v1823
  %1825 = vdwg.mxu0
  %1826 = vmatpush.msra.mxu0 0.0
  %1827 = vmatpush.msra.mxu0 0.0
  %1828 = vmatpush.msra.mxu0 0.0
  %1829 = vmatpush.msra.mxu0 0.0
  %1830 = vmatpush.msra.mxu0 0.0
  %1831 = vmatpush.msra.mxu0 0.0
  %1832 = vmatpush.msra.mxu0 0.0
  %1833 = vmatpush.msra.mxu0 0.0
  %1834 = vmatpush.msra.mxu0 0.0
  %1835 = vmatpush.msra.mxu0 0.0
  %1836 = vmatpush.msra.mxu0 0.0
  %1837 = vmatpush.msra.mxu0 0.0
  %1838 = vmatpush.msra.mxu0 0.0
  %1839 = vmatpush.msra.mxu0 0.0
  %1840 = vmatpush.msra.mxu0 %v29
  %1841 = vmatpush.msra.mxu0 %v25
  %1842 = vmatmul.f32.gmra.mxu0 %v1804
  %v1843 = vpop.f32.mrf.mxu0
  %v1844 = vadd.f32 0.0, %v1843
  %1845 = vdwg.mxu0
  %1846 = vmatpush.msra.mxu0 0.0
  %1847 = vmatpush.msra.mxu0 0.0
  %1848 = vmatpush.msra.mxu0 0.0
  %1849 = vmatpush.msra.mxu0 0.0
  %1850 = vmatpush.msra.mxu0 0.0
  %1851 = vmatpush.msra.mxu0 0.0
  %1852 = vmatpush.msra.mxu0 0.0
  %1853 = vmatpush.msra.mxu0 0.0
  %1854 = vmatpush.msra.mxu0 0.0
  %1855 = vmatpush.msra.mxu0 0.0
  %1856 = vmatpush.msra.mxu0 0.0
  %1857 = vmatpush.msra.mxu0 0.0
  %1858 = vmatpush.msra.mxu0 0.0
  %1859 = vmatpush.msra.mxu0 0.0
  %1860 = vmatpush.msra.mxu0 %v30
  %1861 = vmatpush.msra.mxu0 %v26
  %1862 = vmatmul.f32.gmra.mxu0 %v1804
  %v1863 = vpop.f32.mrf.mxu0
  %v1864 = vadd.f32 0.0, %v1863
  %1865 = vdwg.mxu0
  %1866 = vmatpush.msra.mxu0 0.0
  %1867 = vmatpush.msra.mxu0 0.0
  %1868 = vmatpush.msra.mxu0 0.0
  %1869 = vmatpush.msra.mxu0 0.0
  %1870 = vmatpush.msra.mxu0 0.0
  %1871 = vmatpush.msra.mxu0 0.0
  %1872 = vmatpush.msra.mxu0 0.0
  %1873 = vmatpush.msra.mxu0 0.0
  %1874 = vmatpush.msra.mxu0 0.0
  %1875 = vmatpush.msra.mxu0 0.0
  %1876 = vmatpush.msra.mxu0 0.0
  %1877 = vmatpush.msra.mxu0 0.0
  %1878 = vmatpush.msra.mxu0 0.0
  %1879 = vmatpush.msra.mxu0 0.0
  %1880 = vmatpush.msra.mxu0 %v31
  %1881 = vmatpush.msra.mxu0 %v27
  %1882 = vmatmul.f32.gmra.mxu0 %v1804
  %v1883 = vpop.f32.mrf.mxu0
  %v1884 = vadd.f32 0.0, %v1883
  %1885 = vdwg.mxu0
  %v1886 = vadd.f32 %v1797, %v1824
  %v1887 = vadd.f32 %v1798, %v1844
  %v1888 = vadd.f32 %v1799, %v1864
  %v1889 = vadd.f32 %v1800, %v1884
  %v1890 = vadd.f32 %v1886, %v832
  %v1891 = vadd.f32 %v1887, %v832
  %v1892 = vadd.f32 %v1888, %v832
  %v1893 = vadd.f32 %v1889, %v832
  %v1894 = vtanh.pop %v834
  %v1895 = vtanh.pop %v835
  %v1896 = vtanh.pop %v836
  %v1897 = vtanh.pop %v837
  %v1898 = vtanh.pop %v1186
  %v1899 = vtanh.pop %v1187
  %v1900 = vtanh.pop %v1188
  %v1901 = vtanh.pop %v1189
  %v1902 = vtanh.pop %v1538
  %v1903 = vtanh.pop %v1539
  %v1904 = vtanh.pop %v1540
  %v1905 = vtanh.pop %v1541
  %v1906 = vtanh.pop %v1890
  %v1907 = vtanh.pop %v1891
  %v1908 = vtanh.pop %v1892
  %v1909 = vtanh.pop %v1893
  %v1914 = vrot.slane %v1895, 4
  %v1915 = vrot.slane %v1897, 4
  %vm1916 = vcmask 1043456
  %v1917 = vsel %vm1916, %v1894, %v1914
  %v1918 = vsel %vm1916, %v1896, %v1915
  %1921 = vst [vmem:[%s5] sm:$0x77] %v1917
  %1922 = vst [vmem:[%s5 + $0x8] sm:$0x77] %v1918
  %v1927 = vrot.slane %v1899, 4
  %v1928 = vrot.slane %v1901, 4
  %v1929 = vsel %vm1916, %v1898, %v1927
  %v1930 = vsel %vm1916, %v1900, %v1928
  %s1933 = scalar_lea.vmem %s5, 16
  %1934 = vst [vmem:[%s1933] sm:$0x77] %v1929
  %1935 = vst [vmem:[%s1933 + $0x8] sm:$0x77] %v1930
  %v1940 = vrot.slane %v1903, 4
  %v1941 = vrot.slane %v1905, 4
  %v1942 = vsel %vm1916, %v1902, %v1940
  %v1943 = vsel %vm1916, %v1904, %v1941
  %s1946 = scalar_lea.vmem %s5, 32
  %1947 = vst [vmem:[%s1946] sm:$0x77] %v1942
  %1948 = vst [vmem:[%s1946 + $0x8] sm:$0x77] %v1943
  %v1953 = vrot.slane %v1907, 4
  %v1954 = vrot.slane %v1909, 4
  %v1955 = vsel %vm1916, %v1906, %v1953
  %v1956 = vsel %vm1916, %v1908, %v1954
  %s1959 = scalar_lea.vmem %s5, 48
  %1960 = vst [vmem:[%s1959] sm:$0x77] %v1955
  %1961 = vst [vmem:[%s1959 + $0x8] sm:$0x77] %v1956
  // Predicated region
  $region22: #{generator_forward.7} parent=0 // pred_check
    _
  $region23: #{generator_forward.7} parent=0 // pred_check_branch
    %1963 = sbr.rel (0) target = $region25
  $region24: #{generator_forward.7} parent=0 // pred_region
    _
  $region25: #{generator_forward.7} parent=0 // pred_fallthru
    _
  // Predicated region
  $region26: #{generator_forward.7} parent=0 // pred_check
    _
  $region27: #{generator_forward.7} parent=0 // pred_check_branch
    %1965 = sbr.rel (0) target = $region29
  $region28: #{generator_forward.7} parent=0 // pred_region
    _
  $region29: #{generator_forward.7} parent=0 // pred_fallthru
    _

</llo_original>
